<compile_context>
chip_gen: v7x
topology: tpu7x:2x2x1
jax: 0.10.0
libtpu: 0.0.40
codegen_flags: <defaults>
</compile_context>

<pallas_src>
import functools

import jax
import jax.numpy as jnp
from jax import lax
from jax.experimental import pallas as pl
from jax.experimental.pallas import tpu as pltpu

EPS = 1e-5
LANE = 128
_VMEM_LIMIT = 32 * 1024 * 1024   # under scoped budgets on v5e/v6e/v7x


def _round_up(x, m):
    return (x + m - 1) // m * m


def _pick_tile(m, target=1024):
    """Largest multiple-of-8 divisor of m that is <= target (else m itself)."""
    if m <= target:
        return m
    for t in range(target, 7, -1):
        if m % t == 0 and t % 8 == 0:
            return t
    return m


# ---------------------------------------------------------------------------
# Kernels
# ---------------------------------------------------------------------------
def _bn_scale_shift(s, q, gamma, beta, count, eps):
    """Fold train-mode BN (biased batch stats) into per-channel scale/shift."""
    mean = s * (1.0 / count)
    var = jnp.maximum(q * (1.0 / count) - mean * mean, 0.0)
    inv = lax.rsqrt(var + eps)
    scale = gamma * inv
    shift = beta - mean * scale
    return scale, shift


def _conv_stats_kernel(x_ref, w_ref, y_ref, s_ref, q_ref):
    """y = x @ w; accumulate per-channel sum / sum-of-squares of y."""
    @pl.when(pl.program_id(0) == 0)
    def _init():
        s_ref[...] = jnp.zeros_like(s_ref)
        q_ref[...] = jnp.zeros_like(q_ref)

    y = jnp.dot(x_ref[...], w_ref[...], preferred_element_type=jnp.float32)
    y_ref[...] = y
    s_ref[...] += jnp.sum(y, axis=0, keepdims=True)
    q_ref[...] += jnp.sum(y * y, axis=0, keepdims=True)


def _bn_relu_conv_stats_kernel(y_in_ref, s_in_ref, q_in_ref, g_ref, b_ref, w_ref,
                               y_ref, s_ref, q_ref, *, count, eps):
    """a = relu(bn(y_in)); y = a @ w; accumulate sum / sumsq of y."""
    @pl.when(pl.program_id(0) == 0)
    def _init():
        s_ref[...] = jnp.zeros_like(s_ref)
        q_ref[...] = jnp.zeros_like(q_ref)

    scale, shift = _bn_scale_shift(s_in_ref[...], q_in_ref[...],
                                   g_ref[...], b_ref[...], count, eps)
    a = jnp.maximum(y_in_ref[...] * scale + shift, 0.0)
    y = jnp.dot(a, w_ref[...], preferred_element_type=jnp.float32)
    y_ref[...] = y
    s_ref[...] += jnp.sum(y, axis=0, keepdims=True)
    q_ref[...] += jnp.sum(y * y, axis=0, keepdims=True)


def _bn_relu_conv3x3_stats_kernel(ml_ref, mr_ref, y_in_ref, s_in_ref, q_in_ref,
                                  g_ref, b_ref, w_ref, y_ref, s_ref, q_ref,
                                  *, width, pad_rows, count, eps):
    """Per image: a = relu(bn(y_in)); 3x3/pad-1 conv as 9 shifted matmuls."""
    @pl.when(pl.program_id(0) == 0)
    def _init():
        s_ref[...] = jnp.zeros_like(s_ref)
        q_ref[...] = jnp.zeros_like(q_ref)

    scale, shift = _bn_scale_shift(s_in_ref[...], q_in_ref[...],
                                   g_ref[...], b_ref[...], count, eps)
    a = jnp.maximum(y_in_ref[...] * scale + shift, 0.0)      # [H*W, Cp]
    hw, cp = a.shape

    # Zero-pad along the flattened (row-major) spatial axis once, with a pad
    # size that keeps the concatenate sublane-aligned; each 3x3 tap is then a
    # static shifted slice.  Column wrap-around is killed by the masks.
    zpad = jnp.zeros((pad_rows, cp), a.dtype)
    ap = jnp.concatenate([zpad, a, zpad], axis=0)

    acc = None
    for k in range(9):
        dy, dx = k // 3 - 1, k % 3 - 1
        t = dy * width + dx                                  # flattened shift
        sh = ap[pad_rows + t: pad_rows + t + hw, :]
        if dx == -1:
            sh = sh * ml_ref[...]                            # drop col 0 rows
        elif dx == 1:
            sh = sh * mr_ref[...]                            # drop col W-1 rows
        c = jnp.dot(sh, w_ref[k], preferred_element_type=jnp.float32)
        acc = c if acc is None else acc + c

    y_ref[...] = acc
    s_ref[...] += jnp.sum(acc, axis=0, keepdims=True)
    q_ref[...] += jnp.sum(acc * acc, axis=0, keepdims=True)


def _bn_add_relu_kernel(y_ref, s_ref, q_ref, g_ref, b_ref, r_ref, o_ref,
                        *, count, eps):
    scale, shift = _bn_scale_shift(s_ref[...], q_ref[...],
                                   g_ref[...], b_ref[...], count, eps)
    o_ref[...] = jnp.maximum(y_ref[...] * scale + shift + r_ref[...], 0.0)


# ---------------------------------------------------------------------------
# pallas_call wrappers
# ---------------------------------------------------------------------------
def _compiler_params(semantics):
    return pltpu.CompilerParams(dimension_semantics=semantics,
                                vmem_limit_bytes=_VMEM_LIMIT)


def conv1x1_stats(x, w, tm):
    m, k = x.shape
    cout = w.shape[1]
    return pl.pallas_call(
        _conv_stats_kernel,
        grid=(m // tm,),
        in_specs=[pl.BlockSpec((tm, k), lambda i: (i, 0)),
                  pl.BlockSpec((k, cout), lambda i: (0, 0))],
        out_specs=[pl.BlockSpec((tm, cout), lambda i: (i, 0)),
                   pl.BlockSpec((1, cout), lambda i: (0, 0)),
                   pl.BlockSpec((1, cout), lambda i: (0, 0))],
        out_shape=[jax.ShapeDtypeStruct((m, cout), jnp.float32),
                   jax.ShapeDtypeStruct((1, cout), jnp.float32),
                   jax.ShapeDtypeStruct((1, cout), jnp.float32)],
        compiler_params=_compiler_params(("arbitrary",)),
    )(x, w)


def bn_relu_conv1x1_stats(y_in, s_in, q_in, g, b, w, tm, count):
    m, cin = y_in.shape
    cout = w.shape[1]
    kern = functools.partial(_bn_relu_conv_stats_kernel,
                             count=float(count), eps=EPS)
    return pl.pallas_call(
        kern,
        grid=(m // tm,),
        in_specs=[pl.BlockSpec((tm, cin), lambda i: (i, 0)),
                  pl.BlockSpec((1, cin), lambda i: (0, 0)),
                  pl.BlockSpec((1, cin), lambda i: (0, 0)),
                  pl.BlockSpec((1, cin), lambda i: (0, 0)),
                  pl.BlockSpec((1, cin), lambda i: (0, 0)),
                  pl.BlockSpec((cin, cout), lambda i: (0, 0))],
        out_specs=[pl.BlockSpec((tm, cout), lambda i: (i, 0)),
                   pl.BlockSpec((1, cout), lambda i: (0, 0)),
                   pl.BlockSpec((1, cout), lambda i: (0, 0))],
        out_shape=[jax.ShapeDtypeStruct((m, cout), jnp.float32),
                   jax.ShapeDtypeStruct((1, cout), jnp.float32),
                   jax.ShapeDtypeStruct((1, cout), jnp.float32)],
        compiler_params=_compiler_params(("arbitrary",)),
    )(y_in, s_in, q_in, g, b, w)


def bn_relu_conv3x3_stats(y_in, s_in, q_in, g, b, w9, mask_l, mask_r,
                          batch, height, width, count):
    m, cin = y_in.shape
    hw = height * width
    cout = w9.shape[2]
    pad_rows = _round_up(width + 1, 8)
    kern = functools.partial(_bn_relu_conv3x3_stats_kernel, width=width,
                             pad_rows=pad_rows, count=float(count), eps=EPS)
    return pl.pallas_call(
        kern,
        grid=(batch,),
        in_specs=[pl.BlockSpec((hw, 1), lambda n: (0, 0)),
                  pl.BlockSpec((hw, 1), lambda n: (0, 0)),
                  pl.BlockSpec((hw, cin), lambda n: (n, 0)),
                  pl.BlockSpec((1, cin), lambda n: (0, 0)),
                  pl.BlockSpec((1, cin), lambda n: (0, 0)),
                  pl.BlockSpec((1, cin), lambda n: (0, 0)),
                  pl.BlockSpec((1, cin), lambda n: (0, 0)),
                  pl.BlockSpec((9, cin, cout), lambda n: (0, 0, 0))],
        out_specs=[pl.BlockSpec((hw, cout), lambda n: (n, 0)),
                   pl.BlockSpec((1, cout), lambda n: (0, 0)),
                   pl.BlockSpec((1, cout), lambda n: (0, 0))],
        out_shape=[jax.ShapeDtypeStruct((m, cout), jnp.float32),
                   jax.ShapeDtypeStruct((1, cout), jnp.float32),
                   jax.ShapeDtypeStruct((1, cout), jnp.float32)],
        compiler_params=_compiler_params(("arbitrary",)),
    )(mask_l, mask_r, y_in, s_in, q_in, g, b, w9)


def bn_add_relu(y_in, s_in, q_in, g, b, residual, tm, count):
    m, c = y_in.shape
    kern = functools.partial(_bn_add_relu_kernel, count=float(count), eps=EPS)
    return pl.pallas_call(
        kern,
        grid=(m // tm,),
        in_specs=[pl.BlockSpec((tm, c), lambda i: (i, 0)),
                  pl.BlockSpec((1, c), lambda i: (0, 0)),
                  pl.BlockSpec((1, c), lambda i: (0, 0)),
                  pl.BlockSpec((1, c), lambda i: (0, 0)),
                  pl.BlockSpec((1, c), lambda i: (0, 0)),
                  pl.BlockSpec((tm, c), lambda i: (i, 0))],
        out_specs=pl.BlockSpec((tm, c), lambda i: (i, 0)),
        out_shape=jax.ShapeDtypeStruct((m, c), jnp.float32),
        compiler_params=_compiler_params(("parallel",)),
    )(y_in, s_in, q_in, g, b, residual)


# ---------------------------------------------------------------------------
# Bottleneck forward (glue in plain JAX, hot path in Pallas)
# ---------------------------------------------------------------------------
def bottleneck_forward(x_nhwc, params):
    n, h, w, cin = x_nhwc.shape
    m = n * h * w
    hw = h * w
    cin_pad = params["w1"].shape[0]

    x2d = x_nhwc.reshape(m, cin)
    if cin_pad != cin:
        x2d = jnp.pad(x2d, ((0, 0), (0, cin_pad - cin)))     # lane-dense input

    tm = _pick_tile(m)

    # Static column-boundary masks for the fused 3x3 conv (per-image rows).
    col = (jnp.arange(hw, dtype=jnp.int32) % w).reshape(hw, 1)
    mask_l = (col >= 1).astype(jnp.float32)
    mask_r = (col <= w - 2).astype(jnp.float32)

    # A: conv1 (1x1) + bn1 stats
    y1, s1, q1 = conv1x1_stats(x2d, params["w1"], tm)
    # B: bn1 + relu + conv2 (3x3, pad 1) + bn2 stats  (one image block per step)
    y2, s2, q2 = bn_relu_conv3x3_stats(y1, s1, q1, params["g1"], params["b1"],
                                       params["w2"], mask_l, mask_r, n, h, w, m)
    # C: bn2 + relu + conv3 (1x1) + bn3 stats
    y3, s3, q3 = bn_relu_conv1x1_stats(y2, s2, q2, params["g2"], params["b2"],
                                       params["w3"], tm, m)
    # D: bn3 + residual add + relu
    out = bn_add_relu(y3, s3, q3, params["g3"], params["b3"], x2d, tm, m)

    return out[:, :cin].reshape(n, h, w, cin)


# ---------------------------------------------------------------------------
# Pure-JAX reference (for numerical validation)
# ---------------------------------------------------------------------------
def _bn_ref(y):
    mean = jnp.mean(y, axis=(0, 1, 2), keepdims=True)
    var = jnp.mean((y - mean) ** 2, axis=(0, 1, 2), keepdims=True)
    return (y - mean) * lax.rsqrt(var + EPS)


def _conv_ref(x, w_hwio):
    return lax.conv_general_dilated(
        x, w_hwio, window_strides=(1, 1),
        padding=[((w_hwio.shape[0] - 1) // 2,) * 2,
                 ((w_hwio.shape[1] - 1) // 2,) * 2],
        dimension_numbers=("NHWC", "HWIO", "NHWC"))


def bottleneck_ref(x_nhwc, w1_hwio, w2_hwio, w3_hwio):
    out = jnp.maximum(_bn_ref(_conv_ref(x_nhwc, w1_hwio)), 0.0)
    out = jnp.maximum(_bn_ref(_conv_ref(out, w2_hwio)), 0.0)
    out = _bn_ref(_conv_ref(out, w3_hwio)) + x_nhwc
    return jnp.maximum(out, 0.0)


# ---------------------------------------------------------------------------
if __name__ == "__main__":
    # stride=1, downsample=None  =>  inplanes = 4*planes
    N, H, W = 2, 16, 16
    planes = 4
    inplanes = planes * 4        # 16

    key = jax.random.PRNGKey(0)
    k_x, k1, k2, k3 = jax.random.split(key, 4)

    x_nchw = jax.random.normal(k_x, (N, inplanes, H, W), jnp.float32)
    x_nhwc = jnp.transpose(x_nchw, (0, 2, 3, 1))

    # Deterministic synthetic weights (conv bias=False in the module).
    w1_hwio = jax.random.normal(k1, (1, 1, inplanes, planes), jnp.float32) * 0.1
    w2_hwio = jax.random.normal(k2, (3, 3, planes, planes), jnp.float32) * 0.1
    w3_hwio = jax.random.normal(k3, (1, 1, planes, planes * 4), jnp.float32) * 0.1

    cin_pad = _round_up(inplanes, LANE)
    p_pad = _round_up(planes, LANE)
    c4_pad = _round_up(planes * 4, LANE)

    def pad2(a, rows, cols):
        return jnp.pad(a, ((0, rows - a.shape[0]), (0, cols - a.shape[1])))

    params = {
        "w1": pad2(w1_hwio.reshape(inplanes, planes), cin_pad, p_pad),
        # (ky, kx) -> tap index k = (dy+1)*3 + (dx+1), matching the kernel loop
        "w2": jnp.pad(w2_hwio.reshape(9, planes, planes),
                      ((0, 0), (0, p_pad - planes), (0, p_pad - planes))),
        "w3": pad2(w3_hwio.reshape(planes, planes * 4), p_pad, c4_pad),
        "g1": pad2(jnp.ones((1, planes), jnp.float32), 1, p_pad),
        "b1": jnp.zeros((1, p_pad), jnp.float32),
        "g2": pad2(jnp.ones((1, planes), jnp.float32), 1, p_pad),
        "b2": jnp.zeros((1, p_pad), jnp.float32),
        "g3": pad2(jnp.ones((1, planes * 4), jnp.float32), 1, c4_pad),
        "b3": jnp.zeros((1, c4_pad), jnp.float32),
    }

    out_nhwc = jax.jit(bottleneck_forward)(x_nhwc, params)
    out_nhwc = jax.block_until_ready(out_nhwc)

    ref_nhwc = bottleneck_ref(x_nhwc, w1_hwio, w2_hwio, w3_hwio)
    assert out_nhwc.shape == (N, H, W, inplanes)
    assert jnp.allclose(out_nhwc, ref_nhwc, rtol=1e-3, atol=1e-3), \
        "mismatch vs reference"

    # Back to PyTorch's NCHW convention if needed:
    out_nchw = jnp.transpose(out_nhwc, (0, 3, 1, 2))
    jax.block_until_ready(out_nchw)

    print("KERNEL_OK")
</pallas_src>

<mosaic_0001>
module attributes {stable_mosaic.version = 11 : i64} {
  func.func @_conv_stats_kernel(%arg0: i32, %arg1: memref<512x128xf32, #tpu.memory_space<vmem>>, %arg2: memref<128x128xf32, #tpu.memory_space<vmem>>, %arg3: memref<512x128xf32, #tpu.memory_space<vmem>>, %arg4: memref<1x128xf32, #tpu.memory_space<vmem>>, %arg5: memref<1x128xf32, #tpu.memory_space<vmem>>) attributes {dimension_semantics = [#tpu.dimension_semantics<arbitrary>], iteration_bounds = array<i64: 1>, scalar_prefetch = 0 : i64, scratch_operands = 0 : i64, tpu.core_type = #tpu.core_type<tc>, window_params = [{transform_indices = @transform_0, window_bounds = array<i64: 512, 128>}, {pipeline_mode = #tpu.pipeline_mode<synchronous>, transform_indices = @transform_1, window_bounds = array<i64: 128, 128>}, {transform_indices = @transform_2, window_bounds = array<i64: 512, 128>}, {pipeline_mode = #tpu.pipeline_mode<synchronous>, transform_indices = @transform_3, window_bounds = array<i64: 1, 128>}, {pipeline_mode = #tpu.pipeline_mode<synchronous>, transform_indices = @transform_4, window_bounds = array<i64: 1, 128>}]} {
    %c0_i32 = arith.constant 0 : i32
    %0 = arith.cmpi eq, %arg0, %c0_i32 : i32
    %1 = arith.extui %0 : i1 to i32
    %c0_i32_0 = arith.constant 0 : i32
    %2 = arith.cmpi ne, %1, %c0_i32_0 : i32
    scf.if %2 {
      %cst_16 = arith.constant 0.000000e+00 : f32
      %18 = vector.broadcast %cst_16 : f32 to vector<1x128xf32>
      %c0_17 = arith.constant 0 : index
      %c0_18 = arith.constant 0 : index
      %19 = vector.load %arg4[%c0_17, %c0_18] : memref<1x128xf32, #tpu.memory_space<vmem>>, vector<1x128xf32>
      tpu.vector_store %arg4[%c0_17, %c0_18], %18 {strides = array<i32>} : memref<1x128xf32, #tpu.memory_space<vmem>>, vector<1x128xf32>,
      %cst_19 = arith.constant 0.000000e+00 : f32
      %20 = vector.broadcast %cst_19 : f32 to vector<1x128xf32>
      %c0_20 = arith.constant 0 : index
      %c0_21 = arith.constant 0 : index
      %21 = vector.load %arg5[%c0_20, %c0_21] : memref<1x128xf32, #tpu.memory_space<vmem>>, vector<1x128xf32>
      tpu.vector_store %arg5[%c0_20, %c0_21], %20 {strides = array<i32>} : memref<1x128xf32, #tpu.memory_space<vmem>>, vector<1x128xf32>,
    } else {
    }
    %c0 = arith.constant 0 : index
    %c0_1 = arith.constant 0 : index
    %3 = vector.load %arg1[%c0, %c0_1] : memref<512x128xf32, #tpu.memory_space<vmem>>, vector<512x128xf32>
    %c0_2 = arith.constant 0 : index
    %c0_3 = arith.constant 0 : index
    %4 = vector.load %arg2[%c0_2, %c0_3] : memref<128x128xf32, #tpu.memory_space<vmem>>, vector<128x128xf32>
    %cst = arith.constant dense<0.000000e+00> : vector<512x128xf32>
    %5 = tpu.matmul %3, %4, %cst {dimension_numbers = #tpu.dot_dimension_numbers<[1], [0], [0], [1], [0, 0, 1, 1], [], []>} : vector<512x128xf32>, vector<128x128xf32>, vector<512x128xf32> -> vector<512x128xf32>
    %c0_4 = arith.constant 0 : index
    %c0_5 = arith.constant 0 : index
    %6 = vector.load %arg3[%c0_4, %c0_5] : memref<512x128xf32, #tpu.memory_space<vmem>>, vector<512x128xf32>
    tpu.vector_store %arg3[%c0_4, %c0_5], %5 {strides = array<i32>} : memref<512x128xf32, #tpu.memory_space<vmem>>, vector<512x128xf32>,
    %c0_6 = arith.constant 0 : index
    %c0_7 = arith.constant 0 : index
    %7 = vector.load %arg4[%c0_6, %c0_7] : memref<1x128xf32, #tpu.memory_space<vmem>>, vector<1x128xf32>
    %cst_8 = arith.constant dense<0.000000e+00> : vector<128xf32>
    %8 = vector.multi_reduction <add>, %5, %cst_8 [0] : vector<512x128xf32> to vector<128xf32>
    %9 = vector.shape_cast %8 : vector<128xf32> to vector<1x128xf32>
    %10 = arith.addf %7, %9 : vector<1x128xf32>
    %c0_9 = arith.constant 0 : index
    %c0_10 = arith.constant 0 : index
    %11 = vector.load %arg4[%c0_9, %c0_10] : memref<1x128xf32, #tpu.memory_space<vmem>>, vector<1x128xf32>
    tpu.vector_store %arg4[%c0_9, %c0_10], %10 {strides = array<i32>} : memref<1x128xf32, #tpu.memory_space<vmem>>, vector<1x128xf32>,
    %c0_11 = arith.constant 0 : index
    %c0_12 = arith.constant 0 : index
    %12 = vector.load %arg5[%c0_11, %c0_12] : memref<1x128xf32, #tpu.memory_space<vmem>>, vector<1x128xf32>
    %13 = arith.mulf %5, %5 : vector<512x128xf32>
    %cst_13 = arith.constant dense<0.000000e+00> : vector<128xf32>
    %14 = vector.multi_reduction <add>, %13, %cst_13 [0] : vector<512x128xf32> to vector<128xf32>
    %15 = vector.shape_cast %14 : vector<128xf32> to vector<1x128xf32>
    %16 = arith.addf %12, %15 : vector<1x128xf32>
    %c0_14 = arith.constant 0 : index
    %c0_15 = arith.constant 0 : index
    %17 = vector.load %arg5[%c0_14, %c0_15] : memref<1x128xf32, #tpu.memory_space<vmem>>, vector<1x128xf32>
    tpu.vector_store %arg5[%c0_14, %c0_15], %16 {strides = array<i32>} : memref<1x128xf32, #tpu.memory_space<vmem>>, vector<1x128xf32>,
    return
  }
  func.func @transform_0(%arg0: i32) -> (i32, i32) {
    %c0_i32 = arith.constant 0 : i32
    %c0_i32_0 = arith.constant 0 : i32
    return %arg0, %c0_i32 : i32, i32
  }
  func.func @transform_1(%arg0: i32) -> (i32, i32) {
    %c0_i32 = arith.constant 0 : i32
    %c0_i32_0 = arith.constant 0 : i32
    %c0_i32_1 = arith.constant 0 : i32
    return %c0_i32, %c0_i32_0 : i32, i32
  }
  func.func @transform_2(%arg0: i32) -> (i32, i32) {
    %c0_i32 = arith.constant 0 : i32
    %c0_i32_0 = arith.constant 0 : i32
    return %arg0, %c0_i32 : i32, i32
  }
  func.func @transform_3(%arg0: i32) -> (i32, i32) {
    %c0_i32 = arith.constant 0 : i32
    %c0_i32_0 = arith.constant 0 : i32
    %c0_i32_1 = arith.constant 0 : i32
    return %c0_i32, %c0_i32_0 : i32, i32
  }
  func.func @transform_4(%arg0: i32) -> (i32, i32) {
    %c0_i32 = arith.constant 0 : i32
    %c0_i32_0 = arith.constant 0 : i32
    %c0_i32_1 = arith.constant 0 : i32
    return %c0_i32, %c0_i32_0 : i32, i32
  }
}

module attributes {stable_mosaic.version = 11 : i64} {
  func.func @_bn_relu_conv3x3_stats_kernel(%arg0: i32, %arg1: memref<256x1xf32, #tpu.memory_space<vmem>>, %arg2: memref<256x1xf32, #tpu.memory_space<vmem>>, %arg3: memref<256x128xf32, #tpu.memory_space<vmem>>, %arg4: memref<1x128xf32, #tpu.memory_space<vmem>>, %arg5: memref<1x128xf32, #tpu.memory_space<vmem>>, %arg6: memref<1x128xf32, #tpu.memory_space<vmem>>, %arg7: memref<1x128xf32, #tpu.memory_space<vmem>>, %arg8: memref<9x128x128xf32, #tpu.memory_space<vmem>>, %arg9: memref<256x128xf32, #tpu.memory_space<vmem>>, %arg10: memref<1x128xf32, #tpu.memory_space<vmem>>, %arg11: memref<1x128xf32, #tpu.memory_space<vmem>>) attributes {dimension_semantics = [#tpu.dimension_semantics<arbitrary>], iteration_bounds = array<i64: 2>, scalar_prefetch = 0 : i64, scratch_operands = 0 : i64, tpu.core_type = #tpu.core_type<tc>, window_params = [{pipeline_mode = #tpu.pipeline_mode<synchronous>, transform_indices = @transform_0, window_bounds = array<i64: 256, 1>}, {pipeline_mode = #tpu.pipeline_mode<synchronous>, transform_indices = @transform_1, window_bounds = array<i64: 256, 1>}, {transform_indices = @transform_2, window_bounds = array<i64: 256, 128>}, {pipeline_mode = #tpu.pipeline_mode<synchronous>, transform_indices = @transform_3, window_bounds = array<i64: 1, 128>}, {pipeline_mode = #tpu.pipeline_mode<synchronous>, transform_indices = @transform_4, window_bounds = array<i64: 1, 128>}, {pipeline_mode = #tpu.pipeline_mode<synchronous>, transform_indices = @transform_5, window_bounds = array<i64: 1, 128>}, {pipeline_mode = #tpu.pipeline_mode<synchronous>, transform_indices = @transform_6, window_bounds = array<i64: 1, 128>}, {pipeline_mode = #tpu.pipeline_mode<synchronous>, transform_indices = @transform_7, window_bounds = array<i64: 9, 128, 128>}, {transform_indices = @transform_8, window_bounds = array<i64: 256, 128>}, {pipeline_mode = #tpu.pipeline_mode<synchronous>, transform_indices = @transform_9, window_bounds = array<i64: 1, 128>}, {pipeline_mode = #tpu.pipeline_mode<synchronous>, transform_indices = @transform_10, window_bounds = array<i64: 1, 128>}]} {
    %c0_i32 = arith.constant 0 : i32
    %0 = arith.cmpi eq, %arg0, %c0_i32 : i32
    %1 = arith.extui %0 : i1 to i32
    %c0_i32_0 = arith.constant 0 : i32
    %2 = arith.cmpi ne, %1, %c0_i32_0 : i32
    scf.if %2 {
      %cst_67 = arith.constant 0.000000e+00 : f32
      %104 = vector.broadcast %cst_67 : f32 to vector<1x128xf32>
      %c0_68 = arith.constant 0 : index
      %c0_69 = arith.constant 0 : index
      %105 = vector.load %arg10[%c0_68, %c0_69] : memref<1x128xf32, #tpu.memory_space<vmem>>, vector<1x128xf32>
      tpu.vector_store %arg10[%c0_68, %c0_69], %104 {strides = array<i32>} : memref<1x128xf32, #tpu.memory_space<vmem>>, vector<1x128xf32>,
      %cst_70 = arith.constant 0.000000e+00 : f32
      %106 = vector.broadcast %cst_70 : f32 to vector<1x128xf32>
      %c0_71 = arith.constant 0 : index
      %c0_72 = arith.constant 0 : index
      %107 = vector.load %arg11[%c0_71, %c0_72] : memref<1x128xf32, #tpu.memory_space<vmem>>, vector<1x128xf32>
      tpu.vector_store %arg11[%c0_71, %c0_72], %106 {strides = array<i32>} : memref<1x128xf32, #tpu.memory_space<vmem>>, vector<1x128xf32>,
    } else {
    }
    %c0 = arith.constant 0 : index
    %c0_1 = arith.constant 0 : index
    %3 = vector.load %arg4[%c0, %c0_1] : memref<1x128xf32, #tpu.memory_space<vmem>>, vector<1x128xf32>
    %c0_2 = arith.constant 0 : index
    %c0_3 = arith.constant 0 : index
    %4 = vector.load %arg5[%c0_2, %c0_3] : memref<1x128xf32, #tpu.memory_space<vmem>>, vector<1x128xf32>
    %c0_4 = arith.constant 0 : index
    %c0_5 = arith.constant 0 : index
    %5 = vector.load %arg6[%c0_4, %c0_5] : memref<1x128xf32, #tpu.memory_space<vmem>>, vector<1x128xf32>
    %c0_6 = arith.constant 0 : index
    %c0_7 = arith.constant 0 : index
    %6 = vector.load %arg7[%c0_6, %c0_7] : memref<1x128xf32, #tpu.memory_space<vmem>>, vector<1x128xf32>
    %cst = arith.constant 0.001953125 : f32
    %7 = vector.broadcast %cst : f32 to vector<1x128xf32>
    %8 = arith.mulf %3, %7 : vector<1x128xf32>
    %cst_8 = arith.constant 0.001953125 : f32
    %9 = vector.broadcast %cst_8 : f32 to vector<1x128xf32>
    %10 = arith.mulf %4, %9 : vector<1x128xf32>
    %11 = arith.mulf %8, %8 : vector<1x128xf32>
    %12 = arith.subf %10, %11 : vector<1x128xf32>
    %cst_9 = arith.constant 0.000000e+00 : f32
    %13 = vector.broadcast %cst_9 : f32 to vector<1x128xf32>
    %14 = arith.maximumf %12, %13 : vector<1x128xf32>
    %cst_10 = arith.constant 9.99999974E-6 : f32
    %15 = vector.broadcast %cst_10 : f32 to vector<1x128xf32>
    %16 = arith.addf %14, %15 : vector<1x128xf32>
    %17 = math.rsqrt %16 : vector<1x128xf32>
    %18 = arith.mulf %5, %17 : vector<1x128xf32>
    %19 = arith.mulf %8, %18 : vector<1x128xf32>
    %20 = arith.subf %6, %19 : vector<1x128xf32>
    %c0_11 = arith.constant 0 : index
    %c0_12 = arith.constant 0 : index
    %21 = vector.load %arg3[%c0_11, %c0_12] : memref<256x128xf32, #tpu.memory_space<vmem>>, vector<256x128xf32>
    %22 = vector.broadcast %18 : vector<1x128xf32> to vector<256x128xf32>
    %23 = arith.mulf %21, %22 : vector<256x128xf32>
    %24 = vector.broadcast %20 : vector<1x128xf32> to vector<256x128xf32>
    %25 = arith.addf %23, %24 : vector<256x128xf32>
    %cst_13 = arith.constant 0.000000e+00 : f32
    %26 = vector.broadcast %cst_13 : f32 to vector<256x128xf32>
    %27 = arith.maximumf %25, %26 : vector<256x128xf32>
    %cst_14 = arith.constant 0.000000e+00 : f32
    %28 = vector.broadcast %cst_14 : f32 to vector<24x128xf32>
    %29 = tpu.concatenate %28, %27, %28 in 0 : vector<24x128xf32>, vector<256x128xf32>, vector<24x128xf32> -> vector<304x128xf32>
    %30 = vector.extract_strided_slice %29 {offsets = [7, 0], sizes = [256, 128], strides = [1, 1]} : vector<304x128xf32> to vector<256x128xf32>
    %c0_15 = arith.constant 0 : index
    %c0_16 = arith.constant 0 : index
    %31 = vector.load %arg1[%c0_15, %c0_16] : memref<256x1xf32, #tpu.memory_space<vmem>>, vector<256x1xf32>
    %32 = vector.broadcast %31 : vector<256x1xf32> to vector<256x128xf32>
    %33 = arith.mulf %30, %32 : vector<256x128xf32>
    %c0_17 = arith.constant 0 : index
    %c0_18 = arith.constant 0 : index
    %c0_19 = arith.constant 0 : index
    %34 = vector.load %arg8[%c0_17, %c0_18, %c0_19] : memref<9x128x128xf32, #tpu.memory_space<vmem>>, vector<1x128x128xf32>
    %35 = vector.shape_cast %34 : vector<1x128x128xf32> to vector<128x128xf32>
    %cst_20 = arith.constant dense<0.000000e+00> : vector<256x128xf32>
    %36 = tpu.matmul %33, %35, %cst_20 {dimension_numbers = #tpu.dot_dimension_numbers<[1], [0], [0], [1], [0, 0, 1, 1], [], []>} : vector<256x128xf32>, vector<128x128xf32>, vector<256x128xf32> -> vector<256x128xf32>
    %37 = vector.extract_strided_slice %29 {offsets = [8, 0], sizes = [256, 128], strides = [1, 1]} : vector<304x128xf32> to vector<256x128xf32>
    %c1 = arith.constant 1 : index
    %c0_21 = arith.constant 0 : index
    %c0_22 = arith.constant 0 : index
    %38 = vector.load %arg8[%c1, %c0_21, %c0_22] : memref<9x128x128xf32, #tpu.memory_space<vmem>>, vector<1x128x128xf32>
    %39 = vector.shape_cast %38 : vector<1x128x128xf32> to vector<128x128xf32>
    %cst_23 = arith.constant dense<0.000000e+00> : vector<256x128xf32>
    %40 = tpu.matmul %37, %39, %cst_23 {dimension_numbers = #tpu.dot_dimension_numbers<[1], [0], [0], [1], [0, 0, 1, 1], [], []>} : vector<256x128xf32>, vector<128x128xf32>, vector<256x128xf32> -> vector<256x128xf32>
    %41 = arith.addf %36, %40 : vector<256x128xf32>
    %42 = vector.extract_strided_slice %29 {offsets = [9, 0], sizes = [256, 128], strides = [1, 1]} : vector<304x128xf32> to vector<256x128xf32>
    %c0_24 = arith.constant 0 : index
    %c0_25 = arith.constant 0 : index
    %43 = vector.load %arg2[%c0_24, %c0_25] : memref<256x1xf32, #tpu.memory_space<vmem>>, vector<256x1xf32>
    %44 = vector.broadcast %43 : vector<256x1xf32> to vector<256x128xf32>
    %45 = arith.mulf %42, %44 : vector<256x128xf32>
    %c2 = arith.constant 2 : index
    %c0_26 = arith.constant 0 : index
    %c0_27 = arith.constant 0 : index
    %46 = vector.load %arg8[%c2, %c0_26, %c0_27] : memref<9x128x128xf32, #tpu.memory_space<vmem>>, vector<1x128x128xf32>
    %47 = vector.shape_cast %46 : vector<1x128x128xf32> to vector<128x128xf32>
    %cst_28 = arith.constant dense<0.000000e+00> : vector<256x128xf32>
    %48 = tpu.matmul %45, %47, %cst_28 {dimension_numbers = #tpu.dot_dimension_numbers<[1], [0], [0], [1], [0, 0, 1, 1], [], []>} : vector<256x128xf32>, vector<128x128xf32>, vector<256x128xf32> -> vector<256x128xf32>
    %49 = arith.addf %41, %48 : vector<256x128xf32>
    %50 = vector.extract_strided_slice %29 {offsets = [23, 0], sizes = [256, 128], strides = [1, 1]} : vector<304x128xf32> to vector<256x128xf32>
    %c0_29 = arith.constant 0 : index
    %c0_30 = arith.constant 0 : index
    %51 = vector.load %arg1[%c0_29, %c0_30] : memref<256x1xf32, #tpu.memory_space<vmem>>, vector<256x1xf32>
    %52 = vector.broadcast %51 : vector<256x1xf32> to vector<256x128xf32>
    %53 = arith.mulf %50, %52 : vector<256x128xf32>
    %c3 = arith.constant 3 : index
    %c0_31 = arith.constant 0 : index
    %c0_32 = arith.constant 0 : index
    %54 = vector.load %arg8[%c3, %c0_31, %c0_32] : memref<9x128x128xf32, #tpu.memory_space<vmem>>, vector<1x128x128xf32>
    %55 = vector.shape_cast %54 : vector<1x128x128xf32> to vector<128x128xf32>
    %cst_33 = arith.constant dense<0.000000e+00> : vector<256x128xf32>
    %56 = tpu.matmul %53, %55, %cst_33 {dimension_numbers = #tpu.dot_dimension_numbers<[1], [0], [0], [1], [0, 0, 1, 1], [], []>} : vector<256x128xf32>, vector<128x128xf32>, vector<256x128xf32> -> vector<256x128xf32>
    %57 = arith.addf %49, %56 : vector<256x128xf32>
    %58 = vector.extract_strided_slice %29 {offsets = [24, 0], sizes = [256, 128], strides = [1, 1]} : vector<304x128xf32> to vector<256x128xf32>
    %c4 = arith.constant 4 : index
    %c0_34 = arith.constant 0 : index
    %c0_35 = arith.constant 0 : index
    %59 = vector.load %arg8[%c4, %c0_34, %c0_35] : memref<9x128x128xf32, #tpu.memory_space<vmem>>, vector<1x128x128xf32>
    %60 = vector.shape_cast %59 : vector<1x128x128xf32> to vector<128x128xf32>
    %cst_36 = arith.constant dense<0.000000e+00> : vector<256x128xf32>
    %61 = tpu.matmul %58, %60, %cst_36 {dimension_numbers = #tpu.dot_dimension_numbers<[1], [0], [0], [1], [0, 0, 1, 1], [], []>} : vector<256x128xf32>, vector<128x128xf32>, vector<256x128xf32> -> vector<256x128xf32>
    %62 = arith.addf %57, %61 : vector<256x128xf32>
    %63 = vector.extract_strided_slice %29 {offsets = [25, 0], sizes = [256, 128], strides = [1, 1]} : vector<304x128xf32> to vector<256x128xf32>
    %c0_37 = arith.constant 0 : index
    %c0_38 = arith.constant 0 : index
    %64 = vector.load %arg2[%c0_37, %c0_38] : memref<256x1xf32, #tpu.memory_space<vmem>>, vector<256x1xf32>
    %65 = vector.broadcast %64 : vector<256x1xf32> to vector<256x128xf32>
    %66 = arith.mulf %63, %65 : vector<256x128xf32>
    %c5 = arith.constant 5 : index
    %c0_39 = arith.constant 0 : index
    %c0_40 = arith.constant 0 : index
    %67 = vector.load %arg8[%c5, %c0_39, %c0_40] : memref<9x128x128xf32, #tpu.memory_space<vmem>>, vector<1x128x128xf32>
    %68 = vector.shape_cast %67 : vector<1x128x128xf32> to vector<128x128xf32>
    %cst_41 = arith.constant dense<0.000000e+00> : vector<256x128xf32>
    %69 = tpu.matmul %66, %68, %cst_41 {dimension_numbers = #tpu.dot_dimension_numbers<[1], [0], [0], [1], [0, 0, 1, 1], [], []>} : vector<256x128xf32>, vector<128x128xf32>, vector<256x128xf32> -> vector<256x128xf32>
    %70 = arith.addf %62, %69 : vector<256x128xf32>
    %71 = vector.extract_strided_slice %29 {offsets = [39, 0], sizes = [256, 128], strides = [1, 1]} : vector<304x128xf32> to vector<256x128xf32>
    %c0_42 = arith.constant 0 : index
    %c0_43 = arith.constant 0 : index
    %72 = vector.load %arg1[%c0_42, %c0_43] : memref<256x1xf32, #tpu.memory_space<vmem>>, vector<256x1xf32>
    %73 = vector.broadcast %72 : vector<256x1xf32> to vector<256x128xf32>
    %74 = arith.mulf %71, %73 : vector<256x128xf32>
    %c6 = arith.constant 6 : index
    %c0_44 = arith.constant 0 : index
    %c0_45 = arith.constant 0 : index
    %75 = vector.load %arg8[%c6, %c0_44, %c0_45] : memref<9x128x128xf32, #tpu.memory_space<vmem>>, vector<1x128x128xf32>
    %76 = vector.shape_cast %75 : vector<1x128x128xf32> to vector<128x128xf32>
    %cst_46 = arith.constant dense<0.000000e+00> : vector<256x128xf32>
    %77 = tpu.matmul %74, %76, %cst_46 {dimension_numbers = #tpu.dot_dimension_numbers<[1], [0], [0], [1], [0, 0, 1, 1], [], []>} : vector<256x128xf32>, vector<128x128xf32>, vector<256x128xf32> -> vector<256x128xf32>
    %78 = arith.addf %70, %77 : vector<256x128xf32>
    %79 = vector.extract_strided_slice %29 {offsets = [40, 0], sizes = [256, 128], strides = [1, 1]} : vector<304x128xf32> to vector<256x128xf32>
    %c7 = arith.constant 7 : index
    %c0_47 = arith.constant 0 : index
    %c0_48 = arith.constant 0 : index
    %80 = vector.load %arg8[%c7, %c0_47, %c0_48] : memref<9x128x128xf32, #tpu.memory_space<vmem>>, vector<1x128x128xf32>
    %81 = vector.shape_cast %80 : vector<1x128x128xf32> to vector<128x128xf32>
    %cst_49 = arith.constant dense<0.000000e+00> : vector<256x128xf32>
    %82 = tpu.matmul %79, %81, %cst_49 {dimension_numbers = #tpu.dot_dimension_numbers<[1], [0], [0], [1], [0, 0, 1, 1], [], []>} : vector<256x128xf32>, vector<128x128xf32>, vector<256x128xf32> -> vector<256x128xf32>
    %83 = arith.addf %78, %82 : vector<256x128xf32>
    %84 = vector.extract_strided_slice %29 {offsets = [41, 0], sizes = [256, 128], strides = [1, 1]} : vector<304x128xf32> to vector<256x128xf32>
    %c0_50 = arith.constant 0 : index
    %c0_51 = arith.constant 0 : index
    %85 = vector.load %arg2[%c0_50, %c0_51] : memref<256x1xf32, #tpu.memory_space<vmem>>, vector<256x1xf32>
    %86 = vector.broadcast %85 : vector<256x1xf32> to vector<256x128xf32>
    %87 = arith.mulf %84, %86 : vector<256x128xf32>
    %c8 = arith.constant 8 : index
    %c0_52 = arith.constant 0 : index
    %c0_53 = arith.constant 0 : index
    %88 = vector.load %arg8[%c8, %c0_52, %c0_53] : memref<9x128x128xf32, #tpu.memory_space<vmem>>, vector<1x128x128xf32>
    %89 = vector.shape_cast %88 : vector<1x128x128xf32> to vector<128x128xf32>
    %cst_54 = arith.constant dense<0.000000e+00> : vector<256x128xf32>
    %90 = tpu.matmul %87, %89, %cst_54 {dimension_numbers = #tpu.dot_dimension_numbers<[1], [0], [0], [1], [0, 0, 1, 1], [], []>} : vector<256x128xf32>, vector<128x128xf32>, vector<256x128xf32> -> vector<256x128xf32>
    %91 = arith.addf %83, %90 : vector<256x128xf32>
    %c0_55 = arith.constant 0 : index
    %c0_56 = arith.constant 0 : index
    %92 = vector.load %arg9[%c0_55, %c0_56] : memref<256x128xf32, #tpu.memory_space<vmem>>, vector<256x128xf32>
    tpu.vector_store %arg9[%c0_55, %c0_56], %91 {strides = array<i32>} : memref<256x128xf32, #tpu.memory_space<vmem>>, vector<256x128xf32>,
    %c0_57 = arith.constant 0 : index
    %c0_58 = arith.constant 0 : index
    %93 = vector.load %arg10[%c0_57, %c0_58] : memref<1x128xf32, #tpu.memory_space<vmem>>, vector<1x128xf32>
    %cst_59 = arith.constant dense<0.000000e+00> : vector<128xf32>
    %94 = vector.multi_reduction <add>, %91, %cst_59 [0] : vector<256x128xf32> to vector<128xf32>
    %95 = vector.shape_cast %94 : vector<128xf32> to vector<1x128xf32>
    %96 = arith.addf %93, %95 : vector<1x128xf32>
    %c0_60 = arith.constant 0 : index
    %c0_61 = arith.constant 0 : index
    %97 = vector.load %arg10[%c0_60, %c0_61] : memref<1x128xf32, #tpu.memory_space<vmem>>, vector<1x128xf32>
    tpu.vector_store %arg10[%c0_60, %c0_61], %96 {strides = array<i32>} : memref<1x128xf32, #tpu.memory_space<vmem>>, vector<1x128xf32>,
    %c0_62 = arith.constant 0 : index
    %c0_63 = arith.constant 0 : index
    %98 = vector.load %arg11[%c0_62, %c0_63] : memref<1x128xf32, #tpu.memory_space<vmem>>, vector<1x128xf32>
    %99 = arith.mulf %91, %91 : vector<256x128xf32>
    %cst_64 = arith.constant dense<0.000000e+00> : vector<128xf32>
    %100 = vector.multi_reduction <add>, %99, %cst_64 [0] : vector<256x128xf32> to vector<128xf32>
    %101 = vector.shape_cast %100 : vector<128xf32> to vector<1x128xf32>
    %102 = arith.addf %98, %101 : vector<1x128xf32>
    %c0_65 = arith.constant 0 : index
    %c0_66 = arith.constant 0 : index
    %103 = vector.load %arg11[%c0_65, %c0_66] : memref<1x128xf32, #tpu.memory_space<vmem>>, vector<1x128xf32>
    tpu.vector_store %arg11[%c0_65, %c0_66], %102 {strides = array<i32>} : memref<1x128xf32, #tpu.memory_space<vmem>>, vector<1x128xf32>,
    return
  }
  func.func @transform_0(%arg0: i32) -> (i32, i32) {
    %c0_i32 = arith.constant 0 : i32
    %c0_i32_0 = arith.constant 0 : i32
    %c0_i32_1 = arith.constant 0 : i32
    return %c0_i32, %c0_i32_0 : i32, i32
  }
  func.func @transform_1(%arg0: i32) -> (i32, i32) {
    %c0_i32 = arith.constant 0 : i32
    %c0_i32_0 = arith.constant 0 : i32
    %c0_i32_1 = arith.constant 0 : i32
    return %c0_i32, %c0_i32_0 : i32, i32
  }
  func.func @transform_2(%arg0: i32) -> (i32, i32) {
    %c0_i32 = arith.constant 0 : i32
    %c0_i32_0 = arith.constant 0 : i32
    return %arg0, %c0_i32 : i32, i32
  }
  func.func @transform_3(%arg0: i32) -> (i32, i32) {
    %c0_i32 = arith.constant 0 : i32
    %c0_i32_0 = arith.constant 0 : i32
    %c0_i32_1 = arith.constant 0 : i32
    return %c0_i32, %c0_i32_0 : i32, i32
  }
  func.func @transform_4(%arg0: i32) -> (i32, i32) {
    %c0_i32 = arith.constant 0 : i32
    %c0_i32_0 = arith.constant 0 : i32
    %c0_i32_1 = arith.constant 0 : i32
    return %c0_i32, %c0_i32_0 : i32, i32
  }
  func.func @transform_5(%arg0: i32) -> (i32, i32) {
    %c0_i32 = arith.constant 0 : i32
    %c0_i32_0 = arith.constant 0 : i32
    %c0_i32_1 = arith.constant 0 : i32
    return %c0_i32, %c0_i32_0 : i32, i32
  }
  func.func @transform_6(%arg0: i32) -> (i32, i32) {
    %c0_i32 = arith.constant 0 : i32
    %c0_i32_0 = arith.constant 0 : i32
    %c0_i32_1 = arith.constant 0 : i32
    return %c0_i32, %c0_i32_0 : i32, i32
  }
  func.func @transform_7(%arg0: i32) -> (i32, i32, i32) {
    %c0_i32 = arith.constant 0 : i32
    %c0_i32_0 = arith.constant 0 : i32
    %c0_i32_1 = arith.constant 0 : i32
    %c0_i32_2 = arith.constant 0 : i32
    return %c0_i32, %c0_i32_0, %c0_i32_1 : i32, i32, i32
  }
  func.func @transform_8(%arg0: i32) -> (i32, i32) {
    %c0_i32 = arith.constant 0 : i32
    %c0_i32_0 = arith.constant 0 : i32
    return %arg0, %c0_i32 : i32, i32
  }
  func.func @transform_9(%arg0: i32) -> (i32, i32) {
    %c0_i32 = arith.constant 0 : i32
    %c0_i32_0 = arith.constant 0 : i32
    %c0_i32_1 = arith.constant 0 : i32
    return %c0_i32, %c0_i32_0 : i32, i32
  }
  func.func @transform_10(%arg0: i32) -> (i32, i32) {
    %c0_i32 = arith.constant 0 : i32
    %c0_i32_0 = arith.constant 0 : i32
    %c0_i32_1 = arith.constant 0 : i32
    return %c0_i32, %c0_i32_0 : i32, i32
  }
}

module attributes {stable_mosaic.version = 11 : i64} {
  func.func @_bn_relu_conv_stats_kernel(%arg0: i32, %arg1: memref<512x128xf32, #tpu.memory_space<vmem>>, %arg2: memref<1x128xf32, #tpu.memory_space<vmem>>, %arg3: memref<1x128xf32, #tpu.memory_space<vmem>>, %arg4: memref<1x128xf32, #tpu.memory_space<vmem>>, %arg5: memref<1x128xf32, #tpu.memory_space<vmem>>, %arg6: memref<128x128xf32, #tpu.memory_space<vmem>>, %arg7: memref<512x128xf32, #tpu.memory_space<vmem>>, %arg8: memref<1x128xf32, #tpu.memory_space<vmem>>, %arg9: memref<1x128xf32, #tpu.memory_space<vmem>>) attributes {dimension_semantics = [#tpu.dimension_semantics<arbitrary>], iteration_bounds = array<i64: 1>, scalar_prefetch = 0 : i64, scratch_operands = 0 : i64, tpu.core_type = #tpu.core_type<tc>, window_params = [{transform_indices = @transform_0, window_bounds = array<i64: 512, 128>}, {pipeline_mode = #tpu.pipeline_mode<synchronous>, transform_indices = @transform_1, window_bounds = array<i64: 1, 128>}, {pipeline_mode = #tpu.pipeline_mode<synchronous>, transform_indices = @transform_2, window_bounds = array<i64: 1, 128>}, {pipeline_mode = #tpu.pipeline_mode<synchronous>, transform_indices = @transform_3, window_bounds = array<i64: 1, 128>}, {pipeline_mode = #tpu.pipeline_mode<synchronous>, transform_indices = @transform_4, window_bounds = array<i64: 1, 128>}, {pipeline_mode = #tpu.pipeline_mode<synchronous>, transform_indices = @transform_5, window_bounds = array<i64: 128, 128>}, {transform_indices = @transform_6, window_bounds = array<i64: 512, 128>}, {pipeline_mode = #tpu.pipeline_mode<synchronous>, transform_indices = @transform_7, window_bounds = array<i64: 1, 128>}, {pipeline_mode = #tpu.pipeline_mode<synchronous>, transform_indices = @transform_8, window_bounds = array<i64: 1, 128>}]} {
    %c0_i32 = arith.constant 0 : i32
    %0 = arith.cmpi eq, %arg0, %c0_i32 : i32
    %1 = arith.extui %0 : i1 to i32
    %c0_i32_0 = arith.constant 0 : i32
    %2 = arith.cmpi ne, %1, %c0_i32_0 : i32
    scf.if %2 {
      %cst_29 = arith.constant 0.000000e+00 : f32
      %42 = vector.broadcast %cst_29 : f32 to vector<1x128xf32>
      %c0_30 = arith.constant 0 : index
      %c0_31 = arith.constant 0 : index
      %43 = vector.load %arg8[%c0_30, %c0_31] : memref<1x128xf32, #tpu.memory_space<vmem>>, vector<1x128xf32>
      tpu.vector_store %arg8[%c0_30, %c0_31], %42 {strides = array<i32>} : memref<1x128xf32, #tpu.memory_space<vmem>>, vector<1x128xf32>,
      %cst_32 = arith.constant 0.000000e+00 : f32
      %44 = vector.broadcast %cst_32 : f32 to vector<1x128xf32>
      %c0_33 = arith.constant 0 : index
      %c0_34 = arith.constant 0 : index
      %45 = vector.load %arg9[%c0_33, %c0_34] : memref<1x128xf32, #tpu.memory_space<vmem>>, vector<1x128xf32>
      tpu.vector_store %arg9[%c0_33, %c0_34], %44 {strides = array<i32>} : memref<1x128xf32, #tpu.memory_space<vmem>>, vector<1x128xf32>,
    } else {
    }
    %c0 = arith.constant 0 : index
    %c0_1 = arith.constant 0 : index
    %3 = vector.load %arg2[%c0, %c0_1] : memref<1x128xf32, #tpu.memory_space<vmem>>, vector<1x128xf32>
    %c0_2 = arith.constant 0 : index
    %c0_3 = arith.constant 0 : index
    %4 = vector.load %arg3[%c0_2, %c0_3] : memref<1x128xf32, #tpu.memory_space<vmem>>, vector<1x128xf32>
    %c0_4 = arith.constant 0 : index
    %c0_5 = arith.constant 0 : index
    %5 = vector.load %arg4[%c0_4, %c0_5] : memref<1x128xf32, #tpu.memory_space<vmem>>, vector<1x128xf32>
    %c0_6 = arith.constant 0 : index
    %c0_7 = arith.constant 0 : index
    %6 = vector.load %arg5[%c0_6, %c0_7] : memref<1x128xf32, #tpu.memory_space<vmem>>, vector<1x128xf32>
    %cst = arith.constant 0.001953125 : f32
    %7 = vector.broadcast %cst : f32 to vector<1x128xf32>
    %8 = arith.mulf %3, %7 : vector<1x128xf32>
    %cst_8 = arith.constant 0.001953125 : f32
    %9 = vector.broadcast %cst_8 : f32 to vector<1x128xf32>
    %10 = arith.mulf %4, %9 : vector<1x128xf32>
    %11 = arith.mulf %8, %8 : vector<1x128xf32>
    %12 = arith.subf %10, %11 : vector<1x128xf32>
    %cst_9 = arith.constant 0.000000e+00 : f32
    %13 = vector.broadcast %cst_9 : f32 to vector<1x128xf32>
    %14 = arith.maximumf %12, %13 : vector<1x128xf32>
    %cst_10 = arith.constant 9.99999974E-6 : f32
    %15 = vector.broadcast %cst_10 : f32 to vector<1x128xf32>
    %16 = arith.addf %14, %15 : vector<1x128xf32>
    %17 = math.rsqrt %16 : vector<1x128xf32>
    %18 = arith.mulf %5, %17 : vector<1x128xf32>
    %19 = arith.mulf %8, %18 : vector<1x128xf32>
    %20 = arith.subf %6, %19 : vector<1x128xf32>
    %c0_11 = arith.constant 0 : index
    %c0_12 = arith.constant 0 : index
    %21 = vector.load %arg1[%c0_11, %c0_12] : memref<512x128xf32, #tpu.memory_space<vmem>>, vector<512x128xf32>
    %22 = vector.broadcast %18 : vector<1x128xf32> to vector<512x128xf32>
    %23 = arith.mulf %21, %22 : vector<512x128xf32>
    %24 = vector.broadcast %20 : vector<1x128xf32> to vector<512x128xf32>
    %25 = arith.addf %23, %24 : vector<512x128xf32>
    %cst_13 = arith.constant 0.000000e+00 : f32
    %26 = vector.broadcast %cst_13 : f32 to vector<512x128xf32>
    %27 = arith.maximumf %25, %26 : vector<512x128xf32>
    %c0_14 = arith.constant 0 : index
    %c0_15 = arith.constant 0 : index
    %28 = vector.load %arg6[%c0_14, %c0_15] : memref<128x128xf32, #tpu.memory_space<vmem>>, vector<128x128xf32>
    %cst_16 = arith.constant dense<0.000000e+00> : vector<512x128xf32>
    %29 = tpu.matmul %27, %28, %cst_16 {dimension_numbers = #tpu.dot_dimension_numbers<[1], [0], [0], [1], [0, 0, 1, 1], [], []>} : vector<512x128xf32>, vector<128x128xf32>, vector<512x128xf32> -> vector<512x128xf32>
    %c0_17 = arith.constant 0 : index
    %c0_18 = arith.constant 0 : index
    %30 = vector.load %arg7[%c0_17, %c0_18] : memref<512x128xf32, #tpu.memory_space<vmem>>, vector<512x128xf32>
    tpu.vector_store %arg7[%c0_17, %c0_18], %29 {strides = array<i32>} : memref<512x128xf32, #tpu.memory_space<vmem>>, vector<512x128xf32>,
    %c0_19 = arith.constant 0 : index
    %c0_20 = arith.constant 0 : index
    %31 = vector.load %arg8[%c0_19, %c0_20] : memref<1x128xf32, #tpu.memory_space<vmem>>, vector<1x128xf32>
    %cst_21 = arith.constant dense<0.000000e+00> : vector<128xf32>
    %32 = vector.multi_reduction <add>, %29, %cst_21 [0] : vector<512x128xf32> to vector<128xf32>
    %33 = vector.shape_cast %32 : vector<128xf32> to vector<1x128xf32>
    %34 = arith.addf %31, %33 : vector<1x128xf32>
    %c0_22 = arith.constant 0 : index
    %c0_23 = arith.constant 0 : index
    %35 = vector.load %arg8[%c0_22, %c0_23] : memref<1x128xf32, #tpu.memory_space<vmem>>, vector<1x128xf32>
    tpu.vector_store %arg8[%c0_22, %c0_23], %34 {strides = array<i32>} : memref<1x128xf32, #tpu.memory_space<vmem>>, vector<1x128xf32>,
    %c0_24 = arith.constant 0 : index
    %c0_25 = arith.constant 0 : index
    %36 = vector.load %arg9[%c0_24, %c0_25] : memref<1x128xf32, #tpu.memory_space<vmem>>, vector<1x128xf32>
    %37 = arith.mulf %29, %29 : vector<512x128xf32>
    %cst_26 = arith.constant dense<0.000000e+00> : vector<128xf32>
    %38 = vector.multi_reduction <add>, %37, %cst_26 [0] : vector<512x128xf32> to vector<128xf32>
    %39 = vector.shape_cast %38 : vector<128xf32> to vector<1x128xf32>
    %40 = arith.addf %36, %39 : vector<1x128xf32>
    %c0_27 = arith.constant 0 : index
    %c0_28 = arith.constant 0 : index
    %41 = vector.load %arg9[%c0_27, %c0_28] : memref<1x128xf32, #tpu.memory_space<vmem>>, vector<1x128xf32>
    tpu.vector_store %arg9[%c0_27, %c0_28], %40 {strides = array<i32>} : memref<1x128xf32, #tpu.memory_space<vmem>>, vector<1x128xf32>,
    return
  }
  func.func @transform_0(%arg0: i32) -> (i32, i32) {
    %c0_i32 = arith.constant 0 : i32
    %c0_i32_0 = arith.constant 0 : i32
    return %arg0, %c0_i32 : i32, i32
  }
  func.func @transform_1(%arg0: i32) -> (i32, i32) {
    %c0_i32 = arith.constant 0 : i32
    %c0_i32_0 = arith.constant 0 : i32
    %c0_i32_1 = arith.constant 0 : i32
    return %c0_i32, %c0_i32_0 : i32, i32
  }
  func.func @transform_2(%arg0: i32) -> (i32, i32) {
    %c0_i32 = arith.constant 0 : i32
    %c0_i32_0 = arith.constant 0 : i32
    %c0_i32_1 = arith.constant 0 : i32
    return %c0_i32, %c0_i32_0 : i32, i32
  }
  func.func @transform_3(%arg0: i32) -> (i32, i32) {
    %c0_i32 = arith.constant 0 : i32
    %c0_i32_0 = arith.constant 0 : i32
    %c0_i32_1 = arith.constant 0 : i32
    return %c0_i32, %c0_i32_0 : i32, i32
  }
  func.func @transform_4(%arg0: i32) -> (i32, i32) {
    %c0_i32 = arith.constant 0 : i32
    %c0_i32_0 = arith.constant 0 : i32
    %c0_i32_1 = arith.constant 0 : i32
    return %c0_i32, %c0_i32_0 : i32, i32
  }
  func.func @transform_5(%arg0: i32) -> (i32, i32) {
    %c0_i32 = arith.constant 0 : i32
    %c0_i32_0 = arith.constant 0 : i32
    %c0_i32_1 = arith.constant 0 : i32
    return %c0_i32, %c0_i32_0 : i32, i32
  }
  func.func @transform_6(%arg0: i32) -> (i32, i32) {
    %c0_i32 = arith.constant 0 : i32
    %c0_i32_0 = arith.constant 0 : i32
    return %arg0, %c0_i32 : i32, i32
  }
  func.func @transform_7(%arg0: i32) -> (i32, i32) {
    %c0_i32 = arith.constant 0 : i32
    %c0_i32_0 = arith.constant 0 : i32
    %c0_i32_1 = arith.constant 0 : i32
    return %c0_i32, %c0_i32_0 : i32, i32
  }
  func.func @transform_8(%arg0: i32) -> (i32, i32) {
    %c0_i32 = arith.constant 0 : i32
    %c0_i32_0 = arith.constant 0 : i32
    %c0_i32_1 = arith.constant 0 : i32
    return %c0_i32, %c0_i32_0 : i32, i32
  }
}

module attributes {stable_mosaic.version = 11 : i64} {
  func.func @_bn_add_relu_kernel(%arg0: i32, %arg1: memref<512x128xf32, #tpu.memory_space<vmem>>, %arg2: memref<1x128xf32, #tpu.memory_space<vmem>>, %arg3: memref<1x128xf32, #tpu.memory_space<vmem>>, %arg4: memref<1x128xf32, #tpu.memory_space<vmem>>, %arg5: memref<1x128xf32, #tpu.memory_space<vmem>>, %arg6: memref<512x128xf32, #tpu.memory_space<vmem>>, %arg7: memref<512x128xf32, #tpu.memory_space<vmem>>) attributes {dimension_semantics = [#tpu.dimension_semantics<parallel>], iteration_bounds = array<i64: 1>, scalar_prefetch = 0 : i64, scratch_operands = 0 : i64, tpu.core_type = #tpu.core_type<tc>, window_params = [{transform_indices = @transform_0, window_bounds = array<i64: 512, 128>}, {pipeline_mode = #tpu.pipeline_mode<synchronous>, transform_indices = @transform_1, window_bounds = array<i64: 1, 128>}, {pipeline_mode = #tpu.pipeline_mode<synchronous>, transform_indices = @transform_2, window_bounds = array<i64: 1, 128>}, {pipeline_mode = #tpu.pipeline_mode<synchronous>, transform_indices = @transform_3, window_bounds = array<i64: 1, 128>}, {pipeline_mode = #tpu.pipeline_mode<synchronous>, transform_indices = @transform_4, window_bounds = array<i64: 1, 128>}, {transform_indices = @transform_5, window_bounds = array<i64: 512, 128>}, {transform_indices = @transform_6, window_bounds = array<i64: 512, 128>}]} {
    %c0 = arith.constant 0 : index
    %c0_0 = arith.constant 0 : index
    %0 = vector.load %arg2[%c0, %c0_0] : memref<1x128xf32, #tpu.memory_space<vmem>>, vector<1x128xf32>
    %c0_1 = arith.constant 0 : index
    %c0_2 = arith.constant 0 : index
    %1 = vector.load %arg3[%c0_1, %c0_2] : memref<1x128xf32, #tpu.memory_space<vmem>>, vector<1x128xf32>
    %c0_3 = arith.constant 0 : index
    %c0_4 = arith.constant 0 : index
    %2 = vector.load %arg4[%c0_3, %c0_4] : memref<1x128xf32, #tpu.memory_space<vmem>>, vector<1x128xf32>
    %c0_5 = arith.constant 0 : index
    %c0_6 = arith.constant 0 : index
    %3 = vector.load %arg5[%c0_5, %c0_6] : memref<1x128xf32, #tpu.memory_space<vmem>>, vector<1x128xf32>
    %cst = arith.constant 0.001953125 : f32
    %4 = vector.broadcast %cst : f32 to vector<1x128xf32>
    %5 = arith.mulf %0, %4 : vector<1x128xf32>
    %cst_7 = arith.constant 0.001953125 : f32
    %6 = vector.broadcast %cst_7 : f32 to vector<1x128xf32>
    %7 = arith.mulf %1, %6 : vector<1x128xf32>
    %8 = arith.mulf %5, %5 : vector<1x128xf32>
    %9 = arith.subf %7, %8 : vector<1x128xf32>
    %cst_8 = arith.constant 0.000000e+00 : f32
    %10 = vector.broadcast %cst_8 : f32 to vector<1x128xf32>
    %11 = arith.maximumf %9, %10 : vector<1x128xf32>
    %cst_9 = arith.constant 9.99999974E-6 : f32
    %12 = vector.broadcast %cst_9 : f32 to vector<1x128xf32>
    %13 = arith.addf %11, %12 : vector<1x128xf32>
    %14 = math.rsqrt %13 : vector<1x128xf32>
    %15 = arith.mulf %2, %14 : vector<1x128xf32>
    %16 = arith.mulf %5, %15 : vector<1x128xf32>
    %17 = arith.subf %3, %16 : vector<1x128xf32>
    %c0_10 = arith.constant 0 : index
    %c0_11 = arith.constant 0 : index
    %18 = vector.load %arg1[%c0_10, %c0_11] : memref<512x128xf32, #tpu.memory_space<vmem>>, vector<512x128xf32>
    %19 = vector.broadcast %15 : vector<1x128xf32> to vector<512x128xf32>
    %20 = arith.mulf %18, %19 : vector<512x128xf32>
    %21 = vector.broadcast %17 : vector<1x128xf32> to vector<512x128xf32>
    %22 = arith.addf %20, %21 : vector<512x128xf32>
    %c0_12 = arith.constant 0 : index
    %c0_13 = arith.constant 0 : index
    %23 = vector.load %arg6[%c0_12, %c0_13] : memref<512x128xf32, #tpu.memory_space<vmem>>, vector<512x128xf32>
    %24 = arith.addf %22, %23 : vector<512x128xf32>
    %cst_14 = arith.constant 0.000000e+00 : f32
    %25 = vector.broadcast %cst_14 : f32 to vector<512x128xf32>
    %26 = arith.maximumf %24, %25 : vector<512x128xf32>
    %c0_15 = arith.constant 0 : index
    %c0_16 = arith.constant 0 : index
    %27 = vector.load %arg7[%c0_15, %c0_16] : memref<512x128xf32, #tpu.memory_space<vmem>>, vector<512x128xf32>
    tpu.vector_store %arg7[%c0_15, %c0_16], %26 {strides = array<i32>} : memref<512x128xf32, #tpu.memory_space<vmem>>, vector<512x128xf32>,
    return
  }
  func.func @transform_0(%arg0: i32) -> (i32, i32) {
    %c0_i32 = arith.constant 0 : i32
    %c0_i32_0 = arith.constant 0 : i32
    return %arg0, %c0_i32 : i32, i32
  }
  func.func @transform_1(%arg0: i32) -> (i32, i32) {
    %c0_i32 = arith.constant 0 : i32
    %c0_i32_0 = arith.constant 0 : i32
    %c0_i32_1 = arith.constant 0 : i32
    return %c0_i32, %c0_i32_0 : i32, i32
  }
  func.func @transform_2(%arg0: i32) -> (i32, i32) {
    %c0_i32 = arith.constant 0 : i32
    %c0_i32_0 = arith.constant 0 : i32
    %c0_i32_1 = arith.constant 0 : i32
    return %c0_i32, %c0_i32_0 : i32, i32
  }
  func.func @transform_3(%arg0: i32) -> (i32, i32) {
    %c0_i32 = arith.constant 0 : i32
    %c0_i32_0 = arith.constant 0 : i32
    %c0_i32_1 = arith.constant 0 : i32
    return %c0_i32, %c0_i32_0 : i32, i32
  }
  func.func @transform_4(%arg0: i32) -> (i32, i32) {
    %c0_i32 = arith.constant 0 : i32
    %c0_i32_0 = arith.constant 0 : i32
    %c0_i32_1 = arith.constant 0 : i32
    return %c0_i32, %c0_i32_0 : i32, i32
  }
  func.func @transform_5(%arg0: i32) -> (i32, i32) {
    %c0_i32 = arith.constant 0 : i32
    %c0_i32_0 = arith.constant 0 : i32
    return %arg0, %c0_i32 : i32, i32
  }
  func.func @transform_6(%arg0: i32) -> (i32, i32) {
    %c0_i32 = arith.constant 0 : i32
    %c0_i32_0 = arith.constant 0 : i32
    return %arg0, %c0_i32 : i32, i32
  }
}

</mosaic_0001>

<llo_original>
// kernel: bottleneck_forward.4
$region0: #{bottleneck_forward.4}
  #allocation0 [shape = 'u32[]', space=smem, size = 0x4, offset = 0x4, fixed_abs, tag = 'smem constant byte address 0x4 - core index']
  #allocation1 [shape = 'u32[144,128]{1,0:T(1,128)}', space=vmem, size = 0x12000, scoped, tag = 'internal scratch']
  %s0 = inlined_call_operand.vmem [shape: f32[512,128], index: 0, kind: input, shape index: {}]
  %s1 = inlined_call_operand.vmem [shape: f32[128,128], index: 1, kind: input, shape index: {}]
  %s2 = inlined_call_operand.vmem [shape: f32[512,128], index: 2, kind: output, shape index: {0}]
  %s3 = inlined_call_operand.vmem [shape: f32[1,128], index: 3, kind: output, shape index: {1}]
  %s4 = inlined_call_operand.vmem [shape: f32[1,128], index: 4, kind: output, shape index: {2}]
  %5 = xla_tuple %s2, %s3, %s4
  %s6 = sld [smem:[#allocation0]]
  $region38: #{bottleneck_forward.4} parent=0
    _
  %s8 = ssub.s32 1, %s6
  %s9 = scalar_select 0, %s8, %s6
  // Predicated region
  $region2: #{bottleneck_forward.4} parent=0 // pred_check
    _
  $region3: #{bottleneck_forward.4} parent=0 // pred_check_branch
    %11 = sbr.rel (0) target = $region5
  $region4: #{bottleneck_forward.4} parent=0 // pred_region
    _
  $region5: #{bottleneck_forward.4} parent=0 // pred_fallthru
    _
  // Predicated region
  $region6: #{bottleneck_forward.4} parent=0 // pred_check
    _
  $region7: #{bottleneck_forward.4} parent=0 // pred_check_branch
    %13 = sbr.rel (0) target = $region9
  $region8: #{bottleneck_forward.4} parent=0 // pred_region
    _
  $region9: #{bottleneck_forward.4} parent=0 // pred_fallthru
    _
  %p14 = scmp.eq.s32.totalorder 0, 0
  // Predicated region
  $region10: #{bottleneck_forward.4} parent=0 // pred_check
    %p15 = pneg %p14
  $region11: #{bottleneck_forward.4} parent=0 // pred_check_branch
    %17 = sbr.rel (%p15) target = $region13
  $region12: #{bottleneck_forward.4} parent=0 // pred_region
    %18 = vst [vmem:[%s3] sm:$0x1] 0.0
    %19 = vst [vmem:[%s4] sm:$0x1] 0.0
  $region13: #{bottleneck_forward.4} parent=0 // pred_fallthru
    _
  %v20 = vld [vmem:[%s0] sm:$0xff]
  %v21 = vld [vmem:[%s0 + $0x8] sm:$0xff]
  %v22 = vld [vmem:[%s0 + $0x10] sm:$0xff]
  %v23 = vld [vmem:[%s0 + $0x18] sm:$0xff]
  %v24 = vld [vmem:[%s0 + $0x20] sm:$0xff]
  %v25 = vld [vmem:[%s0 + $0x28] sm:$0xff]
  %v26 = vld [vmem:[%s0 + $0x30] sm:$0xff]
  %v27 = vld [vmem:[%s0 + $0x38] sm:$0xff]
  %v28 = vld [vmem:[%s0 + $0x40] sm:$0xff]
  %v29 = vld [vmem:[%s0 + $0x48] sm:$0xff]
  %v30 = vld [vmem:[%s0 + $0x50] sm:$0xff]
  %v31 = vld [vmem:[%s0 + $0x58] sm:$0xff]
  %v32 = vld [vmem:[%s0 + $0x60] sm:$0xff]
  %v33 = vld [vmem:[%s0 + $0x68] sm:$0xff]
  %v34 = vld [vmem:[%s0 + $0x70] sm:$0xff]
  %v35 = vld [vmem:[%s0 + $0x78] sm:$0xff]
  %v36 = vld [vmem:[%s0 + $0x80] sm:$0xff]
  %v37 = vld [vmem:[%s0 + $0x88] sm:$0xff]
  %v38 = vld [vmem:[%s0 + $0x90] sm:$0xff]
  %v39 = vld [vmem:[%s0 + $0x98] sm:$0xff]
  %v40 = vld [vmem:[%s0 + $0xa0] sm:$0xff]
  %v41 = vld [vmem:[%s0 + $0xa8] sm:$0xff]
  %v42 = vld [vmem:[%s0 + $0xb0] sm:$0xff]
  %v43 = vld [vmem:[%s0 + $0xb8] sm:$0xff]
  %v44 = vld [vmem:[%s0 + $0xc0] sm:$0xff]
  %v45 = vld [vmem:[%s0 + $0xc8] sm:$0xff]
  %v46 = vld [vmem:[%s0 + $0xd0] sm:$0xff]
  %v47 = vld [vmem:[%s0 + $0xd8] sm:$0xff]
  %v48 = vld [vmem:[%s0 + $0xe0] sm:$0xff]
  %v49 = vld [vmem:[%s0 + $0xe8] sm:$0xff]
  %v50 = vld [vmem:[%s0 + $0xf0] sm:$0xff]
  %v51 = vld [vmem:[%s0 + $0xf8] sm:$0xff]
  %v52 = vld [vmem:[%s0 + $0x100] sm:$0xff]
  %v53 = vld [vmem:[%s0 + $0x108] sm:$0xff]
  %v54 = vld [vmem:[%s0 + $0x110] sm:$0xff]
  %v55 = vld [vmem:[%s0 + $0x118] sm:$0xff]
  %v56 = vld [vmem:[%s0 + $0x120] sm:$0xff]
  %v57 = vld [vmem:[%s0 + $0x128] sm:$0xff]
  %v58 = vld [vmem:[%s0 + $0x130] sm:$0xff]
  %v59 = vld [vmem:[%s0 + $0x138] sm:$0xff]
  %v60 = vld [vmem:[%s0 + $0x140] sm:$0xff]
  %v61 = vld [vmem:[%s0 + $0x148] sm:$0xff]
  %v62 = vld [vmem:[%s0 + $0x150] sm:$0xff]
  %v63 = vld [vmem:[%s0 + $0x158] sm:$0xff]
  %v64 = vld [vmem:[%s0 + $0x160] sm:$0xff]
  %v65 = vld [vmem:[%s0 + $0x168] sm:$0xff]
  %v66 = vld [vmem:[%s0 + $0x170] sm:$0xff]
  %v67 = vld [vmem:[%s0 + $0x178] sm:$0xff]
  %v68 = vld [vmem:[%s0 + $0x180] sm:$0xff]
  %v69 = vld [vmem:[%s0 + $0x188] sm:$0xff]
  %v70 = vld [vmem:[%s0 + $0x190] sm:$0xff]
  %v71 = vld [vmem:[%s0 + $0x198] sm:$0xff]
  %v72 = vld [vmem:[%s0 + $0x1a0] sm:$0xff]
  %v73 = vld [vmem:[%s0 + $0x1a8] sm:$0xff]
  %v74 = vld [vmem:[%s0 + $0x1b0] sm:$0xff]
  %v75 = vld [vmem:[%s0 + $0x1b8] sm:$0xff]
  %v76 = vld [vmem:[%s0 + $0x1c0] sm:$0xff]
  %v77 = vld [vmem:[%s0 + $0x1c8] sm:$0xff]
  %v78 = vld [vmem:[%s0 + $0x1d0] sm:$0xff]
  %v79 = vld [vmem:[%s0 + $0x1d8] sm:$0xff]
  %v80 = vld [vmem:[%s0 + $0x1e0] sm:$0xff]
  %v81 = vld [vmem:[%s0 + $0x1e8] sm:$0xff]
  %v82 = vld [vmem:[%s0 + $0x1f0] sm:$0xff]
  %v83 = vld [vmem:[%s0 + $0x1f8] sm:$0xff]
  %v84 = vld [vmem:[%s1] sm:$0xff]
  %v85 = vld [vmem:[%s1 + $0x8] sm:$0xff]
  %v86 = vld [vmem:[%s1 + $0x10] sm:$0xff]
  %v87 = vld [vmem:[%s1 + $0x18] sm:$0xff]
  %v88 = vld [vmem:[%s1 + $0x20] sm:$0xff]
  %v89 = vld [vmem:[%s1 + $0x28] sm:$0xff]
  %v90 = vld [vmem:[%s1 + $0x30] sm:$0xff]
  %v91 = vld [vmem:[%s1 + $0x38] sm:$0xff]
  %v92 = vld [vmem:[%s1 + $0x40] sm:$0xff]
  %v93 = vld [vmem:[%s1 + $0x48] sm:$0xff]
  %v94 = vld [vmem:[%s1 + $0x50] sm:$0xff]
  %v95 = vld [vmem:[%s1 + $0x58] sm:$0xff]
  %v96 = vld [vmem:[%s1 + $0x60] sm:$0xff]
  %v97 = vld [vmem:[%s1 + $0x68] sm:$0xff]
  %v98 = vld [vmem:[%s1 + $0x70] sm:$0xff]
  %v99 = vld [vmem:[%s1 + $0x78] sm:$0xff]
  %100 = vmatprep.subr.mxu0 0.0
  %101 = vmatpush1.msra.mxu0 %v84
  %102 = vmatprep.subr.mxu0 0.0
  %103 = vmatpush1.msra.mxu0 %v85
  %104 = vmatprep.subr.mxu0 0.0
  %105 = vmatpush1.msra.mxu0 %v86
  %106 = vmatprep.subr.mxu0 0.0
  %107 = vmatpush1.msra.mxu0 %v87
  %108 = vmatprep.subr.mxu0 0.0
  %109 = vmatpush1.msra.mxu0 %v88
  %110 = vmatprep.subr.mxu0 0.0
  %111 = vmatpush1.msra.mxu0 %v89
  %112 = vmatprep.subr.mxu0 0.0
  %113 = vmatpush1.msra.mxu0 %v90
  %114 = vmatprep.subr.mxu0 0.0
  %115 = vmatpush1.msra.mxu0 %v91
  %116 = vmatprep.subr.mxu0 0.0
  %117 = vmatpush1.msra.mxu0 %v92
  %118 = vmatprep.subr.mxu0 0.0
  %119 = vmatpush1.msra.mxu0 %v93
  %120 = vmatprep.subr.mxu0 0.0
  %121 = vmatpush1.msra.mxu0 %v94
  %122 = vmatprep.subr.mxu0 0.0
  %123 = vmatpush1.msra.mxu0 %v95
  %124 = vmatprep.subr.mxu0 0.0
  %125 = vmatpush1.msra.mxu0 %v96
  %126 = vmatprep.subr.mxu0 0.0
  %127 = vmatpush1.msra.mxu0 %v97
  %128 = vmatprep.subr.mxu0 0.0
  %129 = vmatpush1.msra.mxu0 %v98
  %130 = vmatprep.subr.mxu0 0.0
  %131 = vmatpush1.msra.mxu0 %v99
  %132 = vmatprep.subr.mxu0 0.0
  %133 = vmatpush1.msra.mxu0 0.0
  %134 = vmatprep.subr.mxu0 0.0
  %135 = vmatpush1.msra.mxu0 0.0
  %136 = vmatprep.subr.mxu0 0.0
  %137 = vmatpush1.msra.mxu0 0.0
  %138 = vmatprep.subr.mxu0 0.0
  %139 = vmatpush1.msra.mxu0 0.0
  %140 = vmatprep.subr.mxu0 0.0
  %141 = vmatpush1.msra.mxu0 0.0
  %142 = vmatprep.subr.mxu0 0.0
  %143 = vmatpush1.msra.mxu0 0.0
  %144 = vmatprep.subr.mxu0 0.0
  %145 = vmatpush1.msra.mxu0 0.0
  %146 = vmatprep.subr.mxu0 0.0
  %147 = vmatpush1.msra.mxu0 0.0
  %148 = vmatprep.subr.mxu0 0.0
  %149 = vmatpush1.msra.mxu0 0.0
  %150 = vmatprep.subr.mxu0 0.0
  %151 = vmatpush1.msra.mxu0 0.0
  %152 = vmatprep.subr.mxu0 0.0
  %153 = vmatpush1.msra.mxu0 0.0
  %154 = vmatprep.subr.mxu0 0.0
  %155 = vmatpush1.msra.mxu0 0.0
  %156 = vmatprep.subr.mxu0 0.0
  %157 = vmatpush1.msra.mxu0 0.0
  %158 = vmatprep.subr.mxu0 0.0
  %159 = vmatpush1.msra.mxu0 0.0
  %160 = vmatprep.subr.mxu0 0.0
  %161 = vmatpush1.msra.mxu0 0.0
  %162 = vmatprep.subr.mxu0 0.0
  %163 = vmatpush1.msra.mxu0 0.0
  %164 = vmatprep.mubr.f32.mxu0 0.0
  %165 = vmatmul.mubr.f32.gmra.mrb[0].mxu0 %v20
  %v166 = vpop.f32.mrb[0].mxu0
  %v167 = vadd.f32 0.0, %v166
  %v168 = vpop.f32.mrb[0].mxu0
  %169 = vmatprep.mubr.f32.mxu0 0.0
  %170 = vmatmul.mubr.f32.gmra.mrb[0].mxu0 %v21
  %v171 = vpop.f32.mrb[0].mxu0
  %v172 = vadd.f32 0.0, %v171
  %v173 = vpop.f32.mrb[0].mxu0
  %174 = vmatprep.mubr.f32.mxu0 0.0
  %175 = vmatmul.mubr.f32.gmra.mrb[0].mxu0 %v22
  %v176 = vpop.f32.mrb[0].mxu0
  %v177 = vadd.f32 0.0, %v176
  %v178 = vpop.f32.mrb[0].mxu0
  %179 = vmatprep.mubr.f32.mxu0 0.0
  %180 = vmatmul.mubr.f32.gmra.mrb[0].mxu0 %v23
  %v181 = vpop.f32.mrb[0].mxu0
  %v182 = vadd.f32 0.0, %v181
  %v183 = vpop.f32.mrb[0].mxu0
  %184 = vmatprep.mubr.f32.mxu0 0.0
  %185 = vmatmul.mubr.f32.gmra.mrb[0].mxu0 %v24
  %v186 = vpop.f32.mrb[0].mxu0
  %v187 = vadd.f32 0.0, %v186
  %v188 = vpop.f32.mrb[0].mxu0
  %189 = vmatprep.mubr.f32.mxu0 0.0
  %190 = vmatmul.mubr.f32.gmra.mrb[0].mxu0 %v25
  %v191 = vpop.f32.mrb[0].mxu0
  %v192 = vadd.f32 0.0, %v191
  %v193 = vpop.f32.mrb[0].mxu0
  %194 = vmatprep.mubr.f32.mxu0 0.0
  %195 = vmatmul.mubr.f32.gmra.mrb[0].mxu0 %v26
  %v196 = vpop.f32.mrb[0].mxu0
  %v197 = vadd.f32 0.0, %v196
  %v198 = vpop.f32.mrb[0].mxu0
  %199 = vmatprep.mubr.f32.mxu0 0.0
  %200 = vmatmul.mubr.f32.gmra.mrb[0].mxu0 %v27
  %v201 = vpop.f32.mrb[0].mxu0
  %v202 = vadd.f32 0.0, %v201
  %v203 = vpop.f32.mrb[0].mxu0
  %204 = vmatprep.mubr.f32.mxu0 0.0
  %205 = vmatmul.mubr.f32.gmra.mrb[0].mxu0 %v28
  %v206 = vpop.f32.mrb[0].mxu0
  %v207 = vadd.f32 0.0, %v206
  %v208 = vpop.f32.mrb[0].mxu0
  %209 = vmatprep.mubr.f32.mxu0 0.0
  %210 = vmatmul.mubr.f32.gmra.mrb[0].mxu0 %v29
  %v211 = vpop.f32.mrb[0].mxu0
  %v212 = vadd.f32 0.0, %v211
  %v213 = vpop.f32.mrb[0].mxu0
  %214 = vmatprep.mubr.f32.mxu0 0.0
  %215 = vmatmul.mubr.f32.gmra.mrb[0].mxu0 %v30
  %v216 = vpop.f32.mrb[0].mxu0
  %v217 = vadd.f32 0.0, %v216
  %v218 = vpop.f32.mrb[0].mxu0
  %219 = vmatprep.mubr.f32.mxu0 0.0
  %220 = vmatmul.mubr.f32.gmra.mrb[0].mxu0 %v31
  %v221 = vpop.f32.mrb[0].mxu0
  %v222 = vadd.f32 0.0, %v221
  %v223 = vpop.f32.mrb[0].mxu0
  %224 = vmatprep.mubr.f32.mxu0 0.0
  %225 = vmatmul.mubr.f32.gmra.mrb[0].mxu0 %v32
  %v226 = vpop.f32.mrb[0].mxu0
  %v227 = vadd.f32 0.0, %v226
  %v228 = vpop.f32.mrb[0].mxu0
  %229 = vmatprep.mubr.f32.mxu0 0.0
  %230 = vmatmul.mubr.f32.gmra.mrb[0].mxu0 %v33
  %v231 = vpop.f32.mrb[0].mxu0
  %v232 = vadd.f32 0.0, %v231
  %v233 = vpop.f32.mrb[0].mxu0
  %234 = vmatprep.mubr.f32.mxu0 0.0
  %235 = vmatmul.mubr.f32.gmra.mrb[0].mxu0 %v34
  %v236 = vpop.f32.mrb[0].mxu0
  %v237 = vadd.f32 0.0, %v236
  %v238 = vpop.f32.mrb[0].mxu0
  %239 = vmatprep.mubr.f32.mxu0 0.0
  %240 = vmatmul.mubr.f32.gmra.mrb[0].mxu0 %v35
  %v241 = vpop.f32.mrb[0].mxu0
  %v242 = vadd.f32 0.0, %v241
  %v243 = vpop.f32.mrb[0].mxu0
  %244 = vmatprep.mubr.f32.mxu0 0.0
  %245 = vmatmul.mubr.f32.gmra.mrb[0].mxu0 %v36
  %v246 = vpop.f32.mrb[0].mxu0
  %v247 = vadd.f32 0.0, %v246
  %v248 = vpop.f32.mrb[0].mxu0
  %249 = vmatprep.mubr.f32.mxu0 0.0
  %250 = vmatmul.mubr.f32.gmra.mrb[0].mxu0 %v37
  %v251 = vpop.f32.mrb[0].mxu0
  %v252 = vadd.f32 0.0, %v251
  %v253 = vpop.f32.mrb[0].mxu0
  %254 = vmatprep.mubr.f32.mxu0 0.0
  %255 = vmatmul.mubr.f32.gmra.mrb[0].mxu0 %v38
  %v256 = vpop.f32.mrb[0].mxu0
  %v257 = vadd.f32 0.0, %v256
  %v258 = vpop.f32.mrb[0].mxu0
  %259 = vmatprep.mubr.f32.mxu0 0.0
  %260 = vmatmul.mubr.f32.gmra.mrb[0].mxu0 %v39
  %v261 = vpop.f32.mrb[0].mxu0
  %v262 = vadd.f32 0.0, %v261
  %v263 = vpop.f32.mrb[0].mxu0
  %264 = vmatprep.mubr.f32.mxu0 0.0
  %265 = vmatmul.mubr.f32.gmra.mrb[0].mxu0 %v40
  %v266 = vpop.f32.mrb[0].mxu0
  %v267 = vadd.f32 0.0, %v266
  %v268 = vpop.f32.mrb[0].mxu0
  %269 = vmatprep.mubr.f32.mxu0 0.0
  %270 = vmatmul.mubr.f32.gmra.mrb[0].mxu0 %v41
  %v271 = vpop.f32.mrb[0].mxu0
  %v272 = vadd.f32 0.0, %v271
  %v273 = vpop.f32.mrb[0].mxu0
  %274 = vmatprep.mubr.f32.mxu0 0.0
  %275 = vmatmul.mubr.f32.gmra.mrb[0].mxu0 %v42
  %v276 = vpop.f32.mrb[0].mxu0
  %v277 = vadd.f32 0.0, %v276
  %v278 = vpop.f32.mrb[0].mxu0
  %279 = vmatprep.mubr.f32.mxu0 0.0
  %280 = vmatmul.mubr.f32.gmra.mrb[0].mxu0 %v43
  %v281 = vpop.f32.mrb[0].mxu0
  %v282 = vadd.f32 0.0, %v281
  %v283 = vpop.f32.mrb[0].mxu0
  %284 = vmatprep.mubr.f32.mxu0 0.0
  %285 = vmatmul.mubr.f32.gmra.mrb[0].mxu0 %v44
  %v286 = vpop.f32.mrb[0].mxu0
  %v287 = vadd.f32 0.0, %v286
  %v288 = vpop.f32.mrb[0].mxu0
  %289 = vmatprep.mubr.f32.mxu0 0.0
  %290 = vmatmul.mubr.f32.gmra.mrb[0].mxu0 %v45
  %v291 = vpop.f32.mrb[0].mxu0
  %v292 = vadd.f32 0.0, %v291
  %v293 = vpop.f32.mrb[0].mxu0
  %294 = vmatprep.mubr.f32.mxu0 0.0
  %295 = vmatmul.mubr.f32.gmra.mrb[0].mxu0 %v46
  %v296 = vpop.f32.mrb[0].mxu0
  %v297 = vadd.f32 0.0, %v296
  %v298 = vpop.f32.mrb[0].mxu0
  %299 = vmatprep.mubr.f32.mxu0 0.0
  %300 = vmatmul.mubr.f32.gmra.mrb[0].mxu0 %v47
  %v301 = vpop.f32.mrb[0].mxu0
  %v302 = vadd.f32 0.0, %v301
  %v303 = vpop.f32.mrb[0].mxu0
  %304 = vmatprep.mubr.f32.mxu0 0.0
  %305 = vmatmul.mubr.f32.gmra.mrb[0].mxu0 %v48
  %v306 = vpop.f32.mrb[0].mxu0
  %v307 = vadd.f32 0.0, %v306
  %v308 = vpop.f32.mrb[0].mxu0
  %309 = vmatprep.mubr.f32.mxu0 0.0
  %310 = vmatmul.mubr.f32.gmra.mrb[0].mxu0 %v49
  %v311 = vpop.f32.mrb[0].mxu0
  %v312 = vadd.f32 0.0, %v311
  %v313 = vpop.f32.mrb[0].mxu0
  %314 = vmatprep.mubr.f32.mxu0 0.0
  %315 = vmatmul.mubr.f32.gmra.mrb[0].mxu0 %v50
  %v316 = vpop.f32.mrb[0].mxu0
  %v317 = vadd.f32 0.0, %v316
  %v318 = vpop.f32.mrb[0].mxu0
  %319 = vmatprep.mubr.f32.mxu0 0.0
  %320 = vmatmul.mubr.f32.gmra.mrb[0].mxu0 %v51
  %v321 = vpop.f32.mrb[0].mxu0
  %v322 = vadd.f32 0.0, %v321
  %v323 = vpop.f32.mrb[0].mxu0
  %324 = vmatprep.mubr.f32.mxu0 0.0
  %325 = vmatmul.mubr.f32.gmra.mrb[0].mxu0 %v52
  %v326 = vpop.f32.mrb[0].mxu0
  %v327 = vadd.f32 0.0, %v326
  %v328 = vpop.f32.mrb[0].mxu0
  %329 = vmatprep.mubr.f32.mxu0 0.0
  %330 = vmatmul.mubr.f32.gmra.mrb[0].mxu0 %v53
  %v331 = vpop.f32.mrb[0].mxu0
  %v332 = vadd.f32 0.0, %v331
  %v333 = vpop.f32.mrb[0].mxu0
  %334 = vmatprep.mubr.f32.mxu0 0.0
  %335 = vmatmul.mubr.f32.gmra.mrb[0].mxu0 %v54
  %v336 = vpop.f32.mrb[0].mxu0
  %v337 = vadd.f32 0.0, %v336
  %v338 = vpop.f32.mrb[0].mxu0
  %339 = vmatprep.mubr.f32.mxu0 0.0
  %340 = vmatmul.mubr.f32.gmra.mrb[0].mxu0 %v55
  %v341 = vpop.f32.mrb[0].mxu0
  %v342 = vadd.f32 0.0, %v341
  %v343 = vpop.f32.mrb[0].mxu0
  %344 = vmatprep.mubr.f32.mxu0 0.0
  %345 = vmatmul.mubr.f32.gmra.mrb[0].mxu0 %v56
  %v346 = vpop.f32.mrb[0].mxu0
  %v347 = vadd.f32 0.0, %v346
  %v348 = vpop.f32.mrb[0].mxu0
  %349 = vmatprep.mubr.f32.mxu0 0.0
  %350 = vmatmul.mubr.f32.gmra.mrb[0].mxu0 %v57
  %v351 = vpop.f32.mrb[0].mxu0
  %v352 = vadd.f32 0.0, %v351
  %v353 = vpop.f32.mrb[0].mxu0
  %354 = vmatprep.mubr.f32.mxu0 0.0
  %355 = vmatmul.mubr.f32.gmra.mrb[0].mxu0 %v58
  %v356 = vpop.f32.mrb[0].mxu0
  %v357 = vadd.f32 0.0, %v356
  %v358 = vpop.f32.mrb[0].mxu0
  %359 = vmatprep.mubr.f32.mxu0 0.0
  %360 = vmatmul.mubr.f32.gmra.mrb[0].mxu0 %v59
  %v361 = vpop.f32.mrb[0].mxu0
  %v362 = vadd.f32 0.0, %v361
  %v363 = vpop.f32.mrb[0].mxu0
  %364 = vmatprep.mubr.f32.mxu0 0.0
  %365 = vmatmul.mubr.f32.gmra.mrb[0].mxu0 %v60
  %v366 = vpop.f32.mrb[0].mxu0
  %v367 = vadd.f32 0.0, %v366
  %v368 = vpop.f32.mrb[0].mxu0
  %369 = vmatprep.mubr.f32.mxu0 0.0
  %370 = vmatmul.mubr.f32.gmra.mrb[0].mxu0 %v61
  %v371 = vpop.f32.mrb[0].mxu0
  %v372 = vadd.f32 0.0, %v371
  %v373 = vpop.f32.mrb[0].mxu0
  %374 = vmatprep.mubr.f32.mxu0 0.0
  %375 = vmatmul.mubr.f32.gmra.mrb[0].mxu0 %v62
  %v376 = vpop.f32.mrb[0].mxu0
  %v377 = vadd.f32 0.0, %v376
  %v378 = vpop.f32.mrb[0].mxu0
  %379 = vmatprep.mubr.f32.mxu0 0.0
  %380 = vmatmul.mubr.f32.gmra.mrb[0].mxu0 %v63
  %v381 = vpop.f32.mrb[0].mxu0
  %v382 = vadd.f32 0.0, %v381
  %v383 = vpop.f32.mrb[0].mxu0
  %384 = vmatprep.mubr.f32.mxu0 0.0
  %385 = vmatmul.mubr.f32.gmra.mrb[0].mxu0 %v64
  %v386 = vpop.f32.mrb[0].mxu0
  %v387 = vadd.f32 0.0, %v386
  %v388 = vpop.f32.mrb[0].mxu0
  %389 = vmatprep.mubr.f32.mxu0 0.0
  %390 = vmatmul.mubr.f32.gmra.mrb[0].mxu0 %v65
  %v391 = vpop.f32.mrb[0].mxu0
  %v392 = vadd.f32 0.0, %v391
  %v393 = vpop.f32.mrb[0].mxu0
  %394 = vmatprep.mubr.f32.mxu0 0.0
  %395 = vmatmul.mubr.f32.gmra.mrb[0].mxu0 %v66
  %v396 = vpop.f32.mrb[0].mxu0
  %v397 = vadd.f32 0.0, %v396
  %v398 = vpop.f32.mrb[0].mxu0
  %399 = vmatprep.mubr.f32.mxu0 0.0
  %400 = vmatmul.mubr.f32.gmra.mrb[0].mxu0 %v67
  %v401 = vpop.f32.mrb[0].mxu0
  %v402 = vadd.f32 0.0, %v401
  %v403 = vpop.f32.mrb[0].mxu0
  %404 = vmatprep.mubr.f32.mxu0 0.0
  %405 = vmatmul.mubr.f32.gmra.mrb[0].mxu0 %v68
  %v406 = vpop.f32.mrb[0].mxu0
  %v407 = vadd.f32 0.0, %v406
  %v408 = vpop.f32.mrb[0].mxu0
  %409 = vmatprep.mubr.f32.mxu0 0.0
  %410 = vmatmul.mubr.f32.gmra.mrb[0].mxu0 %v69
  %v411 = vpop.f32.mrb[0].mxu0
  %v412 = vadd.f32 0.0, %v411
  %v413 = vpop.f32.mrb[0].mxu0
  %414 = vmatprep.mubr.f32.mxu0 0.0
  %415 = vmatmul.mubr.f32.gmra.mrb[0].mxu0 %v70
  %v416 = vpop.f32.mrb[0].mxu0
  %v417 = vadd.f32 0.0, %v416
  %v418 = vpop.f32.mrb[0].mxu0
  %419 = vmatprep.mubr.f32.mxu0 0.0
  %420 = vmatmul.mubr.f32.gmra.mrb[0].mxu0 %v71
  %v421 = vpop.f32.mrb[0].mxu0
  %v422 = vadd.f32 0.0, %v421
  %v423 = vpop.f32.mrb[0].mxu0
  %424 = vmatprep.mubr.f32.mxu0 0.0
  %425 = vmatmul.mubr.f32.gmra.mrb[0].mxu0 %v72
  %v426 = vpop.f32.mrb[0].mxu0
  %v427 = vadd.f32 0.0, %v426
  %v428 = vpop.f32.mrb[0].mxu0
  %429 = vmatprep.mubr.f32.mxu0 0.0
  %430 = vmatmul.mubr.f32.gmra.mrb[0].mxu0 %v73
  %v431 = vpop.f32.mrb[0].mxu0
  %v432 = vadd.f32 0.0, %v431
  %v433 = vpop.f32.mrb[0].mxu0
  %434 = vmatprep.mubr.f32.mxu0 0.0
  %435 = vmatmul.mubr.f32.gmra.mrb[0].mxu0 %v74
  %v436 = vpop.f32.mrb[0].mxu0
  %v437 = vadd.f32 0.0, %v436
  %v438 = vpop.f32.mrb[0].mxu0
  %439 = vmatprep.mubr.f32.mxu0 0.0
  %440 = vmatmul.mubr.f32.gmra.mrb[0].mxu0 %v75
  %v441 = vpop.f32.mrb[0].mxu0
  %v442 = vadd.f32 0.0, %v441
  %v443 = vpop.f32.mrb[0].mxu0
  %444 = vmatprep.mubr.f32.mxu0 0.0
  %445 = vmatmul.mubr.f32.gmra.mrb[0].mxu0 %v76
  %v446 = vpop.f32.mrb[0].mxu0
  %v447 = vadd.f32 0.0, %v446
  %v448 = vpop.f32.mrb[0].mxu0
  %449 = vmatprep.mubr.f32.mxu0 0.0
  %450 = vmatmul.mubr.f32.gmra.mrb[0].mxu0 %v77
  %v451 = vpop.f32.mrb[0].mxu0
  %v452 = vadd.f32 0.0, %v451
  %v453 = vpop.f32.mrb[0].mxu0
  %454 = vmatprep.mubr.f32.mxu0 0.0
  %455 = vmatmul.mubr.f32.gmra.mrb[0].mxu0 %v78
  %v456 = vpop.f32.mrb[0].mxu0
  %v457 = vadd.f32 0.0, %v456
  %v458 = vpop.f32.mrb[0].mxu0
  %459 = vmatprep.mubr.f32.mxu0 0.0
  %460 = vmatmul.mubr.f32.gmra.mrb[0].mxu0 %v79
  %v461 = vpop.f32.mrb[0].mxu0
  %v462 = vadd.f32 0.0, %v461
  %v463 = vpop.f32.mrb[0].mxu0
  %464 = vmatprep.mubr.f32.mxu0 0.0
  %465 = vmatmul.mubr.f32.gmra.mrb[0].mxu0 %v80
  %v466 = vpop.f32.mrb[0].mxu0
  %v467 = vadd.f32 0.0, %v466
  %v468 = vpop.f32.mrb[0].mxu0
  %469 = vmatprep.mubr.f32.mxu0 0.0
  %470 = vmatmul.mubr.f32.gmra.mrb[0].mxu0 %v81
  %v471 = vpop.f32.mrb[0].mxu0
  %v472 = vadd.f32 0.0, %v471
  %v473 = vpop.f32.mrb[0].mxu0
  %474 = vmatprep.mubr.f32.mxu0 0.0
  %475 = vmatmul.mubr.f32.gmra.mrb[0].mxu0 %v82
  %v476 = vpop.f32.mrb[0].mxu0
  %v477 = vadd.f32 0.0, %v476
  %v478 = vpop.f32.mrb[0].mxu0
  %479 = vmatprep.mubr.f32.mxu0 0.0
  %480 = vmatmul.mubr.f32.gmra.mrb[0].mxu0 %v83
  %v481 = vpop.f32.mrb[0].mxu0
  %v482 = vadd.f32 0.0, %v481
  %v483 = vpop.f32.mrb[0].mxu0
  %484 = vdwg.mxu0
  %485 = vst [vmem:[%s2] sm:$0xff] %v167
  %486 = vst [vmem:[%s2 + $0x8] sm:$0xff] %v172
  %487 = vst [vmem:[%s2 + $0x10] sm:$0xff] %v177
  %488 = vst [vmem:[%s2 + $0x18] sm:$0xff] %v182
  %489 = vst [vmem:[%s2 + $0x20] sm:$0xff] %v187
  %490 = vst [vmem:[%s2 + $0x28] sm:$0xff] %v192
  %491 = vst [vmem:[%s2 + $0x30] sm:$0xff] %v197
  %492 = vst [vmem:[%s2 + $0x38] sm:$0xff] %v202
  %493 = vst [vmem:[%s2 + $0x40] sm:$0xff] %v207
  %494 = vst [vmem:[%s2 + $0x48] sm:$0xff] %v212
  %495 = vst [vmem:[%s2 + $0x50] sm:$0xff] %v217
  %496 = vst [vmem:[%s2 + $0x58] sm:$0xff] %v222
  %497 = vst [vmem:[%s2 + $0x60] sm:$0xff] %v227
  %498 = vst [vmem:[%s2 + $0x68] sm:$0xff] %v232
  %499 = vst [vmem:[%s2 + $0x70] sm:$0xff] %v237
  %500 = vst [vmem:[%s2 + $0x78] sm:$0xff] %v242
  %501 = vst [vmem:[%s2 + $0x80] sm:$0xff] %v247
  %502 = vst [vmem:[%s2 + $0x88] sm:$0xff] %v252
  %503 = vst [vmem:[%s2 + $0x90] sm:$0xff] %v257
  %504 = vst [vmem:[%s2 + $0x98] sm:$0xff] %v262
  %505 = vst [vmem:[%s2 + $0xa0] sm:$0xff] %v267
  %506 = vst [vmem:[%s2 + $0xa8] sm:$0xff] %v272
  %507 = vst [vmem:[%s2 + $0xb0] sm:$0xff] %v277
  %508 = vst [vmem:[%s2 + $0xb8] sm:$0xff] %v282
  %509 = vst [vmem:[%s2 + $0xc0] sm:$0xff] %v287
  %510 = vst [vmem:[%s2 + $0xc8] sm:$0xff] %v292
  %511 = vst [vmem:[%s2 + $0xd0] sm:$0xff] %v297
  %512 = vst [vmem:[%s2 + $0xd8] sm:$0xff] %v302
  %513 = vst [vmem:[%s2 + $0xe0] sm:$0xff] %v307
  %514 = vst [vmem:[%s2 + $0xe8] sm:$0xff] %v312
  %515 = vst [vmem:[%s2 + $0xf0] sm:$0xff] %v317
  %516 = vst [vmem:[%s2 + $0xf8] sm:$0xff] %v322
  %517 = vst [vmem:[%s2 + $0x100] sm:$0xff] %v327
  %518 = vst [vmem:[%s2 + $0x108] sm:$0xff] %v332
  %519 = vst [vmem:[%s2 + $0x110] sm:$0xff] %v337
  %520 = vst [vmem:[%s2 + $0x118] sm:$0xff] %v342
  %521 = vst [vmem:[%s2 + $0x120] sm:$0xff] %v347
  %522 = vst [vmem:[%s2 + $0x128] sm:$0xff] %v352
  %523 = vst [vmem:[%s2 + $0x130] sm:$0xff] %v357
  %524 = vst [vmem:[%s2 + $0x138] sm:$0xff] %v362
  %525 = vst [vmem:[%s2 + $0x140] sm:$0xff] %v367
  %526 = vst [vmem:[%s2 + $0x148] sm:$0xff] %v372
  %527 = vst [vmem:[%s2 + $0x150] sm:$0xff] %v377
  %528 = vst [vmem:[%s2 + $0x158] sm:$0xff] %v382
  %529 = vst [vmem:[%s2 + $0x160] sm:$0xff] %v387
  %530 = vst [vmem:[%s2 + $0x168] sm:$0xff] %v392
  %531 = vst [vmem:[%s2 + $0x170] sm:$0xff] %v397
  %532 = vst [vmem:[%s2 + $0x178] sm:$0xff] %v402
  %533 = vst [vmem:[%s2 + $0x180] sm:$0xff] %v407
  %534 = vst [vmem:[%s2 + $0x188] sm:$0xff] %v412
  %535 = vst [vmem:[%s2 + $0x190] sm:$0xff] %v417
  %536 = vst [vmem:[%s2 + $0x198] sm:$0xff] %v422
  %537 = vst [vmem:[%s2 + $0x1a0] sm:$0xff] %v427
  %538 = vst [vmem:[%s2 + $0x1a8] sm:$0xff] %v432
  %539 = vst [vmem:[%s2 + $0x1b0] sm:$0xff] %v437
  %540 = vst [vmem:[%s2 + $0x1b8] sm:$0xff] %v442
  %541 = vst [vmem:[%s2 + $0x1c0] sm:$0xff] %v447
  %542 = vst [vmem:[%s2 + $0x1c8] sm:$0xff] %v452
  %543 = vst [vmem:[%s2 + $0x1d0] sm:$0xff] %v457
  %544 = vst [vmem:[%s2 + $0x1d8] sm:$0xff] %v462
  %545 = vst [vmem:[%s2 + $0x1e0] sm:$0xff] %v467
  %546 = vst [vmem:[%s2 + $0x1e8] sm:$0xff] %v472
  %547 = vst [vmem:[%s2 + $0x1f0] sm:$0xff] %v477
  %548 = vst [vmem:[%s2 + $0x1f8] sm:$0xff] %v482
  %v549 = vld [vmem:[%s3] sm:$0x1]
  %v550 = vadd.f32 %v167, %v172
  %v551 = vadd.f32 %v550, %v177
  %v552 = vadd.f32 %v551, %v182
  %v553 = vadd.f32 %v552, %v187
  %v554 = vadd.f32 %v553, %v192
  %v555 = vadd.f32 %v554, %v197
  %v556 = vadd.f32 %v555, %v202
  %v557 = vadd.f32 %v556, %v207
  %v558 = vadd.f32 %v557, %v212
  %v559 = vadd.f32 %v558, %v217
  %v560 = vadd.f32 %v559, %v222
  %v561 = vadd.f32 %v560, %v227
  %v562 = vadd.f32 %v561, %v232
  %v563 = vadd.f32 %v562, %v237
  %v564 = vadd.f32 %v563, %v242
  %v565 = vadd.f32 %v564, %v247
  %v566 = vadd.f32 %v565, %v252
  %v567 = vadd.f32 %v566, %v257
  %v568 = vadd.f32 %v567, %v262
  %v569 = vadd.f32 %v568, %v267
  %v570 = vadd.f32 %v569, %v272
  %v571 = vadd.f32 %v570, %v277
  %v572 = vadd.f32 %v571, %v282
  %v573 = vadd.f32 %v572, %v287
  %v574 = vadd.f32 %v573, %v292
  %v575 = vadd.f32 %v574, %v297
  %v576 = vadd.f32 %v575, %v302
  %v577 = vadd.f32 %v576, %v307
  %v578 = vadd.f32 %v577, %v312
  %v579 = vadd.f32 %v578, %v317
  %v580 = vadd.f32 %v579, %v322
  %v581 = vadd.f32 %v580, %v327
  %v582 = vadd.f32 %v581, %v332
  %v583 = vadd.f32 %v582, %v337
  %v584 = vadd.f32 %v583, %v342
  %v585 = vadd.f32 %v584, %v347
  %v586 = vadd.f32 %v585, %v352
  %v587 = vadd.f32 %v586, %v357
  %v588 = vadd.f32 %v587, %v362
  %v589 = vadd.f32 %v588, %v367
  %v590 = vadd.f32 %v589, %v372
  %v591 = vadd.f32 %v590, %v377
  %v592 = vadd.f32 %v591, %v382
  %v593 = vadd.f32 %v592, %v387
  %v594 = vadd.f32 %v593, %v392
  %v595 = vadd.f32 %v594, %v397
  %v596 = vadd.f32 %v595, %v402
  %v597 = vadd.f32 %v596, %v407
  %v598 = vadd.f32 %v597, %v412
  %v599 = vadd.f32 %v598, %v417
  %v600 = vadd.f32 %v599, %v422
  %v601 = vadd.f32 %v600, %v427
  %v602 = vadd.f32 %v601, %v432
  %v603 = vadd.f32 %v602, %v437
  %v604 = vadd.f32 %v603, %v442
  %v605 = vadd.f32 %v604, %v447
  %v606 = vadd.f32 %v605, %v452
  %v607 = vadd.f32 %v606, %v457
  %v608 = vadd.f32 %v607, %v462
  %v609 = vadd.f32 %v608, %v467
  %v610 = vadd.f32 %v609, %v472
  %v611 = vadd.f32 %v610, %v477
  %v612 = vadd.f32 %v611, %v482
  %v613 = vrot.slane %v612, 4
  %v614 = vadd.f32 %v612, %v613
  %v615 = vrot.slane %v614, 2
  %v616 = vadd.f32 %v614, %v615
  %v617 = vrot.slane %v616, 1
  %v618 = vadd.f32 %v616, %v617
  %v619 = vadd.f32 %v549, %v618
  %620 = vst [vmem:[%s3] sm:$0x1] %v619
  %v621 = vld [vmem:[%s4] sm:$0x1]
  %v622 = vmul.f32 %v167, %v167
  %v623 = vmul.f32 %v172, %v172
  %v624 = vmul.f32 %v177, %v177
  %v625 = vmul.f32 %v182, %v182
  %v626 = vmul.f32 %v187, %v187
  %v627 = vmul.f32 %v192, %v192
  %v628 = vmul.f32 %v197, %v197
  %v629 = vmul.f32 %v202, %v202
  %v630 = vmul.f32 %v207, %v207
  %v631 = vmul.f32 %v212, %v212
  %v632 = vmul.f32 %v217, %v217
  %v633 = vmul.f32 %v222, %v222
  %v634 = vmul.f32 %v227, %v227
  %v635 = vmul.f32 %v232, %v232
  %v636 = vmul.f32 %v237, %v237
  %v637 = vmul.f32 %v242, %v242
  %v638 = vmul.f32 %v247, %v247
  %v639 = vmul.f32 %v252, %v252
  %v640 = vmul.f32 %v257, %v257
  %v641 = vmul.f32 %v262, %v262
  %v642 = vmul.f32 %v267, %v267
  %v643 = vmul.f32 %v272, %v272
  %v644 = vmul.f32 %v277, %v277
  %v645 = vmul.f32 %v282, %v282
  %v646 = vmul.f32 %v287, %v287
  %v647 = vmul.f32 %v292, %v292
  %v648 = vmul.f32 %v297, %v297
  %v649 = vmul.f32 %v302, %v302
  %v650 = vmul.f32 %v307, %v307
  %v651 = vmul.f32 %v312, %v312
  %v652 = vmul.f32 %v317, %v317
  %v653 = vmul.f32 %v322, %v322
  %v654 = vmul.f32 %v327, %v327
  %v655 = vmul.f32 %v332, %v332
  %v656 = vmul.f32 %v337, %v337
  %v657 = vmul.f32 %v342, %v342
  %v658 = vmul.f32 %v347, %v347
  %v659 = vmul.f32 %v352, %v352
  %v660 = vmul.f32 %v357, %v357
  %v661 = vmul.f32 %v362, %v362
  %v662 = vmul.f32 %v367, %v367
  %v663 = vmul.f32 %v372, %v372
  %v664 = vmul.f32 %v377, %v377
  %v665 = vmul.f32 %v382, %v382
  %v666 = vmul.f32 %v387, %v387
  %v667 = vmul.f32 %v392, %v392
  %v668 = vmul.f32 %v397, %v397
  %v669 = vmul.f32 %v402, %v402
  %v670 = vmul.f32 %v407, %v407
  %v671 = vmul.f32 %v412, %v412
  %v672 = vmul.f32 %v417, %v417
  %v673 = vmul.f32 %v422, %v422
  %v674 = vmul.f32 %v427, %v427
  %v675 = vmul.f32 %v432, %v432
  %v676 = vmul.f32 %v437, %v437
  %v677 = vmul.f32 %v442, %v442
  %v678 = vmul.f32 %v447, %v447
  %v679 = vmul.f32 %v452, %v452
  %v680 = vmul.f32 %v457, %v457
  %v681 = vmul.f32 %v462, %v462
  %v682 = vmul.f32 %v467, %v467
  %v683 = vmul.f32 %v472, %v472
  %v684 = vmul.f32 %v477, %v477
  %v685 = vmul.f32 %v482, %v482
  %v686 = vadd.f32 %v622, %v623
  %v687 = vadd.f32 %v686, %v624
  %v688 = vadd.f32 %v687, %v625
  %v689 = vadd.f32 %v688, %v626
  %v690 = vadd.f32 %v689, %v627
  %v691 = vadd.f32 %v690, %v628
  %v692 = vadd.f32 %v691, %v629
  %v693 = vadd.f32 %v692, %v630
  %v694 = vadd.f32 %v693, %v631
  %v695 = vadd.f32 %v694, %v632
  %v696 = vadd.f32 %v695, %v633
  %v697 = vadd.f32 %v696, %v634
  %v698 = vadd.f32 %v697, %v635
  %v699 = vadd.f32 %v698, %v636
  %v700 = vadd.f32 %v699, %v637
  %v701 = vadd.f32 %v700, %v638
  %v702 = vadd.f32 %v701, %v639
  %v703 = vadd.f32 %v702, %v640
  %v704 = vadd.f32 %v703, %v641
  %v705 = vadd.f32 %v704, %v642
  %v706 = vadd.f32 %v705, %v643
  %v707 = vadd.f32 %v706, %v644
  %v708 = vadd.f32 %v707, %v645
  %v709 = vadd.f32 %v708, %v646
  %v710 = vadd.f32 %v709, %v647
  %v711 = vadd.f32 %v710, %v648
  %v712 = vadd.f32 %v711, %v649
  %v713 = vadd.f32 %v712, %v650
  %v714 = vadd.f32 %v713, %v651
  %v715 = vadd.f32 %v714, %v652
  %v716 = vadd.f32 %v715, %v653
  %v717 = vadd.f32 %v716, %v654
  %v718 = vadd.f32 %v717, %v655
  %v719 = vadd.f32 %v718, %v656
  %v720 = vadd.f32 %v719, %v657
  %v721 = vadd.f32 %v720, %v658
  %v722 = vadd.f32 %v721, %v659
  %v723 = vadd.f32 %v722, %v660
  %v724 = vadd.f32 %v723, %v661
  %v725 = vadd.f32 %v724, %v662
  %v726 = vadd.f32 %v725, %v663
  %v727 = vadd.f32 %v726, %v664
  %v728 = vadd.f32 %v727, %v665
  %v729 = vadd.f32 %v728, %v666
  %v730 = vadd.f32 %v729, %v667
  %v731 = vadd.f32 %v730, %v668
  %v732 = vadd.f32 %v731, %v669
  %v733 = vadd.f32 %v732, %v670
  %v734 = vadd.f32 %v733, %v671
  %v735 = vadd.f32 %v734, %v672
  %v736 = vadd.f32 %v735, %v673
  %v737 = vadd.f32 %v736, %v674
  %v738 = vadd.f32 %v737, %v675
  %v739 = vadd.f32 %v738, %v676
  %v740 = vadd.f32 %v739, %v677
  %v741 = vadd.f32 %v740, %v678
  %v742 = vadd.f32 %v741, %v679
  %v743 = vadd.f32 %v742, %v680
  %v744 = vadd.f32 %v743, %v681
  %v745 = vadd.f32 %v744, %v682
  %v746 = vadd.f32 %v745, %v683
  %v747 = vadd.f32 %v746, %v684
  %v748 = vadd.f32 %v747, %v685
  %v749 = vrot.slane %v748, 4
  %v750 = vadd.f32 %v748, %v749
  %v751 = vrot.slane %v750, 2
  %v752 = vadd.f32 %v750, %v751
  %v753 = vrot.slane %v752, 1
  %v754 = vadd.f32 %v752, %v753
  %v755 = vadd.f32 %v621, %v754
  %756 = vst [vmem:[%s4] sm:$0x1] %v755
  // Predicated region
  $region14: #{bottleneck_forward.4} parent=0 // pred_check
    _
  $region15: #{bottleneck_forward.4} parent=0 // pred_check_branch
    %758 = sbr.rel (0) target = $region17
  $region16: #{bottleneck_forward.4} parent=0 // pred_region
    _
  $region17: #{bottleneck_forward.4} parent=0 // pred_fallthru
    _
  // Predicated region
  $region18: #{bottleneck_forward.4} parent=0 // pred_check
    _
  $region19: #{bottleneck_forward.4} parent=0 // pred_check_branch
    %760 = sbr.rel (0) target = $region21
  $region20: #{bottleneck_forward.4} parent=0 // pred_region
    _
  $region21: #{bottleneck_forward.4} parent=0 // pred_fallthru
    _
  // Predicated region
  $region22: #{bottleneck_forward.4} parent=0 // pred_check
    _
  $region23: #{bottleneck_forward.4} parent=0 // pred_check_branch
    %762 = sbr.rel (0) target = $region25
  $region24: #{bottleneck_forward.4} parent=0 // pred_region
    _
  $region25: #{bottleneck_forward.4} parent=0 // pred_fallthru
    _
  // Predicated region
  $region26: #{bottleneck_forward.4} parent=0 // pred_check
    _
  $region27: #{bottleneck_forward.4} parent=0 // pred_check_branch
    %764 = sbr.rel (0) target = $region29
  $region28: #{bottleneck_forward.4} parent=0 // pred_region
    _
  $region29: #{bottleneck_forward.4} parent=0 // pred_fallthru
    _
  // Predicated region
  $region30: #{bottleneck_forward.4} parent=0 // pred_check
    _
  $region31: #{bottleneck_forward.4} parent=0 // pred_check_branch
    %766 = sbr.rel (0) target = $region33
  $region32: #{bottleneck_forward.4} parent=0 // pred_region
    _
  $region33: #{bottleneck_forward.4} parent=0 // pred_fallthru
    _
  // Predicated region
  $region34: #{bottleneck_forward.4} parent=0 // pred_check
    _
  $region35: #{bottleneck_forward.4} parent=0 // pred_check_branch
    %768 = sbr.rel (0) target = $region37
  $region36: #{bottleneck_forward.4} parent=0 // pred_region
    _
  $region37: #{bottleneck_forward.4} parent=0 // pred_fallthru
    _

// kernel: bottleneck_forward.7
$region0: #{bottleneck_forward.7}
  #allocation0 [shape = 'u32[]', space=smem, size = 0x4, offset = 0x4, fixed_abs, tag = 'smem constant byte address 0x4 - core index']
  #allocation1 [shape = 'u32[144,128]{1,0:T(1,128)}', space=vmem, size = 0x12000, scoped, tag = 'internal scratch']
  %s0 = inlined_call_operand.vmem [shape: f32[512,128], index: 0, kind: input, shape index: {}]
  %s1 = inlined_call_operand.vmem [shape: f32[1,128], index: 1, kind: input, shape index: {}]
  %s2 = inlined_call_operand.vmem [shape: f32[1,128], index: 2, kind: input, shape index: {}]
  %s3 = inlined_call_operand.vmem [shape: f32[1,128], index: 3, kind: input, shape index: {}]
  %s4 = inlined_call_operand.vmem [shape: f32[1,128], index: 4, kind: input, shape index: {}]
  %s5 = inlined_call_operand.vmem [shape: f32[512,128], index: 5, kind: input, shape index: {}]
  %s6 = inlined_call_operand.hbm [shape: f32[512,128], index: 6, kind: output, shape index: {}]
  %s7 = sld [smem:[#allocation0]]
  $region34: #{bottleneck_forward.7} parent=0
    _
  %s9 = ssub.s32 1, %s7
  %s10 = scalar_select 0, %s9, %s7
  $region1: #{bottleneck_forward.7} parent=0
    #allocation2 [shape = 'u8[262144]{0}', space=vmem, size = 0x40000, scoped, tag = 'output window, operand 0, single buffered']
    #allocation3 [shape = 's32[1]{0}', space=sflag, size = 0x4, scoped, tag = 'scoped memory for bottleneck_forward.7']
    %11 = vsyncpa [#allocation3], 0
    // Predicated region
    $region2: #{bottleneck_forward.7} parent=1 // pred_check
      _
    $region3: #{bottleneck_forward.7} parent=1 // pred_check_branch
      %13 = sbr.rel (0) target = $region5
    $region4: #{bottleneck_forward.7} parent=1 // pred_region
      _
    $region5: #{bottleneck_forward.7} parent=1 // pred_fallthru
      _
    // Predicated region
    $region6: #{bottleneck_forward.7} parent=1 // pred_check
      _
    $region7: #{bottleneck_forward.7} parent=1 // pred_check_branch
      %15 = sbr.rel (0) target = $region9
    $region8: #{bottleneck_forward.7} parent=1 // pred_region
      _
    $region9: #{bottleneck_forward.7} parent=1 // pred_fallthru
      _
    // Predicated region
    $region10: #{bottleneck_forward.7} parent=1 // pred_check
      _
    $region11: #{bottleneck_forward.7} parent=1 // pred_check_branch
      %17 = sbr.rel (0) target = $region13
    $region12: #{bottleneck_forward.7} parent=1 // pred_region
      _
    $region13: #{bottleneck_forward.7} parent=1 // pred_fallthru
      _
    // Predicated region
    $region14: #{bottleneck_forward.7} parent=1 // pred_check
      _
    $region15: #{bottleneck_forward.7} parent=1 // pred_check_branch
      %19 = sbr.rel (0) target = $region17
    $region16: #{bottleneck_forward.7} parent=1 // pred_region
      _
    $region17: #{bottleneck_forward.7} parent=1 // pred_fallthru
      _
    // Predicated region
    $region18: #{bottleneck_forward.7} parent=1 // pred_check
      _
    $region19: #{bottleneck_forward.7} parent=1 // pred_check_branch
      %21 = sbr.rel (0) target = $region21
    $region20: #{bottleneck_forward.7} parent=1 // pred_region
      _
    $region21: #{bottleneck_forward.7} parent=1 // pred_fallthru
      _
    // Predicated region
    $region22: #{bottleneck_forward.7} parent=1 // pred_check
      _
    $region23: #{bottleneck_forward.7} parent=1 // pred_check_branch
      %23 = sbr.rel (0) target = $region25
    $region24: #{bottleneck_forward.7} parent=1 // pred_region
      _
    $region25: #{bottleneck_forward.7} parent=1 // pred_fallthru
      _
    %v24 = vld [vmem:[%s1] sm:$0x1]
    %v25 = vld [vmem:[%s2] sm:$0x1]
    %v26 = vld [vmem:[%s3] sm:$0x1]
    %v27 = vld [vmem:[%s4] sm:$0x1]
    %v28 = vmul.f32 %v24, 0.001953125
    %v29 = vmul.f32 %v25, 0.001953125
    %v30 = vmul.f32 %v28, %v28
    %v31 = vsub.f32 %v29, %v30
    %v32 = vmax.f32 %v31, 0.0
    %v33 = vadd.f32 %v32, 1e-05
    %v34 = vrsqrt.pop %v33
    %v35 = vmul.f32 %v26, %v34
    %v36 = vmul.f32 %v28, %v35
    %v37 = vsub.f32 %v27, %v36
    %v38 = vld [vmem:[%s0] sm:$0xff]
    %v39 = vld [vmem:[%s0 + $0x8] sm:$0xff]
    %v40 = vld [vmem:[%s0 + $0x10] sm:$0xff]
    %v41 = vld [vmem:[%s0 + $0x18] sm:$0xff]
    %v42 = vld [vmem:[%s0 + $0x20] sm:$0xff]
    %v43 = vld [vmem:[%s0 + $0x28] sm:$0xff]
    %v44 = vld [vmem:[%s0 + $0x30] sm:$0xff]
    %v45 = vld [vmem:[%s0 + $0x38] sm:$0xff]
    %v46 = vld [vmem:[%s0 + $0x40] sm:$0xff]
    %v47 = vld [vmem:[%s0 + $0x48] sm:$0xff]
    %v48 = vld [vmem:[%s0 + $0x50] sm:$0xff]
    %v49 = vld [vmem:[%s0 + $0x58] sm:$0xff]
    %v50 = vld [vmem:[%s0 + $0x60] sm:$0xff]
    %v51 = vld [vmem:[%s0 + $0x68] sm:$0xff]
    %v52 = vld [vmem:[%s0 + $0x70] sm:$0xff]
    %v53 = vld [vmem:[%s0 + $0x78] sm:$0xff]
    %v54 = vld [vmem:[%s0 + $0x80] sm:$0xff]
    %v55 = vld [vmem:[%s0 + $0x88] sm:$0xff]
    %v56 = vld [vmem:[%s0 + $0x90] sm:$0xff]
    %v57 = vld [vmem:[%s0 + $0x98] sm:$0xff]
    %v58 = vld [vmem:[%s0 + $0xa0] sm:$0xff]
    %v59 = vld [vmem:[%s0 + $0xa8] sm:$0xff]
    %v60 = vld [vmem:[%s0 + $0xb0] sm:$0xff]
    %v61 = vld [vmem:[%s0 + $0xb8] sm:$0xff]
    %v62 = vld [vmem:[%s0 + $0xc0] sm:$0xff]
    %v63 = vld [vmem:[%s0 + $0xc8] sm:$0xff]
    %v64 = vld [vmem:[%s0 + $0xd0] sm:$0xff]
    %v65 = vld [vmem:[%s0 + $0xd8] sm:$0xff]
    %v66 = vld [vmem:[%s0 + $0xe0] sm:$0xff]
    %v67 = vld [vmem:[%s0 + $0xe8] sm:$0xff]
    %v68 = vld [vmem:[%s0 + $0xf0] sm:$0xff]
    %v69 = vld [vmem:[%s0 + $0xf8] sm:$0xff]
    %v70 = vld [vmem:[%s0 + $0x100] sm:$0xff]
    %v71 = vld [vmem:[%s0 + $0x108] sm:$0xff]
    %v72 = vld [vmem:[%s0 + $0x110] sm:$0xff]
    %v73 = vld [vmem:[%s0 + $0x118] sm:$0xff]
    %v74 = vld [vmem:[%s0 + $0x120] sm:$0xff]
    %v75 = vld [vmem:[%s0 + $0x128] sm:$0xff]
    %v76 = vld [vmem:[%s0 + $0x130] sm:$0xff]
    %v77 = vld [vmem:[%s0 + $0x138] sm:$0xff]
    %v78 = vld [vmem:[%s0 + $0x140] sm:$0xff]
    %v79 = vld [vmem:[%s0 + $0x148] sm:$0xff]
    %v80 = vld [vmem:[%s0 + $0x150] sm:$0xff]
    %v81 = vld [vmem:[%s0 + $0x158] sm:$0xff]
    %v82 = vld [vmem:[%s0 + $0x160] sm:$0xff]
    %v83 = vld [vmem:[%s0 + $0x168] sm:$0xff]
    %v84 = vld [vmem:[%s0 + $0x170] sm:$0xff]
    %v85 = vld [vmem:[%s0 + $0x178] sm:$0xff]
    %v86 = vld [vmem:[%s0 + $0x180] sm:$0xff]
    %v87 = vld [vmem:[%s0 + $0x188] sm:$0xff]
    %v88 = vld [vmem:[%s0 + $0x190] sm:$0xff]
    %v89 = vld [vmem:[%s0 + $0x198] sm:$0xff]
    %v90 = vld [vmem:[%s0 + $0x1a0] sm:$0xff]
    %v91 = vld [vmem:[%s0 + $0x1a8] sm:$0xff]
    %v92 = vld [vmem:[%s0 + $0x1b0] sm:$0xff]
    %v93 = vld [vmem:[%s0 + $0x1b8] sm:$0xff]
    %v94 = vld [vmem:[%s0 + $0x1c0] sm:$0xff]
    %v95 = vld [vmem:[%s0 + $0x1c8] sm:$0xff]
    %v96 = vld [vmem:[%s0 + $0x1d0] sm:$0xff]
    %v97 = vld [vmem:[%s0 + $0x1d8] sm:$0xff]
    %v98 = vld [vmem:[%s0 + $0x1e0] sm:$0xff]
    %v99 = vld [vmem:[%s0 + $0x1e8] sm:$0xff]
    %v100 = vld [vmem:[%s0 + $0x1f0] sm:$0xff]
    %v101 = vld [vmem:[%s0 + $0x1f8] sm:$0xff]
    %v103 = vlaneseq
    %v104 = vshrl.u32 %v103, 7
    %v105 = vsub.s32 0, %v104
    %v106 = vrot.slane %v35, %v105
    %v108 = vmul.f32 %v38, %v106
    %v109 = vmul.f32 %v39, %v106
    %v110 = vmul.f32 %v40, %v106
    %v111 = vmul.f32 %v41, %v106
    %v112 = vmul.f32 %v42, %v106
    %v113 = vmul.f32 %v43, %v106
    %v114 = vmul.f32 %v44, %v106
    %v115 = vmul.f32 %v45, %v106
    %v116 = vmul.f32 %v46, %v106
    %v117 = vmul.f32 %v47, %v106
    %v118 = vmul.f32 %v48, %v106
    %v119 = vmul.f32 %v49, %v106
    %v120 = vmul.f32 %v50, %v106
    %v121 = vmul.f32 %v51, %v106
    %v122 = vmul.f32 %v52, %v106
    %v123 = vmul.f32 %v53, %v106
    %v124 = vmul.f32 %v54, %v106
    %v125 = vmul.f32 %v55, %v106
    %v126 = vmul.f32 %v56, %v106
    %v127 = vmul.f32 %v57, %v106
    %v128 = vmul.f32 %v58, %v106
    %v129 = vmul.f32 %v59, %v106
    %v130 = vmul.f32 %v60, %v106
    %v131 = vmul.f32 %v61, %v106
    %v132 = vmul.f32 %v62, %v106
    %v133 = vmul.f32 %v63, %v106
    %v134 = vmul.f32 %v64, %v106
    %v135 = vmul.f32 %v65, %v106
    %v136 = vmul.f32 %v66, %v106
    %v137 = vmul.f32 %v67, %v106
    %v138 = vmul.f32 %v68, %v106
    %v139 = vmul.f32 %v69, %v106
    %v140 = vmul.f32 %v70, %v106
    %v141 = vmul.f32 %v71, %v106
    %v142 = vmul.f32 %v72, %v106
    %v143 = vmul.f32 %v73, %v106
    %v144 = vmul.f32 %v74, %v106
    %v145 = vmul.f32 %v75, %v106
    %v146 = vmul.f32 %v76, %v106
    %v147 = vmul.f32 %v77, %v106
    %v148 = vmul.f32 %v78, %v106
    %v149 = vmul.f32 %v79, %v106
    %v150 = vmul.f32 %v80, %v106
    %v151 = vmul.f32 %v81, %v106
    %v152 = vmul.f32 %v82, %v106
    %v153 = vmul.f32 %v83, %v106
    %v154 = vmul.f32 %v84, %v106
    %v155 = vmul.f32 %v85, %v106
    %v156 = vmul.f32 %v86, %v106
    %v157 = vmul.f32 %v87, %v106
    %v158 = vmul.f32 %v88, %v106
    %v159 = vmul.f32 %v89, %v106
    %v160 = vmul.f32 %v90, %v106
    %v161 = vmul.f32 %v91, %v106
    %v162 = vmul.f32 %v92, %v106
    %v163 = vmul.f32 %v93, %v106
    %v164 = vmul.f32 %v94, %v106
    %v165 = vmul.f32 %v95, %v106
    %v166 = vmul.f32 %v96, %v106
    %v167 = vmul.f32 %v97, %v106
    %v168 = vmul.f32 %v98, %v106
    %v169 = vmul.f32 %v99, %v106
    %v170 = vmul.f32 %v100, %v106
    %v171 = vmul.f32 %v101, %v106
    %v173 = vlaneseq
    %v174 = vshrl.u32 %v173, 7
    %v175 = vsub.s32 0, %v174
    %v176 = vrot.slane %v37, %v175
    %v178 = vadd.f32 %v108, %v176
    %v179 = vadd.f32 %v109, %v176
    %v180 = vadd.f32 %v110, %v176
    %v181 = vadd.f32 %v111, %v176
    %v182 = vadd.f32 %v112, %v176
    %v183 = vadd.f32 %v113, %v176
    %v184 = vadd.f32 %v114, %v176
    %v185 = vadd.f32 %v115, %v176
    %v186 = vadd.f32 %v116, %v176
    %v187 = vadd.f32 %v117, %v176
    %v188 = vadd.f32 %v118, %v176
    %v189 = vadd.f32 %v119, %v176
    %v190 = vadd.f32 %v120, %v176
    %v191 = vadd.f32 %v121, %v176
    %v192 = vadd.f32 %v122, %v176
    %v193 = vadd.f32 %v123, %v176
    %v194 = vadd.f32 %v124, %v176
    %v195 = vadd.f32 %v125, %v176
    %v196 = vadd.f32 %v126, %v176
    %v197 = vadd.f32 %v127, %v176
    %v198 = vadd.f32 %v128, %v176
    %v199 = vadd.f32 %v129, %v176
    %v200 = vadd.f32 %v130, %v176
    %v201 = vadd.f32 %v131, %v176
    %v202 = vadd.f32 %v132, %v176
    %v203 = vadd.f32 %v133, %v176
    %v204 = vadd.f32 %v134, %v176
    %v205 = vadd.f32 %v135, %v176
    %v206 = vadd.f32 %v136, %v176
    %v207 = vadd.f32 %v137, %v176
    %v208 = vadd.f32 %v138, %v176
    %v209 = vadd.f32 %v139, %v176
    %v210 = vadd.f32 %v140, %v176
    %v211 = vadd.f32 %v141, %v176
    %v212 = vadd.f32 %v142, %v176
    %v213 = vadd.f32 %v143, %v176
    %v214 = vadd.f32 %v144, %v176
    %v215 = vadd.f32 %v145, %v176
    %v216 = vadd.f32 %v146, %v176
    %v217 = vadd.f32 %v147, %v176
    %v218 = vadd.f32 %v148, %v176
    %v219 = vadd.f32 %v149, %v176
    %v220 = vadd.f32 %v150, %v176
    %v221 = vadd.f32 %v151, %v176
    %v222 = vadd.f32 %v152, %v176
    %v223 = vadd.f32 %v153, %v176
    %v224 = vadd.f32 %v154, %v176
    %v225 = vadd.f32 %v155, %v176
    %v226 = vadd.f32 %v156, %v176
    %v227 = vadd.f32 %v157, %v176
    %v228 = vadd.f32 %v158, %v176
    %v229 = vadd.f32 %v159, %v176
    %v230 = vadd.f32 %v160, %v176
    %v231 = vadd.f32 %v161, %v176
    %v232 = vadd.f32 %v162, %v176
    %v233 = vadd.f32 %v163, %v176
    %v234 = vadd.f32 %v164, %v176
    %v235 = vadd.f32 %v165, %v176
    %v236 = vadd.f32 %v166, %v176
    %v237 = vadd.f32 %v167, %v176
    %v238 = vadd.f32 %v168, %v176
    %v239 = vadd.f32 %v169, %v176
    %v240 = vadd.f32 %v170, %v176
    %v241 = vadd.f32 %v171, %v176
    %v242 = vld [vmem:[%s5] sm:$0xff]
    %v243 = vld [vmem:[%s5 + $0x8] sm:$0xff]
    %v244 = vld [vmem:[%s5 + $0x10] sm:$0xff]
    %v245 = vld [vmem:[%s5 + $0x18] sm:$0xff]
    %v246 = vld [vmem:[%s5 + $0x20] sm:$0xff]
    %v247 = vld [vmem:[%s5 + $0x28] sm:$0xff]
    %v248 = vld [vmem:[%s5 + $0x30] sm:$0xff]
    %v249 = vld [vmem:[%s5 + $0x38] sm:$0xff]
    %v250 = vld [vmem:[%s5 + $0x40] sm:$0xff]
    %v251 = vld [vmem:[%s5 + $0x48] sm:$0xff]
    %v252 = vld [vmem:[%s5 + $0x50] sm:$0xff]
    %v253 = vld [vmem:[%s5 + $0x58] sm:$0xff]
    %v254 = vld [vmem:[%s5 + $0x60] sm:$0xff]
    %v255 = vld [vmem:[%s5 + $0x68] sm:$0xff]
    %v256 = vld [vmem:[%s5 + $0x70] sm:$0xff]
    %v257 = vld [vmem:[%s5 + $0x78] sm:$0xff]
    %v258 = vld [vmem:[%s5 + $0x80] sm:$0xff]
    %v259 = vld [vmem:[%s5 + $0x88] sm:$0xff]
    %v260 = vld [vmem:[%s5 + $0x90] sm:$0xff]
    %v261 = vld [vmem:[%s5 + $0x98] sm:$0xff]
    %v262 = vld [vmem:[%s5 + $0xa0] sm:$0xff]
    %v263 = vld [vmem:[%s5 + $0xa8] sm:$0xff]
    %v264 = vld [vmem:[%s5 + $0xb0] sm:$0xff]
    %v265 = vld [vmem:[%s5 + $0xb8] sm:$0xff]
    %v266 = vld [vmem:[%s5 + $0xc0] sm:$0xff]
    %v267 = vld [vmem:[%s5 + $0xc8] sm:$0xff]
    %v268 = vld [vmem:[%s5 + $0xd0] sm:$0xff]
    %v269 = vld [vmem:[%s5 + $0xd8] sm:$0xff]
    %v270 = vld [vmem:[%s5 + $0xe0] sm:$0xff]
    %v271 = vld [vmem:[%s5 + $0xe8] sm:$0xff]
    %v272 = vld [vmem:[%s5 + $0xf0] sm:$0xff]
    %v273 = vld [vmem:[%s5 + $0xf8] sm:$0xff]
    %v274 = vld [vmem:[%s5 + $0x100] sm:$0xff]
    %v275 = vld [vmem:[%s5 + $0x108] sm:$0xff]
    %v276 = vld [vmem:[%s5 + $0x110] sm:$0xff]
    %v277 = vld [vmem:[%s5 + $0x118] sm:$0xff]
    %v278 = vld [vmem:[%s5 + $0x120] sm:$0xff]
    %v279 = vld [vmem:[%s5 + $0x128] sm:$0xff]
    %v280 = vld [vmem:[%s5 + $0x130] sm:$0xff]
    %v281 = vld [vmem:[%s5 + $0x138] sm:$0xff]
    %v282 = vld [vmem:[%s5 + $0x140] sm:$0xff]
    %v283 = vld [vmem:[%s5 + $0x148] sm:$0xff]
    %v284 = vld [vmem:[%s5 + $0x150] sm:$0xff]
    %v285 = vld [vmem:[%s5 + $0x158] sm:$0xff]
    %v286 = vld [vmem:[%s5 + $0x160] sm:$0xff]
    %v287 = vld [vmem:[%s5 + $0x168] sm:$0xff]
    %v288 = vld [vmem:[%s5 + $0x170] sm:$0xff]
    %v289 = vld [vmem:[%s5 + $0x178] sm:$0xff]
    %v290 = vld [vmem:[%s5 + $0x180] sm:$0xff]
    %v291 = vld [vmem:[%s5 + $0x188] sm:$0xff]
    %v292 = vld [vmem:[%s5 + $0x190] sm:$0xff]
    %v293 = vld [vmem:[%s5 + $0x198] sm:$0xff]
    %v294 = vld [vmem:[%s5 + $0x1a0] sm:$0xff]
    %v295 = vld [vmem:[%s5 + $0x1a8] sm:$0xff]
    %v296 = vld [vmem:[%s5 + $0x1b0] sm:$0xff]
    %v297 = vld [vmem:[%s5 + $0x1b8] sm:$0xff]
    %v298 = vld [vmem:[%s5 + $0x1c0] sm:$0xff]
    %v299 = vld [vmem:[%s5 + $0x1c8] sm:$0xff]
    %v300 = vld [vmem:[%s5 + $0x1d0] sm:$0xff]
    %v301 = vld [vmem:[%s5 + $0x1d8] sm:$0xff]
    %v302 = vld [vmem:[%s5 + $0x1e0] sm:$0xff]
    %v303 = vld [vmem:[%s5 + $0x1e8] sm:$0xff]
    %v304 = vld [vmem:[%s5 + $0x1f0] sm:$0xff]
    %v305 = vld [vmem:[%s5 + $0x1f8] sm:$0xff]
    %v306 = vadd.f32 %v178, %v242
    %v307 = vadd.f32 %v179, %v243
    %v308 = vadd.f32 %v180, %v244
    %v309 = vadd.f32 %v181, %v245
    %v310 = vadd.f32 %v182, %v246
    %v311 = vadd.f32 %v183, %v247
    %v312 = vadd.f32 %v184, %v248
    %v313 = vadd.f32 %v185, %v249
    %v314 = vadd.f32 %v186, %v250
    %v315 = vadd.f32 %v187, %v251
    %v316 = vadd.f32 %v188, %v252
    %v317 = vadd.f32 %v189, %v253
    %v318 = vadd.f32 %v190, %v254
    %v319 = vadd.f32 %v191, %v255
    %v320 = vadd.f32 %v192, %v256
    %v321 = vadd.f32 %v193, %v257
    %v322 = vadd.f32 %v194, %v258
    %v323 = vadd.f32 %v195, %v259
    %v324 = vadd.f32 %v196, %v260
    %v325 = vadd.f32 %v197, %v261
    %v326 = vadd.f32 %v198, %v262
    %v327 = vadd.f32 %v199, %v263
    %v328 = vadd.f32 %v200, %v264
    %v329 = vadd.f32 %v201, %v265
    %v330 = vadd.f32 %v202, %v266
    %v331 = vadd.f32 %v203, %v267
    %v332 = vadd.f32 %v204, %v268
    %v333 = vadd.f32 %v205, %v269
    %v334 = vadd.f32 %v206, %v270
    %v335 = vadd.f32 %v207, %v271
    %v336 = vadd.f32 %v208, %v272
    %v337 = vadd.f32 %v209, %v273
    %v338 = vadd.f32 %v210, %v274
    %v339 = vadd.f32 %v211, %v275
    %v340 = vadd.f32 %v212, %v276
    %v341 = vadd.f32 %v213, %v277
    %v342 = vadd.f32 %v214, %v278
    %v343 = vadd.f32 %v215, %v279
    %v344 = vadd.f32 %v216, %v280
    %v345 = vadd.f32 %v217, %v281
    %v346 = vadd.f32 %v218, %v282
    %v347 = vadd.f32 %v219, %v283
    %v348 = vadd.f32 %v220, %v284
    %v349 = vadd.f32 %v221, %v285
    %v350 = vadd.f32 %v222, %v286
    %v351 = vadd.f32 %v223, %v287
    %v352 = vadd.f32 %v224, %v288
    %v353 = vadd.f32 %v225, %v289
    %v354 = vadd.f32 %v226, %v290
    %v355 = vadd.f32 %v227, %v291
    %v356 = vadd.f32 %v228, %v292
    %v357 = vadd.f32 %v229, %v293
    %v358 = vadd.f32 %v230, %v294
    %v359 = vadd.f32 %v231, %v295
    %v360 = vadd.f32 %v232, %v296
    %v361 = vadd.f32 %v233, %v297
    %v362 = vadd.f32 %v234, %v298
    %v363 = vadd.f32 %v235, %v299
    %v364 = vadd.f32 %v236, %v300
    %v365 = vadd.f32 %v237, %v301
    %v366 = vadd.f32 %v238, %v302
    %v367 = vadd.f32 %v239, %v303
    %v368 = vadd.f32 %v240, %v304
    %v369 = vadd.f32 %v241, %v305
    %v370 = vmax.f32 %v306, 0.0
    %v371 = vmax.f32 %v307, 0.0
    %v372 = vmax.f32 %v308, 0.0
    %v373 = vmax.f32 %v309, 0.0
    %v374 = vmax.f32 %v310, 0.0
    %v375 = vmax.f32 %v311, 0.0
    %v376 = vmax.f32 %v312, 0.0
    %v377 = vmax.f32 %v313, 0.0
    %v378 = vmax.f32 %v314, 0.0
    %v379 = vmax.f32 %v315, 0.0
    %v380 = vmax.f32 %v316, 0.0
    %v381 = vmax.f32 %v317, 0.0
    %v382 = vmax.f32 %v318, 0.0
    %v383 = vmax.f32 %v319, 0.0
    %v384 = vmax.f32 %v320, 0.0
    %v385 = vmax.f32 %v321, 0.0
    %v386 = vmax.f32 %v322, 0.0
    %v387 = vmax.f32 %v323, 0.0
    %v388 = vmax.f32 %v324, 0.0
    %v389 = vmax.f32 %v325, 0.0
    %v390 = vmax.f32 %v326, 0.0
    %v391 = vmax.f32 %v327, 0.0
    %v392 = vmax.f32 %v328, 0.0
    %v393 = vmax.f32 %v329, 0.0
    %v394 = vmax.f32 %v330, 0.0
    %v395 = vmax.f32 %v331, 0.0
    %v396 = vmax.f32 %v332, 0.0
    %v397 = vmax.f32 %v333, 0.0
    %v398 = vmax.f32 %v334, 0.0
    %v399 = vmax.f32 %v335, 0.0
    %v400 = vmax.f32 %v336, 0.0
    %v401 = vmax.f32 %v337, 0.0
    %v402 = vmax.f32 %v338, 0.0
    %v403 = vmax.f32 %v339, 0.0
    %v404 = vmax.f32 %v340, 0.0
    %v405 = vmax.f32 %v341, 0.0
    %v406 = vmax.f32 %v342, 0.0
    %v407 = vmax.f32 %v343, 0.0
    %v408 = vmax.f32 %v344, 0.0
    %v409 = vmax.f32 %v345, 0.0
    %v410 = vmax.f32 %v346, 0.0
    %v411 = vmax.f32 %v347, 0.0
    %v412 = vmax.f32 %v348, 0.0
    %v413 = vmax.f32 %v349, 0.0
    %v414 = vmax.f32 %v350, 0.0
    %v415 = vmax.f32 %v351, 0.0
    %v416 = vmax.f32 %v352, 0.0
    %v417 = vmax.f32 %v353, 0.0
    %v418 = vmax.f32 %v354, 0.0
    %v419 = vmax.f32 %v355, 0.0
    %v420 = vmax.f32 %v356, 0.0
    %v421 = vmax.f32 %v357, 0.0
    %v422 = vmax.f32 %v358, 0.0
    %v423 = vmax.f32 %v359, 0.0
    %v424 = vmax.f32 %v360, 0.0
    %v425 = vmax.f32 %v361, 0.0
    %v426 = vmax.f32 %v362, 0.0
    %v427 = vmax.f32 %v363, 0.0
    %v428 = vmax.f32 %v364, 0.0
    %v429 = vmax.f32 %v365, 0.0
    %v430 = vmax.f32 %v366, 0.0
    %v431 = vmax.f32 %v367, 0.0
    %v432 = vmax.f32 %v368, 0.0
    %v433 = vmax.f32 %v369, 0.0
    %434 = vst [vmem:[#allocation2] sm:$0xff] %v370
    %435 = vst [vmem:[#allocation2 + $0x8] sm:$0xff] %v371
    %436 = vst [vmem:[#allocation2 + $0x10] sm:$0xff] %v372
    %437 = vst [vmem:[#allocation2 + $0x18] sm:$0xff] %v373
    %438 = vst [vmem:[#allocation2 + $0x20] sm:$0xff] %v374
    %439 = vst [vmem:[#allocation2 + $0x28] sm:$0xff] %v375
    %440 = vst [vmem:[#allocation2 + $0x30] sm:$0xff] %v376
    %441 = vst [vmem:[#allocation2 + $0x38] sm:$0xff] %v377
    %442 = vst [vmem:[#allocation2 + $0x40] sm:$0xff] %v378
    %443 = vst [vmem:[#allocation2 + $0x48] sm:$0xff] %v379
    %444 = vst [vmem:[#allocation2 + $0x50] sm:$0xff] %v380
    %445 = vst [vmem:[#allocation2 + $0x58] sm:$0xff] %v381
    %446 = vst [vmem:[#allocation2 + $0x60] sm:$0xff] %v382
    %447 = vst [vmem:[#allocation2 + $0x68] sm:$0xff] %v383
    %448 = vst [vmem:[#allocation2 + $0x70] sm:$0xff] %v384
    %449 = vst [vmem:[#allocation2 + $0x78] sm:$0xff] %v385
    %450 = vst [vmem:[#allocation2 + $0x80] sm:$0xff] %v386
    %451 = vst [vmem:[#allocation2 + $0x88] sm:$0xff] %v387
    %452 = vst [vmem:[#allocation2 + $0x90] sm:$0xff] %v388
    %453 = vst [vmem:[#allocation2 + $0x98] sm:$0xff] %v389
    %454 = vst [vmem:[#allocation2 + $0xa0] sm:$0xff] %v390
    %455 = vst [vmem:[#allocation2 + $0xa8] sm:$0xff] %v391
    %456 = vst [vmem:[#allocation2 + $0xb0] sm:$0xff] %v392
    %457 = vst [vmem:[#allocation2 + $0xb8] sm:$0xff] %v393
    %458 = vst [vmem:[#allocation2 + $0xc0] sm:$0xff] %v394
    %459 = vst [vmem:[#allocation2 + $0xc8] sm:$0xff] %v395
    %460 = vst [vmem:[#allocation2 + $0xd0] sm:$0xff] %v396
    %461 = vst [vmem:[#allocation2 + $0xd8] sm:$0xff] %v397
    %462 = vst [vmem:[#allocation2 + $0xe0] sm:$0xff] %v398
    %463 = vst [vmem:[#allocation2 + $0xe8] sm:$0xff] %v399
    %464 = vst [vmem:[#allocation2 + $0xf0] sm:$0xff] %v400
    %465 = vst [vmem:[#allocation2 + $0xf8] sm:$0xff] %v401
    %466 = vst [vmem:[#allocation2 + $0x100] sm:$0xff] %v402
    %467 = vst [vmem:[#allocation2 + $0x108] sm:$0xff] %v403
    %468 = vst [vmem:[#allocation2 + $0x110] sm:$0xff] %v404
    %469 = vst [vmem:[#allocation2 + $0x118] sm:$0xff] %v405
    %470 = vst [vmem:[#allocation2 + $0x120] sm:$0xff] %v406
    %471 = vst [vmem:[#allocation2 + $0x128] sm:$0xff] %v407
    %472 = vst [vmem:[#allocation2 + $0x130] sm:$0xff] %v408
    %473 = vst [vmem:[#allocation2 + $0x138] sm:$0xff] %v409
    %474 = vst [vmem:[#allocation2 + $0x140] sm:$0xff] %v410
    %475 = vst [vmem:[#allocation2 + $0x148] sm:$0xff] %v411
    %476 = vst [vmem:[#allocation2 + $0x150] sm:$0xff] %v412
    %477 = vst [vmem:[#allocation2 + $0x158] sm:$0xff] %v413
    %478 = vst [vmem:[#allocation2 + $0x160] sm:$0xff] %v414
    %479 = vst [vmem:[#allocation2 + $0x168] sm:$0xff] %v415
    %480 = vst [vmem:[#allocation2 + $0x170] sm:$0xff] %v416
    %481 = vst [vmem:[#allocation2 + $0x178] sm:$0xff] %v417
    %482 = vst [vmem:[#allocation2 + $0x180] sm:$0xff] %v418
    %483 = vst [vmem:[#allocation2 + $0x188] sm:$0xff] %v419
    %484 = vst [vmem:[#allocation2 + $0x190] sm:$0xff] %v420
    %485 = vst [vmem:[#allocation2 + $0x198] sm:$0xff] %v421
    %486 = vst [vmem:[#allocation2 + $0x1a0] sm:$0xff] %v422
    %487 = vst [vmem:[#allocation2 + $0x1a8] sm:$0xff] %v423
    %488 = vst [vmem:[#allocation2 + $0x1b0] sm:$0xff] %v424
    %489 = vst [vmem:[#allocation2 + $0x1b8] sm:$0xff] %v425
    %490 = vst [vmem:[#allocation2 + $0x1c0] sm:$0xff] %v426
    %491 = vst [vmem:[#allocation2 + $0x1c8] sm:$0xff] %v427
    %492 = vst [vmem:[#allocation2 + $0x1d0] sm:$0xff] %v428
    %493 = vst [vmem:[#allocation2 + $0x1d8] sm:$0xff] %v429
    %494 = vst [vmem:[#allocation2 + $0x1e0] sm:$0xff] %v430
    %495 = vst [vmem:[#allocation2 + $0x1e8] sm:$0xff] %v431
    %496 = vst [vmem:[#allocation2 + $0x1f0] sm:$0xff] %v432
    %497 = vst [vmem:[#allocation2 + $0x1f8] sm:$0xff] %v433
    // Predicated region
    $region26: #{bottleneck_forward.7} parent=1 // pred_check
      _
    $region27: #{bottleneck_forward.7} parent=1 // pred_check_branch
      %499 = sbr.rel (0) target = $region29
    $region28: #{bottleneck_forward.7} parent=1 // pred_region
      %s501 = ssub.s32 8192, 8192
      %502 = vsyncadd [#allocation3], %s501
      %s503 = sshll.u32 [#allocation2], 4
      %s504 = int_to_ptr.vmem [resolvable:$true] %s503
      %509 = dma.vmem_to_hbm [thread:$0]  %s504, 8192, %s6, [#allocation3], 128, 128, 8
    $region29: #{bottleneck_forward.7} parent=1 // pred_fallthru
      _
    // Predicated region
    $region30: #{bottleneck_forward.7} parent=1 // pred_check
      _
    $region31: #{bottleneck_forward.7} parent=1 // pred_check_branch
      %511 = sbr.rel (0) target = $region33
    $region32: #{bottleneck_forward.7} parent=1 // pred_region
      %512 = dma.done [#allocation3], 8192
    $region33: #{bottleneck_forward.7} parent=1 // pred_fallthru
      _
    %513 = vsyncpa [#allocation3], 1

// kernel: bottleneck_forward.6
$region0: #{bottleneck_forward.6}
  #allocation0 [shape = 'u32[]', space=smem, size = 0x4, offset = 0x4, fixed_abs, tag = 'smem constant byte address 0x4 - core index']
  #allocation1 [shape = 'u32[144,128]{1,0:T(1,128)}', space=vmem, size = 0x12000, scoped, tag = 'internal scratch']
  %s0 = inlined_call_operand.vmem [shape: f32[512,128], index: 0, kind: input, shape index: {}]
  %s1 = inlined_call_operand.vmem [shape: f32[1,128], index: 1, kind: input, shape index: {}]
  %s2 = inlined_call_operand.vmem [shape: f32[1,128], index: 2, kind: input, shape index: {}]
  %s3 = inlined_call_operand.vmem [shape: f32[1,128], index: 3, kind: input, shape index: {}]
  %s4 = inlined_call_operand.vmem [shape: f32[1,128], index: 4, kind: input, shape index: {}]
  %s5 = inlined_call_operand.vmem [shape: f32[128,128], index: 5, kind: input, shape index: {}]
  %s6 = inlined_call_operand.vmem [shape: f32[512,128], index: 6, kind: output, shape index: {0}]
  %s7 = inlined_call_operand.vmem [shape: f32[1,128], index: 7, kind: output, shape index: {1}]
  %s8 = inlined_call_operand.vmem [shape: f32[1,128], index: 8, kind: output, shape index: {2}]
  %9 = xla_tuple %s6, %s7, %s8
  %s10 = sld [smem:[#allocation0]]
  $region54: #{bottleneck_forward.6} parent=0
    _
  %s12 = ssub.s32 1, %s10
  %s13 = scalar_select 0, %s12, %s10
  // Predicated region
  $region2: #{bottleneck_forward.6} parent=0 // pred_check
    _
  $region3: #{bottleneck_forward.6} parent=0 // pred_check_branch
    %15 = sbr.rel (0) target = $region5
  $region4: #{bottleneck_forward.6} parent=0 // pred_region
    _
  $region5: #{bottleneck_forward.6} parent=0 // pred_fallthru
    _
  // Predicated region
  $region6: #{bottleneck_forward.6} parent=0 // pred_check
    _
  $region7: #{bottleneck_forward.6} parent=0 // pred_check_branch
    %17 = sbr.rel (0) target = $region9
  $region8: #{bottleneck_forward.6} parent=0 // pred_region
    _
  $region9: #{bottleneck_forward.6} parent=0 // pred_fallthru
    _
  // Predicated region
  $region10: #{bottleneck_forward.6} parent=0 // pred_check
    _
  $region11: #{bottleneck_forward.6} parent=0 // pred_check_branch
    %19 = sbr.rel (0) target = $region13
  $region12: #{bottleneck_forward.6} parent=0 // pred_region
    _
  $region13: #{bottleneck_forward.6} parent=0 // pred_fallthru
    _
  // Predicated region
  $region14: #{bottleneck_forward.6} parent=0 // pred_check
    _
  $region15: #{bottleneck_forward.6} parent=0 // pred_check_branch
    %21 = sbr.rel (0) target = $region17
  $region16: #{bottleneck_forward.6} parent=0 // pred_region
    _
  $region17: #{bottleneck_forward.6} parent=0 // pred_fallthru
    _
  // Predicated region
  $region18: #{bottleneck_forward.6} parent=0 // pred_check
    _
  $region19: #{bottleneck_forward.6} parent=0 // pred_check_branch
    %23 = sbr.rel (0) target = $region21
  $region20: #{bottleneck_forward.6} parent=0 // pred_region
    _
  $region21: #{bottleneck_forward.6} parent=0 // pred_fallthru
    _
  // Predicated region
  $region22: #{bottleneck_forward.6} parent=0 // pred_check
    _
  $region23: #{bottleneck_forward.6} parent=0 // pred_check_branch
    %25 = sbr.rel (0) target = $region25
  $region24: #{bottleneck_forward.6} parent=0 // pred_region
    _
  $region25: #{bottleneck_forward.6} parent=0 // pred_fallthru
    _
  %p26 = scmp.eq.s32.totalorder 0, 0
  // Predicated region
  $region26: #{bottleneck_forward.6} parent=0 // pred_check
    %p27 = pneg %p26
  $region27: #{bottleneck_forward.6} parent=0 // pred_check_branch
    %29 = sbr.rel (%p27) target = $region29
  $region28: #{bottleneck_forward.6} parent=0 // pred_region
    %30 = vst [vmem:[%s7] sm:$0x1] 0.0
    %31 = vst [vmem:[%s8] sm:$0x1] 0.0
  $region29: #{bottleneck_forward.6} parent=0 // pred_fallthru
    _
  %v32 = vld [vmem:[%s1] sm:$0x1]
  %v33 = vld [vmem:[%s2] sm:$0x1]
  %v34 = vld [vmem:[%s3] sm:$0x1]
  %v35 = vld [vmem:[%s4] sm:$0x1]
  %v36 = vmul.f32 %v32, 0.001953125
  %v37 = vmul.f32 %v33, 0.001953125
  %v38 = vmul.f32 %v36, %v36
  %v39 = vsub.f32 %v37, %v38
  %v40 = vmax.f32 %v39, 0.0
  %v41 = vadd.f32 %v40, 1e-05
  %v42 = vrsqrt.pop %v41
  %v43 = vmul.f32 %v34, %v42
  %v44 = vmul.f32 %v36, %v43
  %v45 = vsub.f32 %v35, %v44
  %v46 = vld [vmem:[%s0] sm:$0xff]
  %v47 = vld [vmem:[%s0 + $0x8] sm:$0xff]
  %v48 = vld [vmem:[%s0 + $0x10] sm:$0xff]
  %v49 = vld [vmem:[%s0 + $0x18] sm:$0xff]
  %v50 = vld [vmem:[%s0 + $0x20] sm:$0xff]
  %v51 = vld [vmem:[%s0 + $0x28] sm:$0xff]
  %v52 = vld [vmem:[%s0 + $0x30] sm:$0xff]
  %v53 = vld [vmem:[%s0 + $0x38] sm:$0xff]
  %v54 = vld [vmem:[%s0 + $0x40] sm:$0xff]
  %v55 = vld [vmem:[%s0 + $0x48] sm:$0xff]
  %v56 = vld [vmem:[%s0 + $0x50] sm:$0xff]
  %v57 = vld [vmem:[%s0 + $0x58] sm:$0xff]
  %v58 = vld [vmem:[%s0 + $0x60] sm:$0xff]
  %v59 = vld [vmem:[%s0 + $0x68] sm:$0xff]
  %v60 = vld [vmem:[%s0 + $0x70] sm:$0xff]
  %v61 = vld [vmem:[%s0 + $0x78] sm:$0xff]
  %v62 = vld [vmem:[%s0 + $0x80] sm:$0xff]
  %v63 = vld [vmem:[%s0 + $0x88] sm:$0xff]
  %v64 = vld [vmem:[%s0 + $0x90] sm:$0xff]
  %v65 = vld [vmem:[%s0 + $0x98] sm:$0xff]
  %v66 = vld [vmem:[%s0 + $0xa0] sm:$0xff]
  %v67 = vld [vmem:[%s0 + $0xa8] sm:$0xff]
  %v68 = vld [vmem:[%s0 + $0xb0] sm:$0xff]
  %v69 = vld [vmem:[%s0 + $0xb8] sm:$0xff]
  %v70 = vld [vmem:[%s0 + $0xc0] sm:$0xff]
  %v71 = vld [vmem:[%s0 + $0xc8] sm:$0xff]
  %v72 = vld [vmem:[%s0 + $0xd0] sm:$0xff]
  %v73 = vld [vmem:[%s0 + $0xd8] sm:$0xff]
  %v74 = vld [vmem:[%s0 + $0xe0] sm:$0xff]
  %v75 = vld [vmem:[%s0 + $0xe8] sm:$0xff]
  %v76 = vld [vmem:[%s0 + $0xf0] sm:$0xff]
  %v77 = vld [vmem:[%s0 + $0xf8] sm:$0xff]
  %v78 = vld [vmem:[%s0 + $0x100] sm:$0xff]
  %v79 = vld [vmem:[%s0 + $0x108] sm:$0xff]
  %v80 = vld [vmem:[%s0 + $0x110] sm:$0xff]
  %v81 = vld [vmem:[%s0 + $0x118] sm:$0xff]
  %v82 = vld [vmem:[%s0 + $0x120] sm:$0xff]
  %v83 = vld [vmem:[%s0 + $0x128] sm:$0xff]
  %v84 = vld [vmem:[%s0 + $0x130] sm:$0xff]
  %v85 = vld [vmem:[%s0 + $0x138] sm:$0xff]
  %v86 = vld [vmem:[%s0 + $0x140] sm:$0xff]
  %v87 = vld [vmem:[%s0 + $0x148] sm:$0xff]
  %v88 = vld [vmem:[%s0 + $0x150] sm:$0xff]
  %v89 = vld [vmem:[%s0 + $0x158] sm:$0xff]
  %v90 = vld [vmem:[%s0 + $0x160] sm:$0xff]
  %v91 = vld [vmem:[%s0 + $0x168] sm:$0xff]
  %v92 = vld [vmem:[%s0 + $0x170] sm:$0xff]
  %v93 = vld [vmem:[%s0 + $0x178] sm:$0xff]
  %v94 = vld [vmem:[%s0 + $0x180] sm:$0xff]
  %v95 = vld [vmem:[%s0 + $0x188] sm:$0xff]
  %v96 = vld [vmem:[%s0 + $0x190] sm:$0xff]
  %v97 = vld [vmem:[%s0 + $0x198] sm:$0xff]
  %v98 = vld [vmem:[%s0 + $0x1a0] sm:$0xff]
  %v99 = vld [vmem:[%s0 + $0x1a8] sm:$0xff]
  %v100 = vld [vmem:[%s0 + $0x1b0] sm:$0xff]
  %v101 = vld [vmem:[%s0 + $0x1b8] sm:$0xff]
  %v102 = vld [vmem:[%s0 + $0x1c0] sm:$0xff]
  %v103 = vld [vmem:[%s0 + $0x1c8] sm:$0xff]
  %v104 = vld [vmem:[%s0 + $0x1d0] sm:$0xff]
  %v105 = vld [vmem:[%s0 + $0x1d8] sm:$0xff]
  %v106 = vld [vmem:[%s0 + $0x1e0] sm:$0xff]
  %v107 = vld [vmem:[%s0 + $0x1e8] sm:$0xff]
  %v108 = vld [vmem:[%s0 + $0x1f0] sm:$0xff]
  %v109 = vld [vmem:[%s0 + $0x1f8] sm:$0xff]
  %v111 = vlaneseq
  %v112 = vshrl.u32 %v111, 7
  %v113 = vsub.s32 0, %v112
  %v114 = vrot.slane %v43, %v113
  %v116 = vmul.f32 %v46, %v114
  %v117 = vmul.f32 %v47, %v114
  %v118 = vmul.f32 %v48, %v114
  %v119 = vmul.f32 %v49, %v114
  %v120 = vmul.f32 %v50, %v114
  %v121 = vmul.f32 %v51, %v114
  %v122 = vmul.f32 %v52, %v114
  %v123 = vmul.f32 %v53, %v114
  %v124 = vmul.f32 %v54, %v114
  %v125 = vmul.f32 %v55, %v114
  %v126 = vmul.f32 %v56, %v114
  %v127 = vmul.f32 %v57, %v114
  %v128 = vmul.f32 %v58, %v114
  %v129 = vmul.f32 %v59, %v114
  %v130 = vmul.f32 %v60, %v114
  %v131 = vmul.f32 %v61, %v114
  %v132 = vmul.f32 %v62, %v114
  %v133 = vmul.f32 %v63, %v114
  %v134 = vmul.f32 %v64, %v114
  %v135 = vmul.f32 %v65, %v114
  %v136 = vmul.f32 %v66, %v114
  %v137 = vmul.f32 %v67, %v114
  %v138 = vmul.f32 %v68, %v114
  %v139 = vmul.f32 %v69, %v114
  %v140 = vmul.f32 %v70, %v114
  %v141 = vmul.f32 %v71, %v114
  %v142 = vmul.f32 %v72, %v114
  %v143 = vmul.f32 %v73, %v114
  %v144 = vmul.f32 %v74, %v114
  %v145 = vmul.f32 %v75, %v114
  %v146 = vmul.f32 %v76, %v114
  %v147 = vmul.f32 %v77, %v114
  %v148 = vmul.f32 %v78, %v114
  %v149 = vmul.f32 %v79, %v114
  %v150 = vmul.f32 %v80, %v114
  %v151 = vmul.f32 %v81, %v114
  %v152 = vmul.f32 %v82, %v114
  %v153 = vmul.f32 %v83, %v114
  %v154 = vmul.f32 %v84, %v114
  %v155 = vmul.f32 %v85, %v114
  %v156 = vmul.f32 %v86, %v114
  %v157 = vmul.f32 %v87, %v114
  %v158 = vmul.f32 %v88, %v114
  %v159 = vmul.f32 %v89, %v114
  %v160 = vmul.f32 %v90, %v114
  %v161 = vmul.f32 %v91, %v114
  %v162 = vmul.f32 %v92, %v114
  %v163 = vmul.f32 %v93, %v114
  %v164 = vmul.f32 %v94, %v114
  %v165 = vmul.f32 %v95, %v114
  %v166 = vmul.f32 %v96, %v114
  %v167 = vmul.f32 %v97, %v114
  %v168 = vmul.f32 %v98, %v114
  %v169 = vmul.f32 %v99, %v114
  %v170 = vmul.f32 %v100, %v114
  %v171 = vmul.f32 %v101, %v114
  %v172 = vmul.f32 %v102, %v114
  %v173 = vmul.f32 %v103, %v114
  %v174 = vmul.f32 %v104, %v114
  %v175 = vmul.f32 %v105, %v114
  %v176 = vmul.f32 %v106, %v114
  %v177 = vmul.f32 %v107, %v114
  %v178 = vmul.f32 %v108, %v114
  %v179 = vmul.f32 %v109, %v114
  %v181 = vlaneseq
  %v182 = vshrl.u32 %v181, 7
  %v183 = vsub.s32 0, %v182
  %v184 = vrot.slane %v45, %v183
  %v186 = vadd.f32 %v116, %v184
  %v187 = vadd.f32 %v117, %v184
  %v188 = vadd.f32 %v118, %v184
  %v189 = vadd.f32 %v119, %v184
  %v190 = vadd.f32 %v120, %v184
  %v191 = vadd.f32 %v121, %v184
  %v192 = vadd.f32 %v122, %v184
  %v193 = vadd.f32 %v123, %v184
  %v194 = vadd.f32 %v124, %v184
  %v195 = vadd.f32 %v125, %v184
  %v196 = vadd.f32 %v126, %v184
  %v197 = vadd.f32 %v127, %v184
  %v198 = vadd.f32 %v128, %v184
  %v199 = vadd.f32 %v129, %v184
  %v200 = vadd.f32 %v130, %v184
  %v201 = vadd.f32 %v131, %v184
  %v202 = vadd.f32 %v132, %v184
  %v203 = vadd.f32 %v133, %v184
  %v204 = vadd.f32 %v134, %v184
  %v205 = vadd.f32 %v135, %v184
  %v206 = vadd.f32 %v136, %v184
  %v207 = vadd.f32 %v137, %v184
  %v208 = vadd.f32 %v138, %v184
  %v209 = vadd.f32 %v139, %v184
  %v210 = vadd.f32 %v140, %v184
  %v211 = vadd.f32 %v141, %v184
  %v212 = vadd.f32 %v142, %v184
  %v213 = vadd.f32 %v143, %v184
  %v214 = vadd.f32 %v144, %v184
  %v215 = vadd.f32 %v145, %v184
  %v216 = vadd.f32 %v146, %v184
  %v217 = vadd.f32 %v147, %v184
  %v218 = vadd.f32 %v148, %v184
  %v219 = vadd.f32 %v149, %v184
  %v220 = vadd.f32 %v150, %v184
  %v221 = vadd.f32 %v151, %v184
  %v222 = vadd.f32 %v152, %v184
  %v223 = vadd.f32 %v153, %v184
  %v224 = vadd.f32 %v154, %v184
  %v225 = vadd.f32 %v155, %v184
  %v226 = vadd.f32 %v156, %v184
  %v227 = vadd.f32 %v157, %v184
  %v228 = vadd.f32 %v158, %v184
  %v229 = vadd.f32 %v159, %v184
  %v230 = vadd.f32 %v160, %v184
  %v231 = vadd.f32 %v161, %v184
  %v232 = vadd.f32 %v162, %v184
  %v233 = vadd.f32 %v163, %v184
  %v234 = vadd.f32 %v164, %v184
  %v235 = vadd.f32 %v165, %v184
  %v236 = vadd.f32 %v166, %v184
  %v237 = vadd.f32 %v167, %v184
  %v238 = vadd.f32 %v168, %v184
  %v239 = vadd.f32 %v169, %v184
  %v240 = vadd.f32 %v170, %v184
  %v241 = vadd.f32 %v171, %v184
  %v242 = vadd.f32 %v172, %v184
  %v243 = vadd.f32 %v173, %v184
  %v244 = vadd.f32 %v174, %v184
  %v245 = vadd.f32 %v175, %v184
  %v246 = vadd.f32 %v176, %v184
  %v247 = vadd.f32 %v177, %v184
  %v248 = vadd.f32 %v178, %v184
  %v249 = vadd.f32 %v179, %v184
  %v250 = vmax.f32 %v186, 0.0
  %v251 = vmax.f32 %v187, 0.0
  %v252 = vmax.f32 %v188, 0.0
  %v253 = vmax.f32 %v189, 0.0
  %v254 = vmax.f32 %v190, 0.0
  %v255 = vmax.f32 %v191, 0.0
  %v256 = vmax.f32 %v192, 0.0
  %v257 = vmax.f32 %v193, 0.0
  %v258 = vmax.f32 %v194, 0.0
  %v259 = vmax.f32 %v195, 0.0
  %v260 = vmax.f32 %v196, 0.0
  %v261 = vmax.f32 %v197, 0.0
  %v262 = vmax.f32 %v198, 0.0
  %v263 = vmax.f32 %v199, 0.0
  %v264 = vmax.f32 %v200, 0.0
  %v265 = vmax.f32 %v201, 0.0
  %v266 = vmax.f32 %v202, 0.0
  %v267 = vmax.f32 %v203, 0.0
  %v268 = vmax.f32 %v204, 0.0
  %v269 = vmax.f32 %v205, 0.0
  %v270 = vmax.f32 %v206, 0.0
  %v271 = vmax.f32 %v207, 0.0
  %v272 = vmax.f32 %v208, 0.0
  %v273 = vmax.f32 %v209, 0.0
  %v274 = vmax.f32 %v210, 0.0
  %v275 = vmax.f32 %v211, 0.0
  %v276 = vmax.f32 %v212, 0.0
  %v277 = vmax.f32 %v213, 0.0
  %v278 = vmax.f32 %v214, 0.0
  %v279 = vmax.f32 %v215, 0.0
  %v280 = vmax.f32 %v216, 0.0
  %v281 = vmax.f32 %v217, 0.0
  %v282 = vmax.f32 %v218, 0.0
  %v283 = vmax.f32 %v219, 0.0
  %v284 = vmax.f32 %v220, 0.0
  %v285 = vmax.f32 %v221, 0.0
  %v286 = vmax.f32 %v222, 0.0
  %v287 = vmax.f32 %v223, 0.0
  %v288 = vmax.f32 %v224, 0.0
  %v289 = vmax.f32 %v225, 0.0
  %v290 = vmax.f32 %v226, 0.0
  %v291 = vmax.f32 %v227, 0.0
  %v292 = vmax.f32 %v228, 0.0
  %v293 = vmax.f32 %v229, 0.0
  %v294 = vmax.f32 %v230, 0.0
  %v295 = vmax.f32 %v231, 0.0
  %v296 = vmax.f32 %v232, 0.0
  %v297 = vmax.f32 %v233, 0.0
  %v298 = vmax.f32 %v234, 0.0
  %v299 = vmax.f32 %v235, 0.0
  %v300 = vmax.f32 %v236, 0.0
  %v301 = vmax.f32 %v237, 0.0
  %v302 = vmax.f32 %v238, 0.0
  %v303 = vmax.f32 %v239, 0.0
  %v304 = vmax.f32 %v240, 0.0
  %v305 = vmax.f32 %v241, 0.0
  %v306 = vmax.f32 %v242, 0.0
  %v307 = vmax.f32 %v243, 0.0
  %v308 = vmax.f32 %v244, 0.0
  %v309 = vmax.f32 %v245, 0.0
  %v310 = vmax.f32 %v246, 0.0
  %v311 = vmax.f32 %v247, 0.0
  %v312 = vmax.f32 %v248, 0.0
  %v313 = vmax.f32 %v249, 0.0
  %v314 = vld [vmem:[%s5] sm:$0xff]
  %v315 = vld [vmem:[%s5 + $0x8] sm:$0xff]
  %v316 = vld [vmem:[%s5 + $0x10] sm:$0xff]
  %v317 = vld [vmem:[%s5 + $0x18] sm:$0xff]
  %v318 = vld [vmem:[%s5 + $0x20] sm:$0xff]
  %v319 = vld [vmem:[%s5 + $0x28] sm:$0xff]
  %v320 = vld [vmem:[%s5 + $0x30] sm:$0xff]
  %v321 = vld [vmem:[%s5 + $0x38] sm:$0xff]
  %v322 = vld [vmem:[%s5 + $0x40] sm:$0xff]
  %v323 = vld [vmem:[%s5 + $0x48] sm:$0xff]
  %v324 = vld [vmem:[%s5 + $0x50] sm:$0xff]
  %v325 = vld [vmem:[%s5 + $0x58] sm:$0xff]
  %v326 = vld [vmem:[%s5 + $0x60] sm:$0xff]
  %v327 = vld [vmem:[%s5 + $0x68] sm:$0xff]
  %v328 = vld [vmem:[%s5 + $0x70] sm:$0xff]
  %v329 = vld [vmem:[%s5 + $0x78] sm:$0xff]
  %330 = vmatprep.subr.mxu0 0.0
  %331 = vmatpush1.msra.mxu0 %v314
  %332 = vmatprep.subr.mxu0 0.0
  %333 = vmatpush1.msra.mxu0 %v315
  %334 = vmatprep.subr.mxu0 0.0
  %335 = vmatpush1.msra.mxu0 %v316
  %336 = vmatprep.subr.mxu0 0.0
  %337 = vmatpush1.msra.mxu0 %v317
  %338 = vmatprep.subr.mxu0 0.0
  %339 = vmatpush1.msra.mxu0 %v318
  %340 = vmatprep.subr.mxu0 0.0
  %341 = vmatpush1.msra.mxu0 %v319
  %342 = vmatprep.subr.mxu0 0.0
  %343 = vmatpush1.msra.mxu0 %v320
  %344 = vmatprep.subr.mxu0 0.0
  %345 = vmatpush1.msra.mxu0 %v321
  %346 = vmatprep.subr.mxu0 0.0
  %347 = vmatpush1.msra.mxu0 %v322
  %348 = vmatprep.subr.mxu0 0.0
  %349 = vmatpush1.msra.mxu0 %v323
  %350 = vmatprep.subr.mxu0 0.0
  %351 = vmatpush1.msra.mxu0 %v324
  %352 = vmatprep.subr.mxu0 0.0
  %353 = vmatpush1.msra.mxu0 %v325
  %354 = vmatprep.subr.mxu0 0.0
  %355 = vmatpush1.msra.mxu0 %v326
  %356 = vmatprep.subr.mxu0 0.0
  %357 = vmatpush1.msra.mxu0 %v327
  %358 = vmatprep.subr.mxu0 0.0
  %359 = vmatpush1.msra.mxu0 %v328
  %360 = vmatprep.subr.mxu0 0.0
  %361 = vmatpush1.msra.mxu0 %v329
  %362 = vmatprep.subr.mxu0 0.0
  %363 = vmatpush1.msra.mxu0 0.0
  %364 = vmatprep.subr.mxu0 0.0
  %365 = vmatpush1.msra.mxu0 0.0
  %366 = vmatprep.subr.mxu0 0.0
  %367 = vmatpush1.msra.mxu0 0.0
  %368 = vmatprep.subr.mxu0 0.0
  %369 = vmatpush1.msra.mxu0 0.0
  %370 = vmatprep.subr.mxu0 0.0
  %371 = vmatpush1.msra.mxu0 0.0
  %372 = vmatprep.subr.mxu0 0.0
  %373 = vmatpush1.msra.mxu0 0.0
  %374 = vmatprep.subr.mxu0 0.0
  %375 = vmatpush1.msra.mxu0 0.0
  %376 = vmatprep.subr.mxu0 0.0
  %377 = vmatpush1.msra.mxu0 0.0
  %378 = vmatprep.subr.mxu0 0.0
  %379 = vmatpush1.msra.mxu0 0.0
  %380 = vmatprep.subr.mxu0 0.0
  %381 = vmatpush1.msra.mxu0 0.0
  %382 = vmatprep.subr.mxu0 0.0
  %383 = vmatpush1.msra.mxu0 0.0
  %384 = vmatprep.subr.mxu0 0.0
  %385 = vmatpush1.msra.mxu0 0.0
  %386 = vmatprep.subr.mxu0 0.0
  %387 = vmatpush1.msra.mxu0 0.0
  %388 = vmatprep.subr.mxu0 0.0
  %389 = vmatpush1.msra.mxu0 0.0
  %390 = vmatprep.subr.mxu0 0.0
  %391 = vmatpush1.msra.mxu0 0.0
  %392 = vmatprep.subr.mxu0 0.0
  %393 = vmatpush1.msra.mxu0 0.0
  %394 = vmatprep.mubr.f32.mxu0 0.0
  %395 = vmatmul.mubr.f32.gmra.mrb[0].mxu0 %v250
  %v396 = vpop.f32.mrb[0].mxu0
  %v397 = vadd.f32 0.0, %v396
  %v398 = vpop.f32.mrb[0].mxu0
  %399 = vmatprep.mubr.f32.mxu0 0.0
  %400 = vmatmul.mubr.f32.gmra.mrb[0].mxu0 %v251
  %v401 = vpop.f32.mrb[0].mxu0
  %v402 = vadd.f32 0.0, %v401
  %v403 = vpop.f32.mrb[0].mxu0
  %404 = vmatprep.mubr.f32.mxu0 0.0
  %405 = vmatmul.mubr.f32.gmra.mrb[0].mxu0 %v252
  %v406 = vpop.f32.mrb[0].mxu0
  %v407 = vadd.f32 0.0, %v406
  %v408 = vpop.f32.mrb[0].mxu0
  %409 = vmatprep.mubr.f32.mxu0 0.0
  %410 = vmatmul.mubr.f32.gmra.mrb[0].mxu0 %v253
  %v411 = vpop.f32.mrb[0].mxu0
  %v412 = vadd.f32 0.0, %v411
  %v413 = vpop.f32.mrb[0].mxu0
  %414 = vmatprep.mubr.f32.mxu0 0.0
  %415 = vmatmul.mubr.f32.gmra.mrb[0].mxu0 %v254
  %v416 = vpop.f32.mrb[0].mxu0
  %v417 = vadd.f32 0.0, %v416
  %v418 = vpop.f32.mrb[0].mxu0
  %419 = vmatprep.mubr.f32.mxu0 0.0
  %420 = vmatmul.mubr.f32.gmra.mrb[0].mxu0 %v255
  %v421 = vpop.f32.mrb[0].mxu0
  %v422 = vadd.f32 0.0, %v421
  %v423 = vpop.f32.mrb[0].mxu0
  %424 = vmatprep.mubr.f32.mxu0 0.0
  %425 = vmatmul.mubr.f32.gmra.mrb[0].mxu0 %v256
  %v426 = vpop.f32.mrb[0].mxu0
  %v427 = vadd.f32 0.0, %v426
  %v428 = vpop.f32.mrb[0].mxu0
  %429 = vmatprep.mubr.f32.mxu0 0.0
  %430 = vmatmul.mubr.f32.gmra.mrb[0].mxu0 %v257
  %v431 = vpop.f32.mrb[0].mxu0
  %v432 = vadd.f32 0.0, %v431
  %v433 = vpop.f32.mrb[0].mxu0
  %434 = vmatprep.mubr.f32.mxu0 0.0
  %435 = vmatmul.mubr.f32.gmra.mrb[0].mxu0 %v258
  %v436 = vpop.f32.mrb[0].mxu0
  %v437 = vadd.f32 0.0, %v436
  %v438 = vpop.f32.mrb[0].mxu0
  %439 = vmatprep.mubr.f32.mxu0 0.0
  %440 = vmatmul.mubr.f32.gmra.mrb[0].mxu0 %v259
  %v441 = vpop.f32.mrb[0].mxu0
  %v442 = vadd.f32 0.0, %v441
  %v443 = vpop.f32.mrb[0].mxu0
  %444 = vmatprep.mubr.f32.mxu0 0.0
  %445 = vmatmul.mubr.f32.gmra.mrb[0].mxu0 %v260
  %v446 = vpop.f32.mrb[0].mxu0
  %v447 = vadd.f32 0.0, %v446
  %v448 = vpop.f32.mrb[0].mxu0
  %449 = vmatprep.mubr.f32.mxu0 0.0
  %450 = vmatmul.mubr.f32.gmra.mrb[0].mxu0 %v261
  %v451 = vpop.f32.mrb[0].mxu0
  %v452 = vadd.f32 0.0, %v451
  %v453 = vpop.f32.mrb[0].mxu0
  %454 = vmatprep.mubr.f32.mxu0 0.0
  %455 = vmatmul.mubr.f32.gmra.mrb[0].mxu0 %v262
  %v456 = vpop.f32.mrb[0].mxu0
  %v457 = vadd.f32 0.0, %v456
  %v458 = vpop.f32.mrb[0].mxu0
  %459 = vmatprep.mubr.f32.mxu0 0.0
  %460 = vmatmul.mubr.f32.gmra.mrb[0].mxu0 %v263
  %v461 = vpop.f32.mrb[0].mxu0
  %v462 = vadd.f32 0.0, %v461
  %v463 = vpop.f32.mrb[0].mxu0
  %464 = vmatprep.mubr.f32.mxu0 0.0
  %465 = vmatmul.mubr.f32.gmra.mrb[0].mxu0 %v264
  %v466 = vpop.f32.mrb[0].mxu0
  %v467 = vadd.f32 0.0, %v466
  %v468 = vpop.f32.mrb[0].mxu0
  %469 = vmatprep.mubr.f32.mxu0 0.0
  %470 = vmatmul.mubr.f32.gmra.mrb[0].mxu0 %v265
  %v471 = vpop.f32.mrb[0].mxu0
  %v472 = vadd.f32 0.0, %v471
  %v473 = vpop.f32.mrb[0].mxu0
  %474 = vmatprep.mubr.f32.mxu0 0.0
  %475 = vmatmul.mubr.f32.gmra.mrb[0].mxu0 %v266
  %v476 = vpop.f32.mrb[0].mxu0
  %v477 = vadd.f32 0.0, %v476
  %v478 = vpop.f32.mrb[0].mxu0
  %479 = vmatprep.mubr.f32.mxu0 0.0
  %480 = vmatmul.mubr.f32.gmra.mrb[0].mxu0 %v267
  %v481 = vpop.f32.mrb[0].mxu0
  %v482 = vadd.f32 0.0, %v481
  %v483 = vpop.f32.mrb[0].mxu0
  %484 = vmatprep.mubr.f32.mxu0 0.0
  %485 = vmatmul.mubr.f32.gmra.mrb[0].mxu0 %v268
  %v486 = vpop.f32.mrb[0].mxu0
  %v487 = vadd.f32 0.0, %v486
  %v488 = vpop.f32.mrb[0].mxu0
  %489 = vmatprep.mubr.f32.mxu0 0.0
  %490 = vmatmul.mubr.f32.gmra.mrb[0].mxu0 %v269
  %v491 = vpop.f32.mrb[0].mxu0
  %v492 = vadd.f32 0.0, %v491
  %v493 = vpop.f32.mrb[0].mxu0
  %494 = vmatprep.mubr.f32.mxu0 0.0
  %495 = vmatmul.mubr.f32.gmra.mrb[0].mxu0 %v270
  %v496 = vpop.f32.mrb[0].mxu0
  %v497 = vadd.f32 0.0, %v496
  %v498 = vpop.f32.mrb[0].mxu0
  %499 = vmatprep.mubr.f32.mxu0 0.0
  %500 = vmatmul.mubr.f32.gmra.mrb[0].mxu0 %v271
  %v501 = vpop.f32.mrb[0].mxu0
  %v502 = vadd.f32 0.0, %v501
  %v503 = vpop.f32.mrb[0].mxu0
  %504 = vmatprep.mubr.f32.mxu0 0.0
  %505 = vmatmul.mubr.f32.gmra.mrb[0].mxu0 %v272
  %v506 = vpop.f32.mrb[0].mxu0
  %v507 = vadd.f32 0.0, %v506
  %v508 = vpop.f32.mrb[0].mxu0
  %509 = vmatprep.mubr.f32.mxu0 0.0
  %510 = vmatmul.mubr.f32.gmra.mrb[0].mxu0 %v273
  %v511 = vpop.f32.mrb[0].mxu0
  %v512 = vadd.f32 0.0, %v511
  %v513 = vpop.f32.mrb[0].mxu0
  %514 = vmatprep.mubr.f32.mxu0 0.0
  %515 = vmatmul.mubr.f32.gmra.mrb[0].mxu0 %v274
  %v516 = vpop.f32.mrb[0].mxu0
  %v517 = vadd.f32 0.0, %v516
  %v518 = vpop.f32.mrb[0].mxu0
  %519 = vmatprep.mubr.f32.mxu0 0.0
  %520 = vmatmul.mubr.f32.gmra.mrb[0].mxu0 %v275
  %v521 = vpop.f32.mrb[0].mxu0
  %v522 = vadd.f32 0.0, %v521
  %v523 = vpop.f32.mrb[0].mxu0
  %524 = vmatprep.mubr.f32.mxu0 0.0
  %525 = vmatmul.mubr.f32.gmra.mrb[0].mxu0 %v276
  %v526 = vpop.f32.mrb[0].mxu0
  %v527 = vadd.f32 0.0, %v526
  %v528 = vpop.f32.mrb[0].mxu0
  %529 = vmatprep.mubr.f32.mxu0 0.0
  %530 = vmatmul.mubr.f32.gmra.mrb[0].mxu0 %v277
  %v531 = vpop.f32.mrb[0].mxu0
  %v532 = vadd.f32 0.0, %v531
  %v533 = vpop.f32.mrb[0].mxu0
  %534 = vmatprep.mubr.f32.mxu0 0.0
  %535 = vmatmul.mubr.f32.gmra.mrb[0].mxu0 %v278
  %v536 = vpop.f32.mrb[0].mxu0
  %v537 = vadd.f32 0.0, %v536
  %v538 = vpop.f32.mrb[0].mxu0
  %539 = vmatprep.mubr.f32.mxu0 0.0
  %540 = vmatmul.mubr.f32.gmra.mrb[0].mxu0 %v279
  %v541 = vpop.f32.mrb[0].mxu0
  %v542 = vadd.f32 0.0, %v541
  %v543 = vpop.f32.mrb[0].mxu0
  %544 = vmatprep.mubr.f32.mxu0 0.0
  %545 = vmatmul.mubr.f32.gmra.mrb[0].mxu0 %v280
  %v546 = vpop.f32.mrb[0].mxu0
  %v547 = vadd.f32 0.0, %v546
  %v548 = vpop.f32.mrb[0].mxu0
  %549 = vmatprep.mubr.f32.mxu0 0.0
  %550 = vmatmul.mubr.f32.gmra.mrb[0].mxu0 %v281
  %v551 = vpop.f32.mrb[0].mxu0
  %v552 = vadd.f32 0.0, %v551
  %v553 = vpop.f32.mrb[0].mxu0
  %554 = vmatprep.mubr.f32.mxu0 0.0
  %555 = vmatmul.mubr.f32.gmra.mrb[0].mxu0 %v282
  %v556 = vpop.f32.mrb[0].mxu0
  %v557 = vadd.f32 0.0, %v556
  %v558 = vpop.f32.mrb[0].mxu0
  %559 = vmatprep.mubr.f32.mxu0 0.0
  %560 = vmatmul.mubr.f32.gmra.mrb[0].mxu0 %v283
  %v561 = vpop.f32.mrb[0].mxu0
  %v562 = vadd.f32 0.0, %v561
  %v563 = vpop.f32.mrb[0].mxu0
  %564 = vmatprep.mubr.f32.mxu0 0.0
  %565 = vmatmul.mubr.f32.gmra.mrb[0].mxu0 %v284
  %v566 = vpop.f32.mrb[0].mxu0
  %v567 = vadd.f32 0.0, %v566
  %v568 = vpop.f32.mrb[0].mxu0
  %569 = vmatprep.mubr.f32.mxu0 0.0
  %570 = vmatmul.mubr.f32.gmra.mrb[0].mxu0 %v285
  %v571 = vpop.f32.mrb[0].mxu0
  %v572 = vadd.f32 0.0, %v571
  %v573 = vpop.f32.mrb[0].mxu0
  %574 = vmatprep.mubr.f32.mxu0 0.0
  %575 = vmatmul.mubr.f32.gmra.mrb[0].mxu0 %v286
  %v576 = vpop.f32.mrb[0].mxu0
  %v577 = vadd.f32 0.0, %v576
  %v578 = vpop.f32.mrb[0].mxu0
  %579 = vmatprep.mubr.f32.mxu0 0.0
  %580 = vmatmul.mubr.f32.gmra.mrb[0].mxu0 %v287
  %v581 = vpop.f32.mrb[0].mxu0
  %v582 = vadd.f32 0.0, %v581
  %v583 = vpop.f32.mrb[0].mxu0
  %584 = vmatprep.mubr.f32.mxu0 0.0
  %585 = vmatmul.mubr.f32.gmra.mrb[0].mxu0 %v288
  %v586 = vpop.f32.mrb[0].mxu0
  %v587 = vadd.f32 0.0, %v586
  %v588 = vpop.f32.mrb[0].mxu0
  %589 = vmatprep.mubr.f32.mxu0 0.0
  %590 = vmatmul.mubr.f32.gmra.mrb[0].mxu0 %v289
  %v591 = vpop.f32.mrb[0].mxu0
  %v592 = vadd.f32 0.0, %v591
  %v593 = vpop.f32.mrb[0].mxu0
  %594 = vmatprep.mubr.f32.mxu0 0.0
  %595 = vmatmul.mubr.f32.gmra.mrb[0].mxu0 %v290
  %v596 = vpop.f32.mrb[0].mxu0
  %v597 = vadd.f32 0.0, %v596
  %v598 = vpop.f32.mrb[0].mxu0
  %599 = vmatprep.mubr.f32.mxu0 0.0
  %600 = vmatmul.mubr.f32.gmra.mrb[0].mxu0 %v291
  %v601 = vpop.f32.mrb[0].mxu0
  %v602 = vadd.f32 0.0, %v601
  %v603 = vpop.f32.mrb[0].mxu0
  %604 = vmatprep.mubr.f32.mxu0 0.0
  %605 = vmatmul.mubr.f32.gmra.mrb[0].mxu0 %v292
  %v606 = vpop.f32.mrb[0].mxu0
  %v607 = vadd.f32 0.0, %v606
  %v608 = vpop.f32.mrb[0].mxu0
  %609 = vmatprep.mubr.f32.mxu0 0.0
  %610 = vmatmul.mubr.f32.gmra.mrb[0].mxu0 %v293
  %v611 = vpop.f32.mrb[0].mxu0
  %v612 = vadd.f32 0.0, %v611
  %v613 = vpop.f32.mrb[0].mxu0
  %614 = vmatprep.mubr.f32.mxu0 0.0
  %615 = vmatmul.mubr.f32.gmra.mrb[0].mxu0 %v294
  %v616 = vpop.f32.mrb[0].mxu0
  %v617 = vadd.f32 0.0, %v616
  %v618 = vpop.f32.mrb[0].mxu0
  %619 = vmatprep.mubr.f32.mxu0 0.0
  %620 = vmatmul.mubr.f32.gmra.mrb[0].mxu0 %v295
  %v621 = vpop.f32.mrb[0].mxu0
  %v622 = vadd.f32 0.0, %v621
  %v623 = vpop.f32.mrb[0].mxu0
  %624 = vmatprep.mubr.f32.mxu0 0.0
  %625 = vmatmul.mubr.f32.gmra.mrb[0].mxu0 %v296
  %v626 = vpop.f32.mrb[0].mxu0
  %v627 = vadd.f32 0.0, %v626
  %v628 = vpop.f32.mrb[0].mxu0
  %629 = vmatprep.mubr.f32.mxu0 0.0
  %630 = vmatmul.mubr.f32.gmra.mrb[0].mxu0 %v297
  %v631 = vpop.f32.mrb[0].mxu0
  %v632 = vadd.f32 0.0, %v631
  %v633 = vpop.f32.mrb[0].mxu0
  %634 = vmatprep.mubr.f32.mxu0 0.0
  %635 = vmatmul.mubr.f32.gmra.mrb[0].mxu0 %v298
  %v636 = vpop.f32.mrb[0].mxu0
  %v637 = vadd.f32 0.0, %v636
  %v638 = vpop.f32.mrb[0].mxu0
  %639 = vmatprep.mubr.f32.mxu0 0.0
  %640 = vmatmul.mubr.f32.gmra.mrb[0].mxu0 %v299
  %v641 = vpop.f32.mrb[0].mxu0
  %v642 = vadd.f32 0.0, %v641
  %v643 = vpop.f32.mrb[0].mxu0
  %644 = vmatprep.mubr.f32.mxu0 0.0
  %645 = vmatmul.mubr.f32.gmra.mrb[0].mxu0 %v300
  %v646 = vpop.f32.mrb[0].mxu0
  %v647 = vadd.f32 0.0, %v646
  %v648 = vpop.f32.mrb[0].mxu0
  %649 = vmatprep.mubr.f32.mxu0 0.0
  %650 = vmatmul.mubr.f32.gmra.mrb[0].mxu0 %v301
  %v651 = vpop.f32.mrb[0].mxu0
  %v652 = vadd.f32 0.0, %v651
  %v653 = vpop.f32.mrb[0].mxu0
  %654 = vmatprep.mubr.f32.mxu0 0.0
  %655 = vmatmul.mubr.f32.gmra.mrb[0].mxu0 %v302
  %v656 = vpop.f32.mrb[0].mxu0
  %v657 = vadd.f32 0.0, %v656
  %v658 = vpop.f32.mrb[0].mxu0
  %659 = vmatprep.mubr.f32.mxu0 0.0
  %660 = vmatmul.mubr.f32.gmra.mrb[0].mxu0 %v303
  %v661 = vpop.f32.mrb[0].mxu0
  %v662 = vadd.f32 0.0, %v661
  %v663 = vpop.f32.mrb[0].mxu0
  %664 = vmatprep.mubr.f32.mxu0 0.0
  %665 = vmatmul.mubr.f32.gmra.mrb[0].mxu0 %v304
  %v666 = vpop.f32.mrb[0].mxu0
  %v667 = vadd.f32 0.0, %v666
  %v668 = vpop.f32.mrb[0].mxu0
  %669 = vmatprep.mubr.f32.mxu0 0.0
  %670 = vmatmul.mubr.f32.gmra.mrb[0].mxu0 %v305
  %v671 = vpop.f32.mrb[0].mxu0
  %v672 = vadd.f32 0.0, %v671
  %v673 = vpop.f32.mrb[0].mxu0
  %674 = vmatprep.mubr.f32.mxu0 0.0
  %675 = vmatmul.mubr.f32.gmra.mrb[0].mxu0 %v306
  %v676 = vpop.f32.mrb[0].mxu0
  %v677 = vadd.f32 0.0, %v676
  %v678 = vpop.f32.mrb[0].mxu0
  %679 = vmatprep.mubr.f32.mxu0 0.0
  %680 = vmatmul.mubr.f32.gmra.mrb[0].mxu0 %v307
  %v681 = vpop.f32.mrb[0].mxu0
  %v682 = vadd.f32 0.0, %v681
  %v683 = vpop.f32.mrb[0].mxu0
  %684 = vmatprep.mubr.f32.mxu0 0.0
  %685 = vmatmul.mubr.f32.gmra.mrb[0].mxu0 %v308
  %v686 = vpop.f32.mrb[0].mxu0
  %v687 = vadd.f32 0.0, %v686
  %v688 = vpop.f32.mrb[0].mxu0
  %689 = vmatprep.mubr.f32.mxu0 0.0
  %690 = vmatmul.mubr.f32.gmra.mrb[0].mxu0 %v309
  %v691 = vpop.f32.mrb[0].mxu0
  %v692 = vadd.f32 0.0, %v691
  %v693 = vpop.f32.mrb[0].mxu0
  %694 = vmatprep.mubr.f32.mxu0 0.0
  %695 = vmatmul.mubr.f32.gmra.mrb[0].mxu0 %v310
  %v696 = vpop.f32.mrb[0].mxu0
  %v697 = vadd.f32 0.0, %v696
  %v698 = vpop.f32.mrb[0].mxu0
  %699 = vmatprep.mubr.f32.mxu0 0.0
  %700 = vmatmul.mubr.f32.gmra.mrb[0].mxu0 %v311
  %v701 = vpop.f32.mrb[0].mxu0
  %v702 = vadd.f32 0.0, %v701
  %v703 = vpop.f32.mrb[0].mxu0
  %704 = vmatprep.mubr.f32.mxu0 0.0
  %705 = vmatmul.mubr.f32.gmra.mrb[0].mxu0 %v312
  %v706 = vpop.f32.mrb[0].mxu0
  %v707 = vadd.f32 0.0, %v706
  %v708 = vpop.f32.mrb[0].mxu0
  %709 = vmatprep.mubr.f32.mxu0 0.0
  %710 = vmatmul.mubr.f32.gmra.mrb[0].mxu0 %v313
  %v711 = vpop.f32.mrb[0].mxu0
  %v712 = vadd.f32 0.0, %v711
  %v713 = vpop.f32.mrb[0].mxu0
  %714 = vdwg.mxu0
  %715 = vst [vmem:[%s6] sm:$0xff] %v397
  %716 = vst [vmem:[%s6 + $0x8] sm:$0xff] %v402
  %717 = vst [vmem:[%s6 + $0x10] sm:$0xff] %v407
  %718 = vst [vmem:[%s6 + $0x18] sm:$0xff] %v412
  %719 = vst [vmem:[%s6 + $0x20] sm:$0xff] %v417
  %720 = vst [vmem:[%s6 + $0x28] sm:$0xff] %v422
  %721 = vst [vmem:[%s6 + $0x30] sm:$0xff] %v427
  %722 = vst [vmem:[%s6 + $0x38] sm:$0xff] %v432
  %723 = vst [vmem:[%s6 + $0x40] sm:$0xff] %v437
  %724 = vst [vmem:[%s6 + $0x48] sm:$0xff] %v442
  %725 = vst [vmem:[%s6 + $0x50] sm:$0xff] %v447
  %726 = vst [vmem:[%s6 + $0x58] sm:$0xff] %v452
  %727 = vst [vmem:[%s6 + $0x60] sm:$0xff] %v457
  %728 = vst [vmem:[%s6 + $0x68] sm:$0xff] %v462
  %729 = vst [vmem:[%s6 + $0x70] sm:$0xff] %v467
  %730 = vst [vmem:[%s6 + $0x78] sm:$0xff] %v472
  %731 = vst [vmem:[%s6 + $0x80] sm:$0xff] %v477
  %732 = vst [vmem:[%s6 + $0x88] sm:$0xff] %v482
  %733 = vst [vmem:[%s6 + $0x90] sm:$0xff] %v487
  %734 = vst [vmem:[%s6 + $0x98] sm:$0xff] %v492
  %735 = vst [vmem:[%s6 + $0xa0] sm:$0xff] %v497
  %736 = vst [vmem:[%s6 + $0xa8] sm:$0xff] %v502
  %737 = vst [vmem:[%s6 + $0xb0] sm:$0xff] %v507
  %738 = vst [vmem:[%s6 + $0xb8] sm:$0xff] %v512
  %739 = vst [vmem:[%s6 + $0xc0] sm:$0xff] %v517
  %740 = vst [vmem:[%s6 + $0xc8] sm:$0xff] %v522
  %741 = vst [vmem:[%s6 + $0xd0] sm:$0xff] %v527
  %742 = vst [vmem:[%s6 + $0xd8] sm:$0xff] %v532
  %743 = vst [vmem:[%s6 + $0xe0] sm:$0xff] %v537
  %744 = vst [vmem:[%s6 + $0xe8] sm:$0xff] %v542
  %745 = vst [vmem:[%s6 + $0xf0] sm:$0xff] %v547
  %746 = vst [vmem:[%s6 + $0xf8] sm:$0xff] %v552
  %747 = vst [vmem:[%s6 + $0x100] sm:$0xff] %v557
  %748 = vst [vmem:[%s6 + $0x108] sm:$0xff] %v562
  %749 = vst [vmem:[%s6 + $0x110] sm:$0xff] %v567
  %750 = vst [vmem:[%s6 + $0x118] sm:$0xff] %v572
  %751 = vst [vmem:[%s6 + $0x120] sm:$0xff] %v577
  %752 = vst [vmem:[%s6 + $0x128] sm:$0xff] %v582
  %753 = vst [vmem:[%s6 + $0x130] sm:$0xff] %v587
  %754 = vst [vmem:[%s6 + $0x138] sm:$0xff] %v592
  %755 = vst [vmem:[%s6 + $0x140] sm:$0xff] %v597
  %756 = vst [vmem:[%s6 + $0x148] sm:$0xff] %v602
  %757 = vst [vmem:[%s6 + $0x150] sm:$0xff] %v607
  %758 = vst [vmem:[%s6 + $0x158] sm:$0xff] %v612
  %759 = vst [vmem:[%s6 + $0x160] sm:$0xff] %v617
  %760 = vst [vmem:[%s6 + $0x168] sm:$0xff] %v622
  %761 = vst [vmem:[%s6 + $0x170] sm:$0xff] %v627
  %762 = vst [vmem:[%s6 + $0x178] sm:$0xff] %v632
  %763 = vst [vmem:[%s6 + $0x180] sm:$0xff] %v637
  %764 = vst [vmem:[%s6 + $0x188] sm:$0xff] %v642
  %765 = vst [vmem:[%s6 + $0x190] sm:$0xff] %v647
  %766 = vst [vmem:[%s6 + $0x198] sm:$0xff] %v652
  %767 = vst [vmem:[%s6 + $0x1a0] sm:$0xff] %v657
  %768 = vst [vmem:[%s6 + $0x1a8] sm:$0xff] %v662
  %769 = vst [vmem:[%s6 + $0x1b0] sm:$0xff] %v667
  %770 = vst [vmem:[%s6 + $0x1b8] sm:$0xff] %v672
  %771 = vst [vmem:[%s6 + $0x1c0] sm:$0xff] %v677
  %772 = vst [vmem:[%s6 + $0x1c8] sm:$0xff] %v682
  %773 = vst [vmem:[%s6 + $0x1d0] sm:$0xff] %v687
  %774 = vst [vmem:[%s6 + $0x1d8] sm:$0xff] %v692
  %775 = vst [vmem:[%s6 + $0x1e0] sm:$0xff] %v697
  %776 = vst [vmem:[%s6 + $0x1e8] sm:$0xff] %v702
  %777 = vst [vmem:[%s6 + $0x1f0] sm:$0xff] %v707
  %778 = vst [vmem:[%s6 + $0x1f8] sm:$0xff] %v712
  %v779 = vld [vmem:[%s7] sm:$0x1]
  %v780 = vadd.f32 %v397, %v402
  %v781 = vadd.f32 %v780, %v407
  %v782 = vadd.f32 %v781, %v412
  %v783 = vadd.f32 %v782, %v417
  %v784 = vadd.f32 %v783, %v422
  %v785 = vadd.f32 %v784, %v427
  %v786 = vadd.f32 %v785, %v432
  %v787 = vadd.f32 %v786, %v437
  %v788 = vadd.f32 %v787, %v442
  %v789 = vadd.f32 %v788, %v447
  %v790 = vadd.f32 %v789, %v452
  %v791 = vadd.f32 %v790, %v457
  %v792 = vadd.f32 %v791, %v462
  %v793 = vadd.f32 %v792, %v467
  %v794 = vadd.f32 %v793, %v472
  %v795 = vadd.f32 %v794, %v477
  %v796 = vadd.f32 %v795, %v482
  %v797 = vadd.f32 %v796, %v487
  %v798 = vadd.f32 %v797, %v492
  %v799 = vadd.f32 %v798, %v497
  %v800 = vadd.f32 %v799, %v502
  %v801 = vadd.f32 %v800, %v507
  %v802 = vadd.f32 %v801, %v512
  %v803 = vadd.f32 %v802, %v517
  %v804 = vadd.f32 %v803, %v522
  %v805 = vadd.f32 %v804, %v527
  %v806 = vadd.f32 %v805, %v532
  %v807 = vadd.f32 %v806, %v537
  %v808 = vadd.f32 %v807, %v542
  %v809 = vadd.f32 %v808, %v547
  %v810 = vadd.f32 %v809, %v552
  %v811 = vadd.f32 %v810, %v557
  %v812 = vadd.f32 %v811, %v562
  %v813 = vadd.f32 %v812, %v567
  %v814 = vadd.f32 %v813, %v572
  %v815 = vadd.f32 %v814, %v577
  %v816 = vadd.f32 %v815, %v582
  %v817 = vadd.f32 %v816, %v587
  %v818 = vadd.f32 %v817, %v592
  %v819 = vadd.f32 %v818, %v597
  %v820 = vadd.f32 %v819, %v602
  %v821 = vadd.f32 %v820, %v607
  %v822 = vadd.f32 %v821, %v612
  %v823 = vadd.f32 %v822, %v617
  %v824 = vadd.f32 %v823, %v622
  %v825 = vadd.f32 %v824, %v627
  %v826 = vadd.f32 %v825, %v632
  %v827 = vadd.f32 %v826, %v637
  %v828 = vadd.f32 %v827, %v642
  %v829 = vadd.f32 %v828, %v647
  %v830 = vadd.f32 %v829, %v652
  %v831 = vadd.f32 %v830, %v657
  %v832 = vadd.f32 %v831, %v662
  %v833 = vadd.f32 %v832, %v667
  %v834 = vadd.f32 %v833, %v672
  %v835 = vadd.f32 %v834, %v677
  %v836 = vadd.f32 %v835, %v682
  %v837 = vadd.f32 %v836, %v687
  %v838 = vadd.f32 %v837, %v692
  %v839 = vadd.f32 %v838, %v697
  %v840 = vadd.f32 %v839, %v702
  %v841 = vadd.f32 %v840, %v707
  %v842 = vadd.f32 %v841, %v712
  %v843 = vrot.slane %v842, 4
  %v844 = vadd.f32 %v842, %v843
  %v845 = vrot.slane %v844, 2
  %v846 = vadd.f32 %v844, %v845
  %v847 = vrot.slane %v846, 1
  %v848 = vadd.f32 %v846, %v847
  %v849 = vadd.f32 %v779, %v848
  %850 = vst [vmem:[%s7] sm:$0x1] %v849
  %v851 = vld [vmem:[%s8] sm:$0x1]
  %v852 = vmul.f32 %v397, %v397
  %v853 = vmul.f32 %v402, %v402
  %v854 = vmul.f32 %v407, %v407
  %v855 = vmul.f32 %v412, %v412
  %v856 = vmul.f32 %v417, %v417
  %v857 = vmul.f32 %v422, %v422
  %v858 = vmul.f32 %v427, %v427
  %v859 = vmul.f32 %v432, %v432
  %v860 = vmul.f32 %v437, %v437
  %v861 = vmul.f32 %v442, %v442
  %v862 = vmul.f32 %v447, %v447
  %v863 = vmul.f32 %v452, %v452
  %v864 = vmul.f32 %v457, %v457
  %v865 = vmul.f32 %v462, %v462
  %v866 = vmul.f32 %v467, %v467
  %v867 = vmul.f32 %v472, %v472
  %v868 = vmul.f32 %v477, %v477
  %v869 = vmul.f32 %v482, %v482
  %v870 = vmul.f32 %v487, %v487
  %v871 = vmul.f32 %v492, %v492
  %v872 = vmul.f32 %v497, %v497
  %v873 = vmul.f32 %v502, %v502
  %v874 = vmul.f32 %v507, %v507
  %v875 = vmul.f32 %v512, %v512
  %v876 = vmul.f32 %v517, %v517
  %v877 = vmul.f32 %v522, %v522
  %v878 = vmul.f32 %v527, %v527
  %v879 = vmul.f32 %v532, %v532
  %v880 = vmul.f32 %v537, %v537
  %v881 = vmul.f32 %v542, %v542
  %v882 = vmul.f32 %v547, %v547
  %v883 = vmul.f32 %v552, %v552
  %v884 = vmul.f32 %v557, %v557
  %v885 = vmul.f32 %v562, %v562
  %v886 = vmul.f32 %v567, %v567
  %v887 = vmul.f32 %v572, %v572
  %v888 = vmul.f32 %v577, %v577
  %v889 = vmul.f32 %v582, %v582
  %v890 = vmul.f32 %v587, %v587
  %v891 = vmul.f32 %v592, %v592
  %v892 = vmul.f32 %v597, %v597
  %v893 = vmul.f32 %v602, %v602
  %v894 = vmul.f32 %v607, %v607
  %v895 = vmul.f32 %v612, %v612
  %v896 = vmul.f32 %v617, %v617
  %v897 = vmul.f32 %v622, %v622
  %v898 = vmul.f32 %v627, %v627
  %v899 = vmul.f32 %v632, %v632
  %v900 = vmul.f32 %v637, %v637
  %v901 = vmul.f32 %v642, %v642
  %v902 = vmul.f32 %v647, %v647
  %v903 = vmul.f32 %v652, %v652
  %v904 = vmul.f32 %v657, %v657
  %v905 = vmul.f32 %v662, %v662
  %v906 = vmul.f32 %v667, %v667
  %v907 = vmul.f32 %v672, %v672
  %v908 = vmul.f32 %v677, %v677
  %v909 = vmul.f32 %v682, %v682
  %v910 = vmul.f32 %v687, %v687
  %v911 = vmul.f32 %v692, %v692
  %v912 = vmul.f32 %v697, %v697
  %v913 = vmul.f32 %v702, %v702
  %v914 = vmul.f32 %v707, %v707
  %v915 = vmul.f32 %v712, %v712
  %v916 = vadd.f32 %v852, %v853
  %v917 = vadd.f32 %v916, %v854
  %v918 = vadd.f32 %v917, %v855
  %v919 = vadd.f32 %v918, %v856
  %v920 = vadd.f32 %v919, %v857
  %v921 = vadd.f32 %v920, %v858
  %v922 = vadd.f32 %v921, %v859
  %v923 = vadd.f32 %v922, %v860
  %v924 = vadd.f32 %v923, %v861
  %v925 = vadd.f32 %v924, %v862
  %v926 = vadd.f32 %v925, %v863
  %v927 = vadd.f32 %v926, %v864
  %v928 = vadd.f32 %v927, %v865
  %v929 = vadd.f32 %v928, %v866
  %v930 = vadd.f32 %v929, %v867
  %v931 = vadd.f32 %v930, %v868
  %v932 = vadd.f32 %v931, %v869
  %v933 = vadd.f32 %v932, %v870
  %v934 = vadd.f32 %v933, %v871
  %v935 = vadd.f32 %v934, %v872
  %v936 = vadd.f32 %v935, %v873
  %v937 = vadd.f32 %v936, %v874
  %v938 = vadd.f32 %v937, %v875
  %v939 = vadd.f32 %v938, %v876
  %v940 = vadd.f32 %v939, %v877
  %v941 = vadd.f32 %v940, %v878
  %v942 = vadd.f32 %v941, %v879
  %v943 = vadd.f32 %v942, %v880
  %v944 = vadd.f32 %v943, %v881
  %v945 = vadd.f32 %v944, %v882
  %v946 = vadd.f32 %v945, %v883
  %v947 = vadd.f32 %v946, %v884
  %v948 = vadd.f32 %v947, %v885
  %v949 = vadd.f32 %v948, %v886
  %v950 = vadd.f32 %v949, %v887
  %v951 = vadd.f32 %v950, %v888
  %v952 = vadd.f32 %v951, %v889
  %v953 = vadd.f32 %v952, %v890
  %v954 = vadd.f32 %v953, %v891
  %v955 = vadd.f32 %v954, %v892
  %v956 = vadd.f32 %v955, %v893
  %v957 = vadd.f32 %v956, %v894
  %v958 = vadd.f32 %v957, %v895
  %v959 = vadd.f32 %v958, %v896
  %v960 = vadd.f32 %v959, %v897
  %v961 = vadd.f32 %v960, %v898
  %v962 = vadd.f32 %v961, %v899
  %v963 = vadd.f32 %v962, %v900
  %v964 = vadd.f32 %v963, %v901
  %v965 = vadd.f32 %v964, %v902
  %v966 = vadd.f32 %v965, %v903
  %v967 = vadd.f32 %v966, %v904
  %v968 = vadd.f32 %v967, %v905
  %v969 = vadd.f32 %v968, %v906
  %v970 = vadd.f32 %v969, %v907
  %v971 = vadd.f32 %v970, %v908
  %v972 = vadd.f32 %v971, %v909
  %v973 = vadd.f32 %v972, %v910
  %v974 = vadd.f32 %v973, %v911
  %v975 = vadd.f32 %v974, %v912
  %v976 = vadd.f32 %v975, %v913
  %v977 = vadd.f32 %v976, %v914
  %v978 = vadd.f32 %v977, %v915
  %v979 = vrot.slane %v978, 4
  %v980 = vadd.f32 %v978, %v979
  %v981 = vrot.slane %v980, 2
  %v982 = vadd.f32 %v980, %v981
  %v983 = vrot.slane %v982, 1
  %v984 = vadd.f32 %v982, %v983
  %v985 = vadd.f32 %v851, %v984
  %986 = vst [vmem:[%s8] sm:$0x1] %v985
  // Predicated region
  $region30: #{bottleneck_forward.6} parent=0 // pred_check
    _
  $region31: #{bottleneck_forward.6} parent=0 // pred_check_branch
    %988 = sbr.rel (0) target = $region33
  $region32: #{bottleneck_forward.6} parent=0 // pred_region
    _
  $region33: #{bottleneck_forward.6} parent=0 // pred_fallthru
    _
  // Predicated region
  $region34: #{bottleneck_forward.6} parent=0 // pred_check
    _
  $region35: #{bottleneck_forward.6} parent=0 // pred_check_branch
    %990 = sbr.rel (0) target = $region37
  $region36: #{bottleneck_forward.6} parent=0 // pred_region
    _
  $region37: #{bottleneck_forward.6} parent=0 // pred_fallthru
    _
  // Predicated region
  $region38: #{bottleneck_forward.6} parent=0 // pred_check
    _
  $region39: #{bottleneck_forward.6} parent=0 // pred_check_branch
    %992 = sbr.rel (0) target = $region41
  $region40: #{bottleneck_forward.6} parent=0 // pred_region
    _
  $region41: #{bottleneck_forward.6} parent=0 // pred_fallthru
    _
  // Predicated region
  $region42: #{bottleneck_forward.6} parent=0 // pred_check
    _
  $region43: #{bottleneck_forward.6} parent=0 // pred_check_branch
    %994 = sbr.rel (0) target = $region45
  $region44: #{bottleneck_forward.6} parent=0 // pred_region
    _
  $region45: #{bottleneck_forward.6} parent=0 // pred_fallthru
    _
  // Predicated region
  $region46: #{bottleneck_forward.6} parent=0 // pred_check
    _
  $region47: #{bottleneck_forward.6} parent=0 // pred_check_branch
    %996 = sbr.rel (0) target = $region49
  $region48: #{bottleneck_forward.6} parent=0 // pred_region
    _
  $region49: #{bottleneck_forward.6} parent=0 // pred_fallthru
    _
  // Predicated region
  $region50: #{bottleneck_forward.6} parent=0 // pred_check
    _
  $region51: #{bottleneck_forward.6} parent=0 // pred_check_branch
    %998 = sbr.rel (0) target = $region53
  $region52: #{bottleneck_forward.6} parent=0 // pred_region
    _
  $region53: #{bottleneck_forward.6} parent=0 // pred_fallthru
    _

// kernel: bottleneck_forward.5
$region0: #{bottleneck_forward.5}
  #allocation0 [shape = 'u32[]', space=smem, size = 0x4, offset = 0x4, fixed_abs, tag = 'smem constant byte address 0x4 - core index']
  #allocation1 [shape = 'u32[144,128]{1,0:T(1,128)}', space=vmem, size = 0x12000, scoped, tag = 'internal scratch']
  %s0 = inlined_call_operand.vmem [shape: f32[256,1], index: 0, kind: input, shape index: {}]
  %s1 = inlined_call_operand.vmem [shape: f32[256,1], index: 1, kind: input, shape index: {}]
  %s2 = inlined_call_operand.vmem [shape: f32[512,128], index: 2, kind: input, shape index: {}]
  %s3 = inlined_call_operand.vmem [shape: f32[1,128], index: 3, kind: input, shape index: {}]
  %s4 = inlined_call_operand.vmem [shape: f32[1,128], index: 4, kind: input, shape index: {}]
  %s5 = inlined_call_operand.vmem [shape: f32[1,128], index: 5, kind: input, shape index: {}]
  %s6 = inlined_call_operand.vmem [shape: f32[1,128], index: 6, kind: input, shape index: {}]
  %s7 = inlined_call_operand.vmem [shape: f32[9,128,128], index: 7, kind: input, shape index: {}]
  %s8 = inlined_call_operand.vmem [shape: f32[512,128], index: 8, kind: output, shape index: {0}]
  %s9 = inlined_call_operand.vmem [shape: f32[1,128], index: 9, kind: output, shape index: {1}]
  %s10 = inlined_call_operand.vmem [shape: f32[1,128], index: 10, kind: output, shape index: {2}]
  %11 = xla_tuple %s8, %s9, %s10
  %s12 = sld [smem:[#allocation0]]
  $region85: #{bottleneck_forward.5} parent=0
    _
  %s14 = ssub.s32 1, %s12
  %s15 = scalar_select 0, %s14, %s12
  loop: start=0, step=1, limit=4
  $region2: #{bottleneck_forward.5} parent=0 // loop_pre_header
    _
  $region3: #{bottleneck_forward.5} parent=0 // loop_header
    %s17 = sphi 0, %s21
    %p18 = scmp.ge.s32.totalorder %s17, 4
    %s25 = sphi 0, %s25
    %s27 = sphi 0, %s25
    %s28 = sphi 0, %s27
    %s42 = sphi 0, %s28
    %s46 = sphi 0, %s46
    %s48 = sphi 0, %s46
    %s49 = sphi 0, %s48
    %s63 = sphi 0, %s49
    %s69 = sphi 0, %s71
    %s72 = sphi 0, %s69
    %s73 = sphi 0, %s72
    %s89 = sphi 0, %s73
    %s93 = sphi 0, %s93
    %s95 = sphi 0, %s93
    %s96 = sphi 0, %s95
    %s110 = sphi 0, %s96
    %s114 = sphi 0, %s114
    %s116 = sphi 0, %s114
    %s117 = sphi 0, %s116
    %s131 = sphi 0, %s117
    %s135 = sphi 0, %s135
    %s137 = sphi 0, %s135
    %s138 = sphi 0, %s137
    %s152 = sphi 0, %s138
    %s156 = sphi 0, %s156
    %s158 = sphi 0, %s156
    %s159 = sphi 0, %s158
    %s173 = sphi 0, %s159
    %s177 = sphi 0, %s177
    %s179 = sphi 0, %s177
    %s180 = sphi 0, %s179
    %s194 = sphi 0, %s180
    %s200 = sphi 0, %s202
    %s203 = sphi 0, %s200
    %s204 = sphi 0, %s203
    %s220 = sphi 0, %s204
    %s224 = sphi 0, %s224
    %s226 = sphi 0, %s224
    %s227 = sphi 0, %s226
    %s241 = sphi 0, %s227
    %s245 = sphi 0, %s245
    %s247 = sphi 0, %s245
    %s248 = sphi 0, %s247
    %s262 = sphi 0, %s248
  $region4: #{bottleneck_forward.5} parent=0 // loop_header_branch
    %20 = sbr.rel (%p18) target = $region8
  $region5: #{bottleneck_forward.5} parent=0 // loop_body
    %s22 = ssub.s32 %s17, 1
    %s23 = ssub.s32 %s17, 2
    %s24 = sadd.s32 %s17, 1
    %s26 = sadd.s32 %s25, 1
    %p29 = scmp.eq.s32.totalorder %s17, 1
    %p30 = scmp.ne.s32.totalorder %s25, %s27
    %p31 = scmp.eq.s32.totalorder %s17, 0
    %p32 = por %p30, %p31
    %p33 = scmp.ne.s32.totalorder %s25, %s27
    %p34 = scmp.eq.s32.totalorder %s22, 1
    %p35 = por %p33, %p34
    %p36 = scmp.ne.s32.totalorder %s27, %s28
    %p37 = scmp.eq.s32.totalorder %s22, 0
    %p38 = por %p36, %p37
    %p39 = scmp.ne.s32.totalorder %s27, %s28
    %p40 = scmp.eq.s32.totalorder %s23, 1
    %p41 = por %p39, %p40
    %p43 = scmp.ne.s32.totalorder %s28, %s42
    %p44 = scmp.eq.s32.totalorder %s23, 0
    %p45 = por %p43, %p44
    %s47 = sadd.s32 %s46, 1
    %p50 = scmp.eq.s32.totalorder %s17, 1
    %p51 = scmp.ne.s32.totalorder %s46, %s48
    %p52 = scmp.eq.s32.totalorder %s17, 0
    %p53 = por %p51, %p52
    %p54 = scmp.ne.s32.totalorder %s46, %s48
    %p55 = scmp.eq.s32.totalorder %s22, 1
    %p56 = por %p54, %p55
    %p57 = scmp.ne.s32.totalorder %s48, %s49
    %p58 = scmp.eq.s32.totalorder %s22, 0
    %p59 = por %p57, %p58
    %p60 = scmp.ne.s32.totalorder %s48, %s49
    %p61 = scmp.eq.s32.totalorder %s23, 1
    %p62 = por %p60, %p61
    %p64 = scmp.ne.s32.totalorder %s49, %s63
    %p65 = scmp.eq.s32.totalorder %s23, 0
    %p66 = por %p64, %p65
    %s67 = ssub.s32 %s17, %s24
    %p68 = scmp.eq.s32.totalorder %s67, 0
    %s70 = sadd.s32 %s69, 1
    %s71 = scalar_select %p68, %s69, %s70
    %p74 = pneg %p68
    %p75 = scmp.eq.s32.totalorder %s17, 1
    %p76 = por %p74, %p75
    %p77 = scmp.ne.s32.totalorder %s69, %s72
    %p78 = scmp.eq.s32.totalorder %s17, 0
    %p79 = por %p77, %p78
    %p80 = scmp.ne.s32.totalorder %s69, %s72
    %p81 = scmp.eq.s32.totalorder %s22, 1
    %p82 = por %p80, %p81
    %p83 = scmp.ne.s32.totalorder %s72, %s73
    %p84 = scmp.eq.s32.totalorder %s22, 0
    %p85 = por %p83, %p84
    %p86 = scmp.ne.s32.totalorder %s72, %s73
    %p87 = scmp.eq.s32.totalorder %s23, 1
    %p88 = por %p86, %p87
    %p90 = scmp.ne.s32.totalorder %s73, %s89
    %p91 = scmp.eq.s32.totalorder %s23, 0
    %p92 = por %p90, %p91
    %s94 = sadd.s32 %s93, 1
    %p97 = scmp.eq.s32.totalorder %s17, 1
    %p98 = scmp.ne.s32.totalorder %s93, %s95
    %p99 = scmp.eq.s32.totalorder %s17, 0
    %p100 = por %p98, %p99
    %p101 = scmp.ne.s32.totalorder %s93, %s95
    %p102 = scmp.eq.s32.totalorder %s22, 1
    %p103 = por %p101, %p102
    %p104 = scmp.ne.s32.totalorder %s95, %s96
    %p105 = scmp.eq.s32.totalorder %s22, 0
    %p106 = por %p104, %p105
    %p107 = scmp.ne.s32.totalorder %s95, %s96
    %p108 = scmp.eq.s32.totalorder %s23, 1
    %p109 = por %p107, %p108
    %p111 = scmp.ne.s32.totalorder %s96, %s110
    %p112 = scmp.eq.s32.totalorder %s23, 0
    %p113 = por %p111, %p112
    %s115 = sadd.s32 %s114, 1
    %p118 = scmp.eq.s32.totalorder %s17, 1
    %p119 = scmp.ne.s32.totalorder %s114, %s116
    %p120 = scmp.eq.s32.totalorder %s17, 0
    %p121 = por %p119, %p120
    %p122 = scmp.ne.s32.totalorder %s114, %s116
    %p123 = scmp.eq.s32.totalorder %s22, 1
    %p124 = por %p122, %p123
    %p125 = scmp.ne.s32.totalorder %s116, %s117
    %p126 = scmp.eq.s32.totalorder %s22, 0
    %p127 = por %p125, %p126
    %p128 = scmp.ne.s32.totalorder %s116, %s117
    %p129 = scmp.eq.s32.totalorder %s23, 1
    %p130 = por %p128, %p129
    %p132 = scmp.ne.s32.totalorder %s117, %s131
    %p133 = scmp.eq.s32.totalorder %s23, 0
    %p134 = por %p132, %p133
    %s136 = sadd.s32 %s135, 1
    %p139 = scmp.eq.s32.totalorder %s17, 1
    %p140 = scmp.ne.s32.totalorder %s135, %s137
    %p141 = scmp.eq.s32.totalorder %s17, 0
    %p142 = por %p140, %p141
    %p143 = scmp.ne.s32.totalorder %s135, %s137
    %p144 = scmp.eq.s32.totalorder %s22, 1
    %p145 = por %p143, %p144
    %p146 = scmp.ne.s32.totalorder %s137, %s138
    %p147 = scmp.eq.s32.totalorder %s22, 0
    %p148 = por %p146, %p147
    %p149 = scmp.ne.s32.totalorder %s137, %s138
    %p150 = scmp.eq.s32.totalorder %s23, 1
    %p151 = por %p149, %p150
    %p153 = scmp.ne.s32.totalorder %s138, %s152
    %p154 = scmp.eq.s32.totalorder %s23, 0
    %p155 = por %p153, %p154
    %s157 = sadd.s32 %s156, 1
    %p160 = scmp.eq.s32.totalorder %s17, 1
    %p161 = scmp.ne.s32.totalorder %s156, %s158
    %p162 = scmp.eq.s32.totalorder %s17, 0
    %p163 = por %p161, %p162
    %p164 = scmp.ne.s32.totalorder %s156, %s158
    %p165 = scmp.eq.s32.totalorder %s22, 1
    %p166 = por %p164, %p165
    %p167 = scmp.ne.s32.totalorder %s158, %s159
    %p168 = scmp.eq.s32.totalorder %s22, 0
    %p169 = por %p167, %p168
    %p170 = scmp.ne.s32.totalorder %s158, %s159
    %p171 = scmp.eq.s32.totalorder %s23, 1
    %p172 = por %p170, %p171
    %p174 = scmp.ne.s32.totalorder %s159, %s173
    %p175 = scmp.eq.s32.totalorder %s23, 0
    %p176 = por %p174, %p175
    %s178 = sadd.s32 %s177, 1
    %p181 = scmp.eq.s32.totalorder %s17, 1
    %p182 = scmp.ne.s32.totalorder %s177, %s179
    %p183 = scmp.eq.s32.totalorder %s17, 0
    %p184 = por %p182, %p183
    %p185 = scmp.ne.s32.totalorder %s177, %s179
    %p186 = scmp.eq.s32.totalorder %s22, 1
    %p187 = por %p185, %p186
    %p188 = scmp.ne.s32.totalorder %s179, %s180
    %p189 = scmp.eq.s32.totalorder %s22, 0
    %p190 = por %p188, %p189
    %p191 = scmp.ne.s32.totalorder %s179, %s180
    %p192 = scmp.eq.s32.totalorder %s23, 1
    %p193 = por %p191, %p192
    %p195 = scmp.ne.s32.totalorder %s180, %s194
    %p196 = scmp.eq.s32.totalorder %s23, 0
    %p197 = por %p195, %p196
    %s198 = ssub.s32 %s17, %s24
    %p199 = scmp.eq.s32.totalorder %s198, 0
    %s201 = sadd.s32 %s200, 1
    %s202 = scalar_select %p199, %s200, %s201
    %p205 = pneg %p199
    %p206 = scmp.eq.s32.totalorder %s17, 1
    %p207 = por %p205, %p206
    %p208 = scmp.ne.s32.totalorder %s200, %s203
    %p209 = scmp.eq.s32.totalorder %s17, 0
    %p210 = por %p208, %p209
    %p211 = scmp.ne.s32.totalorder %s200, %s203
    %p212 = scmp.eq.s32.totalorder %s22, 1
    %p213 = por %p211, %p212
    %p214 = scmp.ne.s32.totalorder %s203, %s204
    %p215 = scmp.eq.s32.totalorder %s22, 0
    %p216 = por %p214, %p215
    %p217 = scmp.ne.s32.totalorder %s203, %s204
    %p218 = scmp.eq.s32.totalorder %s23, 1
    %p219 = por %p217, %p218
    %p221 = scmp.ne.s32.totalorder %s204, %s220
    %p222 = scmp.eq.s32.totalorder %s23, 0
    %p223 = por %p221, %p222
    %s225 = sadd.s32 %s224, 1
    %p228 = scmp.eq.s32.totalorder %s17, 1
    %p229 = scmp.ne.s32.totalorder %s224, %s226
    %p230 = scmp.eq.s32.totalorder %s17, 0
    %p231 = por %p229, %p230
    %p232 = scmp.ne.s32.totalorder %s224, %s226
    %p233 = scmp.eq.s32.totalorder %s22, 1
    %p234 = por %p232, %p233
    %p235 = scmp.ne.s32.totalorder %s226, %s227
    %p236 = scmp.eq.s32.totalorder %s22, 0
    %p237 = por %p235, %p236
    %p238 = scmp.ne.s32.totalorder %s226, %s227
    %p239 = scmp.eq.s32.totalorder %s23, 1
    %p240 = por %p238, %p239
    %p242 = scmp.ne.s32.totalorder %s227, %s241
    %p243 = scmp.eq.s32.totalorder %s23, 0
    %p244 = por %p242, %p243
    %s246 = sadd.s32 %s245, 1
    %p249 = scmp.eq.s32.totalorder %s17, 1
    %p250 = scmp.ne.s32.totalorder %s245, %s247
    %p251 = scmp.eq.s32.totalorder %s17, 0
    %p252 = por %p250, %p251
    %p253 = scmp.ne.s32.totalorder %s245, %s247
    %p254 = scmp.eq.s32.totalorder %s22, 1
    %p255 = por %p253, %p254
    %p256 = scmp.ne.s32.totalorder %s247, %s248
    %p257 = scmp.eq.s32.totalorder %s22, 0
    %p258 = por %p256, %p257
    %p259 = scmp.ne.s32.totalorder %s247, %s248
    %p260 = scmp.eq.s32.totalorder %s23, 1
    %p261 = por %p259, %p260
    %p263 = scmp.ne.s32.totalorder %s248, %s262
    %p264 = scmp.eq.s32.totalorder %s23, 0
    %p265 = por %p263, %p264
    %p266 = scmp.le.s32.totalorder 1, %s17
    %p267 = scmp.lt.s32.totalorder %s17, 3
    %p268 = pnand %p266, %p267
    %p269 = pneg %p268
    // Predicated region
    $region9: #{bottleneck_forward.5} parent=5 // pred_check
      _
    $region10: #{bottleneck_forward.5} parent=5 // pred_check_branch
      %271 = sbr.rel (%p268) target = $region12
    $region11: #{bottleneck_forward.5} parent=5 // pred_region
      %s272 = ssub.s32 %s17, 1
      // Predicated region
      $region13: #{bottleneck_forward.5} parent=11 // pred_check
        %p273 = pneg %p38
      $region14: #{bottleneck_forward.5} parent=11 // pred_check_branch
        %275 = sbr.rel (%p273) target = $region16
      $region15: #{bottleneck_forward.5} parent=11 // pred_region
        _
      $region16: #{bottleneck_forward.5} parent=11 // pred_fallthru
        _
      // Predicated region
      $region17: #{bottleneck_forward.5} parent=11 // pred_check
        %p276 = pneg %p59
      $region18: #{bottleneck_forward.5} parent=11 // pred_check_branch
        %278 = sbr.rel (%p276) target = $region20
      $region19: #{bottleneck_forward.5} parent=11 // pred_region
        _
      $region20: #{bottleneck_forward.5} parent=11 // pred_fallthru
        _
      // Predicated region
      $region21: #{bottleneck_forward.5} parent=11 // pred_check
        %p279 = pneg %p106
      $region22: #{bottleneck_forward.5} parent=11 // pred_check_branch
        %281 = sbr.rel (%p279) target = $region24
      $region23: #{bottleneck_forward.5} parent=11 // pred_region
        _
      $region24: #{bottleneck_forward.5} parent=11 // pred_fallthru
        _
      // Predicated region
      $region25: #{bottleneck_forward.5} parent=11 // pred_check
        %p282 = pneg %p127
      $region26: #{bottleneck_forward.5} parent=11 // pred_check_branch
        %284 = sbr.rel (%p282) target = $region28
      $region27: #{bottleneck_forward.5} parent=11 // pred_region
        _
      $region28: #{bottleneck_forward.5} parent=11 // pred_fallthru
        _
      // Predicated region
      $region29: #{bottleneck_forward.5} parent=11 // pred_check
        %p285 = pneg %p148
      $region30: #{bottleneck_forward.5} parent=11 // pred_check_branch
        %287 = sbr.rel (%p285) target = $region32
      $region31: #{bottleneck_forward.5} parent=11 // pred_region
        _
      $region32: #{bottleneck_forward.5} parent=11 // pred_fallthru
        _
      // Predicated region
      $region33: #{bottleneck_forward.5} parent=11 // pred_check
        %p288 = pneg %p169
      $region34: #{bottleneck_forward.5} parent=11 // pred_check_branch
        %290 = sbr.rel (%p288) target = $region36
      $region35: #{bottleneck_forward.5} parent=11 // pred_region
        _
      $region36: #{bottleneck_forward.5} parent=11 // pred_fallthru
        _
      // Predicated region
      $region37: #{bottleneck_forward.5} parent=11 // pred_check
        %p291 = pneg %p190
      $region38: #{bottleneck_forward.5} parent=11 // pred_check_branch
        %293 = sbr.rel (%p291) target = $region40
      $region39: #{bottleneck_forward.5} parent=11 // pred_region
        _
      $region40: #{bottleneck_forward.5} parent=11 // pred_fallthru
        _
    $region12: #{bottleneck_forward.5} parent=5 // pred_fallthru
      _
    %p294 = scmp.lt.s32.totalorder %s17, 2
    // Predicated region
    $region41: #{bottleneck_forward.5} parent=5 // pred_check
      %p295 = pneg %p294
    $region42: #{bottleneck_forward.5} parent=5 // pred_check_branch
      %297 = sbr.rel (%p295) target = $region44
    $region43: #{bottleneck_forward.5} parent=5 // pred_region
      // Predicated region
      $region45: #{bottleneck_forward.5} parent=43 // pred_check
        %p298 = pneg %p79
      $region46: #{bottleneck_forward.5} parent=43 // pred_check_branch
        %300 = sbr.rel (%p298) target = $region48
      $region47: #{bottleneck_forward.5} parent=43 // pred_region
        %s301 = smul.u32 32, %s17
        %p302 = scmp.lt.s32.totalorder %s301, 63
        %s303 = scalar_select %p302, %s301, 63
        %s304 = smul.addr %s303, 8
        %s305 = scalar_lea.vmem %s2, %s304
        %s306 = smul.u32 32, %s17
      $region48: #{bottleneck_forward.5} parent=43 // pred_fallthru
        _
    $region44: #{bottleneck_forward.5} parent=5 // pred_fallthru
      _
    %p307 = scmp.le.s32.totalorder 1, %s17
    %p308 = scmp.lt.s32.totalorder %s17, 3
    %p309 = pnand %p307, %p308
    %p310 = pneg %p309
    // Predicated region
    $region49: #{bottleneck_forward.5} parent=5 // pred_check
      _
    $region50: #{bottleneck_forward.5} parent=5 // pred_check_branch
      %312 = sbr.rel (%p309) target = $region52
    $region51: #{bottleneck_forward.5} parent=5 // pred_region
      %s313 = ssub.s32 %s17, 1
      %p314 = pneg %p38
      %p315 = pneg %p35
      %p316 = pneg %p59
      %p317 = pneg %p56
      %s318 = smul.u32 32, %s22
      %p319 = scmp.lt.s32.totalorder %s318, 63
      %s320 = scalar_select %p319, %s318, 63
      %s321 = smul.addr %s320, 8
      %s322 = scalar_lea.vmem %s2, %s321
      %p323 = pneg %p85
      %p324 = pneg %p82
      %p325 = pneg %p106
      %p326 = pneg %p103
      %p327 = pneg %p127
      %p328 = pneg %p124
      %p329 = pneg %p148
      %p330 = pneg %p145
      %p331 = pneg %p169
      %p332 = pneg %p166
      %p333 = pneg %p190
      %p334 = pneg %p187
      %p335 = pneg %p216
      %p336 = pneg %p213
      %s337 = smul.u32 32, %s22
      %p338 = scmp.lt.s32.totalorder %s337, 63
      %s339 = scalar_select %p338, %s337, 63
      %s340 = smul.addr %s339, 8
      %s341 = scalar_lea.vmem %s8, %s340
      %p342 = pneg %p237
      %p343 = pneg %p234
      %p344 = pneg %p258
      %p345 = pneg %p255
      %s346 = smul.u32 32, %s22
      %p347 = scmp.lt.s32.totalorder %s346, 63
      %s348 = scalar_select %p347, %s346, 63
      %s349 = smul.addr %s348, 8
      %s350 = scalar_lea.vmem %s2, %s349
      %s351 = smul.u32 32, %s22
      %s352 = smul.u32 32, %s22
      %p353 = scmp.lt.s32.totalorder %s352, 63
      %s354 = scalar_select %p353, %s352, 63
      %s355 = smul.addr %s354, 8
      %s356 = scalar_lea.vmem %s8, %s355
      %s357 = smul.u32 32, %s22
      %p358 = scmp.eq.s32.totalorder %s22, 0
      // Predicated region
      $region53: #{bottleneck_forward.5} parent=51 // pred_check
        %p359 = pneg %p358
      $region54: #{bottleneck_forward.5} parent=51 // pred_check_branch
        %361 = sbr.rel (%p359) target = $region56
      $region55: #{bottleneck_forward.5} parent=51 // pred_region
        %362 = vst [vmem:[%s9] sm:$0x1] 0.0
        %363 = vst [vmem:[%s10] sm:$0x1] 0.0
      $region56: #{bottleneck_forward.5} parent=51 // pred_fallthru
        _
      %v364 = vld [vmem:[%s3] sm:$0x1]
      %v365 = vld [vmem:[%s4] sm:$0x1]
      %v366 = vld [vmem:[%s5] sm:$0x1]
      %v367 = vld [vmem:[%s6] sm:$0x1]
      %v368 = vmul.f32 %v364, 0.001953125
      %v369 = vmul.f32 %v365, 0.001953125
      %v370 = vmul.f32 %v368, %v368
      %v371 = vsub.f32 %v369, %v370
      %v372 = vmax.f32 %v371, 0.0
      %v373 = vadd.f32 %v372, 1e-05
      %v374 = vrsqrt.pop %v373
      %v375 = vmul.f32 %v366, %v374
      %v376 = vmul.f32 %v368, %v375
      %v377 = vsub.f32 %v367, %v376
      %v378 = vld [vmem:[%s350] sm:$0xff]
      %v379 = vld [vmem:[%s350 + $0x8] sm:$0xff]
      %v380 = vld [vmem:[%s350 + $0x10] sm:$0xff]
      %v381 = vld [vmem:[%s350 + $0x18] sm:$0xff]
      %v382 = vld [vmem:[%s350 + $0x20] sm:$0xff]
      %v383 = vld [vmem:[%s350 + $0x28] sm:$0xff]
      %v384 = vld [vmem:[%s350 + $0x30] sm:$0xff]
      %v385 = vld [vmem:[%s350 + $0x38] sm:$0xff]
      %v386 = vld [vmem:[%s350 + $0x40] sm:$0xff]
      %v387 = vld [vmem:[%s350 + $0x48] sm:$0xff]
      %v388 = vld [vmem:[%s350 + $0x50] sm:$0xff]
      %v389 = vld [vmem:[%s350 + $0x58] sm:$0xff]
      %v390 = vld [vmem:[%s350 + $0x60] sm:$0xff]
      %v391 = vld [vmem:[%s350 + $0x68] sm:$0xff]
      %v392 = vld [vmem:[%s350 + $0x70] sm:$0xff]
      %v393 = vld [vmem:[%s350 + $0x78] sm:$0xff]
      %v394 = vld [vmem:[%s350 + $0x80] sm:$0xff]
      %v395 = vld [vmem:[%s350 + $0x88] sm:$0xff]
      %v396 = vld [vmem:[%s350 + $0x90] sm:$0xff]
      %v397 = vld [vmem:[%s350 + $0x98] sm:$0xff]
      %v398 = vld [vmem:[%s350 + $0xa0] sm:$0xff]
      %v399 = vld [vmem:[%s350 + $0xa8] sm:$0xff]
      %v400 = vld [vmem:[%s350 + $0xb0] sm:$0xff]
      %v401 = vld [vmem:[%s350 + $0xb8] sm:$0xff]
      %v402 = vld [vmem:[%s350 + $0xc0] sm:$0xff]
      %v403 = vld [vmem:[%s350 + $0xc8] sm:$0xff]
      %v404 = vld [vmem:[%s350 + $0xd0] sm:$0xff]
      %v405 = vld [vmem:[%s350 + $0xd8] sm:$0xff]
      %v406 = vld [vmem:[%s350 + $0xe0] sm:$0xff]
      %v407 = vld [vmem:[%s350 + $0xe8] sm:$0xff]
      %v408 = vld [vmem:[%s350 + $0xf0] sm:$0xff]
      %v409 = vld [vmem:[%s350 + $0xf8] sm:$0xff]
      %v411 = vlaneseq
      %v412 = vshrl.u32 %v411, 7
      %v413 = vsub.s32 0, %v412
      %v414 = vrot.slane %v375, %v413
      %v416 = vmul.f32 %v378, %v414
      %v417 = vmul.f32 %v379, %v414
      %v418 = vmul.f32 %v380, %v414
      %v419 = vmul.f32 %v381, %v414
      %v420 = vmul.f32 %v382, %v414
      %v421 = vmul.f32 %v383, %v414
      %v422 = vmul.f32 %v384, %v414
      %v423 = vmul.f32 %v385, %v414
      %v424 = vmul.f32 %v386, %v414
      %v425 = vmul.f32 %v387, %v414
      %v426 = vmul.f32 %v388, %v414
      %v427 = vmul.f32 %v389, %v414
      %v428 = vmul.f32 %v390, %v414
      %v429 = vmul.f32 %v391, %v414
      %v430 = vmul.f32 %v392, %v414
      %v431 = vmul.f32 %v393, %v414
      %v432 = vmul.f32 %v394, %v414
      %v433 = vmul.f32 %v395, %v414
      %v434 = vmul.f32 %v396, %v414
      %v435 = vmul.f32 %v397, %v414
      %v436 = vmul.f32 %v398, %v414
      %v437 = vmul.f32 %v399, %v414
      %v438 = vmul.f32 %v400, %v414
      %v439 = vmul.f32 %v401, %v414
      %v440 = vmul.f32 %v402, %v414
      %v441 = vmul.f32 %v403, %v414
      %v442 = vmul.f32 %v404, %v414
      %v443 = vmul.f32 %v405, %v414
      %v444 = vmul.f32 %v406, %v414
      %v445 = vmul.f32 %v407, %v414
      %v446 = vmul.f32 %v408, %v414
      %v447 = vmul.f32 %v409, %v414
      %v449 = vlaneseq
      %v450 = vshrl.u32 %v449, 7
      %v451 = vsub.s32 0, %v450
      %v452 = vrot.slane %v377, %v451
      %v454 = vadd.f32 %v416, %v452
      %v455 = vadd.f32 %v417, %v452
      %v456 = vadd.f32 %v418, %v452
      %v457 = vadd.f32 %v419, %v452
      %v458 = vadd.f32 %v420, %v452
      %v459 = vadd.f32 %v421, %v452
      %v460 = vadd.f32 %v422, %v452
      %v461 = vadd.f32 %v423, %v452
      %v462 = vadd.f32 %v424, %v452
      %v463 = vadd.f32 %v425, %v452
      %v464 = vadd.f32 %v426, %v452
      %v465 = vadd.f32 %v427, %v452
      %v466 = vadd.f32 %v428, %v452
      %v467 = vadd.f32 %v429, %v452
      %v468 = vadd.f32 %v430, %v452
      %v469 = vadd.f32 %v431, %v452
      %v470 = vadd.f32 %v432, %v452
      %v471 = vadd.f32 %v433, %v452
      %v472 = vadd.f32 %v434, %v452
      %v473 = vadd.f32 %v435, %v452
      %v474 = vadd.f32 %v436, %v452
      %v475 = vadd.f32 %v437, %v452
      %v476 = vadd.f32 %v438, %v452
      %v477 = vadd.f32 %v439, %v452
      %v478 = vadd.f32 %v440, %v452
      %v479 = vadd.f32 %v441, %v452
      %v480 = vadd.f32 %v442, %v452
      %v481 = vadd.f32 %v443, %v452
      %v482 = vadd.f32 %v444, %v452
      %v483 = vadd.f32 %v445, %v452
      %v484 = vadd.f32 %v446, %v452
      %v485 = vadd.f32 %v447, %v452
      %v486 = vmax.f32 %v454, 0.0
      %v487 = vmax.f32 %v455, 0.0
      %v488 = vmax.f32 %v456, 0.0
      %v489 = vmax.f32 %v457, 0.0
      %v490 = vmax.f32 %v458, 0.0
      %v491 = vmax.f32 %v459, 0.0
      %v492 = vmax.f32 %v460, 0.0
      %v493 = vmax.f32 %v461, 0.0
      %v494 = vmax.f32 %v462, 0.0
      %v495 = vmax.f32 %v463, 0.0
      %v496 = vmax.f32 %v464, 0.0
      %v497 = vmax.f32 %v465, 0.0
      %v498 = vmax.f32 %v466, 0.0
      %v499 = vmax.f32 %v467, 0.0
      %v500 = vmax.f32 %v468, 0.0
      %v501 = vmax.f32 %v469, 0.0
      %v502 = vmax.f32 %v470, 0.0
      %v503 = vmax.f32 %v471, 0.0
      %v504 = vmax.f32 %v472, 0.0
      %v505 = vmax.f32 %v473, 0.0
      %v506 = vmax.f32 %v474, 0.0
      %v507 = vmax.f32 %v475, 0.0
      %v508 = vmax.f32 %v476, 0.0
      %v509 = vmax.f32 %v477, 0.0
      %v510 = vmax.f32 %v478, 0.0
      %v511 = vmax.f32 %v479, 0.0
      %v512 = vmax.f32 %v480, 0.0
      %v513 = vmax.f32 %v481, 0.0
      %v514 = vmax.f32 %v482, 0.0
      %v515 = vmax.f32 %v483, 0.0
      %v516 = vmax.f32 %v484, 0.0
      %v517 = vmax.f32 %v485, 0.0
      %v518 = vld [vmem:[%s0] sm:$0xff]
      %v519 = vld [vmem:[%s0 + $0x8] sm:$0xff]
      %v520 = vld [vmem:[%s0 + $0x10] sm:$0xff]
      %v521 = vld [vmem:[%s0 + $0x18] sm:$0xff]
      %v522 = vld [vmem:[%s0 + $0x20] sm:$0xff]
      %v523 = vld [vmem:[%s0 + $0x28] sm:$0xff]
      %v524 = vld [vmem:[%s0 + $0x30] sm:$0xff]
      %v525 = vld [vmem:[%s0 + $0x38] sm:$0xff]
      %v526 = vld [vmem:[%s0 + $0x40] sm:$0xff]
      %v527 = vld [vmem:[%s0 + $0x48] sm:$0xff]
      %v528 = vld [vmem:[%s0 + $0x50] sm:$0xff]
      %v529 = vld [vmem:[%s0 + $0x58] sm:$0xff]
      %v530 = vld [vmem:[%s0 + $0x60] sm:$0xff]
      %v531 = vld [vmem:[%s0 + $0x68] sm:$0xff]
      %v532 = vld [vmem:[%s0 + $0x70] sm:$0xff]
      %v533 = vld [vmem:[%s0 + $0x78] sm:$0xff]
      %v534 = vld [vmem:[%s0 + $0x80] sm:$0xff]
      %v535 = vld [vmem:[%s0 + $0x88] sm:$0xff]
      %v536 = vld [vmem:[%s0 + $0x90] sm:$0xff]
      %v537 = vld [vmem:[%s0 + $0x98] sm:$0xff]
      %v538 = vld [vmem:[%s0 + $0xa0] sm:$0xff]
      %v539 = vld [vmem:[%s0 + $0xa8] sm:$0xff]
      %v540 = vld [vmem:[%s0 + $0xb0] sm:$0xff]
      %v541 = vld [vmem:[%s0 + $0xb8] sm:$0xff]
      %v542 = vld [vmem:[%s0 + $0xc0] sm:$0xff]
      %v543 = vld [vmem:[%s0 + $0xc8] sm:$0xff]
      %v544 = vld [vmem:[%s0 + $0xd0] sm:$0xff]
      %v545 = vld [vmem:[%s0 + $0xd8] sm:$0xff]
      %v546 = vld [vmem:[%s0 + $0xe0] sm:$0xff]
      %v547 = vld [vmem:[%s0 + $0xe8] sm:$0xff]
      %v548 = vld [vmem:[%s0 + $0xf0] sm:$0xff]
      %v549 = vld [vmem:[%s0 + $0xf8] sm:$0xff]
      %551 = vset.pattern.permute.xlu0 0
      %552 = vperm.xlu0 %551, %v518
      %v553 = vpop.permute.xlu0 %552
      %555 = vset.pattern.permute.xlu0 0
      %556 = vperm.xlu0 %555, %v519
      %v557 = vpop.permute.xlu0 %556
      %559 = vset.pattern.permute.xlu0 0
      %560 = vperm.xlu0 %559, %v520
      %v561 = vpop.permute.xlu0 %560
      %563 = vset.pattern.permute.xlu0 0
      %564 = vperm.xlu0 %563, %v521
      %v565 = vpop.permute.xlu0 %564
      %567 = vset.pattern.permute.xlu0 0
      %568 = vperm.xlu0 %567, %v522
      %v569 = vpop.permute.xlu0 %568
      %571 = vset.pattern.permute.xlu0 0
      %572 = vperm.xlu0 %571, %v523
      %v573 = vpop.permute.xlu0 %572
      %575 = vset.pattern.permute.xlu0 0
      %576 = vperm.xlu0 %575, %v524
      %v577 = vpop.permute.xlu0 %576
      %579 = vset.pattern.permute.xlu0 0
      %580 = vperm.xlu0 %579, %v525
      %v581 = vpop.permute.xlu0 %580
      %583 = vset.pattern.permute.xlu0 0
      %584 = vperm.xlu0 %583, %v526
      %v585 = vpop.permute.xlu0 %584
      %587 = vset.pattern.permute.xlu0 0
      %588 = vperm.xlu0 %587, %v527
      %v589 = vpop.permute.xlu0 %588
      %591 = vset.pattern.permute.xlu0 0
      %592 = vperm.xlu0 %591, %v528
      %v593 = vpop.permute.xlu0 %592
      %595 = vset.pattern.permute.xlu0 0
      %596 = vperm.xlu0 %595, %v529
      %v597 = vpop.permute.xlu0 %596
      %599 = vset.pattern.permute.xlu0 0
      %600 = vperm.xlu0 %599, %v530
      %v601 = vpop.permute.xlu0 %600
      %603 = vset.pattern.permute.xlu0 0
      %604 = vperm.xlu0 %603, %v531
      %v605 = vpop.permute.xlu0 %604
      %607 = vset.pattern.permute.xlu0 0
      %608 = vperm.xlu0 %607, %v532
      %v609 = vpop.permute.xlu0 %608
      %611 = vset.pattern.permute.xlu0 0
      %612 = vperm.xlu0 %611, %v533
      %v613 = vpop.permute.xlu0 %612
      %615 = vset.pattern.permute.xlu0 0
      %616 = vperm.xlu0 %615, %v534
      %v617 = vpop.permute.xlu0 %616
      %619 = vset.pattern.permute.xlu0 0
      %620 = vperm.xlu0 %619, %v535
      %v621 = vpop.permute.xlu0 %620
      %623 = vset.pattern.permute.xlu0 0
      %624 = vperm.xlu0 %623, %v536
      %v625 = vpop.permute.xlu0 %624
      %627 = vset.pattern.permute.xlu0 0
      %628 = vperm.xlu0 %627, %v537
      %v629 = vpop.permute.xlu0 %628
      %631 = vset.pattern.permute.xlu0 0
      %632 = vperm.xlu0 %631, %v538
      %v633 = vpop.permute.xlu0 %632
      %635 = vset.pattern.permute.xlu0 0
      %636 = vperm.xlu0 %635, %v539
      %v637 = vpop.permute.xlu0 %636
      %639 = vset.pattern.permute.xlu0 0
      %640 = vperm.xlu0 %639, %v540
      %v641 = vpop.permute.xlu0 %640
      %643 = vset.pattern.permute.xlu0 0
      %644 = vperm.xlu0 %643, %v541
      %v645 = vpop.permute.xlu0 %644
      %647 = vset.pattern.permute.xlu0 0
      %648 = vperm.xlu0 %647, %v542
      %v649 = vpop.permute.xlu0 %648
      %651 = vset.pattern.permute.xlu0 0
      %652 = vperm.xlu0 %651, %v543
      %v653 = vpop.permute.xlu0 %652
      %655 = vset.pattern.permute.xlu0 0
      %656 = vperm.xlu0 %655, %v544
      %v657 = vpop.permute.xlu0 %656
      %659 = vset.pattern.permute.xlu0 0
      %660 = vperm.xlu0 %659, %v545
      %v661 = vpop.permute.xlu0 %660
      %663 = vset.pattern.permute.xlu0 0
      %664 = vperm.xlu0 %663, %v546
      %v665 = vpop.permute.xlu0 %664
      %667 = vset.pattern.permute.xlu0 0
      %668 = vperm.xlu0 %667, %v547
      %v669 = vpop.permute.xlu0 %668
      %671 = vset.pattern.permute.xlu0 0
      %672 = vperm.xlu0 %671, %v548
      %v673 = vpop.permute.xlu0 %672
      %675 = vset.pattern.permute.xlu0 0
      %676 = vperm.xlu0 %675, %v549
      %v677 = vpop.permute.xlu0 %676
      %vm678 = vcmask 1046528
      %v679 = vrot.slane %v553, 1
      %v680 = vrot.slane %v557, 1
      %v681 = vsel %vm678, %v679, %v680
      %v682 = vrot.slane %v561, 1
      %v683 = vsel %vm678, %v680, %v682
      %v684 = vrot.slane %v565, 1
      %v685 = vsel %vm678, %v682, %v684
      %v686 = vrot.slane %v569, 1
      %v687 = vsel %vm678, %v684, %v686
      %v688 = vrot.slane %v573, 1
      %v689 = vsel %vm678, %v686, %v688
      %v690 = vrot.slane %v577, 1
      %v691 = vsel %vm678, %v688, %v690
      %v692 = vrot.slane %v581, 1
      %v693 = vsel %vm678, %v690, %v692
      %v694 = vrot.slane %v585, 1
      %v695 = vsel %vm678, %v692, %v694
      %v696 = vrot.slane %v589, 1
      %v697 = vsel %vm678, %v694, %v696
      %v698 = vrot.slane %v593, 1
      %v699 = vsel %vm678, %v696, %v698
      %v700 = vrot.slane %v597, 1
      %v701 = vsel %vm678, %v698, %v700
      %v702 = vrot.slane %v601, 1
      %v703 = vsel %vm678, %v700, %v702
      %v704 = vrot.slane %v605, 1
      %v705 = vsel %vm678, %v702, %v704
      %v706 = vrot.slane %v609, 1
      %v707 = vsel %vm678, %v704, %v706
      %v708 = vrot.slane %v613, 1
      %v709 = vsel %vm678, %v706, %v708
      %v710 = vrot.slane %v617, 1
      %v711 = vsel %vm678, %v708, %v710
      %v712 = vrot.slane %v621, 1
      %v713 = vsel %vm678, %v710, %v712
      %v714 = vrot.slane %v625, 1
      %v715 = vsel %vm678, %v712, %v714
      %v716 = vrot.slane %v629, 1
      %v717 = vsel %vm678, %v714, %v716
      %v718 = vrot.slane %v633, 1
      %v719 = vsel %vm678, %v716, %v718
      %v720 = vrot.slane %v637, 1
      %v721 = vsel %vm678, %v718, %v720
      %v722 = vrot.slane %v641, 1
      %v723 = vsel %vm678, %v720, %v722
      %v724 = vrot.slane %v645, 1
      %v725 = vsel %vm678, %v722, %v724
      %v726 = vrot.slane %v649, 1
      %v727 = vsel %vm678, %v724, %v726
      %v728 = vrot.slane %v653, 1
      %v729 = vsel %vm678, %v726, %v728
      %v730 = vrot.slane %v657, 1
      %v731 = vsel %vm678, %v728, %v730
      %v732 = vrot.slane %v661, 1
      %v733 = vsel %vm678, %v730, %v732
      %v734 = vrot.slane %v665, 1
      %v735 = vsel %vm678, %v732, %v734
      %v736 = vrot.slane %v669, 1
      %v737 = vsel %vm678, %v734, %v736
      %v738 = vrot.slane %v673, 1
      %v739 = vsel %vm678, %v736, %v738
      %v740 = vrot.slane %v677, 1
      %v741 = vsel %vm678, %v738, %v740
      %v775 = vmul.f32 %v679, 0.0
      %v776 = vmul.f32 %v681, 0.0
      %v777 = vmul.f32 %v683, 0.0
      %v778 = vmul.f32 %v486, %v685
      %v779 = vmul.f32 %v487, %v687
      %v780 = vmul.f32 %v488, %v689
      %v781 = vmul.f32 %v489, %v691
      %v782 = vmul.f32 %v490, %v693
      %v783 = vmul.f32 %v491, %v695
      %v784 = vmul.f32 %v492, %v697
      %v785 = vmul.f32 %v493, %v699
      %v786 = vmul.f32 %v494, %v701
      %v787 = vmul.f32 %v495, %v703
      %v788 = vmul.f32 %v496, %v705
      %v789 = vmul.f32 %v497, %v707
      %v790 = vmul.f32 %v498, %v709
      %v791 = vmul.f32 %v499, %v711
      %v792 = vmul.f32 %v500, %v713
      %v793 = vmul.f32 %v501, %v715
      %v794 = vmul.f32 %v502, %v717
      %v795 = vmul.f32 %v503, %v719
      %v796 = vmul.f32 %v504, %v721
      %v797 = vmul.f32 %v505, %v723
      %v798 = vmul.f32 %v506, %v725
      %v799 = vmul.f32 %v507, %v727
      %v800 = vmul.f32 %v508, %v729
      %v801 = vmul.f32 %v509, %v731
      %v802 = vmul.f32 %v510, %v733
      %v803 = vmul.f32 %v511, %v735
      %v804 = vmul.f32 %v512, %v737
      %v805 = vmul.f32 %v513, %v739
      %v806 = vmul.f32 %v514, %v741
      %v807 = vmul.f32 %v515, %v740
      %v808 = vld [vmem:[%s7] sm:$0xff]
      %v809 = vld [vmem:[%s7 + $0x8] sm:$0xff]
      %v810 = vld [vmem:[%s7 + $0x10] sm:$0xff]
      %v811 = vld [vmem:[%s7 + $0x18] sm:$0xff]
      %v812 = vld [vmem:[%s7 + $0x20] sm:$0xff]
      %v813 = vld [vmem:[%s7 + $0x28] sm:$0xff]
      %v814 = vld [vmem:[%s7 + $0x30] sm:$0xff]
      %v815 = vld [vmem:[%s7 + $0x38] sm:$0xff]
      %v816 = vld [vmem:[%s7 + $0x40] sm:$0xff]
      %v817 = vld [vmem:[%s7 + $0x48] sm:$0xff]
      %v818 = vld [vmem:[%s7 + $0x50] sm:$0xff]
      %v819 = vld [vmem:[%s7 + $0x58] sm:$0xff]
      %v820 = vld [vmem:[%s7 + $0x60] sm:$0xff]
      %v821 = vld [vmem:[%s7 + $0x68] sm:$0xff]
      %v822 = vld [vmem:[%s7 + $0x70] sm:$0xff]
      %v823 = vld [vmem:[%s7 + $0x78] sm:$0xff]
      %s824 = scalar_lea.vmem %s7, 128
      %v825 = vld [vmem:[%s824] sm:$0xff]
      %v826 = vld [vmem:[%s824 + $0x8] sm:$0xff]
      %v827 = vld [vmem:[%s824 + $0x10] sm:$0xff]
      %v828 = vld [vmem:[%s824 + $0x18] sm:$0xff]
      %v829 = vld [vmem:[%s824 + $0x20] sm:$0xff]
      %v830 = vld [vmem:[%s824 + $0x28] sm:$0xff]
      %v831 = vld [vmem:[%s824 + $0x30] sm:$0xff]
      %v832 = vld [vmem:[%s824 + $0x38] sm:$0xff]
      %v833 = vld [vmem:[%s824 + $0x40] sm:$0xff]
      %v834 = vld [vmem:[%s824 + $0x48] sm:$0xff]
      %v835 = vld [vmem:[%s824 + $0x50] sm:$0xff]
      %v836 = vld [vmem:[%s824 + $0x58] sm:$0xff]
      %v837 = vld [vmem:[%s824 + $0x60] sm:$0xff]
      %v838 = vld [vmem:[%s824 + $0x68] sm:$0xff]
      %v839 = vld [vmem:[%s824 + $0x70] sm:$0xff]
      %v840 = vld [vmem:[%s824 + $0x78] sm:$0xff]
      %841 = vmatprep.subr.mxu0 0.0
      %842 = vmatpush1.msra.mxu0 %v825
      %843 = vmatprep.subr.mxu0 0.0
      %844 = vmatpush1.msra.mxu0 %v826
      %845 = vmatprep.subr.mxu0 0.0
      %846 = vmatpush1.msra.mxu0 %v827
      %847 = vmatprep.subr.mxu0 0.0
      %848 = vmatpush1.msra.mxu0 %v828
      %849 = vmatprep.subr.mxu0 0.0
      %850 = vmatpush1.msra.mxu0 %v829
      %851 = vmatprep.subr.mxu0 0.0
      %852 = vmatpush1.msra.mxu0 %v830
      %853 = vmatprep.subr.mxu0 0.0
      %854 = vmatpush1.msra.mxu0 %v831
      %855 = vmatprep.subr.mxu0 0.0
      %856 = vmatpush1.msra.mxu0 %v832
      %857 = vmatprep.subr.mxu0 0.0
      %858 = vmatpush1.msra.mxu0 %v833
      %859 = vmatprep.subr.mxu0 0.0
      %860 = vmatpush1.msra.mxu0 %v834
      %861 = vmatprep.subr.mxu0 0.0
      %862 = vmatpush1.msra.mxu0 %v835
      %863 = vmatprep.subr.mxu0 0.0
      %864 = vmatpush1.msra.mxu0 %v836
      %865 = vmatprep.subr.mxu0 0.0
      %866 = vmatpush1.msra.mxu0 %v837
      %867 = vmatprep.subr.mxu0 0.0
      %868 = vmatpush1.msra.mxu0 %v838
      %869 = vmatprep.subr.mxu0 0.0
      %870 = vmatpush1.msra.mxu0 %v839
      %871 = vmatprep.subr.mxu0 0.0
      %872 = vmatpush1.msra.mxu0 %v840
      %873 = vmatprep.subr.mxu0 0.0
      %874 = vmatpush1.msra.mxu0 0.0
      %875 = vmatprep.subr.mxu0 0.0
      %876 = vmatpush1.msra.mxu0 0.0
      %877 = vmatprep.subr.mxu0 0.0
      %878 = vmatpush1.msra.mxu0 0.0
      %879 = vmatprep.subr.mxu0 0.0
      %880 = vmatpush1.msra.mxu0 0.0
      %881 = vmatprep.subr.mxu0 0.0
      %882 = vmatpush1.msra.mxu0 0.0
      %883 = vmatprep.subr.mxu0 0.0
      %884 = vmatpush1.msra.mxu0 0.0
      %885 = vmatprep.subr.mxu0 0.0
      %886 = vmatpush1.msra.mxu0 0.0
      %887 = vmatprep.subr.mxu0 0.0
      %888 = vmatpush1.msra.mxu0 0.0
      %889 = vmatprep.subr.mxu0 0.0
      %890 = vmatpush1.msra.mxu0 0.0
      %891 = vmatprep.subr.mxu0 0.0
      %892 = vmatpush1.msra.mxu0 0.0
      %893 = vmatprep.subr.mxu0 0.0
      %894 = vmatpush1.msra.mxu0 0.0
      %895 = vmatprep.subr.mxu0 0.0
      %896 = vmatpush1.msra.mxu0 0.0
      %897 = vmatprep.subr.mxu0 0.0
      %898 = vmatpush1.msra.mxu0 0.0
      %899 = vmatprep.subr.mxu0 0.0
      %900 = vmatpush1.msra.mxu0 0.0
      %901 = vmatprep.subr.mxu0 0.0
      %902 = vmatpush1.msra.mxu0 0.0
      %903 = vmatprep.subr.mxu0 0.0
      %904 = vmatpush1.msra.mxu0 0.0
      %905 = vmatprep.mubr.f32.mxu0 0.0
      %906 = vmatmul.mubr.f32.gmra.mrb[0].mxu0 0.0
      %v907 = vpop.f32.mrb[0].mxu0
      %v908 = vadd.f32 0.0, %v907
      %v909 = vpop.f32.mrb[0].mxu0
      %910 = vmatprep.mubr.f32.mxu0 0.0
      %911 = vmatmul.mubr.f32.gmra.mrb[0].mxu0 0.0
      %v912 = vpop.f32.mrb[0].mxu0
      %v913 = vadd.f32 0.0, %v912
      %v914 = vpop.f32.mrb[0].mxu0
      %915 = vmatprep.mubr.f32.mxu0 0.0
      %916 = vmatmul.mubr.f32.gmra.mrb[0].mxu0 %v486
      %v917 = vpop.f32.mrb[0].mxu0
      %v918 = vadd.f32 0.0, %v917
      %v919 = vpop.f32.mrb[0].mxu0
      %920 = vmatprep.mubr.f32.mxu0 0.0
      %921 = vmatmul.mubr.f32.gmra.mrb[0].mxu0 %v487
      %v922 = vpop.f32.mrb[0].mxu0
      %v923 = vadd.f32 0.0, %v922
      %v924 = vpop.f32.mrb[0].mxu0
      %925 = vmatprep.mubr.f32.mxu0 0.0
      %926 = vmatmul.mubr.f32.gmra.mrb[0].mxu0 %v488
      %v927 = vpop.f32.mrb[0].mxu0
      %v928 = vadd.f32 0.0, %v927
      %v929 = vpop.f32.mrb[0].mxu0
      %930 = vmatprep.mubr.f32.mxu0 0.0
      %931 = vmatmul.mubr.f32.gmra.mrb[0].mxu0 %v489
      %v932 = vpop.f32.mrb[0].mxu0
      %v933 = vadd.f32 0.0, %v932
      %v934 = vpop.f32.mrb[0].mxu0
      %935 = vmatprep.mubr.f32.mxu0 0.0
      %936 = vmatmul.mubr.f32.gmra.mrb[0].mxu0 %v490
      %v937 = vpop.f32.mrb[0].mxu0
      %v938 = vadd.f32 0.0, %v937
      %v939 = vpop.f32.mrb[0].mxu0
      %940 = vmatprep.mubr.f32.mxu0 0.0
      %941 = vmatmul.mubr.f32.gmra.mrb[0].mxu0 %v491
      %v942 = vpop.f32.mrb[0].mxu0
      %v943 = vadd.f32 0.0, %v942
      %v944 = vpop.f32.mrb[0].mxu0
      %945 = vmatprep.mubr.f32.mxu0 0.0
      %946 = vmatmul.mubr.f32.gmra.mrb[0].mxu0 %v492
      %v947 = vpop.f32.mrb[0].mxu0
      %v948 = vadd.f32 0.0, %v947
      %v949 = vpop.f32.mrb[0].mxu0
      %950 = vmatprep.mubr.f32.mxu0 0.0
      %951 = vmatmul.mubr.f32.gmra.mrb[0].mxu0 %v493
      %v952 = vpop.f32.mrb[0].mxu0
      %v953 = vadd.f32 0.0, %v952
      %v954 = vpop.f32.mrb[0].mxu0
      %955 = vmatprep.mubr.f32.mxu0 0.0
      %956 = vmatmul.mubr.f32.gmra.mrb[0].mxu0 %v494
      %v957 = vpop.f32.mrb[0].mxu0
      %v958 = vadd.f32 0.0, %v957
      %v959 = vpop.f32.mrb[0].mxu0
      %960 = vmatprep.mubr.f32.mxu0 0.0
      %961 = vmatmul.mubr.f32.gmra.mrb[0].mxu0 %v495
      %v962 = vpop.f32.mrb[0].mxu0
      %v963 = vadd.f32 0.0, %v962
      %v964 = vpop.f32.mrb[0].mxu0
      %965 = vmatprep.mubr.f32.mxu0 0.0
      %966 = vmatmul.mubr.f32.gmra.mrb[0].mxu0 %v496
      %v967 = vpop.f32.mrb[0].mxu0
      %v968 = vadd.f32 0.0, %v967
      %v969 = vpop.f32.mrb[0].mxu0
      %970 = vmatprep.mubr.f32.mxu0 0.0
      %971 = vmatmul.mubr.f32.gmra.mrb[0].mxu0 %v497
      %v972 = vpop.f32.mrb[0].mxu0
      %v973 = vadd.f32 0.0, %v972
      %v974 = vpop.f32.mrb[0].mxu0
      %975 = vmatprep.mubr.f32.mxu0 0.0
      %976 = vmatmul.mubr.f32.gmra.mrb[0].mxu0 %v498
      %v977 = vpop.f32.mrb[0].mxu0
      %v978 = vadd.f32 0.0, %v977
      %v979 = vpop.f32.mrb[0].mxu0
      %980 = vmatprep.mubr.f32.mxu0 0.0
      %981 = vmatmul.mubr.f32.gmra.mrb[0].mxu0 %v499
      %v982 = vpop.f32.mrb[0].mxu0
      %v983 = vadd.f32 0.0, %v982
      %v984 = vpop.f32.mrb[0].mxu0
      %985 = vmatprep.mubr.f32.mxu0 0.0
      %986 = vmatmul.mubr.f32.gmra.mrb[0].mxu0 %v500
      %v987 = vpop.f32.mrb[0].mxu0
      %v988 = vadd.f32 0.0, %v987
      %v989 = vpop.f32.mrb[0].mxu0
      %990 = vmatprep.mubr.f32.mxu0 0.0
      %991 = vmatmul.mubr.f32.gmra.mrb[0].mxu0 %v501
      %v992 = vpop.f32.mrb[0].mxu0
      %v993 = vadd.f32 0.0, %v992
      %v994 = vpop.f32.mrb[0].mxu0
      %995 = vmatprep.mubr.f32.mxu0 0.0
      %996 = vmatmul.mubr.f32.gmra.mrb[0].mxu0 %v502
      %v997 = vpop.f32.mrb[0].mxu0
      %v998 = vadd.f32 0.0, %v997
      %v999 = vpop.f32.mrb[0].mxu0
      %1000 = vmatprep.mubr.f32.mxu0 0.0
      %1001 = vmatmul.mubr.f32.gmra.mrb[0].mxu0 %v503
      %v1002 = vpop.f32.mrb[0].mxu0
      %v1003 = vadd.f32 0.0, %v1002
      %v1004 = vpop.f32.mrb[0].mxu0
      %1005 = vmatprep.mubr.f32.mxu0 0.0
      %1006 = vmatmul.mubr.f32.gmra.mrb[0].mxu0 %v504
      %v1007 = vpop.f32.mrb[0].mxu0
      %v1008 = vadd.f32 0.0, %v1007
      %v1009 = vpop.f32.mrb[0].mxu0
      %1010 = vmatprep.mubr.f32.mxu0 0.0
      %1011 = vmatmul.mubr.f32.gmra.mrb[0].mxu0 %v505
      %v1012 = vpop.f32.mrb[0].mxu0
      %v1013 = vadd.f32 0.0, %v1012
      %v1014 = vpop.f32.mrb[0].mxu0
      %1015 = vmatprep.mubr.f32.mxu0 0.0
      %1016 = vmatmul.mubr.f32.gmra.mrb[0].mxu0 %v506
      %v1017 = vpop.f32.mrb[0].mxu0
      %v1018 = vadd.f32 0.0, %v1017
      %v1019 = vpop.f32.mrb[0].mxu0
      %1020 = vmatprep.mubr.f32.mxu0 0.0
      %1021 = vmatmul.mubr.f32.gmra.mrb[0].mxu0 %v507
      %v1022 = vpop.f32.mrb[0].mxu0
      %v1023 = vadd.f32 0.0, %v1022
      %v1024 = vpop.f32.mrb[0].mxu0
      %1025 = vmatprep.mubr.f32.mxu0 0.0
      %1026 = vmatmul.mubr.f32.gmra.mrb[0].mxu0 %v508
      %v1027 = vpop.f32.mrb[0].mxu0
      %v1028 = vadd.f32 0.0, %v1027
      %v1029 = vpop.f32.mrb[0].mxu0
      %1030 = vmatprep.mubr.f32.mxu0 0.0
      %1031 = vmatmul.mubr.f32.gmra.mrb[0].mxu0 %v509
      %v1032 = vpop.f32.mrb[0].mxu0
      %v1033 = vadd.f32 0.0, %v1032
      %v1034 = vpop.f32.mrb[0].mxu0
      %1035 = vmatprep.mubr.f32.mxu0 0.0
      %1036 = vmatmul.mubr.f32.gmra.mrb[0].mxu0 %v510
      %v1037 = vpop.f32.mrb[0].mxu0
      %v1038 = vadd.f32 0.0, %v1037
      %v1039 = vpop.f32.mrb[0].mxu0
      %1040 = vmatprep.mubr.f32.mxu0 0.0
      %1041 = vmatmul.mubr.f32.gmra.mrb[0].mxu0 %v511
      %v1042 = vpop.f32.mrb[0].mxu0
      %v1043 = vadd.f32 0.0, %v1042
      %v1044 = vpop.f32.mrb[0].mxu0
      %1045 = vmatprep.mubr.f32.mxu0 0.0
      %1046 = vmatmul.mubr.f32.gmra.mrb[0].mxu0 %v512
      %v1047 = vpop.f32.mrb[0].mxu0
      %v1048 = vadd.f32 0.0, %v1047
      %v1049 = vpop.f32.mrb[0].mxu0
      %1050 = vmatprep.mubr.f32.mxu0 0.0
      %1051 = vmatmul.mubr.f32.gmra.mrb[0].mxu0 %v513
      %v1052 = vpop.f32.mrb[0].mxu0
      %v1053 = vadd.f32 0.0, %v1052
      %v1054 = vpop.f32.mrb[0].mxu0
      %1055 = vmatprep.mubr.f32.mxu0 0.0
      %1056 = vmatmul.mubr.f32.gmra.mrb[0].mxu0 %v514
      %v1057 = vpop.f32.mrb[0].mxu0
      %v1058 = vadd.f32 0.0, %v1057
      %v1059 = vpop.f32.mrb[0].mxu0
      %1060 = vmatprep.mubr.f32.mxu0 0.0
      %1061 = vmatmul.mubr.f32.gmra.mrb[0].mxu0 %v515
      %v1062 = vpop.f32.mrb[0].mxu0
      %v1063 = vadd.f32 0.0, %v1062
      %v1064 = vpop.f32.mrb[0].mxu0
      %1065 = vdwg.mxu0
      %vm1099 = vcmask 1040384
      %v1100 = vrot.slane %v775, 7
      %v1101 = vrot.slane %v776, 7
      %v1102 = vsel %vm1099, %v1100, %v1101
      %v1103 = vrot.slane %v777, 7
      %v1104 = vsel %vm1099, %v1101, %v1103
      %v1105 = vrot.slane %v778, 7
      %v1106 = vsel %vm1099, %v1103, %v1105
      %v1107 = vrot.slane %v779, 7
      %v1108 = vsel %vm1099, %v1105, %v1107
      %v1109 = vrot.slane %v780, 7
      %v1110 = vsel %vm1099, %v1107, %v1109
      %v1111 = vrot.slane %v781, 7
      %v1112 = vsel %vm1099, %v1109, %v1111
      %v1113 = vrot.slane %v782, 7
      %v1114 = vsel %vm1099, %v1111, %v1113
      %v1115 = vrot.slane %v783, 7
      %v1116 = vsel %vm1099, %v1113, %v1115
      %v1117 = vrot.slane %v784, 7
      %v1118 = vsel %vm1099, %v1115, %v1117
      %v1119 = vrot.slane %v785, 7
      %v1120 = vsel %vm1099, %v1117, %v1119
      %v1121 = vrot.slane %v786, 7
      %v1122 = vsel %vm1099, %v1119, %v1121
      %v1123 = vrot.slane %v787, 7
      %v1124 = vsel %vm1099, %v1121, %v1123
      %v1125 = vrot.slane %v788, 7
      %v1126 = vsel %vm1099, %v1123, %v1125
      %v1127 = vrot.slane %v789, 7
      %v1128 = vsel %vm1099, %v1125, %v1127
      %v1129 = vrot.slane %v790, 7
      %v1130 = vsel %vm1099, %v1127, %v1129
      %v1131 = vrot.slane %v791, 7
      %v1132 = vsel %vm1099, %v1129, %v1131
      %v1133 = vrot.slane %v792, 7
      %v1134 = vsel %vm1099, %v1131, %v1133
      %v1135 = vrot.slane %v793, 7
      %v1136 = vsel %vm1099, %v1133, %v1135
      %v1137 = vrot.slane %v794, 7
      %v1138 = vsel %vm1099, %v1135, %v1137
      %v1139 = vrot.slane %v795, 7
      %v1140 = vsel %vm1099, %v1137, %v1139
      %v1141 = vrot.slane %v796, 7
      %v1142 = vsel %vm1099, %v1139, %v1141
      %v1143 = vrot.slane %v797, 7
      %v1144 = vsel %vm1099, %v1141, %v1143
      %v1145 = vrot.slane %v798, 7
      %v1146 = vsel %vm1099, %v1143, %v1145
      %v1147 = vrot.slane %v799, 7
      %v1148 = vsel %vm1099, %v1145, %v1147
      %v1149 = vrot.slane %v800, 7
      %v1150 = vsel %vm1099, %v1147, %v1149
      %v1151 = vrot.slane %v801, 7
      %v1152 = vsel %vm1099, %v1149, %v1151
      %v1153 = vrot.slane %v802, 7
      %v1154 = vsel %vm1099, %v1151, %v1153
      %v1155 = vrot.slane %v803, 7
      %v1156 = vsel %vm1099, %v1153, %v1155
      %v1157 = vrot.slane %v804, 7
      %v1158 = vsel %vm1099, %v1155, %v1157
      %v1159 = vrot.slane %v805, 7
      %v1160 = vsel %vm1099, %v1157, %v1159
      %v1161 = vrot.slane %v806, 7
      %v1162 = vsel %vm1099, %v1159, %v1161
      %v1163 = vrot.slane %v807, 7
      %v1164 = vsel %vm1099, %v1161, %v1163
      %1197 = vmatprep.subr.mxu0 0.0
      %1198 = vmatpush1.msra.mxu0 %v808
      %1199 = vmatprep.subr.mxu0 0.0
      %1200 = vmatpush1.msra.mxu0 %v809
      %1201 = vmatprep.subr.mxu0 0.0
      %1202 = vmatpush1.msra.mxu0 %v810
      %1203 = vmatprep.subr.mxu0 0.0
      %1204 = vmatpush1.msra.mxu0 %v811
      %1205 = vmatprep.subr.mxu0 0.0
      %1206 = vmatpush1.msra.mxu0 %v812
      %1207 = vmatprep.subr.mxu0 0.0
      %1208 = vmatpush1.msra.mxu0 %v813
      %1209 = vmatprep.subr.mxu0 0.0
      %1210 = vmatpush1.msra.mxu0 %v814
      %1211 = vmatprep.subr.mxu0 0.0
      %1212 = vmatpush1.msra.mxu0 %v815
      %1213 = vmatprep.subr.mxu0 0.0
      %1214 = vmatpush1.msra.mxu0 %v816
      %1215 = vmatprep.subr.mxu0 0.0
      %1216 = vmatpush1.msra.mxu0 %v817
      %1217 = vmatprep.subr.mxu0 0.0
      %1218 = vmatpush1.msra.mxu0 %v818
      %1219 = vmatprep.subr.mxu0 0.0
      %1220 = vmatpush1.msra.mxu0 %v819
      %1221 = vmatprep.subr.mxu0 0.0
      %1222 = vmatpush1.msra.mxu0 %v820
      %1223 = vmatprep.subr.mxu0 0.0
      %1224 = vmatpush1.msra.mxu0 %v821
      %1225 = vmatprep.subr.mxu0 0.0
      %1226 = vmatpush1.msra.mxu0 %v822
      %1227 = vmatprep.subr.mxu0 0.0
      %1228 = vmatpush1.msra.mxu0 %v823
      %1229 = vmatprep.subr.mxu0 0.0
      %1230 = vmatpush1.msra.mxu0 0.0
      %1231 = vmatprep.subr.mxu0 0.0
      %1232 = vmatpush1.msra.mxu0 0.0
      %1233 = vmatprep.subr.mxu0 0.0
      %1234 = vmatpush1.msra.mxu0 0.0
      %1235 = vmatprep.subr.mxu0 0.0
      %1236 = vmatpush1.msra.mxu0 0.0
      %1237 = vmatprep.subr.mxu0 0.0
      %1238 = vmatpush1.msra.mxu0 0.0
      %1239 = vmatprep.subr.mxu0 0.0
      %1240 = vmatpush1.msra.mxu0 0.0
      %1241 = vmatprep.subr.mxu0 0.0
      %1242 = vmatpush1.msra.mxu0 0.0
      %1243 = vmatprep.subr.mxu0 0.0
      %1244 = vmatpush1.msra.mxu0 0.0
      %1245 = vmatprep.subr.mxu0 0.0
      %1246 = vmatpush1.msra.mxu0 0.0
      %1247 = vmatprep.subr.mxu0 0.0
      %1248 = vmatpush1.msra.mxu0 0.0
      %1249 = vmatprep.subr.mxu0 0.0
      %1250 = vmatpush1.msra.mxu0 0.0
      %1251 = vmatprep.subr.mxu0 0.0
      %1252 = vmatpush1.msra.mxu0 0.0
      %1253 = vmatprep.subr.mxu0 0.0
      %1254 = vmatpush1.msra.mxu0 0.0
      %1255 = vmatprep.subr.mxu0 0.0
      %1256 = vmatpush1.msra.mxu0 0.0
      %1257 = vmatprep.subr.mxu0 0.0
      %1258 = vmatpush1.msra.mxu0 0.0
      %1259 = vmatprep.subr.mxu0 0.0
      %1260 = vmatpush1.msra.mxu0 0.0
      %1261 = vmatprep.mubr.f32.mxu0 0.0
      %1262 = vmatmul.mubr.f32.gmra.mrb[0].mxu0 %v1102
      %v1263 = vpop.f32.mrb[0].mxu0
      %v1264 = vadd.f32 %v908, %v1263
      %v1265 = vpop.f32.mrb[0].mxu0
      %1266 = vmatprep.mubr.f32.mxu0 0.0
      %1267 = vmatmul.mubr.f32.gmra.mrb[0].mxu0 %v1104
      %v1268 = vpop.f32.mrb[0].mxu0
      %v1269 = vadd.f32 %v913, %v1268
      %v1270 = vpop.f32.mrb[0].mxu0
      %1271 = vmatprep.mubr.f32.mxu0 0.0
      %1272 = vmatmul.mubr.f32.gmra.mrb[0].mxu0 %v1106
      %v1273 = vpop.f32.mrb[0].mxu0
      %v1274 = vadd.f32 %v918, %v1273
      %v1275 = vpop.f32.mrb[0].mxu0
      %1276 = vmatprep.mubr.f32.mxu0 0.0
      %1277 = vmatmul.mubr.f32.gmra.mrb[0].mxu0 %v1108
      %v1278 = vpop.f32.mrb[0].mxu0
      %v1279 = vadd.f32 %v923, %v1278
      %v1280 = vpop.f32.mrb[0].mxu0
      %1281 = vmatprep.mubr.f32.mxu0 0.0
      %1282 = vmatmul.mubr.f32.gmra.mrb[0].mxu0 %v1110
      %v1283 = vpop.f32.mrb[0].mxu0
      %v1284 = vadd.f32 %v928, %v1283
      %v1285 = vpop.f32.mrb[0].mxu0
      %1286 = vmatprep.mubr.f32.mxu0 0.0
      %1287 = vmatmul.mubr.f32.gmra.mrb[0].mxu0 %v1112
      %v1288 = vpop.f32.mrb[0].mxu0
      %v1289 = vadd.f32 %v933, %v1288
      %v1290 = vpop.f32.mrb[0].mxu0
      %1291 = vmatprep.mubr.f32.mxu0 0.0
      %1292 = vmatmul.mubr.f32.gmra.mrb[0].mxu0 %v1114
      %v1293 = vpop.f32.mrb[0].mxu0
      %v1294 = vadd.f32 %v938, %v1293
      %v1295 = vpop.f32.mrb[0].mxu0
      %1296 = vmatprep.mubr.f32.mxu0 0.0
      %1297 = vmatmul.mubr.f32.gmra.mrb[0].mxu0 %v1116
      %v1298 = vpop.f32.mrb[0].mxu0
      %v1299 = vadd.f32 %v943, %v1298
      %v1300 = vpop.f32.mrb[0].mxu0
      %1301 = vmatprep.mubr.f32.mxu0 0.0
      %1302 = vmatmul.mubr.f32.gmra.mrb[0].mxu0 %v1118
      %v1303 = vpop.f32.mrb[0].mxu0
      %v1304 = vadd.f32 %v948, %v1303
      %v1305 = vpop.f32.mrb[0].mxu0
      %1306 = vmatprep.mubr.f32.mxu0 0.0
      %1307 = vmatmul.mubr.f32.gmra.mrb[0].mxu0 %v1120
      %v1308 = vpop.f32.mrb[0].mxu0
      %v1309 = vadd.f32 %v953, %v1308
      %v1310 = vpop.f32.mrb[0].mxu0
      %1311 = vmatprep.mubr.f32.mxu0 0.0
      %1312 = vmatmul.mubr.f32.gmra.mrb[0].mxu0 %v1122
      %v1313 = vpop.f32.mrb[0].mxu0
      %v1314 = vadd.f32 %v958, %v1313
      %v1315 = vpop.f32.mrb[0].mxu0
      %1316 = vmatprep.mubr.f32.mxu0 0.0
      %1317 = vmatmul.mubr.f32.gmra.mrb[0].mxu0 %v1124
      %v1318 = vpop.f32.mrb[0].mxu0
      %v1319 = vadd.f32 %v963, %v1318
      %v1320 = vpop.f32.mrb[0].mxu0
      %1321 = vmatprep.mubr.f32.mxu0 0.0
      %1322 = vmatmul.mubr.f32.gmra.mrb[0].mxu0 %v1126
      %v1323 = vpop.f32.mrb[0].mxu0
      %v1324 = vadd.f32 %v968, %v1323
      %v1325 = vpop.f32.mrb[0].mxu0
      %1326 = vmatprep.mubr.f32.mxu0 0.0
      %1327 = vmatmul.mubr.f32.gmra.mrb[0].mxu0 %v1128
      %v1328 = vpop.f32.mrb[0].mxu0
      %v1329 = vadd.f32 %v973, %v1328
      %v1330 = vpop.f32.mrb[0].mxu0
      %1331 = vmatprep.mubr.f32.mxu0 0.0
      %1332 = vmatmul.mubr.f32.gmra.mrb[0].mxu0 %v1130
      %v1333 = vpop.f32.mrb[0].mxu0
      %v1334 = vadd.f32 %v978, %v1333
      %v1335 = vpop.f32.mrb[0].mxu0
      %1336 = vmatprep.mubr.f32.mxu0 0.0
      %1337 = vmatmul.mubr.f32.gmra.mrb[0].mxu0 %v1132
      %v1338 = vpop.f32.mrb[0].mxu0
      %v1339 = vadd.f32 %v983, %v1338
      %v1340 = vpop.f32.mrb[0].mxu0
      %1341 = vmatprep.mubr.f32.mxu0 0.0
      %1342 = vmatmul.mubr.f32.gmra.mrb[0].mxu0 %v1134
      %v1343 = vpop.f32.mrb[0].mxu0
      %v1344 = vadd.f32 %v988, %v1343
      %v1345 = vpop.f32.mrb[0].mxu0
      %1346 = vmatprep.mubr.f32.mxu0 0.0
      %1347 = vmatmul.mubr.f32.gmra.mrb[0].mxu0 %v1136
      %v1348 = vpop.f32.mrb[0].mxu0
      %v1349 = vadd.f32 %v993, %v1348
      %v1350 = vpop.f32.mrb[0].mxu0
      %1351 = vmatprep.mubr.f32.mxu0 0.0
      %1352 = vmatmul.mubr.f32.gmra.mrb[0].mxu0 %v1138
      %v1353 = vpop.f32.mrb[0].mxu0
      %v1354 = vadd.f32 %v998, %v1353
      %v1355 = vpop.f32.mrb[0].mxu0
      %1356 = vmatprep.mubr.f32.mxu0 0.0
      %1357 = vmatmul.mubr.f32.gmra.mrb[0].mxu0 %v1140
      %v1358 = vpop.f32.mrb[0].mxu0
      %v1359 = vadd.f32 %v1003, %v1358
      %v1360 = vpop.f32.mrb[0].mxu0
      %1361 = vmatprep.mubr.f32.mxu0 0.0
      %1362 = vmatmul.mubr.f32.gmra.mrb[0].mxu0 %v1142
      %v1363 = vpop.f32.mrb[0].mxu0
      %v1364 = vadd.f32 %v1008, %v1363
      %v1365 = vpop.f32.mrb[0].mxu0
      %1366 = vmatprep.mubr.f32.mxu0 0.0
      %1367 = vmatmul.mubr.f32.gmra.mrb[0].mxu0 %v1144
      %v1368 = vpop.f32.mrb[0].mxu0
      %v1369 = vadd.f32 %v1013, %v1368
      %v1370 = vpop.f32.mrb[0].mxu0
      %1371 = vmatprep.mubr.f32.mxu0 0.0
      %1372 = vmatmul.mubr.f32.gmra.mrb[0].mxu0 %v1146
      %v1373 = vpop.f32.mrb[0].mxu0
      %v1374 = vadd.f32 %v1018, %v1373
      %v1375 = vpop.f32.mrb[0].mxu0
      %1376 = vmatprep.mubr.f32.mxu0 0.0
      %1377 = vmatmul.mubr.f32.gmra.mrb[0].mxu0 %v1148
      %v1378 = vpop.f32.mrb[0].mxu0
      %v1379 = vadd.f32 %v1023, %v1378
      %v1380 = vpop.f32.mrb[0].mxu0
      %1381 = vmatprep.mubr.f32.mxu0 0.0
      %1382 = vmatmul.mubr.f32.gmra.mrb[0].mxu0 %v1150
      %v1383 = vpop.f32.mrb[0].mxu0
      %v1384 = vadd.f32 %v1028, %v1383
      %v1385 = vpop.f32.mrb[0].mxu0
      %1386 = vmatprep.mubr.f32.mxu0 0.0
      %1387 = vmatmul.mubr.f32.gmra.mrb[0].mxu0 %v1152
      %v1388 = vpop.f32.mrb[0].mxu0
      %v1389 = vadd.f32 %v1033, %v1388
      %v1390 = vpop.f32.mrb[0].mxu0
      %1391 = vmatprep.mubr.f32.mxu0 0.0
      %1392 = vmatmul.mubr.f32.gmra.mrb[0].mxu0 %v1154
      %v1393 = vpop.f32.mrb[0].mxu0
      %v1394 = vadd.f32 %v1038, %v1393
      %v1395 = vpop.f32.mrb[0].mxu0
      %1396 = vmatprep.mubr.f32.mxu0 0.0
      %1397 = vmatmul.mubr.f32.gmra.mrb[0].mxu0 %v1156
      %v1398 = vpop.f32.mrb[0].mxu0
      %v1399 = vadd.f32 %v1043, %v1398
      %v1400 = vpop.f32.mrb[0].mxu0
      %1401 = vmatprep.mubr.f32.mxu0 0.0
      %1402 = vmatmul.mubr.f32.gmra.mrb[0].mxu0 %v1158
      %v1403 = vpop.f32.mrb[0].mxu0
      %v1404 = vadd.f32 %v1048, %v1403
      %v1405 = vpop.f32.mrb[0].mxu0
      %1406 = vmatprep.mubr.f32.mxu0 0.0
      %1407 = vmatmul.mubr.f32.gmra.mrb[0].mxu0 %v1160
      %v1408 = vpop.f32.mrb[0].mxu0
      %v1409 = vadd.f32 %v1053, %v1408
      %v1410 = vpop.f32.mrb[0].mxu0
      %1411 = vmatprep.mubr.f32.mxu0 0.0
      %1412 = vmatmul.mubr.f32.gmra.mrb[0].mxu0 %v1162
      %v1413 = vpop.f32.mrb[0].mxu0
      %v1414 = vadd.f32 %v1058, %v1413
      %v1415 = vpop.f32.mrb[0].mxu0
      %1416 = vmatprep.mubr.f32.mxu0 0.0
      %1417 = vmatmul.mubr.f32.gmra.mrb[0].mxu0 %v1164
      %v1418 = vpop.f32.mrb[0].mxu0
      %v1419 = vadd.f32 %v1063, %v1418
      %v1420 = vpop.f32.mrb[0].mxu0
      %1421 = vdwg.mxu0
      %v1422 = vld [vmem:[%s1] sm:$0xff]
      %v1423 = vld [vmem:[%s1 + $0x8] sm:$0xff]
      %v1424 = vld [vmem:[%s1 + $0x10] sm:$0xff]
      %v1425 = vld [vmem:[%s1 + $0x18] sm:$0xff]
      %v1426 = vld [vmem:[%s1 + $0x20] sm:$0xff]
      %v1427 = vld [vmem:[%s1 + $0x28] sm:$0xff]
      %v1428 = vld [vmem:[%s1 + $0x30] sm:$0xff]
      %v1429 = vld [vmem:[%s1 + $0x38] sm:$0xff]
      %v1430 = vld [vmem:[%s1 + $0x40] sm:$0xff]
      %v1431 = vld [vmem:[%s1 + $0x48] sm:$0xff]
      %v1432 = vld [vmem:[%s1 + $0x50] sm:$0xff]
      %v1433 = vld [vmem:[%s1 + $0x58] sm:$0xff]
      %v1434 = vld [vmem:[%s1 + $0x60] sm:$0xff]
      %v1435 = vld [vmem:[%s1 + $0x68] sm:$0xff]
      %v1436 = vld [vmem:[%s1 + $0x70] sm:$0xff]
      %v1437 = vld [vmem:[%s1 + $0x78] sm:$0xff]
      %v1438 = vld [vmem:[%s1 + $0x80] sm:$0xff]
      %v1439 = vld [vmem:[%s1 + $0x88] sm:$0xff]
      %v1440 = vld [vmem:[%s1 + $0x90] sm:$0xff]
      %v1441 = vld [vmem:[%s1 + $0x98] sm:$0xff]
      %v1442 = vld [vmem:[%s1 + $0xa0] sm:$0xff]
      %v1443 = vld [vmem:[%s1 + $0xa8] sm:$0xff]
      %v1444 = vld [vmem:[%s1 + $0xb0] sm:$0xff]
      %v1445 = vld [vmem:[%s1 + $0xb8] sm:$0xff]
      %v1446 = vld [vmem:[%s1 + $0xc0] sm:$0xff]
      %v1447 = vld [vmem:[%s1 + $0xc8] sm:$0xff]
      %v1448 = vld [vmem:[%s1 + $0xd0] sm:$0xff]
      %v1449 = vld [vmem:[%s1 + $0xd8] sm:$0xff]
      %v1450 = vld [vmem:[%s1 + $0xe0] sm:$0xff]
      %v1451 = vld [vmem:[%s1 + $0xe8] sm:$0xff]
      %v1452 = vld [vmem:[%s1 + $0xf0] sm:$0xff]
      %v1453 = vld [vmem:[%s1 + $0xf8] sm:$0xff]
      %1455 = vset.pattern.permute.xlu0 0
      %1456 = vperm.xlu0 %1455, %v1422
      %v1457 = vpop.permute.xlu0 %1456
      %1459 = vset.pattern.permute.xlu0 0
      %1460 = vperm.xlu0 %1459, %v1423
      %v1461 = vpop.permute.xlu0 %1460
      %1463 = vset.pattern.permute.xlu0 0
      %1464 = vperm.xlu0 %1463, %v1424
      %v1465 = vpop.permute.xlu0 %1464
      %1467 = vset.pattern.permute.xlu0 0
      %1468 = vperm.xlu0 %1467, %v1425
      %v1469 = vpop.permute.xlu0 %1468
      %1471 = vset.pattern.permute.xlu0 0
      %1472 = vperm.xlu0 %1471, %v1426
      %v1473 = vpop.permute.xlu0 %1472
      %1475 = vset.pattern.permute.xlu0 0
      %1476 = vperm.xlu0 %1475, %v1427
      %v1477 = vpop.permute.xlu0 %1476
      %1479 = vset.pattern.permute.xlu0 0
      %1480 = vperm.xlu0 %1479, %v1428
      %v1481 = vpop.permute.xlu0 %1480
      %1483 = vset.pattern.permute.xlu0 0
      %1484 = vperm.xlu0 %1483, %v1429
      %v1485 = vpop.permute.xlu0 %1484
      %1487 = vset.pattern.permute.xlu0 0
      %1488 = vperm.xlu0 %1487, %v1430
      %v1489 = vpop.permute.xlu0 %1488
      %1491 = vset.pattern.permute.xlu0 0
      %1492 = vperm.xlu0 %1491, %v1431
      %v1493 = vpop.permute.xlu0 %1492
      %1495 = vset.pattern.permute.xlu0 0
      %1496 = vperm.xlu0 %1495, %v1432
      %v1497 = vpop.permute.xlu0 %1496
      %1499 = vset.pattern.permute.xlu0 0
      %1500 = vperm.xlu0 %1499, %v1433
      %v1501 = vpop.permute.xlu0 %1500
      %1503 = vset.pattern.permute.xlu0 0
      %1504 = vperm.xlu0 %1503, %v1434
      %v1505 = vpop.permute.xlu0 %1504
      %1507 = vset.pattern.permute.xlu0 0
      %1508 = vperm.xlu0 %1507, %v1435
      %v1509 = vpop.permute.xlu0 %1508
      %1511 = vset.pattern.permute.xlu0 0
      %1512 = vperm.xlu0 %1511, %v1436
      %v1513 = vpop.permute.xlu0 %1512
      %1515 = vset.pattern.permute.xlu0 0
      %1516 = vperm.xlu0 %1515, %v1437
      %v1517 = vpop.permute.xlu0 %1516
      %1519 = vset.pattern.permute.xlu0 0
      %1520 = vperm.xlu0 %1519, %v1438
      %v1521 = vpop.permute.xlu0 %1520
      %1523 = vset.pattern.permute.xlu0 0
      %1524 = vperm.xlu0 %1523, %v1439
      %v1525 = vpop.permute.xlu0 %1524
      %1527 = vset.pattern.permute.xlu0 0
      %1528 = vperm.xlu0 %1527, %v1440
      %v1529 = vpop.permute.xlu0 %1528
      %1531 = vset.pattern.permute.xlu0 0
      %1532 = vperm.xlu0 %1531, %v1441
      %v1533 = vpop.permute.xlu0 %1532
      %1535 = vset.pattern.permute.xlu0 0
      %1536 = vperm.xlu0 %1535, %v1442
      %v1537 = vpop.permute.xlu0 %1536
      %1539 = vset.pattern.permute.xlu0 0
      %1540 = vperm.xlu0 %1539, %v1443
      %v1541 = vpop.permute.xlu0 %1540
      %1543 = vset.pattern.permute.xlu0 0
      %1544 = vperm.xlu0 %1543, %v1444
      %v1545 = vpop.permute.xlu0 %1544
      %1547 = vset.pattern.permute.xlu0 0
      %1548 = vperm.xlu0 %1547, %v1445
      %v1549 = vpop.permute.xlu0 %1548
      %1551 = vset.pattern.permute.xlu0 0
      %1552 = vperm.xlu0 %1551, %v1446
      %v1553 = vpop.permute.xlu0 %1552
      %1555 = vset.pattern.permute.xlu0 0
      %1556 = vperm.xlu0 %1555, %v1447
      %v1557 = vpop.permute.xlu0 %1556
      %1559 = vset.pattern.permute.xlu0 0
      %1560 = vperm.xlu0 %1559, %v1448
      %v1561 = vpop.permute.xlu0 %1560
      %1563 = vset.pattern.permute.xlu0 0
      %1564 = vperm.xlu0 %1563, %v1449
      %v1565 = vpop.permute.xlu0 %1564
      %1567 = vset.pattern.permute.xlu0 0
      %1568 = vperm.xlu0 %1567, %v1450
      %v1569 = vpop.permute.xlu0 %1568
      %1571 = vset.pattern.permute.xlu0 0
      %1572 = vperm.xlu0 %1571, %v1451
      %v1573 = vpop.permute.xlu0 %1572
      %1575 = vset.pattern.permute.xlu0 0
      %1576 = vperm.xlu0 %1575, %v1452
      %v1577 = vpop.permute.xlu0 %1576
      %1579 = vset.pattern.permute.xlu0 0
      %1580 = vperm.xlu0 %1579, %v1453
      %v1581 = vpop.permute.xlu0 %1580
      %v1582 = vrot.slane %v1457, 7
      %v1583 = vrot.slane %v1461, 7
      %v1584 = vsel %vm1099, %v1582, %v1583
      %v1585 = vrot.slane %v1465, 7
      %v1586 = vsel %vm1099, %v1583, %v1585
      %v1587 = vrot.slane %v1469, 7
      %v1588 = vsel %vm1099, %v1585, %v1587
      %v1589 = vrot.slane %v1473, 7
      %v1590 = vsel %vm1099, %v1587, %v1589
      %v1591 = vrot.slane %v1477, 7
      %v1592 = vsel %vm1099, %v1589, %v1591
      %v1593 = vrot.slane %v1481, 7
      %v1594 = vsel %vm1099, %v1591, %v1593
      %v1595 = vrot.slane %v1485, 7
      %v1596 = vsel %vm1099, %v1593, %v1595
      %v1597 = vrot.slane %v1489, 7
      %v1598 = vsel %vm1099, %v1595, %v1597
      %v1599 = vrot.slane %v1493, 7
      %v1600 = vsel %vm1099, %v1597, %v1599
      %v1601 = vrot.slane %v1497, 7
      %v1602 = vsel %vm1099, %v1599, %v1601
      %v1603 = vrot.slane %v1501, 7
      %v1604 = vsel %vm1099, %v1601, %v1603
      %v1605 = vrot.slane %v1505, 7
      %v1606 = vsel %vm1099, %v1603, %v1605
      %v1607 = vrot.slane %v1509, 7
      %v1608 = vsel %vm1099, %v1605, %v1607
      %v1609 = vrot.slane %v1513, 7
      %v1610 = vsel %vm1099, %v1607, %v1609
      %v1611 = vrot.slane %v1517, 7
      %v1612 = vsel %vm1099, %v1609, %v1611
      %v1613 = vrot.slane %v1521, 7
      %v1614 = vsel %vm1099, %v1611, %v1613
      %v1615 = vrot.slane %v1525, 7
      %v1616 = vsel %vm1099, %v1613, %v1615
      %v1617 = vrot.slane %v1529, 7
      %v1618 = vsel %vm1099, %v1615, %v1617
      %v1619 = vrot.slane %v1533, 7
      %v1620 = vsel %vm1099, %v1617, %v1619
      %v1621 = vrot.slane %v1537, 7
      %v1622 = vsel %vm1099, %v1619, %v1621
      %v1623 = vrot.slane %v1541, 7
      %v1624 = vsel %vm1099, %v1621, %v1623
      %v1625 = vrot.slane %v1545, 7
      %v1626 = vsel %vm1099, %v1623, %v1625
      %v1627 = vrot.slane %v1549, 7
      %v1628 = vsel %vm1099, %v1625, %v1627
      %v1629 = vrot.slane %v1553, 7
      %v1630 = vsel %vm1099, %v1627, %v1629
      %v1631 = vrot.slane %v1557, 7
      %v1632 = vsel %vm1099, %v1629, %v1631
      %v1633 = vrot.slane %v1561, 7
      %v1634 = vsel %vm1099, %v1631, %v1633
      %v1635 = vrot.slane %v1565, 7
      %v1636 = vsel %vm1099, %v1633, %v1635
      %v1637 = vrot.slane %v1569, 7
      %v1638 = vsel %vm1099, %v1635, %v1637
      %v1639 = vrot.slane %v1573, 7
      %v1640 = vsel %vm1099, %v1637, %v1639
      %v1641 = vrot.slane %v1577, 7
      %v1642 = vsel %vm1099, %v1639, %v1641
      %v1643 = vrot.slane %v1581, 7
      %v1644 = vsel %vm1099, %v1641, %v1643
      %v1678 = vmul.f32 %v1582, 0.0
      %v1679 = vmul.f32 %v1584, 0.0
      %v1680 = vmul.f32 %v486, %v1586
      %v1681 = vmul.f32 %v487, %v1588
      %v1682 = vmul.f32 %v488, %v1590
      %v1683 = vmul.f32 %v489, %v1592
      %v1684 = vmul.f32 %v490, %v1594
      %v1685 = vmul.f32 %v491, %v1596
      %v1686 = vmul.f32 %v492, %v1598
      %v1687 = vmul.f32 %v493, %v1600
      %v1688 = vmul.f32 %v494, %v1602
      %v1689 = vmul.f32 %v495, %v1604
      %v1690 = vmul.f32 %v496, %v1606
      %v1691 = vmul.f32 %v497, %v1608
      %v1692 = vmul.f32 %v498, %v1610
      %v1693 = vmul.f32 %v499, %v1612
      %v1694 = vmul.f32 %v500, %v1614
      %v1695 = vmul.f32 %v501, %v1616
      %v1696 = vmul.f32 %v502, %v1618
      %v1697 = vmul.f32 %v503, %v1620
      %v1698 = vmul.f32 %v504, %v1622
      %v1699 = vmul.f32 %v505, %v1624
      %v1700 = vmul.f32 %v506, %v1626
      %v1701 = vmul.f32 %v507, %v1628
      %v1702 = vmul.f32 %v508, %v1630
      %v1703 = vmul.f32 %v509, %v1632
      %v1704 = vmul.f32 %v510, %v1634
      %v1705 = vmul.f32 %v511, %v1636
      %v1706 = vmul.f32 %v512, %v1638
      %v1707 = vmul.f32 %v513, %v1640
      %v1708 = vmul.f32 %v514, %v1642
      %v1709 = vmul.f32 %v515, %v1644
      %v1710 = vmul.f32 %v516, %v1643
      %s1711 = scalar_lea.vmem %s7, 256
      %v1712 = vld [vmem:[%s1711] sm:$0xff]
      %v1713 = vld [vmem:[%s1711 + $0x8] sm:$0xff]
      %v1714 = vld [vmem:[%s1711 + $0x10] sm:$0xff]
      %v1715 = vld [vmem:[%s1711 + $0x18] sm:$0xff]
      %v1716 = vld [vmem:[%s1711 + $0x20] sm:$0xff]
      %v1717 = vld [vmem:[%s1711 + $0x28] sm:$0xff]
      %v1718 = vld [vmem:[%s1711 + $0x30] sm:$0xff]
      %v1719 = vld [vmem:[%s1711 + $0x38] sm:$0xff]
      %v1720 = vld [vmem:[%s1711 + $0x40] sm:$0xff]
      %v1721 = vld [vmem:[%s1711 + $0x48] sm:$0xff]
      %v1722 = vld [vmem:[%s1711 + $0x50] sm:$0xff]
      %v1723 = vld [vmem:[%s1711 + $0x58] sm:$0xff]
      %v1724 = vld [vmem:[%s1711 + $0x60] sm:$0xff]
      %v1725 = vld [vmem:[%s1711 + $0x68] sm:$0xff]
      %v1726 = vld [vmem:[%s1711 + $0x70] sm:$0xff]
      %v1727 = vld [vmem:[%s1711 + $0x78] sm:$0xff]
      %v1761 = vrot.slane %v1678, 1
      %v1762 = vrot.slane %v1679, 1
      %v1763 = vsel %vm678, %v1761, %v1762
      %v1764 = vrot.slane %v1680, 1
      %v1765 = vsel %vm678, %v1762, %v1764
      %v1766 = vrot.slane %v1681, 1
      %v1767 = vsel %vm678, %v1764, %v1766
      %v1768 = vrot.slane %v1682, 1
      %v1769 = vsel %vm678, %v1766, %v1768
      %v1770 = vrot.slane %v1683, 1
      %v1771 = vsel %vm678, %v1768, %v1770
      %v1772 = vrot.slane %v1684, 1
      %v1773 = vsel %vm678, %v1770, %v1772
      %v1774 = vrot.slane %v1685, 1
      %v1775 = vsel %vm678, %v1772, %v1774
      %v1776 = vrot.slane %v1686, 1
      %v1777 = vsel %vm678, %v1774, %v1776
      %v1778 = vrot.slane %v1687, 1
      %v1779 = vsel %vm678, %v1776, %v1778
      %v1780 = vrot.slane %v1688, 1
      %v1781 = vsel %vm678, %v1778, %v1780
      %v1782 = vrot.slane %v1689, 1
      %v1783 = vsel %vm678, %v1780, %v1782
      %v1784 = vrot.slane %v1690, 1
      %v1785 = vsel %vm678, %v1782, %v1784
      %v1786 = vrot.slane %v1691, 1
      %v1787 = vsel %vm678, %v1784, %v1786
      %v1788 = vrot.slane %v1692, 1
      %v1789 = vsel %vm678, %v1786, %v1788
      %v1790 = vrot.slane %v1693, 1
      %v1791 = vsel %vm678, %v1788, %v1790
      %v1792 = vrot.slane %v1694, 1
      %v1793 = vsel %vm678, %v1790, %v1792
      %v1794 = vrot.slane %v1695, 1
      %v1795 = vsel %vm678, %v1792, %v1794
      %v1796 = vrot.slane %v1696, 1
      %v1797 = vsel %vm678, %v1794, %v1796
      %v1798 = vrot.slane %v1697, 1
      %v1799 = vsel %vm678, %v1796, %v1798
      %v1800 = vrot.slane %v1698, 1
      %v1801 = vsel %vm678, %v1798, %v1800
      %v1802 = vrot.slane %v1699, 1
      %v1803 = vsel %vm678, %v1800, %v1802
      %v1804 = vrot.slane %v1700, 1
      %v1805 = vsel %vm678, %v1802, %v1804
      %v1806 = vrot.slane %v1701, 1
      %v1807 = vsel %vm678, %v1804, %v1806
      %v1808 = vrot.slane %v1702, 1
      %v1809 = vsel %vm678, %v1806, %v1808
      %v1810 = vrot.slane %v1703, 1
      %v1811 = vsel %vm678, %v1808, %v1810
      %v1812 = vrot.slane %v1704, 1
      %v1813 = vsel %vm678, %v1810, %v1812
      %v1814 = vrot.slane %v1705, 1
      %v1815 = vsel %vm678, %v1812, %v1814
      %v1816 = vrot.slane %v1706, 1
      %v1817 = vsel %vm678, %v1814, %v1816
      %v1818 = vrot.slane %v1707, 1
      %v1819 = vsel %vm678, %v1816, %v1818
      %v1820 = vrot.slane %v1708, 1
      %v1821 = vsel %vm678, %v1818, %v1820
      %v1822 = vrot.slane %v1709, 1
      %v1823 = vsel %vm678, %v1820, %v1822
      %v1824 = vrot.slane %v1710, 1
      %v1825 = vsel %vm678, %v1822, %v1824
      %1858 = vmatprep.subr.mxu0 0.0
      %1859 = vmatpush1.msra.mxu0 %v1712
      %1860 = vmatprep.subr.mxu0 0.0
      %1861 = vmatpush1.msra.mxu0 %v1713
      %1862 = vmatprep.subr.mxu0 0.0
      %1863 = vmatpush1.msra.mxu0 %v1714
      %1864 = vmatprep.subr.mxu0 0.0
      %1865 = vmatpush1.msra.mxu0 %v1715
      %1866 = vmatprep.subr.mxu0 0.0
      %1867 = vmatpush1.msra.mxu0 %v1716
      %1868 = vmatprep.subr.mxu0 0.0
      %1869 = vmatpush1.msra.mxu0 %v1717
      %1870 = vmatprep.subr.mxu0 0.0
      %1871 = vmatpush1.msra.mxu0 %v1718
      %1872 = vmatprep.subr.mxu0 0.0
      %1873 = vmatpush1.msra.mxu0 %v1719
      %1874 = vmatprep.subr.mxu0 0.0
      %1875 = vmatpush1.msra.mxu0 %v1720
      %1876 = vmatprep.subr.mxu0 0.0
      %1877 = vmatpush1.msra.mxu0 %v1721
      %1878 = vmatprep.subr.mxu0 0.0
      %1879 = vmatpush1.msra.mxu0 %v1722
      %1880 = vmatprep.subr.mxu0 0.0
      %1881 = vmatpush1.msra.mxu0 %v1723
      %1882 = vmatprep.subr.mxu0 0.0
      %1883 = vmatpush1.msra.mxu0 %v1724
      %1884 = vmatprep.subr.mxu0 0.0
      %1885 = vmatpush1.msra.mxu0 %v1725
      %1886 = vmatprep.subr.mxu0 0.0
      %1887 = vmatpush1.msra.mxu0 %v1726
      %1888 = vmatprep.subr.mxu0 0.0
      %1889 = vmatpush1.msra.mxu0 %v1727
      %1890 = vmatprep.subr.mxu0 0.0
      %1891 = vmatpush1.msra.mxu0 0.0
      %1892 = vmatprep.subr.mxu0 0.0
      %1893 = vmatpush1.msra.mxu0 0.0
      %1894 = vmatprep.subr.mxu0 0.0
      %1895 = vmatpush1.msra.mxu0 0.0
      %1896 = vmatprep.subr.mxu0 0.0
      %1897 = vmatpush1.msra.mxu0 0.0
      %1898 = vmatprep.subr.mxu0 0.0
      %1899 = vmatpush1.msra.mxu0 0.0
      %1900 = vmatprep.subr.mxu0 0.0
      %1901 = vmatpush1.msra.mxu0 0.0
      %1902 = vmatprep.subr.mxu0 0.0
      %1903 = vmatpush1.msra.mxu0 0.0
      %1904 = vmatprep.subr.mxu0 0.0
      %1905 = vmatpush1.msra.mxu0 0.0
      %1906 = vmatprep.subr.mxu0 0.0
      %1907 = vmatpush1.msra.mxu0 0.0
      %1908 = vmatprep.subr.mxu0 0.0
      %1909 = vmatpush1.msra.mxu0 0.0
      %1910 = vmatprep.subr.mxu0 0.0
      %1911 = vmatpush1.msra.mxu0 0.0
      %1912 = vmatprep.subr.mxu0 0.0
      %1913 = vmatpush1.msra.mxu0 0.0
      %1914 = vmatprep.subr.mxu0 0.0
      %1915 = vmatpush1.msra.mxu0 0.0
      %1916 = vmatprep.subr.mxu0 0.0
      %1917 = vmatpush1.msra.mxu0 0.0
      %1918 = vmatprep.subr.mxu0 0.0
      %1919 = vmatpush1.msra.mxu0 0.0
      %1920 = vmatprep.subr.mxu0 0.0
      %1921 = vmatpush1.msra.mxu0 0.0
      %1922 = vmatprep.mubr.f32.mxu0 0.0
      %1923 = vmatmul.mubr.f32.gmra.mrb[0].mxu0 %v1763
      %v1924 = vpop.f32.mrb[0].mxu0
      %v1925 = vadd.f32 0.0, %v1924
      %v1926 = vpop.f32.mrb[0].mxu0
      %1927 = vmatprep.mubr.f32.mxu0 0.0
      %1928 = vmatmul.mubr.f32.gmra.mrb[0].mxu0 %v1765
      %v1929 = vpop.f32.mrb[0].mxu0
      %v1930 = vadd.f32 0.0, %v1929
      %v1931 = vpop.f32.mrb[0].mxu0
      %1932 = vmatprep.mubr.f32.mxu0 0.0
      %1933 = vmatmul.mubr.f32.gmra.mrb[0].mxu0 %v1767
      %v1934 = vpop.f32.mrb[0].mxu0
      %v1935 = vadd.f32 0.0, %v1934
      %v1936 = vpop.f32.mrb[0].mxu0
      %1937 = vmatprep.mubr.f32.mxu0 0.0
      %1938 = vmatmul.mubr.f32.gmra.mrb[0].mxu0 %v1769
      %v1939 = vpop.f32.mrb[0].mxu0
      %v1940 = vadd.f32 0.0, %v1939
      %v1941 = vpop.f32.mrb[0].mxu0
      %1942 = vmatprep.mubr.f32.mxu0 0.0
      %1943 = vmatmul.mubr.f32.gmra.mrb[0].mxu0 %v1771
      %v1944 = vpop.f32.mrb[0].mxu0
      %v1945 = vadd.f32 0.0, %v1944
      %v1946 = vpop.f32.mrb[0].mxu0
      %1947 = vmatprep.mubr.f32.mxu0 0.0
      %1948 = vmatmul.mubr.f32.gmra.mrb[0].mxu0 %v1773
      %v1949 = vpop.f32.mrb[0].mxu0
      %v1950 = vadd.f32 0.0, %v1949
      %v1951 = vpop.f32.mrb[0].mxu0
      %1952 = vmatprep.mubr.f32.mxu0 0.0
      %1953 = vmatmul.mubr.f32.gmra.mrb[0].mxu0 %v1775
      %v1954 = vpop.f32.mrb[0].mxu0
      %v1955 = vadd.f32 0.0, %v1954
      %v1956 = vpop.f32.mrb[0].mxu0
      %1957 = vmatprep.mubr.f32.mxu0 0.0
      %1958 = vmatmul.mubr.f32.gmra.mrb[0].mxu0 %v1777
      %v1959 = vpop.f32.mrb[0].mxu0
      %v1960 = vadd.f32 0.0, %v1959
      %v1961 = vpop.f32.mrb[0].mxu0
      %1962 = vmatprep.mubr.f32.mxu0 0.0
      %1963 = vmatmul.mubr.f32.gmra.mrb[0].mxu0 %v1779
      %v1964 = vpop.f32.mrb[0].mxu0
      %v1965 = vadd.f32 0.0, %v1964
      %v1966 = vpop.f32.mrb[0].mxu0
      %1967 = vmatprep.mubr.f32.mxu0 0.0
      %1968 = vmatmul.mubr.f32.gmra.mrb[0].mxu0 %v1781
      %v1969 = vpop.f32.mrb[0].mxu0
      %v1970 = vadd.f32 0.0, %v1969
      %v1971 = vpop.f32.mrb[0].mxu0
      %1972 = vmatprep.mubr.f32.mxu0 0.0
      %1973 = vmatmul.mubr.f32.gmra.mrb[0].mxu0 %v1783
      %v1974 = vpop.f32.mrb[0].mxu0
      %v1975 = vadd.f32 0.0, %v1974
      %v1976 = vpop.f32.mrb[0].mxu0
      %1977 = vmatprep.mubr.f32.mxu0 0.0
      %1978 = vmatmul.mubr.f32.gmra.mrb[0].mxu0 %v1785
      %v1979 = vpop.f32.mrb[0].mxu0
      %v1980 = vadd.f32 0.0, %v1979
      %v1981 = vpop.f32.mrb[0].mxu0
      %1982 = vmatprep.mubr.f32.mxu0 0.0
      %1983 = vmatmul.mubr.f32.gmra.mrb[0].mxu0 %v1787
      %v1984 = vpop.f32.mrb[0].mxu0
      %v1985 = vadd.f32 0.0, %v1984
      %v1986 = vpop.f32.mrb[0].mxu0
      %1987 = vmatprep.mubr.f32.mxu0 0.0
      %1988 = vmatmul.mubr.f32.gmra.mrb[0].mxu0 %v1789
      %v1989 = vpop.f32.mrb[0].mxu0
      %v1990 = vadd.f32 0.0, %v1989
      %v1991 = vpop.f32.mrb[0].mxu0
      %1992 = vmatprep.mubr.f32.mxu0 0.0
      %1993 = vmatmul.mubr.f32.gmra.mrb[0].mxu0 %v1791
      %v1994 = vpop.f32.mrb[0].mxu0
      %v1995 = vadd.f32 0.0, %v1994
      %v1996 = vpop.f32.mrb[0].mxu0
      %1997 = vmatprep.mubr.f32.mxu0 0.0
      %1998 = vmatmul.mubr.f32.gmra.mrb[0].mxu0 %v1793
      %v1999 = vpop.f32.mrb[0].mxu0
      %v2000 = vadd.f32 0.0, %v1999
      %v2001 = vpop.f32.mrb[0].mxu0
      %2002 = vmatprep.mubr.f32.mxu0 0.0
      %2003 = vmatmul.mubr.f32.gmra.mrb[0].mxu0 %v1795
      %v2004 = vpop.f32.mrb[0].mxu0
      %v2005 = vadd.f32 0.0, %v2004
      %v2006 = vpop.f32.mrb[0].mxu0
      %2007 = vmatprep.mubr.f32.mxu0 0.0
      %2008 = vmatmul.mubr.f32.gmra.mrb[0].mxu0 %v1797
      %v2009 = vpop.f32.mrb[0].mxu0
      %v2010 = vadd.f32 0.0, %v2009
      %v2011 = vpop.f32.mrb[0].mxu0
      %2012 = vmatprep.mubr.f32.mxu0 0.0
      %2013 = vmatmul.mubr.f32.gmra.mrb[0].mxu0 %v1799
      %v2014 = vpop.f32.mrb[0].mxu0
      %v2015 = vadd.f32 0.0, %v2014
      %v2016 = vpop.f32.mrb[0].mxu0
      %2017 = vmatprep.mubr.f32.mxu0 0.0
      %2018 = vmatmul.mubr.f32.gmra.mrb[0].mxu0 %v1801
      %v2019 = vpop.f32.mrb[0].mxu0
      %v2020 = vadd.f32 0.0, %v2019
      %v2021 = vpop.f32.mrb[0].mxu0
      %2022 = vmatprep.mubr.f32.mxu0 0.0
      %2023 = vmatmul.mubr.f32.gmra.mrb[0].mxu0 %v1803
      %v2024 = vpop.f32.mrb[0].mxu0
      %v2025 = vadd.f32 0.0, %v2024
      %v2026 = vpop.f32.mrb[0].mxu0
      %2027 = vmatprep.mubr.f32.mxu0 0.0
      %2028 = vmatmul.mubr.f32.gmra.mrb[0].mxu0 %v1805
      %v2029 = vpop.f32.mrb[0].mxu0
      %v2030 = vadd.f32 0.0, %v2029
      %v2031 = vpop.f32.mrb[0].mxu0
      %2032 = vmatprep.mubr.f32.mxu0 0.0
      %2033 = vmatmul.mubr.f32.gmra.mrb[0].mxu0 %v1807
      %v2034 = vpop.f32.mrb[0].mxu0
      %v2035 = vadd.f32 0.0, %v2034
      %v2036 = vpop.f32.mrb[0].mxu0
      %2037 = vmatprep.mubr.f32.mxu0 0.0
      %2038 = vmatmul.mubr.f32.gmra.mrb[0].mxu0 %v1809
      %v2039 = vpop.f32.mrb[0].mxu0
      %v2040 = vadd.f32 0.0, %v2039
      %v2041 = vpop.f32.mrb[0].mxu0
      %2042 = vmatprep.mubr.f32.mxu0 0.0
      %2043 = vmatmul.mubr.f32.gmra.mrb[0].mxu0 %v1811
      %v2044 = vpop.f32.mrb[0].mxu0
      %v2045 = vadd.f32 0.0, %v2044
      %v2046 = vpop.f32.mrb[0].mxu0
      %2047 = vmatprep.mubr.f32.mxu0 0.0
      %2048 = vmatmul.mubr.f32.gmra.mrb[0].mxu0 %v1813
      %v2049 = vpop.f32.mrb[0].mxu0
      %v2050 = vadd.f32 0.0, %v2049
      %v2051 = vpop.f32.mrb[0].mxu0
      %2052 = vmatprep.mubr.f32.mxu0 0.0
      %2053 = vmatmul.mubr.f32.gmra.mrb[0].mxu0 %v1815
      %v2054 = vpop.f32.mrb[0].mxu0
      %v2055 = vadd.f32 0.0, %v2054
      %v2056 = vpop.f32.mrb[0].mxu0
      %2057 = vmatprep.mubr.f32.mxu0 0.0
      %2058 = vmatmul.mubr.f32.gmra.mrb[0].mxu0 %v1817
      %v2059 = vpop.f32.mrb[0].mxu0
      %v2060 = vadd.f32 0.0, %v2059
      %v2061 = vpop.f32.mrb[0].mxu0
      %2062 = vmatprep.mubr.f32.mxu0 0.0
      %2063 = vmatmul.mubr.f32.gmra.mrb[0].mxu0 %v1819
      %v2064 = vpop.f32.mrb[0].mxu0
      %v2065 = vadd.f32 0.0, %v2064
      %v2066 = vpop.f32.mrb[0].mxu0
      %2067 = vmatprep.mubr.f32.mxu0 0.0
      %2068 = vmatmul.mubr.f32.gmra.mrb[0].mxu0 %v1821
      %v2069 = vpop.f32.mrb[0].mxu0
      %v2070 = vadd.f32 0.0, %v2069
      %v2071 = vpop.f32.mrb[0].mxu0
      %2072 = vmatprep.mubr.f32.mxu0 0.0
      %2073 = vmatmul.mubr.f32.gmra.mrb[0].mxu0 %v1823
      %v2074 = vpop.f32.mrb[0].mxu0
      %v2075 = vadd.f32 0.0, %v2074
      %v2076 = vpop.f32.mrb[0].mxu0
      %2077 = vmatprep.mubr.f32.mxu0 0.0
      %2078 = vmatmul.mubr.f32.gmra.mrb[0].mxu0 %v1825
      %v2079 = vpop.f32.mrb[0].mxu0
      %v2080 = vadd.f32 0.0, %v2079
      %v2081 = vpop.f32.mrb[0].mxu0
      %2082 = vdwg.mxu0
      %v2083 = vadd.f32 %v1264, %v1925
      %v2084 = vadd.f32 %v1269, %v1930
      %v2085 = vadd.f32 %v1274, %v1935
      %v2086 = vadd.f32 %v1279, %v1940
      %v2087 = vadd.f32 %v1284, %v1945
      %v2088 = vadd.f32 %v1289, %v1950
      %v2089 = vadd.f32 %v1294, %v1955
      %v2090 = vadd.f32 %v1299, %v1960
      %v2091 = vadd.f32 %v1304, %v1965
      %v2092 = vadd.f32 %v1309, %v1970
      %v2093 = vadd.f32 %v1314, %v1975
      %v2094 = vadd.f32 %v1319, %v1980
      %v2095 = vadd.f32 %v1324, %v1985
      %v2096 = vadd.f32 %v1329, %v1990
      %v2097 = vadd.f32 %v1334, %v1995
      %v2098 = vadd.f32 %v1339, %v2000
      %v2099 = vadd.f32 %v1344, %v2005
      %v2100 = vadd.f32 %v1349, %v2010
      %v2101 = vadd.f32 %v1354, %v2015
      %v2102 = vadd.f32 %v1359, %v2020
      %v2103 = vadd.f32 %v1364, %v2025
      %v2104 = vadd.f32 %v1369, %v2030
      %v2105 = vadd.f32 %v1374, %v2035
      %v2106 = vadd.f32 %v1379, %v2040
      %v2107 = vadd.f32 %v1384, %v2045
      %v2108 = vadd.f32 %v1389, %v2050
      %v2109 = vadd.f32 %v1394, %v2055
      %v2110 = vadd.f32 %v1399, %v2060
      %v2111 = vadd.f32 %v1404, %v2065
      %v2112 = vadd.f32 %v1409, %v2070
      %v2113 = vadd.f32 %v1414, %v2075
      %v2114 = vadd.f32 %v1419, %v2080
      %v2115 = vmul.f32 %v486, %v681
      %v2116 = vmul.f32 %v487, %v683
      %v2117 = vmul.f32 %v488, %v685
      %v2118 = vmul.f32 %v489, %v687
      %v2119 = vmul.f32 %v490, %v689
      %v2120 = vmul.f32 %v491, %v691
      %v2121 = vmul.f32 %v492, %v693
      %v2122 = vmul.f32 %v493, %v695
      %v2123 = vmul.f32 %v494, %v697
      %v2124 = vmul.f32 %v495, %v699
      %v2125 = vmul.f32 %v496, %v701
      %v2126 = vmul.f32 %v497, %v703
      %v2127 = vmul.f32 %v498, %v705
      %v2128 = vmul.f32 %v499, %v707
      %v2129 = vmul.f32 %v500, %v709
      %v2130 = vmul.f32 %v501, %v711
      %v2131 = vmul.f32 %v502, %v713
      %v2132 = vmul.f32 %v503, %v715
      %v2133 = vmul.f32 %v504, %v717
      %v2134 = vmul.f32 %v505, %v719
      %v2135 = vmul.f32 %v506, %v721
      %v2136 = vmul.f32 %v507, %v723
      %v2137 = vmul.f32 %v508, %v725
      %v2138 = vmul.f32 %v509, %v727
      %v2139 = vmul.f32 %v510, %v729
      %v2140 = vmul.f32 %v511, %v731
      %v2141 = vmul.f32 %v512, %v733
      %v2142 = vmul.f32 %v513, %v735
      %v2143 = vmul.f32 %v514, %v737
      %v2144 = vmul.f32 %v515, %v739
      %v2145 = vmul.f32 %v516, %v741
      %v2146 = vmul.f32 %v517, %v740
      %s2147 = scalar_lea.vmem %s7, 384
      %v2148 = vld [vmem:[%s2147] sm:$0xff]
      %v2149 = vld [vmem:[%s2147 + $0x8] sm:$0xff]
      %v2150 = vld [vmem:[%s2147 + $0x10] sm:$0xff]
      %v2151 = vld [vmem:[%s2147 + $0x18] sm:$0xff]
      %v2152 = vld [vmem:[%s2147 + $0x20] sm:$0xff]
      %v2153 = vld [vmem:[%s2147 + $0x28] sm:$0xff]
      %v2154 = vld [vmem:[%s2147 + $0x30] sm:$0xff]
      %v2155 = vld [vmem:[%s2147 + $0x38] sm:$0xff]
      %v2156 = vld [vmem:[%s2147 + $0x40] sm:$0xff]
      %v2157 = vld [vmem:[%s2147 + $0x48] sm:$0xff]
      %v2158 = vld [vmem:[%s2147 + $0x50] sm:$0xff]
      %v2159 = vld [vmem:[%s2147 + $0x58] sm:$0xff]
      %v2160 = vld [vmem:[%s2147 + $0x60] sm:$0xff]
      %v2161 = vld [vmem:[%s2147 + $0x68] sm:$0xff]
      %v2162 = vld [vmem:[%s2147 + $0x70] sm:$0xff]
      %v2163 = vld [vmem:[%s2147 + $0x78] sm:$0xff]
      %v2196 = vrot.slane %v2115, 7
      %v2197 = vsel %vm1099, %v1100, %v2196
      %v2198 = vrot.slane %v2116, 7
      %v2199 = vsel %vm1099, %v2196, %v2198
      %v2200 = vrot.slane %v2117, 7
      %v2201 = vsel %vm1099, %v2198, %v2200
      %v2202 = vrot.slane %v2118, 7
      %v2203 = vsel %vm1099, %v2200, %v2202
      %v2204 = vrot.slane %v2119, 7
      %v2205 = vsel %vm1099, %v2202, %v2204
      %v2206 = vrot.slane %v2120, 7
      %v2207 = vsel %vm1099, %v2204, %v2206
      %v2208 = vrot.slane %v2121, 7
      %v2209 = vsel %vm1099, %v2206, %v2208
      %v2210 = vrot.slane %v2122, 7
      %v2211 = vsel %vm1099, %v2208, %v2210
      %v2212 = vrot.slane %v2123, 7
      %v2213 = vsel %vm1099, %v2210, %v2212
      %v2214 = vrot.slane %v2124, 7
      %v2215 = vsel %vm1099, %v2212, %v2214
      %v2216 = vrot.slane %v2125, 7
      %v2217 = vsel %vm1099, %v2214, %v2216
      %v2218 = vrot.slane %v2126, 7
      %v2219 = vsel %vm1099, %v2216, %v2218
      %v2220 = vrot.slane %v2127, 7
      %v2221 = vsel %vm1099, %v2218, %v2220
      %v2222 = vrot.slane %v2128, 7
      %v2223 = vsel %vm1099, %v2220, %v2222
      %v2224 = vrot.slane %v2129, 7
      %v2225 = vsel %vm1099, %v2222, %v2224
      %v2226 = vrot.slane %v2130, 7
      %v2227 = vsel %vm1099, %v2224, %v2226
      %v2228 = vrot.slane %v2131, 7
      %v2229 = vsel %vm1099, %v2226, %v2228
      %v2230 = vrot.slane %v2132, 7
      %v2231 = vsel %vm1099, %v2228, %v2230
      %v2232 = vrot.slane %v2133, 7
      %v2233 = vsel %vm1099, %v2230, %v2232
      %v2234 = vrot.slane %v2134, 7
      %v2235 = vsel %vm1099, %v2232, %v2234
      %v2236 = vrot.slane %v2135, 7
      %v2237 = vsel %vm1099, %v2234, %v2236
      %v2238 = vrot.slane %v2136, 7
      %v2239 = vsel %vm1099, %v2236, %v2238
      %v2240 = vrot.slane %v2137, 7
      %v2241 = vsel %vm1099, %v2238, %v2240
      %v2242 = vrot.slane %v2138, 7
      %v2243 = vsel %vm1099, %v2240, %v2242
      %v2244 = vrot.slane %v2139, 7
      %v2245 = vsel %vm1099, %v2242, %v2244
      %v2246 = vrot.slane %v2140, 7
      %v2247 = vsel %vm1099, %v2244, %v2246
      %v2248 = vrot.slane %v2141, 7
      %v2249 = vsel %vm1099, %v2246, %v2248
      %v2250 = vrot.slane %v2142, 7
      %v2251 = vsel %vm1099, %v2248, %v2250
      %v2252 = vrot.slane %v2143, 7
      %v2253 = vsel %vm1099, %v2250, %v2252
      %v2254 = vrot.slane %v2144, 7
      %v2255 = vsel %vm1099, %v2252, %v2254
      %v2256 = vrot.slane %v2145, 7
      %v2257 = vsel %vm1099, %v2254, %v2256
      %v2258 = vrot.slane %v2146, 7
      %v2259 = vsel %vm1099, %v2256, %v2258
      %2292 = vmatprep.subr.mxu0 0.0
      %2293 = vmatpush1.msra.mxu0 %v2148
      %2294 = vmatprep.subr.mxu0 0.0
      %2295 = vmatpush1.msra.mxu0 %v2149
      %2296 = vmatprep.subr.mxu0 0.0
      %2297 = vmatpush1.msra.mxu0 %v2150
      %2298 = vmatprep.subr.mxu0 0.0
      %2299 = vmatpush1.msra.mxu0 %v2151
      %2300 = vmatprep.subr.mxu0 0.0
      %2301 = vmatpush1.msra.mxu0 %v2152
      %2302 = vmatprep.subr.mxu0 0.0
      %2303 = vmatpush1.msra.mxu0 %v2153
      %2304 = vmatprep.subr.mxu0 0.0
      %2305 = vmatpush1.msra.mxu0 %v2154
      %2306 = vmatprep.subr.mxu0 0.0
      %2307 = vmatpush1.msra.mxu0 %v2155
      %2308 = vmatprep.subr.mxu0 0.0
      %2309 = vmatpush1.msra.mxu0 %v2156
      %2310 = vmatprep.subr.mxu0 0.0
      %2311 = vmatpush1.msra.mxu0 %v2157
      %2312 = vmatprep.subr.mxu0 0.0
      %2313 = vmatpush1.msra.mxu0 %v2158
      %2314 = vmatprep.subr.mxu0 0.0
      %2315 = vmatpush1.msra.mxu0 %v2159
      %2316 = vmatprep.subr.mxu0 0.0
      %2317 = vmatpush1.msra.mxu0 %v2160
      %2318 = vmatprep.subr.mxu0 0.0
      %2319 = vmatpush1.msra.mxu0 %v2161
      %2320 = vmatprep.subr.mxu0 0.0
      %2321 = vmatpush1.msra.mxu0 %v2162
      %2322 = vmatprep.subr.mxu0 0.0
      %2323 = vmatpush1.msra.mxu0 %v2163
      %2324 = vmatprep.subr.mxu0 0.0
      %2325 = vmatpush1.msra.mxu0 0.0
      %2326 = vmatprep.subr.mxu0 0.0
      %2327 = vmatpush1.msra.mxu0 0.0
      %2328 = vmatprep.subr.mxu0 0.0
      %2329 = vmatpush1.msra.mxu0 0.0
      %2330 = vmatprep.subr.mxu0 0.0
      %2331 = vmatpush1.msra.mxu0 0.0
      %2332 = vmatprep.subr.mxu0 0.0
      %2333 = vmatpush1.msra.mxu0 0.0
      %2334 = vmatprep.subr.mxu0 0.0
      %2335 = vmatpush1.msra.mxu0 0.0
      %2336 = vmatprep.subr.mxu0 0.0
      %2337 = vmatpush1.msra.mxu0 0.0
      %2338 = vmatprep.subr.mxu0 0.0
      %2339 = vmatpush1.msra.mxu0 0.0
      %2340 = vmatprep.subr.mxu0 0.0
      %2341 = vmatpush1.msra.mxu0 0.0
      %2342 = vmatprep.subr.mxu0 0.0
      %2343 = vmatpush1.msra.mxu0 0.0
      %2344 = vmatprep.subr.mxu0 0.0
      %2345 = vmatpush1.msra.mxu0 0.0
      %2346 = vmatprep.subr.mxu0 0.0
      %2347 = vmatpush1.msra.mxu0 0.0
      %2348 = vmatprep.subr.mxu0 0.0
      %2349 = vmatpush1.msra.mxu0 0.0
      %2350 = vmatprep.subr.mxu0 0.0
      %2351 = vmatpush1.msra.mxu0 0.0
      %2352 = vmatprep.subr.mxu0 0.0
      %2353 = vmatpush1.msra.mxu0 0.0
      %2354 = vmatprep.subr.mxu0 0.0
      %2355 = vmatpush1.msra.mxu0 0.0
      %2356 = vmatprep.mubr.f32.mxu0 0.0
      %2357 = vmatmul.mubr.f32.gmra.mrb[0].mxu0 %v2197
      %v2358 = vpop.f32.mrb[0].mxu0
      %v2359 = vadd.f32 0.0, %v2358
      %v2360 = vpop.f32.mrb[0].mxu0
      %2361 = vmatprep.mubr.f32.mxu0 0.0
      %2362 = vmatmul.mubr.f32.gmra.mrb[0].mxu0 %v2199
      %v2363 = vpop.f32.mrb[0].mxu0
      %v2364 = vadd.f32 0.0, %v2363
      %v2365 = vpop.f32.mrb[0].mxu0
      %2366 = vmatprep.mubr.f32.mxu0 0.0
      %2367 = vmatmul.mubr.f32.gmra.mrb[0].mxu0 %v2201
      %v2368 = vpop.f32.mrb[0].mxu0
      %v2369 = vadd.f32 0.0, %v2368
      %v2370 = vpop.f32.mrb[0].mxu0
      %2371 = vmatprep.mubr.f32.mxu0 0.0
      %2372 = vmatmul.mubr.f32.gmra.mrb[0].mxu0 %v2203
      %v2373 = vpop.f32.mrb[0].mxu0
      %v2374 = vadd.f32 0.0, %v2373
      %v2375 = vpop.f32.mrb[0].mxu0
      %2376 = vmatprep.mubr.f32.mxu0 0.0
      %2377 = vmatmul.mubr.f32.gmra.mrb[0].mxu0 %v2205
      %v2378 = vpop.f32.mrb[0].mxu0
      %v2379 = vadd.f32 0.0, %v2378
      %v2380 = vpop.f32.mrb[0].mxu0
      %2381 = vmatprep.mubr.f32.mxu0 0.0
      %2382 = vmatmul.mubr.f32.gmra.mrb[0].mxu0 %v2207
      %v2383 = vpop.f32.mrb[0].mxu0
      %v2384 = vadd.f32 0.0, %v2383
      %v2385 = vpop.f32.mrb[0].mxu0
      %2386 = vmatprep.mubr.f32.mxu0 0.0
      %2387 = vmatmul.mubr.f32.gmra.mrb[0].mxu0 %v2209
      %v2388 = vpop.f32.mrb[0].mxu0
      %v2389 = vadd.f32 0.0, %v2388
      %v2390 = vpop.f32.mrb[0].mxu0
      %2391 = vmatprep.mubr.f32.mxu0 0.0
      %2392 = vmatmul.mubr.f32.gmra.mrb[0].mxu0 %v2211
      %v2393 = vpop.f32.mrb[0].mxu0
      %v2394 = vadd.f32 0.0, %v2393
      %v2395 = vpop.f32.mrb[0].mxu0
      %2396 = vmatprep.mubr.f32.mxu0 0.0
      %2397 = vmatmul.mubr.f32.gmra.mrb[0].mxu0 %v2213
      %v2398 = vpop.f32.mrb[0].mxu0
      %v2399 = vadd.f32 0.0, %v2398
      %v2400 = vpop.f32.mrb[0].mxu0
      %2401 = vmatprep.mubr.f32.mxu0 0.0
      %2402 = vmatmul.mubr.f32.gmra.mrb[0].mxu0 %v2215
      %v2403 = vpop.f32.mrb[0].mxu0
      %v2404 = vadd.f32 0.0, %v2403
      %v2405 = vpop.f32.mrb[0].mxu0
      %2406 = vmatprep.mubr.f32.mxu0 0.0
      %2407 = vmatmul.mubr.f32.gmra.mrb[0].mxu0 %v2217
      %v2408 = vpop.f32.mrb[0].mxu0
      %v2409 = vadd.f32 0.0, %v2408
      %v2410 = vpop.f32.mrb[0].mxu0
      %2411 = vmatprep.mubr.f32.mxu0 0.0
      %2412 = vmatmul.mubr.f32.gmra.mrb[0].mxu0 %v2219
      %v2413 = vpop.f32.mrb[0].mxu0
      %v2414 = vadd.f32 0.0, %v2413
      %v2415 = vpop.f32.mrb[0].mxu0
      %2416 = vmatprep.mubr.f32.mxu0 0.0
      %2417 = vmatmul.mubr.f32.gmra.mrb[0].mxu0 %v2221
      %v2418 = vpop.f32.mrb[0].mxu0
      %v2419 = vadd.f32 0.0, %v2418
      %v2420 = vpop.f32.mrb[0].mxu0
      %2421 = vmatprep.mubr.f32.mxu0 0.0
      %2422 = vmatmul.mubr.f32.gmra.mrb[0].mxu0 %v2223
      %v2423 = vpop.f32.mrb[0].mxu0
      %v2424 = vadd.f32 0.0, %v2423
      %v2425 = vpop.f32.mrb[0].mxu0
      %2426 = vmatprep.mubr.f32.mxu0 0.0
      %2427 = vmatmul.mubr.f32.gmra.mrb[0].mxu0 %v2225
      %v2428 = vpop.f32.mrb[0].mxu0
      %v2429 = vadd.f32 0.0, %v2428
      %v2430 = vpop.f32.mrb[0].mxu0
      %2431 = vmatprep.mubr.f32.mxu0 0.0
      %2432 = vmatmul.mubr.f32.gmra.mrb[0].mxu0 %v2227
      %v2433 = vpop.f32.mrb[0].mxu0
      %v2434 = vadd.f32 0.0, %v2433
      %v2435 = vpop.f32.mrb[0].mxu0
      %2436 = vmatprep.mubr.f32.mxu0 0.0
      %2437 = vmatmul.mubr.f32.gmra.mrb[0].mxu0 %v2229
      %v2438 = vpop.f32.mrb[0].mxu0
      %v2439 = vadd.f32 0.0, %v2438
      %v2440 = vpop.f32.mrb[0].mxu0
      %2441 = vmatprep.mubr.f32.mxu0 0.0
      %2442 = vmatmul.mubr.f32.gmra.mrb[0].mxu0 %v2231
      %v2443 = vpop.f32.mrb[0].mxu0
      %v2444 = vadd.f32 0.0, %v2443
      %v2445 = vpop.f32.mrb[0].mxu0
      %2446 = vmatprep.mubr.f32.mxu0 0.0
      %2447 = vmatmul.mubr.f32.gmra.mrb[0].mxu0 %v2233
      %v2448 = vpop.f32.mrb[0].mxu0
      %v2449 = vadd.f32 0.0, %v2448
      %v2450 = vpop.f32.mrb[0].mxu0
      %2451 = vmatprep.mubr.f32.mxu0 0.0
      %2452 = vmatmul.mubr.f32.gmra.mrb[0].mxu0 %v2235
      %v2453 = vpop.f32.mrb[0].mxu0
      %v2454 = vadd.f32 0.0, %v2453
      %v2455 = vpop.f32.mrb[0].mxu0
      %2456 = vmatprep.mubr.f32.mxu0 0.0
      %2457 = vmatmul.mubr.f32.gmra.mrb[0].mxu0 %v2237
      %v2458 = vpop.f32.mrb[0].mxu0
      %v2459 = vadd.f32 0.0, %v2458
      %v2460 = vpop.f32.mrb[0].mxu0
      %2461 = vmatprep.mubr.f32.mxu0 0.0
      %2462 = vmatmul.mubr.f32.gmra.mrb[0].mxu0 %v2239
      %v2463 = vpop.f32.mrb[0].mxu0
      %v2464 = vadd.f32 0.0, %v2463
      %v2465 = vpop.f32.mrb[0].mxu0
      %2466 = vmatprep.mubr.f32.mxu0 0.0
      %2467 = vmatmul.mubr.f32.gmra.mrb[0].mxu0 %v2241
      %v2468 = vpop.f32.mrb[0].mxu0
      %v2469 = vadd.f32 0.0, %v2468
      %v2470 = vpop.f32.mrb[0].mxu0
      %2471 = vmatprep.mubr.f32.mxu0 0.0
      %2472 = vmatmul.mubr.f32.gmra.mrb[0].mxu0 %v2243
      %v2473 = vpop.f32.mrb[0].mxu0
      %v2474 = vadd.f32 0.0, %v2473
      %v2475 = vpop.f32.mrb[0].mxu0
      %2476 = vmatprep.mubr.f32.mxu0 0.0
      %2477 = vmatmul.mubr.f32.gmra.mrb[0].mxu0 %v2245
      %v2478 = vpop.f32.mrb[0].mxu0
      %v2479 = vadd.f32 0.0, %v2478
      %v2480 = vpop.f32.mrb[0].mxu0
      %2481 = vmatprep.mubr.f32.mxu0 0.0
      %2482 = vmatmul.mubr.f32.gmra.mrb[0].mxu0 %v2247
      %v2483 = vpop.f32.mrb[0].mxu0
      %v2484 = vadd.f32 0.0, %v2483
      %v2485 = vpop.f32.mrb[0].mxu0
      %2486 = vmatprep.mubr.f32.mxu0 0.0
      %2487 = vmatmul.mubr.f32.gmra.mrb[0].mxu0 %v2249
      %v2488 = vpop.f32.mrb[0].mxu0
      %v2489 = vadd.f32 0.0, %v2488
      %v2490 = vpop.f32.mrb[0].mxu0
      %2491 = vmatprep.mubr.f32.mxu0 0.0
      %2492 = vmatmul.mubr.f32.gmra.mrb[0].mxu0 %v2251
      %v2493 = vpop.f32.mrb[0].mxu0
      %v2494 = vadd.f32 0.0, %v2493
      %v2495 = vpop.f32.mrb[0].mxu0
      %2496 = vmatprep.mubr.f32.mxu0 0.0
      %2497 = vmatmul.mubr.f32.gmra.mrb[0].mxu0 %v2253
      %v2498 = vpop.f32.mrb[0].mxu0
      %v2499 = vadd.f32 0.0, %v2498
      %v2500 = vpop.f32.mrb[0].mxu0
      %2501 = vmatprep.mubr.f32.mxu0 0.0
      %2502 = vmatmul.mubr.f32.gmra.mrb[0].mxu0 %v2255
      %v2503 = vpop.f32.mrb[0].mxu0
      %v2504 = vadd.f32 0.0, %v2503
      %v2505 = vpop.f32.mrb[0].mxu0
      %2506 = vmatprep.mubr.f32.mxu0 0.0
      %2507 = vmatmul.mubr.f32.gmra.mrb[0].mxu0 %v2257
      %v2508 = vpop.f32.mrb[0].mxu0
      %v2509 = vadd.f32 0.0, %v2508
      %v2510 = vpop.f32.mrb[0].mxu0
      %2511 = vmatprep.mubr.f32.mxu0 0.0
      %2512 = vmatmul.mubr.f32.gmra.mrb[0].mxu0 %v2259
      %v2513 = vpop.f32.mrb[0].mxu0
      %v2514 = vadd.f32 0.0, %v2513
      %v2515 = vpop.f32.mrb[0].mxu0
      %2516 = vdwg.mxu0
      %v2517 = vadd.f32 %v2083, %v2359
      %v2518 = vadd.f32 %v2084, %v2364
      %v2519 = vadd.f32 %v2085, %v2369
      %v2520 = vadd.f32 %v2086, %v2374
      %v2521 = vadd.f32 %v2087, %v2379
      %v2522 = vadd.f32 %v2088, %v2384
      %v2523 = vadd.f32 %v2089, %v2389
      %v2524 = vadd.f32 %v2090, %v2394
      %v2525 = vadd.f32 %v2091, %v2399
      %v2526 = vadd.f32 %v2092, %v2404
      %v2527 = vadd.f32 %v2093, %v2409
      %v2528 = vadd.f32 %v2094, %v2414
      %v2529 = vadd.f32 %v2095, %v2419
      %v2530 = vadd.f32 %v2096, %v2424
      %v2531 = vadd.f32 %v2097, %v2429
      %v2532 = vadd.f32 %v2098, %v2434
      %v2533 = vadd.f32 %v2099, %v2439
      %v2534 = vadd.f32 %v2100, %v2444
      %v2535 = vadd.f32 %v2101, %v2449
      %v2536 = vadd.f32 %v2102, %v2454
      %v2537 = vadd.f32 %v2103, %v2459
      %v2538 = vadd.f32 %v2104, %v2464
      %v2539 = vadd.f32 %v2105, %v2469
      %v2540 = vadd.f32 %v2106, %v2474
      %v2541 = vadd.f32 %v2107, %v2479
      %v2542 = vadd.f32 %v2108, %v2484
      %v2543 = vadd.f32 %v2109, %v2489
      %v2544 = vadd.f32 %v2110, %v2494
      %v2545 = vadd.f32 %v2111, %v2499
      %v2546 = vadd.f32 %v2112, %v2504
      %v2547 = vadd.f32 %v2113, %v2509
      %v2548 = vadd.f32 %v2114, %v2514
      %s2549 = scalar_lea.vmem %s7, 512
      %v2550 = vld [vmem:[%s2549] sm:$0xff]
      %v2551 = vld [vmem:[%s2549 + $0x8] sm:$0xff]
      %v2552 = vld [vmem:[%s2549 + $0x10] sm:$0xff]
      %v2553 = vld [vmem:[%s2549 + $0x18] sm:$0xff]
      %v2554 = vld [vmem:[%s2549 + $0x20] sm:$0xff]
      %v2555 = vld [vmem:[%s2549 + $0x28] sm:$0xff]
      %v2556 = vld [vmem:[%s2549 + $0x30] sm:$0xff]
      %v2557 = vld [vmem:[%s2549 + $0x38] sm:$0xff]
      %v2558 = vld [vmem:[%s2549 + $0x40] sm:$0xff]
      %v2559 = vld [vmem:[%s2549 + $0x48] sm:$0xff]
      %v2560 = vld [vmem:[%s2549 + $0x50] sm:$0xff]
      %v2561 = vld [vmem:[%s2549 + $0x58] sm:$0xff]
      %v2562 = vld [vmem:[%s2549 + $0x60] sm:$0xff]
      %v2563 = vld [vmem:[%s2549 + $0x68] sm:$0xff]
      %v2564 = vld [vmem:[%s2549 + $0x70] sm:$0xff]
      %v2565 = vld [vmem:[%s2549 + $0x78] sm:$0xff]
      %2566 = vmatprep.subr.mxu0 0.0
      %2567 = vmatpush1.msra.mxu0 %v2550
      %2568 = vmatprep.subr.mxu0 0.0
      %2569 = vmatpush1.msra.mxu0 %v2551
      %2570 = vmatprep.subr.mxu0 0.0
      %2571 = vmatpush1.msra.mxu0 %v2552
      %2572 = vmatprep.subr.mxu0 0.0
      %2573 = vmatpush1.msra.mxu0 %v2553
      %2574 = vmatprep.subr.mxu0 0.0
      %2575 = vmatpush1.msra.mxu0 %v2554
      %2576 = vmatprep.subr.mxu0 0.0
      %2577 = vmatpush1.msra.mxu0 %v2555
      %2578 = vmatprep.subr.mxu0 0.0
      %2579 = vmatpush1.msra.mxu0 %v2556
      %2580 = vmatprep.subr.mxu0 0.0
      %2581 = vmatpush1.msra.mxu0 %v2557
      %2582 = vmatprep.subr.mxu0 0.0
      %2583 = vmatpush1.msra.mxu0 %v2558
      %2584 = vmatprep.subr.mxu0 0.0
      %2585 = vmatpush1.msra.mxu0 %v2559
      %2586 = vmatprep.subr.mxu0 0.0
      %2587 = vmatpush1.msra.mxu0 %v2560
      %2588 = vmatprep.subr.mxu0 0.0
      %2589 = vmatpush1.msra.mxu0 %v2561
      %2590 = vmatprep.subr.mxu0 0.0
      %2591 = vmatpush1.msra.mxu0 %v2562
      %2592 = vmatprep.subr.mxu0 0.0
      %2593 = vmatpush1.msra.mxu0 %v2563
      %2594 = vmatprep.subr.mxu0 0.0
      %2595 = vmatpush1.msra.mxu0 %v2564
      %2596 = vmatprep.subr.mxu0 0.0
      %2597 = vmatpush1.msra.mxu0 %v2565
      %2598 = vmatprep.subr.mxu0 0.0
      %2599 = vmatpush1.msra.mxu0 0.0
      %2600 = vmatprep.subr.mxu0 0.0
      %2601 = vmatpush1.msra.mxu0 0.0
      %2602 = vmatprep.subr.mxu0 0.0
      %2603 = vmatpush1.msra.mxu0 0.0
      %2604 = vmatprep.subr.mxu0 0.0
      %2605 = vmatpush1.msra.mxu0 0.0
      %2606 = vmatprep.subr.mxu0 0.0
      %2607 = vmatpush1.msra.mxu0 0.0
      %2608 = vmatprep.subr.mxu0 0.0
      %2609 = vmatpush1.msra.mxu0 0.0
      %2610 = vmatprep.subr.mxu0 0.0
      %2611 = vmatpush1.msra.mxu0 0.0
      %2612 = vmatprep.subr.mxu0 0.0
      %2613 = vmatpush1.msra.mxu0 0.0
      %2614 = vmatprep.subr.mxu0 0.0
      %2615 = vmatpush1.msra.mxu0 0.0
      %2616 = vmatprep.subr.mxu0 0.0
      %2617 = vmatpush1.msra.mxu0 0.0
      %2618 = vmatprep.subr.mxu0 0.0
      %2619 = vmatpush1.msra.mxu0 0.0
      %2620 = vmatprep.subr.mxu0 0.0
      %2621 = vmatpush1.msra.mxu0 0.0
      %2622 = vmatprep.subr.mxu0 0.0
      %2623 = vmatpush1.msra.mxu0 0.0
      %2624 = vmatprep.subr.mxu0 0.0
      %2625 = vmatpush1.msra.mxu0 0.0
      %2626 = vmatprep.subr.mxu0 0.0
      %2627 = vmatpush1.msra.mxu0 0.0
      %2628 = vmatprep.subr.mxu0 0.0
      %2629 = vmatpush1.msra.mxu0 0.0
      %2630 = vmatprep.mubr.f32.mxu0 0.0
      %2631 = vmatmul.mubr.f32.gmra.mrb[0].mxu0 %v486
      %v2632 = vpop.f32.mrb[0].mxu0
      %v2633 = vadd.f32 0.0, %v2632
      %v2634 = vpop.f32.mrb[0].mxu0
      %2635 = vmatprep.mubr.f32.mxu0 0.0
      %2636 = vmatmul.mubr.f32.gmra.mrb[0].mxu0 %v487
      %v2637 = vpop.f32.mrb[0].mxu0
      %v2638 = vadd.f32 0.0, %v2637
      %v2639 = vpop.f32.mrb[0].mxu0
      %2640 = vmatprep.mubr.f32.mxu0 0.0
      %2641 = vmatmul.mubr.f32.gmra.mrb[0].mxu0 %v488
      %v2642 = vpop.f32.mrb[0].mxu0
      %v2643 = vadd.f32 0.0, %v2642
      %v2644 = vpop.f32.mrb[0].mxu0
      %2645 = vmatprep.mubr.f32.mxu0 0.0
      %2646 = vmatmul.mubr.f32.gmra.mrb[0].mxu0 %v489
      %v2647 = vpop.f32.mrb[0].mxu0
      %v2648 = vadd.f32 0.0, %v2647
      %v2649 = vpop.f32.mrb[0].mxu0
      %2650 = vmatprep.mubr.f32.mxu0 0.0
      %2651 = vmatmul.mubr.f32.gmra.mrb[0].mxu0 %v490
      %v2652 = vpop.f32.mrb[0].mxu0
      %v2653 = vadd.f32 0.0, %v2652
      %v2654 = vpop.f32.mrb[0].mxu0
      %2655 = vmatprep.mubr.f32.mxu0 0.0
      %2656 = vmatmul.mubr.f32.gmra.mrb[0].mxu0 %v491
      %v2657 = vpop.f32.mrb[0].mxu0
      %v2658 = vadd.f32 0.0, %v2657
      %v2659 = vpop.f32.mrb[0].mxu0
      %2660 = vmatprep.mubr.f32.mxu0 0.0
      %2661 = vmatmul.mubr.f32.gmra.mrb[0].mxu0 %v492
      %v2662 = vpop.f32.mrb[0].mxu0
      %v2663 = vadd.f32 0.0, %v2662
      %v2664 = vpop.f32.mrb[0].mxu0
      %2665 = vmatprep.mubr.f32.mxu0 0.0
      %2666 = vmatmul.mubr.f32.gmra.mrb[0].mxu0 %v493
      %v2667 = vpop.f32.mrb[0].mxu0
      %v2668 = vadd.f32 0.0, %v2667
      %v2669 = vpop.f32.mrb[0].mxu0
      %2670 = vmatprep.mubr.f32.mxu0 0.0
      %2671 = vmatmul.mubr.f32.gmra.mrb[0].mxu0 %v494
      %v2672 = vpop.f32.mrb[0].mxu0
      %v2673 = vadd.f32 0.0, %v2672
      %v2674 = vpop.f32.mrb[0].mxu0
      %2675 = vmatprep.mubr.f32.mxu0 0.0
      %2676 = vmatmul.mubr.f32.gmra.mrb[0].mxu0 %v495
      %v2677 = vpop.f32.mrb[0].mxu0
      %v2678 = vadd.f32 0.0, %v2677
      %v2679 = vpop.f32.mrb[0].mxu0
      %2680 = vmatprep.mubr.f32.mxu0 0.0
      %2681 = vmatmul.mubr.f32.gmra.mrb[0].mxu0 %v496
      %v2682 = vpop.f32.mrb[0].mxu0
      %v2683 = vadd.f32 0.0, %v2682
      %v2684 = vpop.f32.mrb[0].mxu0
      %2685 = vmatprep.mubr.f32.mxu0 0.0
      %2686 = vmatmul.mubr.f32.gmra.mrb[0].mxu0 %v497
      %v2687 = vpop.f32.mrb[0].mxu0
      %v2688 = vadd.f32 0.0, %v2687
      %v2689 = vpop.f32.mrb[0].mxu0
      %2690 = vmatprep.mubr.f32.mxu0 0.0
      %2691 = vmatmul.mubr.f32.gmra.mrb[0].mxu0 %v498
      %v2692 = vpop.f32.mrb[0].mxu0
      %v2693 = vadd.f32 0.0, %v2692
      %v2694 = vpop.f32.mrb[0].mxu0
      %2695 = vmatprep.mubr.f32.mxu0 0.0
      %2696 = vmatmul.mubr.f32.gmra.mrb[0].mxu0 %v499
      %v2697 = vpop.f32.mrb[0].mxu0
      %v2698 = vadd.f32 0.0, %v2697
      %v2699 = vpop.f32.mrb[0].mxu0
      %2700 = vmatprep.mubr.f32.mxu0 0.0
      %2701 = vmatmul.mubr.f32.gmra.mrb[0].mxu0 %v500
      %v2702 = vpop.f32.mrb[0].mxu0
      %v2703 = vadd.f32 0.0, %v2702
      %v2704 = vpop.f32.mrb[0].mxu0
      %2705 = vmatprep.mubr.f32.mxu0 0.0
      %2706 = vmatmul.mubr.f32.gmra.mrb[0].mxu0 %v501
      %v2707 = vpop.f32.mrb[0].mxu0
      %v2708 = vadd.f32 0.0, %v2707
      %v2709 = vpop.f32.mrb[0].mxu0
      %2710 = vmatprep.mubr.f32.mxu0 0.0
      %2711 = vmatmul.mubr.f32.gmra.mrb[0].mxu0 %v502
      %v2712 = vpop.f32.mrb[0].mxu0
      %v2713 = vadd.f32 0.0, %v2712
      %v2714 = vpop.f32.mrb[0].mxu0
      %2715 = vmatprep.mubr.f32.mxu0 0.0
      %2716 = vmatmul.mubr.f32.gmra.mrb[0].mxu0 %v503
      %v2717 = vpop.f32.mrb[0].mxu0
      %v2718 = vadd.f32 0.0, %v2717
      %v2719 = vpop.f32.mrb[0].mxu0
      %2720 = vmatprep.mubr.f32.mxu0 0.0
      %2721 = vmatmul.mubr.f32.gmra.mrb[0].mxu0 %v504
      %v2722 = vpop.f32.mrb[0].mxu0
      %v2723 = vadd.f32 0.0, %v2722
      %v2724 = vpop.f32.mrb[0].mxu0
      %2725 = vmatprep.mubr.f32.mxu0 0.0
      %2726 = vmatmul.mubr.f32.gmra.mrb[0].mxu0 %v505
      %v2727 = vpop.f32.mrb[0].mxu0
      %v2728 = vadd.f32 0.0, %v2727
      %v2729 = vpop.f32.mrb[0].mxu0
      %2730 = vmatprep.mubr.f32.mxu0 0.0
      %2731 = vmatmul.mubr.f32.gmra.mrb[0].mxu0 %v506
      %v2732 = vpop.f32.mrb[0].mxu0
      %v2733 = vadd.f32 0.0, %v2732
      %v2734 = vpop.f32.mrb[0].mxu0
      %2735 = vmatprep.mubr.f32.mxu0 0.0
      %2736 = vmatmul.mubr.f32.gmra.mrb[0].mxu0 %v507
      %v2737 = vpop.f32.mrb[0].mxu0
      %v2738 = vadd.f32 0.0, %v2737
      %v2739 = vpop.f32.mrb[0].mxu0
      %2740 = vmatprep.mubr.f32.mxu0 0.0
      %2741 = vmatmul.mubr.f32.gmra.mrb[0].mxu0 %v508
      %v2742 = vpop.f32.mrb[0].mxu0
      %v2743 = vadd.f32 0.0, %v2742
      %v2744 = vpop.f32.mrb[0].mxu0
      %2745 = vmatprep.mubr.f32.mxu0 0.0
      %2746 = vmatmul.mubr.f32.gmra.mrb[0].mxu0 %v509
      %v2747 = vpop.f32.mrb[0].mxu0
      %v2748 = vadd.f32 0.0, %v2747
      %v2749 = vpop.f32.mrb[0].mxu0
      %2750 = vmatprep.mubr.f32.mxu0 0.0
      %2751 = vmatmul.mubr.f32.gmra.mrb[0].mxu0 %v510
      %v2752 = vpop.f32.mrb[0].mxu0
      %v2753 = vadd.f32 0.0, %v2752
      %v2754 = vpop.f32.mrb[0].mxu0
      %2755 = vmatprep.mubr.f32.mxu0 0.0
      %2756 = vmatmul.mubr.f32.gmra.mrb[0].mxu0 %v511
      %v2757 = vpop.f32.mrb[0].mxu0
      %v2758 = vadd.f32 0.0, %v2757
      %v2759 = vpop.f32.mrb[0].mxu0
      %2760 = vmatprep.mubr.f32.mxu0 0.0
      %2761 = vmatmul.mubr.f32.gmra.mrb[0].mxu0 %v512
      %v2762 = vpop.f32.mrb[0].mxu0
      %v2763 = vadd.f32 0.0, %v2762
      %v2764 = vpop.f32.mrb[0].mxu0
      %2765 = vmatprep.mubr.f32.mxu0 0.0
      %2766 = vmatmul.mubr.f32.gmra.mrb[0].mxu0 %v513
      %v2767 = vpop.f32.mrb[0].mxu0
      %v2768 = vadd.f32 0.0, %v2767
      %v2769 = vpop.f32.mrb[0].mxu0
      %2770 = vmatprep.mubr.f32.mxu0 0.0
      %2771 = vmatmul.mubr.f32.gmra.mrb[0].mxu0 %v514
      %v2772 = vpop.f32.mrb[0].mxu0
      %v2773 = vadd.f32 0.0, %v2772
      %v2774 = vpop.f32.mrb[0].mxu0
      %2775 = vmatprep.mubr.f32.mxu0 0.0
      %2776 = vmatmul.mubr.f32.gmra.mrb[0].mxu0 %v515
      %v2777 = vpop.f32.mrb[0].mxu0
      %v2778 = vadd.f32 0.0, %v2777
      %v2779 = vpop.f32.mrb[0].mxu0
      %2780 = vmatprep.mubr.f32.mxu0 0.0
      %2781 = vmatmul.mubr.f32.gmra.mrb[0].mxu0 %v516
      %v2782 = vpop.f32.mrb[0].mxu0
      %v2783 = vadd.f32 0.0, %v2782
      %v2784 = vpop.f32.mrb[0].mxu0
      %2785 = vmatprep.mubr.f32.mxu0 0.0
      %2786 = vmatmul.mubr.f32.gmra.mrb[0].mxu0 %v517
      %v2787 = vpop.f32.mrb[0].mxu0
      %v2788 = vadd.f32 0.0, %v2787
      %v2789 = vpop.f32.mrb[0].mxu0
      %2790 = vdwg.mxu0
      %v2791 = vadd.f32 %v2517, %v2633
      %v2792 = vadd.f32 %v2518, %v2638
      %v2793 = vadd.f32 %v2519, %v2643
      %v2794 = vadd.f32 %v2520, %v2648
      %v2795 = vadd.f32 %v2521, %v2653
      %v2796 = vadd.f32 %v2522, %v2658
      %v2797 = vadd.f32 %v2523, %v2663
      %v2798 = vadd.f32 %v2524, %v2668
      %v2799 = vadd.f32 %v2525, %v2673
      %v2800 = vadd.f32 %v2526, %v2678
      %v2801 = vadd.f32 %v2527, %v2683
      %v2802 = vadd.f32 %v2528, %v2688
      %v2803 = vadd.f32 %v2529, %v2693
      %v2804 = vadd.f32 %v2530, %v2698
      %v2805 = vadd.f32 %v2531, %v2703
      %v2806 = vadd.f32 %v2532, %v2708
      %v2807 = vadd.f32 %v2533, %v2713
      %v2808 = vadd.f32 %v2534, %v2718
      %v2809 = vadd.f32 %v2535, %v2723
      %v2810 = vadd.f32 %v2536, %v2728
      %v2811 = vadd.f32 %v2537, %v2733
      %v2812 = vadd.f32 %v2538, %v2738
      %v2813 = vadd.f32 %v2539, %v2743
      %v2814 = vadd.f32 %v2540, %v2748
      %v2815 = vadd.f32 %v2541, %v2753
      %v2816 = vadd.f32 %v2542, %v2758
      %v2817 = vadd.f32 %v2543, %v2763
      %v2818 = vadd.f32 %v2544, %v2768
      %v2819 = vadd.f32 %v2545, %v2773
      %v2820 = vadd.f32 %v2546, %v2778
      %v2821 = vadd.f32 %v2547, %v2783
      %v2822 = vadd.f32 %v2548, %v2788
      %v2823 = vmul.f32 %v486, %v1582
      %v2824 = vmul.f32 %v487, %v1584
      %v2825 = vmul.f32 %v488, %v1586
      %v2826 = vmul.f32 %v489, %v1588
      %v2827 = vmul.f32 %v490, %v1590
      %v2828 = vmul.f32 %v491, %v1592
      %v2829 = vmul.f32 %v492, %v1594
      %v2830 = vmul.f32 %v493, %v1596
      %v2831 = vmul.f32 %v494, %v1598
      %v2832 = vmul.f32 %v495, %v1600
      %v2833 = vmul.f32 %v496, %v1602
      %v2834 = vmul.f32 %v497, %v1604
      %v2835 = vmul.f32 %v498, %v1606
      %v2836 = vmul.f32 %v499, %v1608
      %v2837 = vmul.f32 %v500, %v1610
      %v2838 = vmul.f32 %v501, %v1612
      %v2839 = vmul.f32 %v502, %v1614
      %v2840 = vmul.f32 %v503, %v1616
      %v2841 = vmul.f32 %v504, %v1618
      %v2842 = vmul.f32 %v505, %v1620
      %v2843 = vmul.f32 %v506, %v1622
      %v2844 = vmul.f32 %v507, %v1624
      %v2845 = vmul.f32 %v508, %v1626
      %v2846 = vmul.f32 %v509, %v1628
      %v2847 = vmul.f32 %v510, %v1630
      %v2848 = vmul.f32 %v511, %v1632
      %v2849 = vmul.f32 %v512, %v1634
      %v2850 = vmul.f32 %v513, %v1636
      %v2851 = vmul.f32 %v514, %v1638
      %v2852 = vmul.f32 %v515, %v1640
      %v2853 = vmul.f32 %v516, %v1642
      %v2854 = vmul.f32 %v517, %v1644
      %v2855 = vmul.f32 %v1643, 0.0
      %s2856 = scalar_lea.vmem %s7, 640
      %v2857 = vld [vmem:[%s2856] sm:$0xff]
      %v2858 = vld [vmem:[%s2856 + $0x8] sm:$0xff]
      %v2859 = vld [vmem:[%s2856 + $0x10] sm:$0xff]
      %v2860 = vld [vmem:[%s2856 + $0x18] sm:$0xff]
      %v2861 = vld [vmem:[%s2856 + $0x20] sm:$0xff]
      %v2862 = vld [vmem:[%s2856 + $0x28] sm:$0xff]
      %v2863 = vld [vmem:[%s2856 + $0x30] sm:$0xff]
      %v2864 = vld [vmem:[%s2856 + $0x38] sm:$0xff]
      %v2865 = vld [vmem:[%s2856 + $0x40] sm:$0xff]
      %v2866 = vld [vmem:[%s2856 + $0x48] sm:$0xff]
      %v2867 = vld [vmem:[%s2856 + $0x50] sm:$0xff]
      %v2868 = vld [vmem:[%s2856 + $0x58] sm:$0xff]
      %v2869 = vld [vmem:[%s2856 + $0x60] sm:$0xff]
      %v2870 = vld [vmem:[%s2856 + $0x68] sm:$0xff]
      %v2871 = vld [vmem:[%s2856 + $0x70] sm:$0xff]
      %v2872 = vld [vmem:[%s2856 + $0x78] sm:$0xff]
      %v2906 = vrot.slane %v2823, 1
      %v2907 = vrot.slane %v2824, 1
      %v2908 = vsel %vm678, %v2906, %v2907
      %v2909 = vrot.slane %v2825, 1
      %v2910 = vsel %vm678, %v2907, %v2909
      %v2911 = vrot.slane %v2826, 1
      %v2912 = vsel %vm678, %v2909, %v2911
      %v2913 = vrot.slane %v2827, 1
      %v2914 = vsel %vm678, %v2911, %v2913
      %v2915 = vrot.slane %v2828, 1
      %v2916 = vsel %vm678, %v2913, %v2915
      %v2917 = vrot.slane %v2829, 1
      %v2918 = vsel %vm678, %v2915, %v2917
      %v2919 = vrot.slane %v2830, 1
      %v2920 = vsel %vm678, %v2917, %v2919
      %v2921 = vrot.slane %v2831, 1
      %v2922 = vsel %vm678, %v2919, %v2921
      %v2923 = vrot.slane %v2832, 1
      %v2924 = vsel %vm678, %v2921, %v2923
      %v2925 = vrot.slane %v2833, 1
      %v2926 = vsel %vm678, %v2923, %v2925
      %v2927 = vrot.slane %v2834, 1
      %v2928 = vsel %vm678, %v2925, %v2927
      %v2929 = vrot.slane %v2835, 1
      %v2930 = vsel %vm678, %v2927, %v2929
      %v2931 = vrot.slane %v2836, 1
      %v2932 = vsel %vm678, %v2929, %v2931
      %v2933 = vrot.slane %v2837, 1
      %v2934 = vsel %vm678, %v2931, %v2933
      %v2935 = vrot.slane %v2838, 1
      %v2936 = vsel %vm678, %v2933, %v2935
      %v2937 = vrot.slane %v2839, 1
      %v2938 = vsel %vm678, %v2935, %v2937
      %v2939 = vrot.slane %v2840, 1
      %v2940 = vsel %vm678, %v2937, %v2939
      %v2941 = vrot.slane %v2841, 1
      %v2942 = vsel %vm678, %v2939, %v2941
      %v2943 = vrot.slane %v2842, 1
      %v2944 = vsel %vm678, %v2941, %v2943
      %v2945 = vrot.slane %v2843, 1
      %v2946 = vsel %vm678, %v2943, %v2945
      %v2947 = vrot.slane %v2844, 1
      %v2948 = vsel %vm678, %v2945, %v2947
      %v2949 = vrot.slane %v2845, 1
      %v2950 = vsel %vm678, %v2947, %v2949
      %v2951 = vrot.slane %v2846, 1
      %v2952 = vsel %vm678, %v2949, %v2951
      %v2953 = vrot.slane %v2847, 1
      %v2954 = vsel %vm678, %v2951, %v2953
      %v2955 = vrot.slane %v2848, 1
      %v2956 = vsel %vm678, %v2953, %v2955
      %v2957 = vrot.slane %v2849, 1
      %v2958 = vsel %vm678, %v2955, %v2957
      %v2959 = vrot.slane %v2850, 1
      %v2960 = vsel %vm678, %v2957, %v2959
      %v2961 = vrot.slane %v2851, 1
      %v2962 = vsel %vm678, %v2959, %v2961
      %v2963 = vrot.slane %v2852, 1
      %v2964 = vsel %vm678, %v2961, %v2963
      %v2965 = vrot.slane %v2853, 1
      %v2966 = vsel %vm678, %v2963, %v2965
      %v2967 = vrot.slane %v2854, 1
      %v2968 = vsel %vm678, %v2965, %v2967
      %v2969 = vrot.slane %v2855, 1
      %v2970 = vsel %vm678, %v2967, %v2969
      %3003 = vmatprep.subr.mxu0 0.0
      %3004 = vmatpush1.msra.mxu0 %v2857
      %3005 = vmatprep.subr.mxu0 0.0
      %3006 = vmatpush1.msra.mxu0 %v2858
      %3007 = vmatprep.subr.mxu0 0.0
      %3008 = vmatpush1.msra.mxu0 %v2859
      %3009 = vmatprep.subr.mxu0 0.0
      %3010 = vmatpush1.msra.mxu0 %v2860
      %3011 = vmatprep.subr.mxu0 0.0
      %3012 = vmatpush1.msra.mxu0 %v2861
      %3013 = vmatprep.subr.mxu0 0.0
      %3014 = vmatpush1.msra.mxu0 %v2862
      %3015 = vmatprep.subr.mxu0 0.0
      %3016 = vmatpush1.msra.mxu0 %v2863
      %3017 = vmatprep.subr.mxu0 0.0
      %3018 = vmatpush1.msra.mxu0 %v2864
      %3019 = vmatprep.subr.mxu0 0.0
      %3020 = vmatpush1.msra.mxu0 %v2865
      %3021 = vmatprep.subr.mxu0 0.0
      %3022 = vmatpush1.msra.mxu0 %v2866
      %3023 = vmatprep.subr.mxu0 0.0
      %3024 = vmatpush1.msra.mxu0 %v2867
      %3025 = vmatprep.subr.mxu0 0.0
      %3026 = vmatpush1.msra.mxu0 %v2868
      %3027 = vmatprep.subr.mxu0 0.0
      %3028 = vmatpush1.msra.mxu0 %v2869
      %3029 = vmatprep.subr.mxu0 0.0
      %3030 = vmatpush1.msra.mxu0 %v2870
      %3031 = vmatprep.subr.mxu0 0.0
      %3032 = vmatpush1.msra.mxu0 %v2871
      %3033 = vmatprep.subr.mxu0 0.0
      %3034 = vmatpush1.msra.mxu0 %v2872
      %3035 = vmatprep.subr.mxu0 0.0
      %3036 = vmatpush1.msra.mxu0 0.0
      %3037 = vmatprep.subr.mxu0 0.0
      %3038 = vmatpush1.msra.mxu0 0.0
      %3039 = vmatprep.subr.mxu0 0.0
      %3040 = vmatpush1.msra.mxu0 0.0
      %3041 = vmatprep.subr.mxu0 0.0
      %3042 = vmatpush1.msra.mxu0 0.0
      %3043 = vmatprep.subr.mxu0 0.0
      %3044 = vmatpush1.msra.mxu0 0.0
      %3045 = vmatprep.subr.mxu0 0.0
      %3046 = vmatpush1.msra.mxu0 0.0
      %3047 = vmatprep.subr.mxu0 0.0
      %3048 = vmatpush1.msra.mxu0 0.0
      %3049 = vmatprep.subr.mxu0 0.0
      %3050 = vmatpush1.msra.mxu0 0.0
      %3051 = vmatprep.subr.mxu0 0.0
      %3052 = vmatpush1.msra.mxu0 0.0
      %3053 = vmatprep.subr.mxu0 0.0
      %3054 = vmatpush1.msra.mxu0 0.0
      %3055 = vmatprep.subr.mxu0 0.0
      %3056 = vmatpush1.msra.mxu0 0.0
      %3057 = vmatprep.subr.mxu0 0.0
      %3058 = vmatpush1.msra.mxu0 0.0
      %3059 = vmatprep.subr.mxu0 0.0
      %3060 = vmatpush1.msra.mxu0 0.0
      %3061 = vmatprep.subr.mxu0 0.0
      %3062 = vmatpush1.msra.mxu0 0.0
      %3063 = vmatprep.subr.mxu0 0.0
      %3064 = vmatpush1.msra.mxu0 0.0
      %3065 = vmatprep.subr.mxu0 0.0
      %3066 = vmatpush1.msra.mxu0 0.0
      %3067 = vmatprep.mubr.f32.mxu0 0.0
      %3068 = vmatmul.mubr.f32.gmra.mrb[0].mxu0 %v2908
      %v3069 = vpop.f32.mrb[0].mxu0
      %v3070 = vadd.f32 0.0, %v3069
      %v3071 = vpop.f32.mrb[0].mxu0
      %3072 = vmatprep.mubr.f32.mxu0 0.0
      %3073 = vmatmul.mubr.f32.gmra.mrb[0].mxu0 %v2910
      %v3074 = vpop.f32.mrb[0].mxu0
      %v3075 = vadd.f32 0.0, %v3074
      %v3076 = vpop.f32.mrb[0].mxu0
      %3077 = vmatprep.mubr.f32.mxu0 0.0
      %3078 = vmatmul.mubr.f32.gmra.mrb[0].mxu0 %v2912
      %v3079 = vpop.f32.mrb[0].mxu0
      %v3080 = vadd.f32 0.0, %v3079
      %v3081 = vpop.f32.mrb[0].mxu0
      %3082 = vmatprep.mubr.f32.mxu0 0.0
      %3083 = vmatmul.mubr.f32.gmra.mrb[0].mxu0 %v2914
      %v3084 = vpop.f32.mrb[0].mxu0
      %v3085 = vadd.f32 0.0, %v3084
      %v3086 = vpop.f32.mrb[0].mxu0
      %3087 = vmatprep.mubr.f32.mxu0 0.0
      %3088 = vmatmul.mubr.f32.gmra.mrb[0].mxu0 %v2916
      %v3089 = vpop.f32.mrb[0].mxu0
      %v3090 = vadd.f32 0.0, %v3089
      %v3091 = vpop.f32.mrb[0].mxu0
      %3092 = vmatprep.mubr.f32.mxu0 0.0
      %3093 = vmatmul.mubr.f32.gmra.mrb[0].mxu0 %v2918
      %v3094 = vpop.f32.mrb[0].mxu0
      %v3095 = vadd.f32 0.0, %v3094
      %v3096 = vpop.f32.mrb[0].mxu0
      %3097 = vmatprep.mubr.f32.mxu0 0.0
      %3098 = vmatmul.mubr.f32.gmra.mrb[0].mxu0 %v2920
      %v3099 = vpop.f32.mrb[0].mxu0
      %v3100 = vadd.f32 0.0, %v3099
      %v3101 = vpop.f32.mrb[0].mxu0
      %3102 = vmatprep.mubr.f32.mxu0 0.0
      %3103 = vmatmul.mubr.f32.gmra.mrb[0].mxu0 %v2922
      %v3104 = vpop.f32.mrb[0].mxu0
      %v3105 = vadd.f32 0.0, %v3104
      %v3106 = vpop.f32.mrb[0].mxu0
      %3107 = vmatprep.mubr.f32.mxu0 0.0
      %3108 = vmatmul.mubr.f32.gmra.mrb[0].mxu0 %v2924
      %v3109 = vpop.f32.mrb[0].mxu0
      %v3110 = vadd.f32 0.0, %v3109
      %v3111 = vpop.f32.mrb[0].mxu0
      %3112 = vmatprep.mubr.f32.mxu0 0.0
      %3113 = vmatmul.mubr.f32.gmra.mrb[0].mxu0 %v2926
      %v3114 = vpop.f32.mrb[0].mxu0
      %v3115 = vadd.f32 0.0, %v3114
      %v3116 = vpop.f32.mrb[0].mxu0
      %3117 = vmatprep.mubr.f32.mxu0 0.0
      %3118 = vmatmul.mubr.f32.gmra.mrb[0].mxu0 %v2928
      %v3119 = vpop.f32.mrb[0].mxu0
      %v3120 = vadd.f32 0.0, %v3119
      %v3121 = vpop.f32.mrb[0].mxu0
      %3122 = vmatprep.mubr.f32.mxu0 0.0
      %3123 = vmatmul.mubr.f32.gmra.mrb[0].mxu0 %v2930
      %v3124 = vpop.f32.mrb[0].mxu0
      %v3125 = vadd.f32 0.0, %v3124
      %v3126 = vpop.f32.mrb[0].mxu0
      %3127 = vmatprep.mubr.f32.mxu0 0.0
      %3128 = vmatmul.mubr.f32.gmra.mrb[0].mxu0 %v2932
      %v3129 = vpop.f32.mrb[0].mxu0
      %v3130 = vadd.f32 0.0, %v3129
      %v3131 = vpop.f32.mrb[0].mxu0
      %3132 = vmatprep.mubr.f32.mxu0 0.0
      %3133 = vmatmul.mubr.f32.gmra.mrb[0].mxu0 %v2934
      %v3134 = vpop.f32.mrb[0].mxu0
      %v3135 = vadd.f32 0.0, %v3134
      %v3136 = vpop.f32.mrb[0].mxu0
      %3137 = vmatprep.mubr.f32.mxu0 0.0
      %3138 = vmatmul.mubr.f32.gmra.mrb[0].mxu0 %v2936
      %v3139 = vpop.f32.mrb[0].mxu0
      %v3140 = vadd.f32 0.0, %v3139
      %v3141 = vpop.f32.mrb[0].mxu0
      %3142 = vmatprep.mubr.f32.mxu0 0.0
      %3143 = vmatmul.mubr.f32.gmra.mrb[0].mxu0 %v2938
      %v3144 = vpop.f32.mrb[0].mxu0
      %v3145 = vadd.f32 0.0, %v3144
      %v3146 = vpop.f32.mrb[0].mxu0
      %3147 = vmatprep.mubr.f32.mxu0 0.0
      %3148 = vmatmul.mubr.f32.gmra.mrb[0].mxu0 %v2940
      %v3149 = vpop.f32.mrb[0].mxu0
      %v3150 = vadd.f32 0.0, %v3149
      %v3151 = vpop.f32.mrb[0].mxu0
      %3152 = vmatprep.mubr.f32.mxu0 0.0
      %3153 = vmatmul.mubr.f32.gmra.mrb[0].mxu0 %v2942
      %v3154 = vpop.f32.mrb[0].mxu0
      %v3155 = vadd.f32 0.0, %v3154
      %v3156 = vpop.f32.mrb[0].mxu0
      %3157 = vmatprep.mubr.f32.mxu0 0.0
      %3158 = vmatmul.mubr.f32.gmra.mrb[0].mxu0 %v2944
      %v3159 = vpop.f32.mrb[0].mxu0
      %v3160 = vadd.f32 0.0, %v3159
      %v3161 = vpop.f32.mrb[0].mxu0
      %3162 = vmatprep.mubr.f32.mxu0 0.0
      %3163 = vmatmul.mubr.f32.gmra.mrb[0].mxu0 %v2946
      %v3164 = vpop.f32.mrb[0].mxu0
      %v3165 = vadd.f32 0.0, %v3164
      %v3166 = vpop.f32.mrb[0].mxu0
      %3167 = vmatprep.mubr.f32.mxu0 0.0
      %3168 = vmatmul.mubr.f32.gmra.mrb[0].mxu0 %v2948
      %v3169 = vpop.f32.mrb[0].mxu0
      %v3170 = vadd.f32 0.0, %v3169
      %v3171 = vpop.f32.mrb[0].mxu0
      %3172 = vmatprep.mubr.f32.mxu0 0.0
      %3173 = vmatmul.mubr.f32.gmra.mrb[0].mxu0 %v2950
      %v3174 = vpop.f32.mrb[0].mxu0
      %v3175 = vadd.f32 0.0, %v3174
      %v3176 = vpop.f32.mrb[0].mxu0
      %3177 = vmatprep.mubr.f32.mxu0 0.0
      %3178 = vmatmul.mubr.f32.gmra.mrb[0].mxu0 %v2952
      %v3179 = vpop.f32.mrb[0].mxu0
      %v3180 = vadd.f32 0.0, %v3179
      %v3181 = vpop.f32.mrb[0].mxu0
      %3182 = vmatprep.mubr.f32.mxu0 0.0
      %3183 = vmatmul.mubr.f32.gmra.mrb[0].mxu0 %v2954
      %v3184 = vpop.f32.mrb[0].mxu0
      %v3185 = vadd.f32 0.0, %v3184
      %v3186 = vpop.f32.mrb[0].mxu0
      %3187 = vmatprep.mubr.f32.mxu0 0.0
      %3188 = vmatmul.mubr.f32.gmra.mrb[0].mxu0 %v2956
      %v3189 = vpop.f32.mrb[0].mxu0
      %v3190 = vadd.f32 0.0, %v3189
      %v3191 = vpop.f32.mrb[0].mxu0
      %3192 = vmatprep.mubr.f32.mxu0 0.0
      %3193 = vmatmul.mubr.f32.gmra.mrb[0].mxu0 %v2958
      %v3194 = vpop.f32.mrb[0].mxu0
      %v3195 = vadd.f32 0.0, %v3194
      %v3196 = vpop.f32.mrb[0].mxu0
      %3197 = vmatprep.mubr.f32.mxu0 0.0
      %3198 = vmatmul.mubr.f32.gmra.mrb[0].mxu0 %v2960
      %v3199 = vpop.f32.mrb[0].mxu0
      %v3200 = vadd.f32 0.0, %v3199
      %v3201 = vpop.f32.mrb[0].mxu0
      %3202 = vmatprep.mubr.f32.mxu0 0.0
      %3203 = vmatmul.mubr.f32.gmra.mrb[0].mxu0 %v2962
      %v3204 = vpop.f32.mrb[0].mxu0
      %v3205 = vadd.f32 0.0, %v3204
      %v3206 = vpop.f32.mrb[0].mxu0
      %3207 = vmatprep.mubr.f32.mxu0 0.0
      %3208 = vmatmul.mubr.f32.gmra.mrb[0].mxu0 %v2964
      %v3209 = vpop.f32.mrb[0].mxu0
      %v3210 = vadd.f32 0.0, %v3209
      %v3211 = vpop.f32.mrb[0].mxu0
      %3212 = vmatprep.mubr.f32.mxu0 0.0
      %3213 = vmatmul.mubr.f32.gmra.mrb[0].mxu0 %v2966
      %v3214 = vpop.f32.mrb[0].mxu0
      %v3215 = vadd.f32 0.0, %v3214
      %v3216 = vpop.f32.mrb[0].mxu0
      %3217 = vmatprep.mubr.f32.mxu0 0.0
      %3218 = vmatmul.mubr.f32.gmra.mrb[0].mxu0 %v2968
      %v3219 = vpop.f32.mrb[0].mxu0
      %v3220 = vadd.f32 0.0, %v3219
      %v3221 = vpop.f32.mrb[0].mxu0
      %3222 = vmatprep.mubr.f32.mxu0 0.0
      %3223 = vmatmul.mubr.f32.gmra.mrb[0].mxu0 %v2970
      %v3224 = vpop.f32.mrb[0].mxu0
      %v3225 = vadd.f32 0.0, %v3224
      %v3226 = vpop.f32.mrb[0].mxu0
      %3227 = vdwg.mxu0
      %v3228 = vadd.f32 %v2791, %v3070
      %v3229 = vadd.f32 %v2792, %v3075
      %v3230 = vadd.f32 %v2793, %v3080
      %v3231 = vadd.f32 %v2794, %v3085
      %v3232 = vadd.f32 %v2795, %v3090
      %v3233 = vadd.f32 %v2796, %v3095
      %v3234 = vadd.f32 %v2797, %v3100
      %v3235 = vadd.f32 %v2798, %v3105
      %v3236 = vadd.f32 %v2799, %v3110
      %v3237 = vadd.f32 %v2800, %v3115
      %v3238 = vadd.f32 %v2801, %v3120
      %v3239 = vadd.f32 %v2802, %v3125
      %v3240 = vadd.f32 %v2803, %v3130
      %v3241 = vadd.f32 %v2804, %v3135
      %v3242 = vadd.f32 %v2805, %v3140
      %v3243 = vadd.f32 %v2806, %v3145
      %v3244 = vadd.f32 %v2807, %v3150
      %v3245 = vadd.f32 %v2808, %v3155
      %v3246 = vadd.f32 %v2809, %v3160
      %v3247 = vadd.f32 %v2810, %v3165
      %v3248 = vadd.f32 %v2811, %v3170
      %v3249 = vadd.f32 %v2812, %v3175
      %v3250 = vadd.f32 %v2813, %v3180
      %v3251 = vadd.f32 %v2814, %v3185
      %v3252 = vadd.f32 %v2815, %v3190
      %v3253 = vadd.f32 %v2816, %v3195
      %v3254 = vadd.f32 %v2817, %v3200
      %v3255 = vadd.f32 %v2818, %v3205
      %v3256 = vadd.f32 %v2819, %v3210
      %v3257 = vadd.f32 %v2820, %v3215
      %v3258 = vadd.f32 %v2821, %v3220
      %v3259 = vadd.f32 %v2822, %v3225
      %v3260 = vmul.f32 %v487, %v679
      %v3261 = vmul.f32 %v488, %v681
      %v3262 = vmul.f32 %v489, %v683
      %v3263 = vmul.f32 %v490, %v685
      %v3264 = vmul.f32 %v491, %v687
      %v3265 = vmul.f32 %v492, %v689
      %v3266 = vmul.f32 %v493, %v691
      %v3267 = vmul.f32 %v494, %v693
      %v3268 = vmul.f32 %v495, %v695
      %v3269 = vmul.f32 %v496, %v697
      %v3270 = vmul.f32 %v497, %v699
      %v3271 = vmul.f32 %v498, %v701
      %v3272 = vmul.f32 %v499, %v703
      %v3273 = vmul.f32 %v500, %v705
      %v3274 = vmul.f32 %v501, %v707
      %v3275 = vmul.f32 %v502, %v709
      %v3276 = vmul.f32 %v503, %v711
      %v3277 = vmul.f32 %v504, %v713
      %v3278 = vmul.f32 %v505, %v715
      %v3279 = vmul.f32 %v506, %v717
      %v3280 = vmul.f32 %v507, %v719
      %v3281 = vmul.f32 %v508, %v721
      %v3282 = vmul.f32 %v509, %v723
      %v3283 = vmul.f32 %v510, %v725
      %v3284 = vmul.f32 %v511, %v727
      %v3285 = vmul.f32 %v512, %v729
      %v3286 = vmul.f32 %v513, %v731
      %v3287 = vmul.f32 %v514, %v733
      %v3288 = vmul.f32 %v515, %v735
      %v3289 = vmul.f32 %v516, %v737
      %v3290 = vmul.f32 %v517, %v739
      %v3291 = vmul.f32 %v741, 0.0
      %v3292 = vmul.f32 %v740, 0.0
      %s3293 = scalar_lea.vmem %s7, 768
      %v3294 = vld [vmem:[%s3293] sm:$0xff]
      %v3295 = vld [vmem:[%s3293 + $0x8] sm:$0xff]
      %v3296 = vld [vmem:[%s3293 + $0x10] sm:$0xff]
      %v3297 = vld [vmem:[%s3293 + $0x18] sm:$0xff]
      %v3298 = vld [vmem:[%s3293 + $0x20] sm:$0xff]
      %v3299 = vld [vmem:[%s3293 + $0x28] sm:$0xff]
      %v3300 = vld [vmem:[%s3293 + $0x30] sm:$0xff]
      %v3301 = vld [vmem:[%s3293 + $0x38] sm:$0xff]
      %v3302 = vld [vmem:[%s3293 + $0x40] sm:$0xff]
      %v3303 = vld [vmem:[%s3293 + $0x48] sm:$0xff]
      %v3304 = vld [vmem:[%s3293 + $0x50] sm:$0xff]
      %v3305 = vld [vmem:[%s3293 + $0x58] sm:$0xff]
      %v3306 = vld [vmem:[%s3293 + $0x60] sm:$0xff]
      %v3307 = vld [vmem:[%s3293 + $0x68] sm:$0xff]
      %v3308 = vld [vmem:[%s3293 + $0x70] sm:$0xff]
      %v3309 = vld [vmem:[%s3293 + $0x78] sm:$0xff]
      %v3343 = vrot.slane %v3260, 7
      %v3344 = vrot.slane %v3261, 7
      %v3345 = vsel %vm1099, %v3343, %v3344
      %v3346 = vrot.slane %v3262, 7
      %v3347 = vsel %vm1099, %v3344, %v3346
      %v3348 = vrot.slane %v3263, 7
      %v3349 = vsel %vm1099, %v3346, %v3348
      %v3350 = vrot.slane %v3264, 7
      %v3351 = vsel %vm1099, %v3348, %v3350
      %v3352 = vrot.slane %v3265, 7
      %v3353 = vsel %vm1099, %v3350, %v3352
      %v3354 = vrot.slane %v3266, 7
      %v3355 = vsel %vm1099, %v3352, %v3354
      %v3356 = vrot.slane %v3267, 7
      %v3357 = vsel %vm1099, %v3354, %v3356
      %v3358 = vrot.slane %v3268, 7
      %v3359 = vsel %vm1099, %v3356, %v3358
      %v3360 = vrot.slane %v3269, 7
      %v3361 = vsel %vm1099, %v3358, %v3360
      %v3362 = vrot.slane %v3270, 7
      %v3363 = vsel %vm1099, %v3360, %v3362
      %v3364 = vrot.slane %v3271, 7
      %v3365 = vsel %vm1099, %v3362, %v3364
      %v3366 = vrot.slane %v3272, 7
      %v3367 = vsel %vm1099, %v3364, %v3366
      %v3368 = vrot.slane %v3273, 7
      %v3369 = vsel %vm1099, %v3366, %v3368
      %v3370 = vrot.slane %v3274, 7
      %v3371 = vsel %vm1099, %v3368, %v3370
      %v3372 = vrot.slane %v3275, 7
      %v3373 = vsel %vm1099, %v3370, %v3372
      %v3374 = vrot.slane %v3276, 7
      %v3375 = vsel %vm1099, %v3372, %v3374
      %v3376 = vrot.slane %v3277, 7
      %v3377 = vsel %vm1099, %v3374, %v3376
      %v3378 = vrot.slane %v3278, 7
      %v3379 = vsel %vm1099, %v3376, %v3378
      %v3380 = vrot.slane %v3279, 7
      %v3381 = vsel %vm1099, %v3378, %v3380
      %v3382 = vrot.slane %v3280, 7
      %v3383 = vsel %vm1099, %v3380, %v3382
      %v3384 = vrot.slane %v3281, 7
      %v3385 = vsel %vm1099, %v3382, %v3384
      %v3386 = vrot.slane %v3282, 7
      %v3387 = vsel %vm1099, %v3384, %v3386
      %v3388 = vrot.slane %v3283, 7
      %v3389 = vsel %vm1099, %v3386, %v3388
      %v3390 = vrot.slane %v3284, 7
      %v3391 = vsel %vm1099, %v3388, %v3390
      %v3392 = vrot.slane %v3285, 7
      %v3393 = vsel %vm1099, %v3390, %v3392
      %v3394 = vrot.slane %v3286, 7
      %v3395 = vsel %vm1099, %v3392, %v3394
      %v3396 = vrot.slane %v3287, 7
      %v3397 = vsel %vm1099, %v3394, %v3396
      %v3398 = vrot.slane %v3288, 7
      %v3399 = vsel %vm1099, %v3396, %v3398
      %v3400 = vrot.slane %v3289, 7
      %v3401 = vsel %vm1099, %v3398, %v3400
      %v3402 = vrot.slane %v3290, 7
      %v3403 = vsel %vm1099, %v3400, %v3402
      %v3404 = vrot.slane %v3291, 7
      %v3405 = vsel %vm1099, %v3402, %v3404
      %v3406 = vrot.slane %v3292, 7
      %v3407 = vsel %vm1099, %v3404, %v3406
      %3440 = vmatprep.subr.mxu0 0.0
      %3441 = vmatpush1.msra.mxu0 %v3294
      %3442 = vmatprep.subr.mxu0 0.0
      %3443 = vmatpush1.msra.mxu0 %v3295
      %3444 = vmatprep.subr.mxu0 0.0
      %3445 = vmatpush1.msra.mxu0 %v3296
      %3446 = vmatprep.subr.mxu0 0.0
      %3447 = vmatpush1.msra.mxu0 %v3297
      %3448 = vmatprep.subr.mxu0 0.0
      %3449 = vmatpush1.msra.mxu0 %v3298
      %3450 = vmatprep.subr.mxu0 0.0
      %3451 = vmatpush1.msra.mxu0 %v3299
      %3452 = vmatprep.subr.mxu0 0.0
      %3453 = vmatpush1.msra.mxu0 %v3300
      %3454 = vmatprep.subr.mxu0 0.0
      %3455 = vmatpush1.msra.mxu0 %v3301
      %3456 = vmatprep.subr.mxu0 0.0
      %3457 = vmatpush1.msra.mxu0 %v3302
      %3458 = vmatprep.subr.mxu0 0.0
      %3459 = vmatpush1.msra.mxu0 %v3303
      %3460 = vmatprep.subr.mxu0 0.0
      %3461 = vmatpush1.msra.mxu0 %v3304
      %3462 = vmatprep.subr.mxu0 0.0
      %3463 = vmatpush1.msra.mxu0 %v3305
      %3464 = vmatprep.subr.mxu0 0.0
      %3465 = vmatpush1.msra.mxu0 %v3306
      %3466 = vmatprep.subr.mxu0 0.0
      %3467 = vmatpush1.msra.mxu0 %v3307
      %3468 = vmatprep.subr.mxu0 0.0
      %3469 = vmatpush1.msra.mxu0 %v3308
      %3470 = vmatprep.subr.mxu0 0.0
      %3471 = vmatpush1.msra.mxu0 %v3309
      %3472 = vmatprep.subr.mxu0 0.0
      %3473 = vmatpush1.msra.mxu0 0.0
      %3474 = vmatprep.subr.mxu0 0.0
      %3475 = vmatpush1.msra.mxu0 0.0
      %3476 = vmatprep.subr.mxu0 0.0
      %3477 = vmatpush1.msra.mxu0 0.0
      %3478 = vmatprep.subr.mxu0 0.0
      %3479 = vmatpush1.msra.mxu0 0.0
      %3480 = vmatprep.subr.mxu0 0.0
      %3481 = vmatpush1.msra.mxu0 0.0
      %3482 = vmatprep.subr.mxu0 0.0
      %3483 = vmatpush1.msra.mxu0 0.0
      %3484 = vmatprep.subr.mxu0 0.0
      %3485 = vmatpush1.msra.mxu0 0.0
      %3486 = vmatprep.subr.mxu0 0.0
      %3487 = vmatpush1.msra.mxu0 0.0
      %3488 = vmatprep.subr.mxu0 0.0
      %3489 = vmatpush1.msra.mxu0 0.0
      %3490 = vmatprep.subr.mxu0 0.0
      %3491 = vmatpush1.msra.mxu0 0.0
      %3492 = vmatprep.subr.mxu0 0.0
      %3493 = vmatpush1.msra.mxu0 0.0
      %3494 = vmatprep.subr.mxu0 0.0
      %3495 = vmatpush1.msra.mxu0 0.0
      %3496 = vmatprep.subr.mxu0 0.0
      %3497 = vmatpush1.msra.mxu0 0.0
      %3498 = vmatprep.subr.mxu0 0.0
      %3499 = vmatpush1.msra.mxu0 0.0
      %3500 = vmatprep.subr.mxu0 0.0
      %3501 = vmatpush1.msra.mxu0 0.0
      %3502 = vmatprep.subr.mxu0 0.0
      %3503 = vmatpush1.msra.mxu0 0.0
      %3504 = vmatprep.mubr.f32.mxu0 0.0
      %3505 = vmatmul.mubr.f32.gmra.mrb[0].mxu0 %v3345
      %v3506 = vpop.f32.mrb[0].mxu0
      %v3507 = vadd.f32 0.0, %v3506
      %v3508 = vpop.f32.mrb[0].mxu0
      %3509 = vmatprep.mubr.f32.mxu0 0.0
      %3510 = vmatmul.mubr.f32.gmra.mrb[0].mxu0 %v3347
      %v3511 = vpop.f32.mrb[0].mxu0
      %v3512 = vadd.f32 0.0, %v3511
      %v3513 = vpop.f32.mrb[0].mxu0
      %3514 = vmatprep.mubr.f32.mxu0 0.0
      %3515 = vmatmul.mubr.f32.gmra.mrb[0].mxu0 %v3349
      %v3516 = vpop.f32.mrb[0].mxu0
      %v3517 = vadd.f32 0.0, %v3516
      %v3518 = vpop.f32.mrb[0].mxu0
      %3519 = vmatprep.mubr.f32.mxu0 0.0
      %3520 = vmatmul.mubr.f32.gmra.mrb[0].mxu0 %v3351
      %v3521 = vpop.f32.mrb[0].mxu0
      %v3522 = vadd.f32 0.0, %v3521
      %v3523 = vpop.f32.mrb[0].mxu0
      %3524 = vmatprep.mubr.f32.mxu0 0.0
      %3525 = vmatmul.mubr.f32.gmra.mrb[0].mxu0 %v3353
      %v3526 = vpop.f32.mrb[0].mxu0
      %v3527 = vadd.f32 0.0, %v3526
      %v3528 = vpop.f32.mrb[0].mxu0
      %3529 = vmatprep.mubr.f32.mxu0 0.0
      %3530 = vmatmul.mubr.f32.gmra.mrb[0].mxu0 %v3355
      %v3531 = vpop.f32.mrb[0].mxu0
      %v3532 = vadd.f32 0.0, %v3531
      %v3533 = vpop.f32.mrb[0].mxu0
      %3534 = vmatprep.mubr.f32.mxu0 0.0
      %3535 = vmatmul.mubr.f32.gmra.mrb[0].mxu0 %v3357
      %v3536 = vpop.f32.mrb[0].mxu0
      %v3537 = vadd.f32 0.0, %v3536
      %v3538 = vpop.f32.mrb[0].mxu0
      %3539 = vmatprep.mubr.f32.mxu0 0.0
      %3540 = vmatmul.mubr.f32.gmra.mrb[0].mxu0 %v3359
      %v3541 = vpop.f32.mrb[0].mxu0
      %v3542 = vadd.f32 0.0, %v3541
      %v3543 = vpop.f32.mrb[0].mxu0
      %3544 = vmatprep.mubr.f32.mxu0 0.0
      %3545 = vmatmul.mubr.f32.gmra.mrb[0].mxu0 %v3361
      %v3546 = vpop.f32.mrb[0].mxu0
      %v3547 = vadd.f32 0.0, %v3546
      %v3548 = vpop.f32.mrb[0].mxu0
      %3549 = vmatprep.mubr.f32.mxu0 0.0
      %3550 = vmatmul.mubr.f32.gmra.mrb[0].mxu0 %v3363
      %v3551 = vpop.f32.mrb[0].mxu0
      %v3552 = vadd.f32 0.0, %v3551
      %v3553 = vpop.f32.mrb[0].mxu0
      %3554 = vmatprep.mubr.f32.mxu0 0.0
      %3555 = vmatmul.mubr.f32.gmra.mrb[0].mxu0 %v3365
      %v3556 = vpop.f32.mrb[0].mxu0
      %v3557 = vadd.f32 0.0, %v3556
      %v3558 = vpop.f32.mrb[0].mxu0
      %3559 = vmatprep.mubr.f32.mxu0 0.0
      %3560 = vmatmul.mubr.f32.gmra.mrb[0].mxu0 %v3367
      %v3561 = vpop.f32.mrb[0].mxu0
      %v3562 = vadd.f32 0.0, %v3561
      %v3563 = vpop.f32.mrb[0].mxu0
      %3564 = vmatprep.mubr.f32.mxu0 0.0
      %3565 = vmatmul.mubr.f32.gmra.mrb[0].mxu0 %v3369
      %v3566 = vpop.f32.mrb[0].mxu0
      %v3567 = vadd.f32 0.0, %v3566
      %v3568 = vpop.f32.mrb[0].mxu0
      %3569 = vmatprep.mubr.f32.mxu0 0.0
      %3570 = vmatmul.mubr.f32.gmra.mrb[0].mxu0 %v3371
      %v3571 = vpop.f32.mrb[0].mxu0
      %v3572 = vadd.f32 0.0, %v3571
      %v3573 = vpop.f32.mrb[0].mxu0
      %3574 = vmatprep.mubr.f32.mxu0 0.0
      %3575 = vmatmul.mubr.f32.gmra.mrb[0].mxu0 %v3373
      %v3576 = vpop.f32.mrb[0].mxu0
      %v3577 = vadd.f32 0.0, %v3576
      %v3578 = vpop.f32.mrb[0].mxu0
      %3579 = vmatprep.mubr.f32.mxu0 0.0
      %3580 = vmatmul.mubr.f32.gmra.mrb[0].mxu0 %v3375
      %v3581 = vpop.f32.mrb[0].mxu0
      %v3582 = vadd.f32 0.0, %v3581
      %v3583 = vpop.f32.mrb[0].mxu0
      %3584 = vmatprep.mubr.f32.mxu0 0.0
      %3585 = vmatmul.mubr.f32.gmra.mrb[0].mxu0 %v3377
      %v3586 = vpop.f32.mrb[0].mxu0
      %v3587 = vadd.f32 0.0, %v3586
      %v3588 = vpop.f32.mrb[0].mxu0
      %3589 = vmatprep.mubr.f32.mxu0 0.0
      %3590 = vmatmul.mubr.f32.gmra.mrb[0].mxu0 %v3379
      %v3591 = vpop.f32.mrb[0].mxu0
      %v3592 = vadd.f32 0.0, %v3591
      %v3593 = vpop.f32.mrb[0].mxu0
      %3594 = vmatprep.mubr.f32.mxu0 0.0
      %3595 = vmatmul.mubr.f32.gmra.mrb[0].mxu0 %v3381
      %v3596 = vpop.f32.mrb[0].mxu0
      %v3597 = vadd.f32 0.0, %v3596
      %v3598 = vpop.f32.mrb[0].mxu0
      %3599 = vmatprep.mubr.f32.mxu0 0.0
      %3600 = vmatmul.mubr.f32.gmra.mrb[0].mxu0 %v3383
      %v3601 = vpop.f32.mrb[0].mxu0
      %v3602 = vadd.f32 0.0, %v3601
      %v3603 = vpop.f32.mrb[0].mxu0
      %3604 = vmatprep.mubr.f32.mxu0 0.0
      %3605 = vmatmul.mubr.f32.gmra.mrb[0].mxu0 %v3385
      %v3606 = vpop.f32.mrb[0].mxu0
      %v3607 = vadd.f32 0.0, %v3606
      %v3608 = vpop.f32.mrb[0].mxu0
      %3609 = vmatprep.mubr.f32.mxu0 0.0
      %3610 = vmatmul.mubr.f32.gmra.mrb[0].mxu0 %v3387
      %v3611 = vpop.f32.mrb[0].mxu0
      %v3612 = vadd.f32 0.0, %v3611
      %v3613 = vpop.f32.mrb[0].mxu0
      %3614 = vmatprep.mubr.f32.mxu0 0.0
      %3615 = vmatmul.mubr.f32.gmra.mrb[0].mxu0 %v3389
      %v3616 = vpop.f32.mrb[0].mxu0
      %v3617 = vadd.f32 0.0, %v3616
      %v3618 = vpop.f32.mrb[0].mxu0
      %3619 = vmatprep.mubr.f32.mxu0 0.0
      %3620 = vmatmul.mubr.f32.gmra.mrb[0].mxu0 %v3391
      %v3621 = vpop.f32.mrb[0].mxu0
      %v3622 = vadd.f32 0.0, %v3621
      %v3623 = vpop.f32.mrb[0].mxu0
      %3624 = vmatprep.mubr.f32.mxu0 0.0
      %3625 = vmatmul.mubr.f32.gmra.mrb[0].mxu0 %v3393
      %v3626 = vpop.f32.mrb[0].mxu0
      %v3627 = vadd.f32 0.0, %v3626
      %v3628 = vpop.f32.mrb[0].mxu0
      %3629 = vmatprep.mubr.f32.mxu0 0.0
      %3630 = vmatmul.mubr.f32.gmra.mrb[0].mxu0 %v3395
      %v3631 = vpop.f32.mrb[0].mxu0
      %v3632 = vadd.f32 0.0, %v3631
      %v3633 = vpop.f32.mrb[0].mxu0
      %3634 = vmatprep.mubr.f32.mxu0 0.0
      %3635 = vmatmul.mubr.f32.gmra.mrb[0].mxu0 %v3397
      %v3636 = vpop.f32.mrb[0].mxu0
      %v3637 = vadd.f32 0.0, %v3636
      %v3638 = vpop.f32.mrb[0].mxu0
      %3639 = vmatprep.mubr.f32.mxu0 0.0
      %3640 = vmatmul.mubr.f32.gmra.mrb[0].mxu0 %v3399
      %v3641 = vpop.f32.mrb[0].mxu0
      %v3642 = vadd.f32 0.0, %v3641
      %v3643 = vpop.f32.mrb[0].mxu0
      %3644 = vmatprep.mubr.f32.mxu0 0.0
      %3645 = vmatmul.mubr.f32.gmra.mrb[0].mxu0 %v3401
      %v3646 = vpop.f32.mrb[0].mxu0
      %v3647 = vadd.f32 0.0, %v3646
      %v3648 = vpop.f32.mrb[0].mxu0
      %3649 = vmatprep.mubr.f32.mxu0 0.0
      %3650 = vmatmul.mubr.f32.gmra.mrb[0].mxu0 %v3403
      %v3651 = vpop.f32.mrb[0].mxu0
      %v3652 = vadd.f32 0.0, %v3651
      %v3653 = vpop.f32.mrb[0].mxu0
      %3654 = vmatprep.mubr.f32.mxu0 0.0
      %3655 = vmatmul.mubr.f32.gmra.mrb[0].mxu0 %v3405
      %v3656 = vpop.f32.mrb[0].mxu0
      %v3657 = vadd.f32 0.0, %v3656
      %v3658 = vpop.f32.mrb[0].mxu0
      %3659 = vmatprep.mubr.f32.mxu0 0.0
      %3660 = vmatmul.mubr.f32.gmra.mrb[0].mxu0 %v3407
      %v3661 = vpop.f32.mrb[0].mxu0
      %v3662 = vadd.f32 0.0, %v3661
      %v3663 = vpop.f32.mrb[0].mxu0
      %3664 = vdwg.mxu0
      %v3665 = vadd.f32 %v3228, %v3507
      %v3666 = vadd.f32 %v3229, %v3512
      %v3667 = vadd.f32 %v3230, %v3517
      %v3668 = vadd.f32 %v3231, %v3522
      %v3669 = vadd.f32 %v3232, %v3527
      %v3670 = vadd.f32 %v3233, %v3532
      %v3671 = vadd.f32 %v3234, %v3537
      %v3672 = vadd.f32 %v3235, %v3542
      %v3673 = vadd.f32 %v3236, %v3547
      %v3674 = vadd.f32 %v3237, %v3552
      %v3675 = vadd.f32 %v3238, %v3557
      %v3676 = vadd.f32 %v3239, %v3562
      %v3677 = vadd.f32 %v3240, %v3567
      %v3678 = vadd.f32 %v3241, %v3572
      %v3679 = vadd.f32 %v3242, %v3577
      %v3680 = vadd.f32 %v3243, %v3582
      %v3681 = vadd.f32 %v3244, %v3587
      %v3682 = vadd.f32 %v3245, %v3592
      %v3683 = vadd.f32 %v3246, %v3597
      %v3684 = vadd.f32 %v3247, %v3602
      %v3685 = vadd.f32 %v3248, %v3607
      %v3686 = vadd.f32 %v3249, %v3612
      %v3687 = vadd.f32 %v3250, %v3617
      %v3688 = vadd.f32 %v3251, %v3622
      %v3689 = vadd.f32 %v3252, %v3627
      %v3690 = vadd.f32 %v3253, %v3632
      %v3691 = vadd.f32 %v3254, %v3637
      %v3692 = vadd.f32 %v3255, %v3642
      %v3693 = vadd.f32 %v3256, %v3647
      %v3694 = vadd.f32 %v3257, %v3652
      %v3695 = vadd.f32 %v3258, %v3657
      %v3696 = vadd.f32 %v3259, %v3662
      %s3697 = scalar_lea.vmem %s7, 896
      %v3698 = vld [vmem:[%s3697] sm:$0xff]
      %v3699 = vld [vmem:[%s3697 + $0x8] sm:$0xff]
      %v3700 = vld [vmem:[%s3697 + $0x10] sm:$0xff]
      %v3701 = vld [vmem:[%s3697 + $0x18] sm:$0xff]
      %v3702 = vld [vmem:[%s3697 + $0x20] sm:$0xff]
      %v3703 = vld [vmem:[%s3697 + $0x28] sm:$0xff]
      %v3704 = vld [vmem:[%s3697 + $0x30] sm:$0xff]
      %v3705 = vld [vmem:[%s3697 + $0x38] sm:$0xff]
      %v3706 = vld [vmem:[%s3697 + $0x40] sm:$0xff]
      %v3707 = vld [vmem:[%s3697 + $0x48] sm:$0xff]
      %v3708 = vld [vmem:[%s3697 + $0x50] sm:$0xff]
      %v3709 = vld [vmem:[%s3697 + $0x58] sm:$0xff]
      %v3710 = vld [vmem:[%s3697 + $0x60] sm:$0xff]
      %v3711 = vld [vmem:[%s3697 + $0x68] sm:$0xff]
      %v3712 = vld [vmem:[%s3697 + $0x70] sm:$0xff]
      %v3713 = vld [vmem:[%s3697 + $0x78] sm:$0xff]
      %3714 = vmatprep.subr.mxu0 0.0
      %3715 = vmatpush1.msra.mxu0 %v3698
      %3716 = vmatprep.subr.mxu0 0.0
      %3717 = vmatpush1.msra.mxu0 %v3699
      %3718 = vmatprep.subr.mxu0 0.0
      %3719 = vmatpush1.msra.mxu0 %v3700
      %3720 = vmatprep.subr.mxu0 0.0
      %3721 = vmatpush1.msra.mxu0 %v3701
      %3722 = vmatprep.subr.mxu0 0.0
      %3723 = vmatpush1.msra.mxu0 %v3702
      %3724 = vmatprep.subr.mxu0 0.0
      %3725 = vmatpush1.msra.mxu0 %v3703
      %3726 = vmatprep.subr.mxu0 0.0
      %3727 = vmatpush1.msra.mxu0 %v3704
      %3728 = vmatprep.subr.mxu0 0.0
      %3729 = vmatpush1.msra.mxu0 %v3705
      %3730 = vmatprep.subr.mxu0 0.0
      %3731 = vmatpush1.msra.mxu0 %v3706
      %3732 = vmatprep.subr.mxu0 0.0
      %3733 = vmatpush1.msra.mxu0 %v3707
      %3734 = vmatprep.subr.mxu0 0.0
      %3735 = vmatpush1.msra.mxu0 %v3708
      %3736 = vmatprep.subr.mxu0 0.0
      %3737 = vmatpush1.msra.mxu0 %v3709
      %3738 = vmatprep.subr.mxu0 0.0
      %3739 = vmatpush1.msra.mxu0 %v3710
      %3740 = vmatprep.subr.mxu0 0.0
      %3741 = vmatpush1.msra.mxu0 %v3711
      %3742 = vmatprep.subr.mxu0 0.0
      %3743 = vmatpush1.msra.mxu0 %v3712
      %3744 = vmatprep.subr.mxu0 0.0
      %3745 = vmatpush1.msra.mxu0 %v3713
      %3746 = vmatprep.subr.mxu0 0.0
      %3747 = vmatpush1.msra.mxu0 0.0
      %3748 = vmatprep.subr.mxu0 0.0
      %3749 = vmatpush1.msra.mxu0 0.0
      %3750 = vmatprep.subr.mxu0 0.0
      %3751 = vmatpush1.msra.mxu0 0.0
      %3752 = vmatprep.subr.mxu0 0.0
      %3753 = vmatpush1.msra.mxu0 0.0
      %3754 = vmatprep.subr.mxu0 0.0
      %3755 = vmatpush1.msra.mxu0 0.0
      %3756 = vmatprep.subr.mxu0 0.0
      %3757 = vmatpush1.msra.mxu0 0.0
      %3758 = vmatprep.subr.mxu0 0.0
      %3759 = vmatpush1.msra.mxu0 0.0
      %3760 = vmatprep.subr.mxu0 0.0
      %3761 = vmatpush1.msra.mxu0 0.0
      %3762 = vmatprep.subr.mxu0 0.0
      %3763 = vmatpush1.msra.mxu0 0.0
      %3764 = vmatprep.subr.mxu0 0.0
      %3765 = vmatpush1.msra.mxu0 0.0
      %3766 = vmatprep.subr.mxu0 0.0
      %3767 = vmatpush1.msra.mxu0 0.0
      %3768 = vmatprep.subr.mxu0 0.0
      %3769 = vmatpush1.msra.mxu0 0.0
      %3770 = vmatprep.subr.mxu0 0.0
      %3771 = vmatpush1.msra.mxu0 0.0
      %3772 = vmatprep.subr.mxu0 0.0
      %3773 = vmatpush1.msra.mxu0 0.0
      %3774 = vmatprep.subr.mxu0 0.0
      %3775 = vmatpush1.msra.mxu0 0.0
      %3776 = vmatprep.subr.mxu0 0.0
      %3777 = vmatpush1.msra.mxu0 0.0
      %3778 = vmatprep.mubr.f32.mxu0 0.0
      %3779 = vmatmul.mubr.f32.gmra.mrb[0].mxu0 %v488
      %v3780 = vpop.f32.mrb[0].mxu0
      %v3781 = vadd.f32 0.0, %v3780
      %v3782 = vpop.f32.mrb[0].mxu0
      %3783 = vmatprep.mubr.f32.mxu0 0.0
      %3784 = vmatmul.mubr.f32.gmra.mrb[0].mxu0 %v489
      %v3785 = vpop.f32.mrb[0].mxu0
      %v3786 = vadd.f32 0.0, %v3785
      %v3787 = vpop.f32.mrb[0].mxu0
      %3788 = vmatprep.mubr.f32.mxu0 0.0
      %3789 = vmatmul.mubr.f32.gmra.mrb[0].mxu0 %v490
      %v3790 = vpop.f32.mrb[0].mxu0
      %v3791 = vadd.f32 0.0, %v3790
      %v3792 = vpop.f32.mrb[0].mxu0
      %3793 = vmatprep.mubr.f32.mxu0 0.0
      %3794 = vmatmul.mubr.f32.gmra.mrb[0].mxu0 %v491
      %v3795 = vpop.f32.mrb[0].mxu0
      %v3796 = vadd.f32 0.0, %v3795
      %v3797 = vpop.f32.mrb[0].mxu0
      %3798 = vmatprep.mubr.f32.mxu0 0.0
      %3799 = vmatmul.mubr.f32.gmra.mrb[0].mxu0 %v492
      %v3800 = vpop.f32.mrb[0].mxu0
      %v3801 = vadd.f32 0.0, %v3800
      %v3802 = vpop.f32.mrb[0].mxu0
      %3803 = vmatprep.mubr.f32.mxu0 0.0
      %3804 = vmatmul.mubr.f32.gmra.mrb[0].mxu0 %v493
      %v3805 = vpop.f32.mrb[0].mxu0
      %v3806 = vadd.f32 0.0, %v3805
      %v3807 = vpop.f32.mrb[0].mxu0
      %3808 = vmatprep.mubr.f32.mxu0 0.0
      %3809 = vmatmul.mubr.f32.gmra.mrb[0].mxu0 %v494
      %v3810 = vpop.f32.mrb[0].mxu0
      %v3811 = vadd.f32 0.0, %v3810
      %v3812 = vpop.f32.mrb[0].mxu0
      %3813 = vmatprep.mubr.f32.mxu0 0.0
      %3814 = vmatmul.mubr.f32.gmra.mrb[0].mxu0 %v495
      %v3815 = vpop.f32.mrb[0].mxu0
      %v3816 = vadd.f32 0.0, %v3815
      %v3817 = vpop.f32.mrb[0].mxu0
      %3818 = vmatprep.mubr.f32.mxu0 0.0
      %3819 = vmatmul.mubr.f32.gmra.mrb[0].mxu0 %v496
      %v3820 = vpop.f32.mrb[0].mxu0
      %v3821 = vadd.f32 0.0, %v3820
      %v3822 = vpop.f32.mrb[0].mxu0
      %3823 = vmatprep.mubr.f32.mxu0 0.0
      %3824 = vmatmul.mubr.f32.gmra.mrb[0].mxu0 %v497
      %v3825 = vpop.f32.mrb[0].mxu0
      %v3826 = vadd.f32 0.0, %v3825
      %v3827 = vpop.f32.mrb[0].mxu0
      %3828 = vmatprep.mubr.f32.mxu0 0.0
      %3829 = vmatmul.mubr.f32.gmra.mrb[0].mxu0 %v498
      %v3830 = vpop.f32.mrb[0].mxu0
      %v3831 = vadd.f32 0.0, %v3830
      %v3832 = vpop.f32.mrb[0].mxu0
      %3833 = vmatprep.mubr.f32.mxu0 0.0
      %3834 = vmatmul.mubr.f32.gmra.mrb[0].mxu0 %v499
      %v3835 = vpop.f32.mrb[0].mxu0
      %v3836 = vadd.f32 0.0, %v3835
      %v3837 = vpop.f32.mrb[0].mxu0
      %3838 = vmatprep.mubr.f32.mxu0 0.0
      %3839 = vmatmul.mubr.f32.gmra.mrb[0].mxu0 %v500
      %v3840 = vpop.f32.mrb[0].mxu0
      %v3841 = vadd.f32 0.0, %v3840
      %v3842 = vpop.f32.mrb[0].mxu0
      %3843 = vmatprep.mubr.f32.mxu0 0.0
      %3844 = vmatmul.mubr.f32.gmra.mrb[0].mxu0 %v501
      %v3845 = vpop.f32.mrb[0].mxu0
      %v3846 = vadd.f32 0.0, %v3845
      %v3847 = vpop.f32.mrb[0].mxu0
      %3848 = vmatprep.mubr.f32.mxu0 0.0
      %3849 = vmatmul.mubr.f32.gmra.mrb[0].mxu0 %v502
      %v3850 = vpop.f32.mrb[0].mxu0
      %v3851 = vadd.f32 0.0, %v3850
      %v3852 = vpop.f32.mrb[0].mxu0
      %3853 = vmatprep.mubr.f32.mxu0 0.0
      %3854 = vmatmul.mubr.f32.gmra.mrb[0].mxu0 %v503
      %v3855 = vpop.f32.mrb[0].mxu0
      %v3856 = vadd.f32 0.0, %v3855
      %v3857 = vpop.f32.mrb[0].mxu0
      %3858 = vmatprep.mubr.f32.mxu0 0.0
      %3859 = vmatmul.mubr.f32.gmra.mrb[0].mxu0 %v504
      %v3860 = vpop.f32.mrb[0].mxu0
      %v3861 = vadd.f32 0.0, %v3860
      %v3862 = vpop.f32.mrb[0].mxu0
      %3863 = vmatprep.mubr.f32.mxu0 0.0
      %3864 = vmatmul.mubr.f32.gmra.mrb[0].mxu0 %v505
      %v3865 = vpop.f32.mrb[0].mxu0
      %v3866 = vadd.f32 0.0, %v3865
      %v3867 = vpop.f32.mrb[0].mxu0
      %3868 = vmatprep.mubr.f32.mxu0 0.0
      %3869 = vmatmul.mubr.f32.gmra.mrb[0].mxu0 %v506
      %v3870 = vpop.f32.mrb[0].mxu0
      %v3871 = vadd.f32 0.0, %v3870
      %v3872 = vpop.f32.mrb[0].mxu0
      %3873 = vmatprep.mubr.f32.mxu0 0.0
      %3874 = vmatmul.mubr.f32.gmra.mrb[0].mxu0 %v507
      %v3875 = vpop.f32.mrb[0].mxu0
      %v3876 = vadd.f32 0.0, %v3875
      %v3877 = vpop.f32.mrb[0].mxu0
      %3878 = vmatprep.mubr.f32.mxu0 0.0
      %3879 = vmatmul.mubr.f32.gmra.mrb[0].mxu0 %v508
      %v3880 = vpop.f32.mrb[0].mxu0
      %v3881 = vadd.f32 0.0, %v3880
      %v3882 = vpop.f32.mrb[0].mxu0
      %3883 = vmatprep.mubr.f32.mxu0 0.0
      %3884 = vmatmul.mubr.f32.gmra.mrb[0].mxu0 %v509
      %v3885 = vpop.f32.mrb[0].mxu0
      %v3886 = vadd.f32 0.0, %v3885
      %v3887 = vpop.f32.mrb[0].mxu0
      %3888 = vmatprep.mubr.f32.mxu0 0.0
      %3889 = vmatmul.mubr.f32.gmra.mrb[0].mxu0 %v510
      %v3890 = vpop.f32.mrb[0].mxu0
      %v3891 = vadd.f32 0.0, %v3890
      %v3892 = vpop.f32.mrb[0].mxu0
      %3893 = vmatprep.mubr.f32.mxu0 0.0
      %3894 = vmatmul.mubr.f32.gmra.mrb[0].mxu0 %v511
      %v3895 = vpop.f32.mrb[0].mxu0
      %v3896 = vadd.f32 0.0, %v3895
      %v3897 = vpop.f32.mrb[0].mxu0
      %3898 = vmatprep.mubr.f32.mxu0 0.0
      %3899 = vmatmul.mubr.f32.gmra.mrb[0].mxu0 %v512
      %v3900 = vpop.f32.mrb[0].mxu0
      %v3901 = vadd.f32 0.0, %v3900
      %v3902 = vpop.f32.mrb[0].mxu0
      %3903 = vmatprep.mubr.f32.mxu0 0.0
      %3904 = vmatmul.mubr.f32.gmra.mrb[0].mxu0 %v513
      %v3905 = vpop.f32.mrb[0].mxu0
      %v3906 = vadd.f32 0.0, %v3905
      %v3907 = vpop.f32.mrb[0].mxu0
      %3908 = vmatprep.mubr.f32.mxu0 0.0
      %3909 = vmatmul.mubr.f32.gmra.mrb[0].mxu0 %v514
      %v3910 = vpop.f32.mrb[0].mxu0
      %v3911 = vadd.f32 0.0, %v3910
      %v3912 = vpop.f32.mrb[0].mxu0
      %3913 = vmatprep.mubr.f32.mxu0 0.0
      %3914 = vmatmul.mubr.f32.gmra.mrb[0].mxu0 %v515
      %v3915 = vpop.f32.mrb[0].mxu0
      %v3916 = vadd.f32 0.0, %v3915
      %v3917 = vpop.f32.mrb[0].mxu0
      %3918 = vmatprep.mubr.f32.mxu0 0.0
      %3919 = vmatmul.mubr.f32.gmra.mrb[0].mxu0 %v516
      %v3920 = vpop.f32.mrb[0].mxu0
      %v3921 = vadd.f32 0.0, %v3920
      %v3922 = vpop.f32.mrb[0].mxu0
      %3923 = vmatprep.mubr.f32.mxu0 0.0
      %3924 = vmatmul.mubr.f32.gmra.mrb[0].mxu0 %v517
      %v3925 = vpop.f32.mrb[0].mxu0
      %v3926 = vadd.f32 0.0, %v3925
      %v3927 = vpop.f32.mrb[0].mxu0
      %3928 = vmatprep.mubr.f32.mxu0 0.0
      %3929 = vmatmul.mubr.f32.gmra.mrb[0].mxu0 0.0
      %v3930 = vpop.f32.mrb[0].mxu0
      %v3931 = vadd.f32 0.0, %v3930
      %v3932 = vpop.f32.mrb[0].mxu0
      %3933 = vmatprep.mubr.f32.mxu0 0.0
      %3934 = vmatmul.mubr.f32.gmra.mrb[0].mxu0 0.0
      %v3935 = vpop.f32.mrb[0].mxu0
      %v3936 = vadd.f32 0.0, %v3935
      %v3937 = vpop.f32.mrb[0].mxu0
      %3938 = vdwg.mxu0
      %v3939 = vadd.f32 %v3665, %v3781
      %v3940 = vadd.f32 %v3666, %v3786
      %v3941 = vadd.f32 %v3667, %v3791
      %v3942 = vadd.f32 %v3668, %v3796
      %v3943 = vadd.f32 %v3669, %v3801
      %v3944 = vadd.f32 %v3670, %v3806
      %v3945 = vadd.f32 %v3671, %v3811
      %v3946 = vadd.f32 %v3672, %v3816
      %v3947 = vadd.f32 %v3673, %v3821
      %v3948 = vadd.f32 %v3674, %v3826
      %v3949 = vadd.f32 %v3675, %v3831
      %v3950 = vadd.f32 %v3676, %v3836
      %v3951 = vadd.f32 %v3677, %v3841
      %v3952 = vadd.f32 %v3678, %v3846
      %v3953 = vadd.f32 %v3679, %v3851
      %v3954 = vadd.f32 %v3680, %v3856
      %v3955 = vadd.f32 %v3681, %v3861
      %v3956 = vadd.f32 %v3682, %v3866
      %v3957 = vadd.f32 %v3683, %v3871
      %v3958 = vadd.f32 %v3684, %v3876
      %v3959 = vadd.f32 %v3685, %v3881
      %v3960 = vadd.f32 %v3686, %v3886
      %v3961 = vadd.f32 %v3687, %v3891
      %v3962 = vadd.f32 %v3688, %v3896
      %v3963 = vadd.f32 %v3689, %v3901
      %v3964 = vadd.f32 %v3690, %v3906
      %v3965 = vadd.f32 %v3691, %v3911
      %v3966 = vadd.f32 %v3692, %v3916
      %v3967 = vadd.f32 %v3693, %v3921
      %v3968 = vadd.f32 %v3694, %v3926
      %v3969 = vadd.f32 %v3695, %v3931
      %v3970 = vadd.f32 %v3696, %v3936
      %v3971 = vmul.f32 %v488, %v1582
      %v3972 = vmul.f32 %v489, %v1584
      %v3973 = vmul.f32 %v490, %v1586
      %v3974 = vmul.f32 %v491, %v1588
      %v3975 = vmul.f32 %v492, %v1590
      %v3976 = vmul.f32 %v493, %v1592
      %v3977 = vmul.f32 %v494, %v1594
      %v3978 = vmul.f32 %v495, %v1596
      %v3979 = vmul.f32 %v496, %v1598
      %v3980 = vmul.f32 %v497, %v1600
      %v3981 = vmul.f32 %v498, %v1602
      %v3982 = vmul.f32 %v499, %v1604
      %v3983 = vmul.f32 %v500, %v1606
      %v3984 = vmul.f32 %v501, %v1608
      %v3985 = vmul.f32 %v502, %v1610
      %v3986 = vmul.f32 %v503, %v1612
      %v3987 = vmul.f32 %v504, %v1614
      %v3988 = vmul.f32 %v505, %v1616
      %v3989 = vmul.f32 %v506, %v1618
      %v3990 = vmul.f32 %v507, %v1620
      %v3991 = vmul.f32 %v508, %v1622
      %v3992 = vmul.f32 %v509, %v1624
      %v3993 = vmul.f32 %v510, %v1626
      %v3994 = vmul.f32 %v511, %v1628
      %v3995 = vmul.f32 %v512, %v1630
      %v3996 = vmul.f32 %v513, %v1632
      %v3997 = vmul.f32 %v514, %v1634
      %v3998 = vmul.f32 %v515, %v1636
      %v3999 = vmul.f32 %v516, %v1638
      %v4000 = vmul.f32 %v517, %v1640
      %v4001 = vmul.f32 %v1642, 0.0
      %v4002 = vmul.f32 %v1644, 0.0
      %s4003 = scalar_lea.vmem %s7, 1024
      %v4004 = vld [vmem:[%s4003] sm:$0xff]
      %v4005 = vld [vmem:[%s4003 + $0x8] sm:$0xff]
      %v4006 = vld [vmem:[%s4003 + $0x10] sm:$0xff]
      %v4007 = vld [vmem:[%s4003 + $0x18] sm:$0xff]
      %v4008 = vld [vmem:[%s4003 + $0x20] sm:$0xff]
      %v4009 = vld [vmem:[%s4003 + $0x28] sm:$0xff]
      %v4010 = vld [vmem:[%s4003 + $0x30] sm:$0xff]
      %v4011 = vld [vmem:[%s4003 + $0x38] sm:$0xff]
      %v4012 = vld [vmem:[%s4003 + $0x40] sm:$0xff]
      %v4013 = vld [vmem:[%s4003 + $0x48] sm:$0xff]
      %v4014 = vld [vmem:[%s4003 + $0x50] sm:$0xff]
      %v4015 = vld [vmem:[%s4003 + $0x58] sm:$0xff]
      %v4016 = vld [vmem:[%s4003 + $0x60] sm:$0xff]
      %v4017 = vld [vmem:[%s4003 + $0x68] sm:$0xff]
      %v4018 = vld [vmem:[%s4003 + $0x70] sm:$0xff]
      %v4019 = vld [vmem:[%s4003 + $0x78] sm:$0xff]
      %v4052 = vrot.slane %v3971, 1
      %v4053 = vrot.slane %v3972, 1
      %v4054 = vsel %vm678, %v4052, %v4053
      %v4055 = vrot.slane %v3973, 1
      %v4056 = vsel %vm678, %v4053, %v4055
      %v4057 = vrot.slane %v3974, 1
      %v4058 = vsel %vm678, %v4055, %v4057
      %v4059 = vrot.slane %v3975, 1
      %v4060 = vsel %vm678, %v4057, %v4059
      %v4061 = vrot.slane %v3976, 1
      %v4062 = vsel %vm678, %v4059, %v4061
      %v4063 = vrot.slane %v3977, 1
      %v4064 = vsel %vm678, %v4061, %v4063
      %v4065 = vrot.slane %v3978, 1
      %v4066 = vsel %vm678, %v4063, %v4065
      %v4067 = vrot.slane %v3979, 1
      %v4068 = vsel %vm678, %v4065, %v4067
      %v4069 = vrot.slane %v3980, 1
      %v4070 = vsel %vm678, %v4067, %v4069
      %v4071 = vrot.slane %v3981, 1
      %v4072 = vsel %vm678, %v4069, %v4071
      %v4073 = vrot.slane %v3982, 1
      %v4074 = vsel %vm678, %v4071, %v4073
      %v4075 = vrot.slane %v3983, 1
      %v4076 = vsel %vm678, %v4073, %v4075
      %v4077 = vrot.slane %v3984, 1
      %v4078 = vsel %vm678, %v4075, %v4077
      %v4079 = vrot.slane %v3985, 1
      %v4080 = vsel %vm678, %v4077, %v4079
      %v4081 = vrot.slane %v3986, 1
      %v4082 = vsel %vm678, %v4079, %v4081
      %v4083 = vrot.slane %v3987, 1
      %v4084 = vsel %vm678, %v4081, %v4083
      %v4085 = vrot.slane %v3988, 1
      %v4086 = vsel %vm678, %v4083, %v4085
      %v4087 = vrot.slane %v3989, 1
      %v4088 = vsel %vm678, %v4085, %v4087
      %v4089 = vrot.slane %v3990, 1
      %v4090 = vsel %vm678, %v4087, %v4089
      %v4091 = vrot.slane %v3991, 1
      %v4092 = vsel %vm678, %v4089, %v4091
      %v4093 = vrot.slane %v3992, 1
      %v4094 = vsel %vm678, %v4091, %v4093
      %v4095 = vrot.slane %v3993, 1
      %v4096 = vsel %vm678, %v4093, %v4095
      %v4097 = vrot.slane %v3994, 1
      %v4098 = vsel %vm678, %v4095, %v4097
      %v4099 = vrot.slane %v3995, 1
      %v4100 = vsel %vm678, %v4097, %v4099
      %v4101 = vrot.slane %v3996, 1
      %v4102 = vsel %vm678, %v4099, %v4101
      %v4103 = vrot.slane %v3997, 1
      %v4104 = vsel %vm678, %v4101, %v4103
      %v4105 = vrot.slane %v3998, 1
      %v4106 = vsel %vm678, %v4103, %v4105
      %v4107 = vrot.slane %v3999, 1
      %v4108 = vsel %vm678, %v4105, %v4107
      %v4109 = vrot.slane %v4000, 1
      %v4110 = vsel %vm678, %v4107, %v4109
      %v4111 = vrot.slane %v4001, 1
      %v4112 = vsel %vm678, %v4109, %v4111
      %v4113 = vrot.slane %v4002, 1
      %v4114 = vsel %vm678, %v4111, %v4113
      %v4115 = vsel %vm678, %v4113, %v2969
      %4148 = vmatprep.subr.mxu0 0.0
      %4149 = vmatpush1.msra.mxu0 %v4004
      %4150 = vmatprep.subr.mxu0 0.0
      %4151 = vmatpush1.msra.mxu0 %v4005
      %4152 = vmatprep.subr.mxu0 0.0
      %4153 = vmatpush1.msra.mxu0 %v4006
      %4154 = vmatprep.subr.mxu0 0.0
      %4155 = vmatpush1.msra.mxu0 %v4007
      %4156 = vmatprep.subr.mxu0 0.0
      %4157 = vmatpush1.msra.mxu0 %v4008
      %4158 = vmatprep.subr.mxu0 0.0
      %4159 = vmatpush1.msra.mxu0 %v4009
      %4160 = vmatprep.subr.mxu0 0.0
      %4161 = vmatpush1.msra.mxu0 %v4010
      %4162 = vmatprep.subr.mxu0 0.0
      %4163 = vmatpush1.msra.mxu0 %v4011
      %4164 = vmatprep.subr.mxu0 0.0
      %4165 = vmatpush1.msra.mxu0 %v4012
      %4166 = vmatprep.subr.mxu0 0.0
      %4167 = vmatpush1.msra.mxu0 %v4013
      %4168 = vmatprep.subr.mxu0 0.0
      %4169 = vmatpush1.msra.mxu0 %v4014
      %4170 = vmatprep.subr.mxu0 0.0
      %4171 = vmatpush1.msra.mxu0 %v4015
      %4172 = vmatprep.subr.mxu0 0.0
      %4173 = vmatpush1.msra.mxu0 %v4016
      %4174 = vmatprep.subr.mxu0 0.0
      %4175 = vmatpush1.msra.mxu0 %v4017
      %4176 = vmatprep.subr.mxu0 0.0
      %4177 = vmatpush1.msra.mxu0 %v4018
      %4178 = vmatprep.subr.mxu0 0.0
      %4179 = vmatpush1.msra.mxu0 %v4019
      %4180 = vmatprep.subr.mxu0 0.0
      %4181 = vmatpush1.msra.mxu0 0.0
      %4182 = vmatprep.subr.mxu0 0.0
      %4183 = vmatpush1.msra.mxu0 0.0
      %4184 = vmatprep.subr.mxu0 0.0
      %4185 = vmatpush1.msra.mxu0 0.0
      %4186 = vmatprep.subr.mxu0 0.0
      %4187 = vmatpush1.msra.mxu0 0.0
      %4188 = vmatprep.subr.mxu0 0.0
      %4189 = vmatpush1.msra.mxu0 0.0
      %4190 = vmatprep.subr.mxu0 0.0
      %4191 = vmatpush1.msra.mxu0 0.0
      %4192 = vmatprep.subr.mxu0 0.0
      %4193 = vmatpush1.msra.mxu0 0.0
      %4194 = vmatprep.subr.mxu0 0.0
      %4195 = vmatpush1.msra.mxu0 0.0
      %4196 = vmatprep.subr.mxu0 0.0
      %4197 = vmatpush1.msra.mxu0 0.0
      %4198 = vmatprep.subr.mxu0 0.0
      %4199 = vmatpush1.msra.mxu0 0.0
      %4200 = vmatprep.subr.mxu0 0.0
      %4201 = vmatpush1.msra.mxu0 0.0
      %4202 = vmatprep.subr.mxu0 0.0
      %4203 = vmatpush1.msra.mxu0 0.0
      %4204 = vmatprep.subr.mxu0 0.0
      %4205 = vmatpush1.msra.mxu0 0.0
      %4206 = vmatprep.subr.mxu0 0.0
      %4207 = vmatpush1.msra.mxu0 0.0
      %4208 = vmatprep.subr.mxu0 0.0
      %4209 = vmatpush1.msra.mxu0 0.0
      %4210 = vmatprep.subr.mxu0 0.0
      %4211 = vmatpush1.msra.mxu0 0.0
      %4212 = vmatprep.mubr.f32.mxu0 0.0
      %4213 = vmatmul.mubr.f32.gmra.mrb[0].mxu0 %v4054
      %v4214 = vpop.f32.mrb[0].mxu0
      %v4215 = vadd.f32 0.0, %v4214
      %v4216 = vpop.f32.mrb[0].mxu0
      %4217 = vmatprep.mubr.f32.mxu0 0.0
      %4218 = vmatmul.mubr.f32.gmra.mrb[0].mxu0 %v4056
      %v4219 = vpop.f32.mrb[0].mxu0
      %v4220 = vadd.f32 0.0, %v4219
      %v4221 = vpop.f32.mrb[0].mxu0
      %4222 = vmatprep.mubr.f32.mxu0 0.0
      %4223 = vmatmul.mubr.f32.gmra.mrb[0].mxu0 %v4058
      %v4224 = vpop.f32.mrb[0].mxu0
      %v4225 = vadd.f32 0.0, %v4224
      %v4226 = vpop.f32.mrb[0].mxu0
      %4227 = vmatprep.mubr.f32.mxu0 0.0
      %4228 = vmatmul.mubr.f32.gmra.mrb[0].mxu0 %v4060
      %v4229 = vpop.f32.mrb[0].mxu0
      %v4230 = vadd.f32 0.0, %v4229
      %v4231 = vpop.f32.mrb[0].mxu0
      %4232 = vmatprep.mubr.f32.mxu0 0.0
      %4233 = vmatmul.mubr.f32.gmra.mrb[0].mxu0 %v4062
      %v4234 = vpop.f32.mrb[0].mxu0
      %v4235 = vadd.f32 0.0, %v4234
      %v4236 = vpop.f32.mrb[0].mxu0
      %4237 = vmatprep.mubr.f32.mxu0 0.0
      %4238 = vmatmul.mubr.f32.gmra.mrb[0].mxu0 %v4064
      %v4239 = vpop.f32.mrb[0].mxu0
      %v4240 = vadd.f32 0.0, %v4239
      %v4241 = vpop.f32.mrb[0].mxu0
      %4242 = vmatprep.mubr.f32.mxu0 0.0
      %4243 = vmatmul.mubr.f32.gmra.mrb[0].mxu0 %v4066
      %v4244 = vpop.f32.mrb[0].mxu0
      %v4245 = vadd.f32 0.0, %v4244
      %v4246 = vpop.f32.mrb[0].mxu0
      %4247 = vmatprep.mubr.f32.mxu0 0.0
      %4248 = vmatmul.mubr.f32.gmra.mrb[0].mxu0 %v4068
      %v4249 = vpop.f32.mrb[0].mxu0
      %v4250 = vadd.f32 0.0, %v4249
      %v4251 = vpop.f32.mrb[0].mxu0
      %4252 = vmatprep.mubr.f32.mxu0 0.0
      %4253 = vmatmul.mubr.f32.gmra.mrb[0].mxu0 %v4070
      %v4254 = vpop.f32.mrb[0].mxu0
      %v4255 = vadd.f32 0.0, %v4254
      %v4256 = vpop.f32.mrb[0].mxu0
      %4257 = vmatprep.mubr.f32.mxu0 0.0
      %4258 = vmatmul.mubr.f32.gmra.mrb[0].mxu0 %v4072
      %v4259 = vpop.f32.mrb[0].mxu0
      %v4260 = vadd.f32 0.0, %v4259
      %v4261 = vpop.f32.mrb[0].mxu0
      %4262 = vmatprep.mubr.f32.mxu0 0.0
      %4263 = vmatmul.mubr.f32.gmra.mrb[0].mxu0 %v4074
      %v4264 = vpop.f32.mrb[0].mxu0
      %v4265 = vadd.f32 0.0, %v4264
      %v4266 = vpop.f32.mrb[0].mxu0
      %4267 = vmatprep.mubr.f32.mxu0 0.0
      %4268 = vmatmul.mubr.f32.gmra.mrb[0].mxu0 %v4076
      %v4269 = vpop.f32.mrb[0].mxu0
      %v4270 = vadd.f32 0.0, %v4269
      %v4271 = vpop.f32.mrb[0].mxu0
      %4272 = vmatprep.mubr.f32.mxu0 0.0
      %4273 = vmatmul.mubr.f32.gmra.mrb[0].mxu0 %v4078
      %v4274 = vpop.f32.mrb[0].mxu0
      %v4275 = vadd.f32 0.0, %v4274
      %v4276 = vpop.f32.mrb[0].mxu0
      %4277 = vmatprep.mubr.f32.mxu0 0.0
      %4278 = vmatmul.mubr.f32.gmra.mrb[0].mxu0 %v4080
      %v4279 = vpop.f32.mrb[0].mxu0
      %v4280 = vadd.f32 0.0, %v4279
      %v4281 = vpop.f32.mrb[0].mxu0
      %4282 = vmatprep.mubr.f32.mxu0 0.0
      %4283 = vmatmul.mubr.f32.gmra.mrb[0].mxu0 %v4082
      %v4284 = vpop.f32.mrb[0].mxu0
      %v4285 = vadd.f32 0.0, %v4284
      %v4286 = vpop.f32.mrb[0].mxu0
      %4287 = vmatprep.mubr.f32.mxu0 0.0
      %4288 = vmatmul.mubr.f32.gmra.mrb[0].mxu0 %v4084
      %v4289 = vpop.f32.mrb[0].mxu0
      %v4290 = vadd.f32 0.0, %v4289
      %v4291 = vpop.f32.mrb[0].mxu0
      %4292 = vmatprep.mubr.f32.mxu0 0.0
      %4293 = vmatmul.mubr.f32.gmra.mrb[0].mxu0 %v4086
      %v4294 = vpop.f32.mrb[0].mxu0
      %v4295 = vadd.f32 0.0, %v4294
      %v4296 = vpop.f32.mrb[0].mxu0
      %4297 = vmatprep.mubr.f32.mxu0 0.0
      %4298 = vmatmul.mubr.f32.gmra.mrb[0].mxu0 %v4088
      %v4299 = vpop.f32.mrb[0].mxu0
      %v4300 = vadd.f32 0.0, %v4299
      %v4301 = vpop.f32.mrb[0].mxu0
      %4302 = vmatprep.mubr.f32.mxu0 0.0
      %4303 = vmatmul.mubr.f32.gmra.mrb[0].mxu0 %v4090
      %v4304 = vpop.f32.mrb[0].mxu0
      %v4305 = vadd.f32 0.0, %v4304
      %v4306 = vpop.f32.mrb[0].mxu0
      %4307 = vmatprep.mubr.f32.mxu0 0.0
      %4308 = vmatmul.mubr.f32.gmra.mrb[0].mxu0 %v4092
      %v4309 = vpop.f32.mrb[0].mxu0
      %v4310 = vadd.f32 0.0, %v4309
      %v4311 = vpop.f32.mrb[0].mxu0
      %4312 = vmatprep.mubr.f32.mxu0 0.0
      %4313 = vmatmul.mubr.f32.gmra.mrb[0].mxu0 %v4094
      %v4314 = vpop.f32.mrb[0].mxu0
      %v4315 = vadd.f32 0.0, %v4314
      %v4316 = vpop.f32.mrb[0].mxu0
      %4317 = vmatprep.mubr.f32.mxu0 0.0
      %4318 = vmatmul.mubr.f32.gmra.mrb[0].mxu0 %v4096
      %v4319 = vpop.f32.mrb[0].mxu0
      %v4320 = vadd.f32 0.0, %v4319
      %v4321 = vpop.f32.mrb[0].mxu0
      %4322 = vmatprep.mubr.f32.mxu0 0.0
      %4323 = vmatmul.mubr.f32.gmra.mrb[0].mxu0 %v4098
      %v4324 = vpop.f32.mrb[0].mxu0
      %v4325 = vadd.f32 0.0, %v4324
      %v4326 = vpop.f32.mrb[0].mxu0
      %4327 = vmatprep.mubr.f32.mxu0 0.0
      %4328 = vmatmul.mubr.f32.gmra.mrb[0].mxu0 %v4100
      %v4329 = vpop.f32.mrb[0].mxu0
      %v4330 = vadd.f32 0.0, %v4329
      %v4331 = vpop.f32.mrb[0].mxu0
      %4332 = vmatprep.mubr.f32.mxu0 0.0
      %4333 = vmatmul.mubr.f32.gmra.mrb[0].mxu0 %v4102
      %v4334 = vpop.f32.mrb[0].mxu0
      %v4335 = vadd.f32 0.0, %v4334
      %v4336 = vpop.f32.mrb[0].mxu0
      %4337 = vmatprep.mubr.f32.mxu0 0.0
      %4338 = vmatmul.mubr.f32.gmra.mrb[0].mxu0 %v4104
      %v4339 = vpop.f32.mrb[0].mxu0
      %v4340 = vadd.f32 0.0, %v4339
      %v4341 = vpop.f32.mrb[0].mxu0
      %4342 = vmatprep.mubr.f32.mxu0 0.0
      %4343 = vmatmul.mubr.f32.gmra.mrb[0].mxu0 %v4106
      %v4344 = vpop.f32.mrb[0].mxu0
      %v4345 = vadd.f32 0.0, %v4344
      %v4346 = vpop.f32.mrb[0].mxu0
      %4347 = vmatprep.mubr.f32.mxu0 0.0
      %4348 = vmatmul.mubr.f32.gmra.mrb[0].mxu0 %v4108
      %v4349 = vpop.f32.mrb[0].mxu0
      %v4350 = vadd.f32 0.0, %v4349
      %v4351 = vpop.f32.mrb[0].mxu0
      %4352 = vmatprep.mubr.f32.mxu0 0.0
      %4353 = vmatmul.mubr.f32.gmra.mrb[0].mxu0 %v4110
      %v4354 = vpop.f32.mrb[0].mxu0
      %v4355 = vadd.f32 0.0, %v4354
      %v4356 = vpop.f32.mrb[0].mxu0
      %4357 = vmatprep.mubr.f32.mxu0 0.0
      %4358 = vmatmul.mubr.f32.gmra.mrb[0].mxu0 %v4112
      %v4359 = vpop.f32.mrb[0].mxu0
      %v4360 = vadd.f32 0.0, %v4359
      %v4361 = vpop.f32.mrb[0].mxu0
      %4362 = vmatprep.mubr.f32.mxu0 0.0
      %4363 = vmatmul.mubr.f32.gmra.mrb[0].mxu0 %v4114
      %v4364 = vpop.f32.mrb[0].mxu0
      %v4365 = vadd.f32 0.0, %v4364
      %v4366 = vpop.f32.mrb[0].mxu0
      %4367 = vmatprep.mubr.f32.mxu0 0.0
      %4368 = vmatmul.mubr.f32.gmra.mrb[0].mxu0 %v4115
      %v4369 = vpop.f32.mrb[0].mxu0
      %v4370 = vadd.f32 0.0, %v4369
      %v4371 = vpop.f32.mrb[0].mxu0
      %4372 = vdwg.mxu0
      %v4373 = vadd.f32 %v3939, %v4215
      %v4374 = vadd.f32 %v3940, %v4220
      %v4375 = vadd.f32 %v3941, %v4225
      %v4376 = vadd.f32 %v3942, %v4230
      %v4377 = vadd.f32 %v3943, %v4235
      %v4378 = vadd.f32 %v3944, %v4240
      %v4379 = vadd.f32 %v3945, %v4245
      %v4380 = vadd.f32 %v3946, %v4250
      %v4381 = vadd.f32 %v3947, %v4255
      %v4382 = vadd.f32 %v3948, %v4260
      %v4383 = vadd.f32 %v3949, %v4265
      %v4384 = vadd.f32 %v3950, %v4270
      %v4385 = vadd.f32 %v3951, %v4275
      %v4386 = vadd.f32 %v3952, %v4280
      %v4387 = vadd.f32 %v3953, %v4285
      %v4388 = vadd.f32 %v3954, %v4290
      %v4389 = vadd.f32 %v3955, %v4295
      %v4390 = vadd.f32 %v3956, %v4300
      %v4391 = vadd.f32 %v3957, %v4305
      %v4392 = vadd.f32 %v3958, %v4310
      %v4393 = vadd.f32 %v3959, %v4315
      %v4394 = vadd.f32 %v3960, %v4320
      %v4395 = vadd.f32 %v3961, %v4325
      %v4396 = vadd.f32 %v3962, %v4330
      %v4397 = vadd.f32 %v3963, %v4335
      %v4398 = vadd.f32 %v3964, %v4340
      %v4399 = vadd.f32 %v3965, %v4345
      %v4400 = vadd.f32 %v3966, %v4350
      %v4401 = vadd.f32 %v3967, %v4355
      %v4402 = vadd.f32 %v3968, %v4360
      %v4403 = vadd.f32 %v3969, %v4365
      %v4404 = vadd.f32 %v3970, %v4370
      %4405 = vst [vmem:[%s356] sm:$0xff] %v4373
      %4406 = vst [vmem:[%s356 + $0x8] sm:$0xff] %v4374
      %4407 = vst [vmem:[%s356 + $0x10] sm:$0xff] %v4375
      %4408 = vst [vmem:[%s356 + $0x18] sm:$0xff] %v4376
      %4409 = vst [vmem:[%s356 + $0x20] sm:$0xff] %v4377
      %4410 = vst [vmem:[%s356 + $0x28] sm:$0xff] %v4378
      %4411 = vst [vmem:[%s356 + $0x30] sm:$0xff] %v4379
      %4412 = vst [vmem:[%s356 + $0x38] sm:$0xff] %v4380
      %4413 = vst [vmem:[%s356 + $0x40] sm:$0xff] %v4381
      %4414 = vst [vmem:[%s356 + $0x48] sm:$0xff] %v4382
      %4415 = vst [vmem:[%s356 + $0x50] sm:$0xff] %v4383
      %4416 = vst [vmem:[%s356 + $0x58] sm:$0xff] %v4384
      %4417 = vst [vmem:[%s356 + $0x60] sm:$0xff] %v4385
      %4418 = vst [vmem:[%s356 + $0x68] sm:$0xff] %v4386
      %4419 = vst [vmem:[%s356 + $0x70] sm:$0xff] %v4387
      %4420 = vst [vmem:[%s356 + $0x78] sm:$0xff] %v4388
      %4421 = vst [vmem:[%s356 + $0x80] sm:$0xff] %v4389
      %4422 = vst [vmem:[%s356 + $0x88] sm:$0xff] %v4390
      %4423 = vst [vmem:[%s356 + $0x90] sm:$0xff] %v4391
      %4424 = vst [vmem:[%s356 + $0x98] sm:$0xff] %v4392
      %4425 = vst [vmem:[%s356 + $0xa0] sm:$0xff] %v4393
      %4426 = vst [vmem:[%s356 + $0xa8] sm:$0xff] %v4394
      %4427 = vst [vmem:[%s356 + $0xb0] sm:$0xff] %v4395
      %4428 = vst [vmem:[%s356 + $0xb8] sm:$0xff] %v4396
      %4429 = vst [vmem:[%s356 + $0xc0] sm:$0xff] %v4397
      %4430 = vst [vmem:[%s356 + $0xc8] sm:$0xff] %v4398
      %4431 = vst [vmem:[%s356 + $0xd0] sm:$0xff] %v4399
      %4432 = vst [vmem:[%s356 + $0xd8] sm:$0xff] %v4400
      %4433 = vst [vmem:[%s356 + $0xe0] sm:$0xff] %v4401
      %4434 = vst [vmem:[%s356 + $0xe8] sm:$0xff] %v4402
      %4435 = vst [vmem:[%s356 + $0xf0] sm:$0xff] %v4403
      %4436 = vst [vmem:[%s356 + $0xf8] sm:$0xff] %v4404
      %v4437 = vld [vmem:[%s9] sm:$0x1]
      %v4438 = vadd.f32 %v4373, %v4374
      %v4439 = vadd.f32 %v4438, %v4375
      %v4440 = vadd.f32 %v4439, %v4376
      %v4441 = vadd.f32 %v4440, %v4377
      %v4442 = vadd.f32 %v4441, %v4378
      %v4443 = vadd.f32 %v4442, %v4379
      %v4444 = vadd.f32 %v4443, %v4380
      %v4445 = vadd.f32 %v4444, %v4381
      %v4446 = vadd.f32 %v4445, %v4382
      %v4447 = vadd.f32 %v4446, %v4383
      %v4448 = vadd.f32 %v4447, %v4384
      %v4449 = vadd.f32 %v4448, %v4385
      %v4450 = vadd.f32 %v4449, %v4386
      %v4451 = vadd.f32 %v4450, %v4387
      %v4452 = vadd.f32 %v4451, %v4388
      %v4453 = vadd.f32 %v4452, %v4389
      %v4454 = vadd.f32 %v4453, %v4390
      %v4455 = vadd.f32 %v4454, %v4391
      %v4456 = vadd.f32 %v4455, %v4392
      %v4457 = vadd.f32 %v4456, %v4393
      %v4458 = vadd.f32 %v4457, %v4394
      %v4459 = vadd.f32 %v4458, %v4395
      %v4460 = vadd.f32 %v4459, %v4396
      %v4461 = vadd.f32 %v4460, %v4397
      %v4462 = vadd.f32 %v4461, %v4398
      %v4463 = vadd.f32 %v4462, %v4399
      %v4464 = vadd.f32 %v4463, %v4400
      %v4465 = vadd.f32 %v4464, %v4401
      %v4466 = vadd.f32 %v4465, %v4402
      %v4467 = vadd.f32 %v4466, %v4403
      %v4468 = vadd.f32 %v4467, %v4404
      %v4469 = vrot.slane %v4468, 4
      %v4470 = vadd.f32 %v4468, %v4469
      %v4471 = vrot.slane %v4470, 2
      %v4472 = vadd.f32 %v4470, %v4471
      %v4473 = vrot.slane %v4472, 1
      %v4474 = vadd.f32 %v4472, %v4473
      %v4475 = vadd.f32 %v4437, %v4474
      %4476 = vst [vmem:[%s9] sm:$0x1] %v4475
      %v4477 = vld [vmem:[%s10] sm:$0x1]
      %v4478 = vmul.f32 %v4373, %v4373
      %v4479 = vmul.f32 %v4374, %v4374
      %v4480 = vmul.f32 %v4375, %v4375
      %v4481 = vmul.f32 %v4376, %v4376
      %v4482 = vmul.f32 %v4377, %v4377
      %v4483 = vmul.f32 %v4378, %v4378
      %v4484 = vmul.f32 %v4379, %v4379
      %v4485 = vmul.f32 %v4380, %v4380
      %v4486 = vmul.f32 %v4381, %v4381
      %v4487 = vmul.f32 %v4382, %v4382
      %v4488 = vmul.f32 %v4383, %v4383
      %v4489 = vmul.f32 %v4384, %v4384
      %v4490 = vmul.f32 %v4385, %v4385
      %v4491 = vmul.f32 %v4386, %v4386
      %v4492 = vmul.f32 %v4387, %v4387
      %v4493 = vmul.f32 %v4388, %v4388
      %v4494 = vmul.f32 %v4389, %v4389
      %v4495 = vmul.f32 %v4390, %v4390
      %v4496 = vmul.f32 %v4391, %v4391
      %v4497 = vmul.f32 %v4392, %v4392
      %v4498 = vmul.f32 %v4393, %v4393
      %v4499 = vmul.f32 %v4394, %v4394
      %v4500 = vmul.f32 %v4395, %v4395
      %v4501 = vmul.f32 %v4396, %v4396
      %v4502 = vmul.f32 %v4397, %v4397
      %v4503 = vmul.f32 %v4398, %v4398
      %v4504 = vmul.f32 %v4399, %v4399
      %v4505 = vmul.f32 %v4400, %v4400
      %v4506 = vmul.f32 %v4401, %v4401
      %v4507 = vmul.f32 %v4402, %v4402
      %v4508 = vmul.f32 %v4403, %v4403
      %v4509 = vmul.f32 %v4404, %v4404
      %v4510 = vadd.f32 %v4478, %v4479
      %v4511 = vadd.f32 %v4510, %v4480
      %v4512 = vadd.f32 %v4511, %v4481
      %v4513 = vadd.f32 %v4512, %v4482
      %v4514 = vadd.f32 %v4513, %v4483
      %v4515 = vadd.f32 %v4514, %v4484
      %v4516 = vadd.f32 %v4515, %v4485
      %v4517 = vadd.f32 %v4516, %v4486
      %v4518 = vadd.f32 %v4517, %v4487
      %v4519 = vadd.f32 %v4518, %v4488
      %v4520 = vadd.f32 %v4519, %v4489
      %v4521 = vadd.f32 %v4520, %v4490
      %v4522 = vadd.f32 %v4521, %v4491
      %v4523 = vadd.f32 %v4522, %v4492
      %v4524 = vadd.f32 %v4523, %v4493
      %v4525 = vadd.f32 %v4524, %v4494
      %v4526 = vadd.f32 %v4525, %v4495
      %v4527 = vadd.f32 %v4526, %v4496
      %v4528 = vadd.f32 %v4527, %v4497
      %v4529 = vadd.f32 %v4528, %v4498
      %v4530 = vadd.f32 %v4529, %v4499
      %v4531 = vadd.f32 %v4530, %v4500
      %v4532 = vadd.f32 %v4531, %v4501
      %v4533 = vadd.f32 %v4532, %v4502
      %v4534 = vadd.f32 %v4533, %v4503
      %v4535 = vadd.f32 %v4534, %v4504
      %v4536 = vadd.f32 %v4535, %v4505
      %v4537 = vadd.f32 %v4536, %v4506
      %v4538 = vadd.f32 %v4537, %v4507
      %v4539 = vadd.f32 %v4538, %v4508
      %v4540 = vadd.f32 %v4539, %v4509
      %v4541 = vrot.slane %v4540, 4
      %v4542 = vadd.f32 %v4540, %v4541
      %v4543 = vrot.slane %v4542, 2
      %v4544 = vadd.f32 %v4542, %v4543
      %v4545 = vrot.slane %v4544, 1
      %v4546 = vadd.f32 %v4544, %v4545
      %v4547 = vadd.f32 %v4477, %v4546
      %4548 = vst [vmem:[%s10] sm:$0x1] %v4547
      %s4549 = smul.u32 32, %s22
      %p4550 = scmp.lt.s32.totalorder %s4549, 63
      %s4551 = scalar_select %p4550, %s4549, 63
      %s4552 = smul.addr %s4551, 8
      %s4553 = scalar_lea.vmem %s8, %s4552
      // Predicated region
      $region57: #{bottleneck_forward.5} parent=51 // pred_check
        %p4554 = pneg %p213
      $region58: #{bottleneck_forward.5} parent=51 // pred_check_branch
        %4556 = sbr.rel (%p4554) target = $region60
      $region59: #{bottleneck_forward.5} parent=51 // pred_region
        %s4557 = smul.u32 32, %s22
      $region60: #{bottleneck_forward.5} parent=51 // pred_fallthru
        _
      // Predicated region
      $region61: #{bottleneck_forward.5} parent=51 // pred_check
        %p4558 = pneg %p234
      $region62: #{bottleneck_forward.5} parent=51 // pred_check_branch
        %4560 = sbr.rel (%p4558) target = $region64
      $region63: #{bottleneck_forward.5} parent=51 // pred_region
        _
      $region64: #{bottleneck_forward.5} parent=51 // pred_fallthru
        _
      // Predicated region
      $region65: #{bottleneck_forward.5} parent=51 // pred_check
        %p4561 = pneg %p255
      $region66: #{bottleneck_forward.5} parent=51 // pred_check_branch
        %4563 = sbr.rel (%p4561) target = $region68
      $region67: #{bottleneck_forward.5} parent=51 // pred_region
        _
      $region68: #{bottleneck_forward.5} parent=51 // pred_fallthru
        _
      // Predicated region
      $region69: #{bottleneck_forward.5} parent=51 // pred_check
        %p4564 = pneg %p234
      $region70: #{bottleneck_forward.5} parent=51 // pred_check_branch
        %4566 = sbr.rel (%p4564) target = $region72
      $region71: #{bottleneck_forward.5} parent=51 // pred_region
        _
      $region72: #{bottleneck_forward.5} parent=51 // pred_fallthru
        _
      // Predicated region
      $region73: #{bottleneck_forward.5} parent=51 // pred_check
        %p4567 = pneg %p255
      $region74: #{bottleneck_forward.5} parent=51 // pred_check_branch
        %4569 = sbr.rel (%p4567) target = $region76
      $region75: #{bottleneck_forward.5} parent=51 // pred_region
        _
      $region76: #{bottleneck_forward.5} parent=51 // pred_fallthru
        _
    $region52: #{bottleneck_forward.5} parent=5 // pred_fallthru
      _
    %p4570 = scmp.le.s32.totalorder 2, %s17
    // Predicated region
    $region77: #{bottleneck_forward.5} parent=5 // pred_check
      %p4571 = pneg %p4570
    $region78: #{bottleneck_forward.5} parent=5 // pred_check_branch
      %4573 = sbr.rel (%p4571) target = $region80
    $region79: #{bottleneck_forward.5} parent=5 // pred_region
      %s4574 = ssub.s32 %s17, 2
      // Predicated region
      $region81: #{bottleneck_forward.5} parent=79 // pred_check
        %p4575 = pneg %p219
      $region82: #{bottleneck_forward.5} parent=79 // pred_check_branch
        %4577 = sbr.rel (%p4575) target = $region84
      $region83: #{bottleneck_forward.5} parent=79 // pred_region
        %s4578 = smul.u32 32, %s23
        %p4579 = scmp.lt.s32.totalorder %s4578, 63
        %s4580 = scalar_select %p4579, %s4578, 63
        %s4581 = smul.addr %s4580, 8
        %s4582 = scalar_lea.vmem %s8, %s4581
      $region84: #{bottleneck_forward.5} parent=79 // pred_fallthru
        _
    $region80: #{bottleneck_forward.5} parent=5 // pred_fallthru
      _
  $region6: #{bottleneck_forward.5} parent=0 // loop_footer
    %s21 = sadd.s32 1, %s17
  $region7: #{bottleneck_forward.5} parent=0 // loop_footer_branch
    %16 = sbr.rel target = $region3
  $region8: #{bottleneck_forward.5} parent=0 // loop_exit
    _

</llo_original>
